<compile_context>
chip_gen: v7x
topology: tpu7x:2x2x1
jax: 0.10.0
libtpu: 0.0.40
codegen_flags: <defaults>
</compile_context>

<pallas_src>
import functools

import jax
import jax.numpy as jnp
from jax import lax
from jax.experimental import pallas as pl
from jax.experimental.pallas import tpu as pltpu

EPS = 1e-5
LANE = 128
_TARGET_TILE_ROWS = 2048          # flat (row-major) rows per conv tile


def _round_up(x, m):
    return (x + m - 1) // m * m


def _vmem_limit_bytes():
    """~3/4 of physical VMEM: 96 MiB on v5e/v6e (128 MiB), 48 MiB on v7x (64)."""
    try:
        cap = int(getattr(pltpu.get_tpu_info(), "vmem_capacity_bytes",
                          64 * 1024 * 1024))
    except Exception:
        cap = 64 * 1024 * 1024
    return int(min(cap * 3 // 4, 96 * 1024 * 1024))


def _pick_row_tile(H, W):
    """Largest divisor TB of H whose TB*W flat rows stay within the budget."""
    tb = 1
    for cand in range(1, H + 1):
        if H % cand == 0 and cand * W <= _TARGET_TILE_ROWS:
            tb = cand
    return tb


# ---------------------------------------------------------------------------
# in-kernel helpers
# ---------------------------------------------------------------------------
def _conv3x3_tile(top, mid, bot, w_ref, *, W):
    """3x3 'SAME' conv of one tile of image rows; returns (TB*W, cop) float32.

    top/bot : (W, C)   halo rows (already zeroed when outside the image)
    mid     : (TBW, C) tile rows, flattened row-major
    w_ref   : (3, C, 3*cop) weights; axis 0 = ky (input row -1/0/+1),
              lane axis = kx-major / cout-minor.

    Vertical taps are folded into the matmul K dimension (single K=3*C matmul
    when C is lane-aligned, else three K=C matmuls); all three kx taps share
    the same lhs via an rhs widened to N=3*cop.  The +-1 column shifts are
    applied to the matmul output with pltpu.roll (XLU) plus one column mask
    each, so there are no unaligned activation loads and only two masks.
    """
    TBW, C = mid.shape
    cop = w_ref.shape[-1] // 3

    if TBW == W:                                  # single-image-row tile
        up, dn = top, bot
    else:
        up = jnp.concatenate([top, mid[:TBW - W]], axis=0)   # rows y-1
        dn = jnp.concatenate([mid[W:], bot], axis=0)         # rows y+1

    if C % LANE == 0:
        # Full K-fold: one MXU matmul, K = 3*C, N = 3*cop.
        v = jnp.concatenate([up, mid, dn], axis=-1)
        w = w_ref[...].reshape(3 * C, 3 * cop)
        out3 = jnp.dot(v, w, preferred_element_type=jnp.float32)
    else:
        # Narrow channels (raw image): avoid sub-128-lane concatenation but
        # still 3x fewer MXU pushes (and 4 fewer masks) than 9 per-tap matmuls.
        out3 = jnp.dot(up, w_ref[0], preferred_element_type=jnp.float32)
        out3 += jnp.dot(mid, w_ref[1], preferred_element_type=jnp.float32)
        out3 += jnp.dot(dn, w_ref[2], preferred_element_type=jnp.float32)

    col = lax.broadcasted_iota(jnp.int32, (TBW, 1), 0) % W
    # kx = 0 contribution of input column x feeds output column x+1.
    left = jnp.where(col != 0, pltpu.roll(out3[:, :cop], 1, axis=0), 0.0)
    # kx = 2 contribution of input column x feeds output column x-1.
    right = jnp.where(col != W - 1,
                      pltpu.roll(out3[:, 2 * cop:], TBW - 1, axis=0), 0.0)
    return left + out3[:, cop:2 * cop] + right


def _write_tile_stats(st_ref, acc):
    """Per-tile BN partial statistics: channel sum and sum of squares."""
    st_ref[0, 0, 0:1, :] = jnp.sum(acc, axis=0, keepdims=True)
    st_ref[0, 0, 1:2, :] = jnp.sum(acc * acc, axis=0, keepdims=True)


# ---------------------------------------------------------------------------
# kernels
# ---------------------------------------------------------------------------
def _conv1_kernel(x_mid_ref, x_top_ref, x_bot_ref, w_ref, y_ref, st_ref, *, W):
    """grid=(N, H//TB): conv1 of one row-tile + BN1 partial statistics."""
    t = pl.program_id(1)
    nt = pl.num_programs(1)
    TB = x_mid_ref.shape[1]
    C = x_mid_ref.shape[3]
    dt = x_mid_ref.dtype

    mid = x_mid_ref[0].reshape(TB * W, C)
    # Halo rows were fetched with clamped indices; zero them at image edges
    # (this realises the conv's zero 'SAME' padding vertically).
    top = x_top_ref[0, 0] * jnp.where(t > 0, 1.0, 0.0).astype(dt)
    bot = x_bot_ref[0, 0] * jnp.where(t < nt - 1, 1.0, 0.0).astype(dt)

    acc = _conv3x3_tile(top, mid, bot, w_ref, W=W)
    y_ref[0] = acc.reshape(TB, W, -1).astype(y_ref.dtype)
    _write_tile_stats(st_ref, acc)


def _conv2_kernel(y1_mid_ref, y1_top_ref, y1_bot_ref, sc_ref, sh_ref, w_ref,
                  y2_ref, st_ref, *, W, op_dtype):
    """grid=(N, H//TB): BN1 affine + ReLU, conv2, BN2 partial statistics."""
    t = pl.program_id(1)
    nt = pl.num_programs(1)
    TB = y1_mid_ref.shape[1]
    C = y1_mid_ref.shape[3]
    sc = sc_ref[...]
    sh = sh_ref[...]

    def act(v):   # BN1 (batch stats folded into scale/shift) + ReLU
        return jnp.maximum(v.astype(jnp.float32) * sc + sh,
                           0.0).astype(op_dtype)

    mid = act(y1_mid_ref[0].reshape(TB * W, C))
    # Activate the halo rows too (cheap: one row each), then zero them at
    # the image edges so conv2 sees zero padding, not relu(shift).
    top = act(y1_top_ref[0, 0]) * jnp.where(t > 0, 1.0, 0.0).astype(op_dtype)
    bot = act(y1_bot_ref[0, 0]) * jnp.where(t < nt - 1, 1.0,
                                            0.0).astype(op_dtype)

    acc = _conv3x3_tile(top, mid, bot, w_ref, W=W)
    y2_ref[0] = acc.reshape(TB, W, -1).astype(y2_ref.dtype)
    _write_tile_stats(st_ref, acc)


def _bn_relu_kernel(y_ref, sc_ref, sh_ref, o_ref, *, Cout):
    """grid=(rows//TH,): BN2 affine + ReLU; channel un-pad folded into output."""
    y = y_ref[...].astype(jnp.float32)
    act = jnp.maximum(y * sc_ref[...] + sh_ref[...], 0.0)
    o_ref[...] = act[:, :Cout]


# ---------------------------------------------------------------------------
# wrapper
# ---------------------------------------------------------------------------
def _bn_affine(stats, gamma, beta, count):
    """Fold training-mode BN (biased var, eps=1e-5) into scale / shift."""
    mean = stats[0] / count
    var = jnp.maximum(stats[1] / count - mean * mean, 0.0)
    scale = gamma * lax.rsqrt(var + EPS)
    shift = beta - mean * scale
    return scale.reshape(1, -1), shift.reshape(1, -1)


@functools.partial(jax.jit, static_argnames=("matmul_dtype",))
def double_conv(x_nchw, params, *, matmul_dtype=jnp.bfloat16):
    """PyTorch-compatible DoubleConv forward: NCHW float32 in / out."""
    w1, b1, g1, be1, w2, b2, g2, be2 = params
    del b1, b2   # cancelled exactly by the training-mode BN mean subtraction
    N, Cin, H, W = x_nchw.shape
    Cout = w1.shape[-1]
    cin_p = _round_up(Cin, 8)       # keep the raw input cheap in HBM
    cop = _round_up(Cout, LANE)     # everything downstream is lane-dense
    TB = _pick_row_tile(H, W)       # image rows per conv tile
    n_tiles = H // TB
    count = float(N * H * W)
    vmem = _vmem_limit_bytes()
    inter_dtype = matmul_dtype      # bf16 intermediates on the fast path

    # ---- layout plumbing (XLA): NCHW -> NHWC, channel padding --------------
    x = jnp.transpose(x_nchw, (0, 2, 3, 1)).astype(matmul_dtype)
    x = jnp.pad(x, ((0, 0), (0, 0), (0, 0), (0, cin_p - Cin)))

    def reorder_weights(w, cin, cinp):
        # (ky, kx, cin, cout) -> (ky, cin_p, kx*cop + cout)
        wp = jnp.pad(w, ((0, 0), (0, 0), (0, cinp - cin), (0, cop - Cout)))
        return jnp.transpose(wp, (0, 2, 1, 3)).reshape(
            3, cinp, 3 * cop).astype(matmul_dtype)

    w1r = reorder_weights(w1, Cin, cin_p)
    w2r = reorder_weights(w2, Cout, cop)
    g1p = jnp.pad(g1, (0, cop - Cout), constant_values=1.0)
    g2p = jnp.pad(g2, (0, cop - Cout), constant_values=1.0)
    be1p = jnp.pad(be1, (0, cop - Cout))
    be2p = jnp.pad(be2, (0, cop - Cout))

    conv_params = pltpu.CompilerParams(
        dimension_semantics=("parallel", "parallel"),
        vmem_limit_bytes=vmem)

    def halo_specs(chan):
        mid = pl.BlockSpec((1, TB, W, chan), lambda n, t: (n, t, 0, 0))
        top = pl.BlockSpec((1, 1, W, chan),
                           lambda n, t: (n, jnp.maximum(t * TB - 1, 0), 0, 0))
        bot = pl.BlockSpec((1, 1, W, chan),
                           lambda n, t: (n, jnp.minimum(t * TB + TB, H - 1),
                                         0, 0))
        return mid, top, bot

    y_spec = pl.BlockSpec((1, TB, W, cop), lambda n, t: (n, t, 0, 0))
    st_spec = pl.BlockSpec((1, 1, 2, cop), lambda n, t: (n, t, 0, 0))
    vec_spec = pl.BlockSpec((1, cop), lambda n, t: (0, 0))

    # ---- pass 1: conv1 + per-tile BN1 partial statistics -------------------
    mid1, top1, bot1 = halo_specs(cin_p)
    y1, st1 = pl.pallas_call(
        functools.partial(_conv1_kernel, W=W),
        grid=(N, n_tiles),
        in_specs=[mid1, top1, bot1,
                  pl.BlockSpec((3, cin_p, 3 * cop), lambda n, t: (0, 0, 0))],
        out_specs=[y_spec, st_spec],
        out_shape=(jax.ShapeDtypeStruct((N, H, W, cop), inter_dtype),
                   jax.ShapeDtypeStruct((N, n_tiles, 2, cop), jnp.float32)),
        compiler_params=conv_params,
    )(x, x, x, w1r)
    scale1, shift1 = _bn_affine(st1.sum(axis=(0, 1)), g1p, be1p, count)

    # ---- pass 2: BN1 + ReLU + conv2 + per-tile BN2 partial statistics ------
    mid2, top2, bot2 = halo_specs(cop)
    y2, st2 = pl.pallas_call(
        functools.partial(_conv2_kernel, W=W, op_dtype=matmul_dtype),
        grid=(N, n_tiles),
        in_specs=[mid2, top2, bot2, vec_spec, vec_spec,
                  pl.BlockSpec((3, cop, 3 * cop), lambda n, t: (0, 0, 0))],
        out_specs=[y_spec, st_spec],
        out_shape=(jax.ShapeDtypeStruct((N, H, W, cop), inter_dtype),
                   jax.ShapeDtypeStruct((N, n_tiles, 2, cop), jnp.float32)),
        compiler_params=conv_params,
    )(y1, y1, y1, scale1, shift1, w2r)
    scale2, shift2 = _bn_affine(st2.sum(axis=(0, 1)), g2p, be2p, count)

    # ---- pass 3: BN2 + ReLU, lane-dense tiles over the flattened batch -----
    rows = N * H * W
    th = next((c for c in (4096, 2048, 1024, 512, 256, 128, 64, 32, 16, 8)
               if rows % c == 0), rows)
    y2f = y2.reshape(rows, cop)
    out_flat = pl.pallas_call(
        functools.partial(_bn_relu_kernel, Cout=Cout),
        grid=(rows // th,),
        in_specs=[pl.BlockSpec((th, cop), lambda r: (r, 0)),
                  pl.BlockSpec((1, cop), lambda r: (0, 0)),
                  pl.BlockSpec((1, cop), lambda r: (0, 0))],
        out_specs=pl.BlockSpec((th, Cout), lambda r: (r, 0)),
        out_shape=jax.ShapeDtypeStruct((rows, Cout), jnp.float32),
        compiler_params=pltpu.CompilerParams(
            dimension_semantics=("parallel",), vmem_limit_bytes=vmem),
    )(y2f, scale2, shift2)

    out = out_flat.reshape(N, H, W, Cout)
    return jnp.transpose(out, (0, 3, 1, 2))


# ---------------------------------------------------------------------------
# parameters & reference
# ---------------------------------------------------------------------------
def make_params(key, in_channels, out_channels):
    """Deterministic synthetic parameters (shapes from DoubleConv.__init__)."""
    k1, k2, k3, k4 = jax.random.split(key, 4)
    w1 = 0.1 * jax.random.normal(k1, (out_channels, in_channels, 3, 3),
                                 jnp.float32)
    b1 = 0.1 * jax.random.normal(k2, (out_channels,), jnp.float32)
    w2 = 0.1 * jax.random.normal(k3, (out_channels, out_channels, 3, 3),
                                 jnp.float32)
    b2 = 0.1 * jax.random.normal(k4, (out_channels,), jnp.float32)
    w1 = jnp.transpose(w1, (2, 3, 1, 0))   # OIHW -> HWIO
    w2 = jnp.transpose(w2, (2, 3, 1, 0))
    g1 = jnp.ones((out_channels,), jnp.float32)   # BatchNorm2d default init
    be1 = jnp.zeros((out_channels,), jnp.float32)
    g2 = jnp.ones((out_channels,), jnp.float32)
    be2 = jnp.zeros((out_channels,), jnp.float32)
    return (w1, b1, g1, be1, w2, b2, g2, be2)


def ref_forward(x_nchw, params):
    """Pure-JAX f32 reference (lax.conv + training-mode BN + ReLU)."""
    w1, b1, g1, be1, w2, b2, g2, be2 = params

    def conv(x, w, b):
        y = lax.conv_general_dilated(
            x, w, window_strides=(1, 1), padding="SAME",
            dimension_numbers=("NHWC", "HWIO", "NHWC"),
            precision=lax.Precision.HIGHEST,
            preferred_element_type=jnp.float32)
        return y + b

    def bn_relu(y, g, be):
        mean = y.mean(axis=(0, 1, 2), keepdims=True)
        var = ((y - mean) ** 2).mean(axis=(0, 1, 2), keepdims=True)
        return jnp.maximum((y - mean) * lax.rsqrt(var + EPS) * g + be, 0.0)

    x = jnp.transpose(x_nchw, (0, 2, 3, 1)).astype(jnp.float32)
    h = bn_relu(conv(x, w1, b1), g1, be1)
    h = bn_relu(conv(h, w2, b2), g2, be2)
    return jnp.transpose(h, (0, 3, 1, 2))


if __name__ == "__main__":
    key = jax.random.PRNGKey(0)
    kx, kp = jax.random.split(key)

    N, Cin, Cout, H, W = 2, 4, 8, 16, 16
    x = jax.random.normal(kx, (N, Cin, H, W), jnp.float32)  # NCHW like PyTorch
    params = make_params(kp, Cin, Cout)

    ref = ref_forward(x, params)

    # Default path: bf16 MXU operands / intermediates, f32 accumulation & BN.
    out = jax.block_until_ready(double_conv(x, params))
    assert out.shape == (N, Cout, H, W)
    err = float(jnp.max(jnp.abs(out - ref)))
    assert jnp.allclose(out, ref, rtol=5e-2, atol=8e-2), f"bf16 path err {err}"

    # f32 MXU operands / intermediates must track the f32 reference closely.
    out_f32 = jax.block_until_ready(
        double_conv(x, params, matmul_dtype=jnp.float32))
    err32 = float(jnp.max(jnp.abs(out_f32 - ref)))
    assert jnp.allclose(out_f32, ref, rtol=2e-3, atol=2e-3), \
        f"f32 path err {err32}"

    print("KERNEL_OK")
</pallas_src>

<mosaic_0001>
module attributes {stable_mosaic.version = 11 : i64} {
  func.func @_conv1_kernel(%arg0: i32, %arg1: i32, %arg2: memref<1x16x16x8xbf16, #tpu.memory_space<vmem>>, %arg3: memref<1x1x16x8xbf16, #tpu.memory_space<vmem>>, %arg4: memref<1x1x16x8xbf16, #tpu.memory_space<vmem>>, %arg5: memref<3x8x384xbf16, #tpu.memory_space<vmem>>, %arg6: memref<1x16x16x128xbf16, #tpu.memory_space<vmem>>, %arg7: memref<1x1x2x128xf32, #tpu.memory_space<vmem>>) attributes {dimension_semantics = [#tpu.dimension_semantics<parallel>, #tpu.dimension_semantics<parallel>], iteration_bounds = array<i64: 2, 1>, scalar_prefetch = 0 : i64, scratch_operands = 0 : i64, tpu.core_type = #tpu.core_type<tc>, window_params = [{transform_indices = @transform_0, window_bounds = array<i64: 1, 16, 16, 8>}, {transform_indices = @transform_1, window_bounds = array<i64: 1, 1, 16, 8>}, {transform_indices = @transform_2, window_bounds = array<i64: 1, 1, 16, 8>}, {pipeline_mode = #tpu.pipeline_mode<synchronous>, transform_indices = @transform_3, window_bounds = array<i64: 3, 8, 384>}, {transform_indices = @transform_4, window_bounds = array<i64: 1, 16, 16, 128>}, {transform_indices = @transform_5, window_bounds = array<i64: 1, 1, 2, 128>}]} {
    %c0 = arith.constant 0 : index
    %c0_0 = arith.constant 0 : index
    %c0_1 = arith.constant 0 : index
    %c0_2 = arith.constant 0 : index
    %0 = vector.load %arg2[%c0, %c0_0, %c0_1, %c0_2] : memref<1x16x16x8xbf16, #tpu.memory_space<vmem>>, vector<1x16x16x8xbf16>
    %1 = vector.shape_cast %0 : vector<1x16x16x8xbf16> to vector<16x16x8xbf16>
    %2 = vector.shape_cast %1 : vector<16x16x8xbf16> to vector<256x8xbf16>
    %c0_3 = arith.constant 0 : index
    %c0_4 = arith.constant 0 : index
    %c0_5 = arith.constant 0 : index
    %c0_6 = arith.constant 0 : index
    %3 = vector.load %arg3[%c0_3, %c0_4, %c0_5, %c0_6] : memref<1x1x16x8xbf16, #tpu.memory_space<vmem>>, vector<1x1x16x8xbf16>
    %4 = vector.shape_cast %3 : vector<1x1x16x8xbf16> to vector<16x8xbf16>
    %c0_i32 = arith.constant 0 : i32
    %5 = arith.cmpi sgt, %arg1, %c0_i32 : i32
    %cst = arith.constant 1.000000e+00 : f32
    %cst_7 = arith.constant 0.000000e+00 : f32
    %6 = arith.select %5, %cst, %cst_7 : f32
    %7 = arith.truncf %6 : f32 to bf16
    %8 = vector.broadcast %7 : bf16 to vector<16x8xbf16>
    %9 = arith.mulf %4, %8 : vector<16x8xbf16>
    %c0_8 = arith.constant 0 : index
    %c0_9 = arith.constant 0 : index
    %c0_10 = arith.constant 0 : index
    %c0_11 = arith.constant 0 : index
    %10 = vector.load %arg4[%c0_8, %c0_9, %c0_10, %c0_11] : memref<1x1x16x8xbf16, #tpu.memory_space<vmem>>, vector<1x1x16x8xbf16>
    %11 = vector.shape_cast %10 : vector<1x1x16x8xbf16> to vector<16x8xbf16>
    %c0_i32_12 = arith.constant 0 : i32
    %12 = arith.cmpi slt, %arg1, %c0_i32_12 : i32
    %cst_13 = arith.constant 1.000000e+00 : f32
    %cst_14 = arith.constant 0.000000e+00 : f32
    %13 = arith.select %12, %cst_13, %cst_14 : f32
    %14 = arith.truncf %13 : f32 to bf16
    %15 = vector.broadcast %14 : bf16 to vector<16x8xbf16>
    %16 = arith.mulf %11, %15 : vector<16x8xbf16>
    %17 = vector.extract_strided_slice %2 {offsets = [0, 0], sizes = [240, 8], strides = [1, 1]} : vector<256x8xbf16> to vector<240x8xbf16>
    %18 = tpu.concatenate %9, %17 in 0 : vector<16x8xbf16>, vector<240x8xbf16> -> vector<256x8xbf16>
    %19 = vector.extract_strided_slice %2 {offsets = [16, 0], sizes = [240, 8], strides = [1, 1]} : vector<256x8xbf16> to vector<240x8xbf16>
    %20 = tpu.concatenate %19, %16 in 0 : vector<240x8xbf16>, vector<16x8xbf16> -> vector<256x8xbf16>
    %c0_15 = arith.constant 0 : index
    %c0_16 = arith.constant 0 : index
    %c0_17 = arith.constant 0 : index
    %21 = vector.load %arg5[%c0_15, %c0_16, %c0_17] : memref<3x8x384xbf16, #tpu.memory_space<vmem>>, vector<1x8x384xbf16>
    %22 = vector.shape_cast %21 : vector<1x8x384xbf16> to vector<8x384xbf16>
    %cst_18 = arith.constant dense<0.000000e+00> : vector<256x384xf32>
    %23 = tpu.matmul %18, %22, %cst_18 {dimension_numbers = #tpu.dot_dimension_numbers<[1], [0], [0], [1], [0, 0, 1, 1], [], []>} : vector<256x8xbf16>, vector<8x384xbf16>, vector<256x384xf32> -> vector<256x384xf32>
    %c1 = arith.constant 1 : index
    %c0_19 = arith.constant 0 : index
    %c0_20 = arith.constant 0 : index
    %24 = vector.load %arg5[%c1, %c0_19, %c0_20] : memref<3x8x384xbf16, #tpu.memory_space<vmem>>, vector<1x8x384xbf16>
    %25 = vector.shape_cast %24 : vector<1x8x384xbf16> to vector<8x384xbf16>
    %cst_21 = arith.constant dense<0.000000e+00> : vector<256x384xf32>
    %26 = tpu.matmul %2, %25, %cst_21 {dimension_numbers = #tpu.dot_dimension_numbers<[1], [0], [0], [1], [0, 0, 1, 1], [], []>} : vector<256x8xbf16>, vector<8x384xbf16>, vector<256x384xf32> -> vector<256x384xf32>
    %27 = arith.addf %23, %26 : vector<256x384xf32>
    %c2 = arith.constant 2 : index
    %c0_22 = arith.constant 0 : index
    %c0_23 = arith.constant 0 : index
    %28 = vector.load %arg5[%c2, %c0_22, %c0_23] : memref<3x8x384xbf16, #tpu.memory_space<vmem>>, vector<1x8x384xbf16>
    %29 = vector.shape_cast %28 : vector<1x8x384xbf16> to vector<8x384xbf16>
    %cst_24 = arith.constant dense<0.000000e+00> : vector<256x384xf32>
    %30 = tpu.matmul %20, %29, %cst_24 {dimension_numbers = #tpu.dot_dimension_numbers<[1], [0], [0], [1], [0, 0, 1, 1], [], []>} : vector<256x8xbf16>, vector<8x384xbf16>, vector<256x384xf32> -> vector<256x384xf32>
    %31 = arith.addf %27, %30 : vector<256x384xf32>
    %32 = tpu.iota {dimensions = array<i32: 0>} : vector<256x1xi32>
    %c16_i32 = arith.constant 16 : i32
    %c0_i32_25 = arith.constant 0 : i32
    %33 = arith.cmpi eq, %c16_i32, %c0_i32_25 : i32
    %c1_i32 = arith.constant 1 : i32
    %34 = arith.select %33, %c1_i32, %c16_i32 : i32
    %35 = vector.broadcast %34 : i32 to vector<256x1xi32>
    %36 = arith.remsi %32, %35 : vector<256x1xi32>
    %c0_i32_26 = arith.constant 0 : i32
    %37 = vector.broadcast %c0_i32_26 : i32 to vector<256x1xi32>
    %38 = arith.cmpi ne, %36, %37 : vector<256x1xi32>
    %c0_i32_27 = arith.constant 0 : i32
    %39 = vector.broadcast %c0_i32_27 : i32 to vector<256x1xi32>
    %40 = arith.cmpi slt, %36, %39 : vector<256x1xi32>
    %c0_i32_28 = arith.constant 0 : i32
    %41 = arith.cmpi slt, %34, %c0_i32_28 : i32
    %42 = vector.broadcast %41 : i1 to vector<256x1xi1>
    %43 = vector.broadcast %42 : vector<256x1xi1> to vector<256x1xi1>
    %44 = arith.xori %40, %43 : vector<256x1xi1>
    %45 = arith.andi %44, %38 : vector<256x1xi1>
    %46 = vector.broadcast %34 : i32 to vector<256x1xi32>
    %47 = arith.addi %36, %46 : vector<256x1xi32>
    %48 = arith.select %45, %47, %36 : vector<256x1xi1>, vector<256x1xi32>
    %c0_i32_29 = arith.constant 0 : i32
    %49 = vector.broadcast %c0_i32_29 : i32 to vector<256x1xi32>
    %50 = arith.cmpi ne, %48, %49 : vector<256x1xi32>
    %51 = vector.extract_strided_slice %31 {offsets = [0, 0], sizes = [256, 128], strides = [1, 1]} : vector<256x384xf32> to vector<256x128xf32>
    %c1_i32_30 = arith.constant 1 : i32
    %52 = tpu.dynamic_rotate %51 by %c1_i32_30 dim 0 : vector<256x128xf32>, i32 -> vector<256x128xf32>
    %cst_31 = arith.constant 0.000000e+00 : f32
    %53 = vector.shape_cast %50 : vector<256x1xi1> to vector<256x1xi1>
    %54 = vector.broadcast %53 : vector<256x1xi1> to vector<256x128xi1>
    %55 = vector.broadcast %cst_31 : f32 to vector<256x128xf32>
    %56 = arith.select %54, %52, %55 : vector<256x128xi1>, vector<256x128xf32>
    %c15_i32 = arith.constant 15 : i32
    %57 = vector.broadcast %c15_i32 : i32 to vector<256x1xi32>
    %58 = arith.cmpi ne, %48, %57 : vector<256x1xi32>
    %59 = vector.extract_strided_slice %31 {offsets = [0, 256], sizes = [256, 128], strides = [1, 1]} : vector<256x384xf32> to vector<256x128xf32>
    %c255_i32 = arith.constant 255 : i32
    %60 = tpu.dynamic_rotate %59 by %c255_i32 dim 0 : vector<256x128xf32>, i32 -> vector<256x128xf32>
    %cst_32 = arith.constant 0.000000e+00 : f32
    %61 = vector.shape_cast %58 : vector<256x1xi1> to vector<256x1xi1>
    %62 = vector.broadcast %61 : vector<256x1xi1> to vector<256x128xi1>
    %63 = vector.broadcast %cst_32 : f32 to vector<256x128xf32>
    %64 = arith.select %62, %60, %63 : vector<256x128xi1>, vector<256x128xf32>
    %65 = vector.extract_strided_slice %31 {offsets = [0, 128], sizes = [256, 128], strides = [1, 1]} : vector<256x384xf32> to vector<256x128xf32>
    %66 = arith.addf %56, %65 : vector<256x128xf32>
    %67 = arith.addf %66, %64 : vector<256x128xf32>
    %68 = vector.shape_cast %67 : vector<256x128xf32> to vector<16x16x128xf32>
    %69 = arith.truncf %68 : vector<16x16x128xf32> to vector<16x16x128xbf16>
    %c0_33 = arith.constant 0 : index
    %c0_34 = arith.constant 0 : index
    %c0_35 = arith.constant 0 : index
    %c0_36 = arith.constant 0 : index
    %70 = vector.load %arg6[%c0_33, %c0_34, %c0_35, %c0_36] : memref<1x16x16x128xbf16, #tpu.memory_space<vmem>>, vector<1x16x16x128xbf16>
    %71 = vector.shape_cast %70 : vector<1x16x16x128xbf16> to vector<16x16x128xbf16>
    %72 = vector.shape_cast %69 : vector<16x16x128xbf16> to vector<1x16x16x128xbf16>
    tpu.vector_store %arg6[%c0_33, %c0_34, %c0_35, %c0_36], %72 {strides = array<i32>} : memref<1x16x16x128xbf16, #tpu.memory_space<vmem>>, vector<1x16x16x128xbf16>,
    %cst_37 = arith.constant dense<0.000000e+00> : vector<128xf32>
    %73 = vector.multi_reduction <add>, %67, %cst_37 [0] : vector<256x128xf32> to vector<128xf32>
    %74 = vector.shape_cast %73 : vector<128xf32> to vector<1x128xf32>
    %c0_38 = arith.constant 0 : index
    %c0_39 = arith.constant 0 : index
    %c0_40 = arith.constant 0 : index
    %c0_41 = arith.constant 0 : index
    %75 = vector.load %arg7[%c0_38, %c0_39, %c0_40, %c0_41] : memref<1x1x2x128xf32, #tpu.memory_space<vmem>>, vector<1x1x1x128xf32>
    %76 = vector.shape_cast %75 : vector<1x1x1x128xf32> to vector<1x128xf32>
    %77 = vector.shape_cast %74 : vector<1x128xf32> to vector<1x1x1x128xf32>
    tpu.vector_store %arg7[%c0_38, %c0_39, %c0_40, %c0_41], %77 {strides = array<i32>} : memref<1x1x2x128xf32, #tpu.memory_space<vmem>>, vector<1x1x1x128xf32>,
    %78 = arith.mulf %67, %67 : vector<256x128xf32>
    %cst_42 = arith.constant dense<0.000000e+00> : vector<128xf32>
    %79 = vector.multi_reduction <add>, %78, %cst_42 [0] : vector<256x128xf32> to vector<128xf32>
    %80 = vector.shape_cast %79 : vector<128xf32> to vector<1x128xf32>
    %c0_43 = arith.constant 0 : index
    %c0_44 = arith.constant 0 : index
    %c1_45 = arith.constant 1 : index
    %c0_46 = arith.constant 0 : index
    %81 = vector.load %arg7[%c0_43, %c0_44, %c1_45, %c0_46] : memref<1x1x2x128xf32, #tpu.memory_space<vmem>>, vector<1x1x1x128xf32>
    %82 = vector.shape_cast %81 : vector<1x1x1x128xf32> to vector<1x128xf32>
    %83 = vector.shape_cast %80 : vector<1x128xf32> to vector<1x1x1x128xf32>
    tpu.vector_store %arg7[%c0_43, %c0_44, %c1_45, %c0_46], %83 {strides = array<i32>} : memref<1x1x2x128xf32, #tpu.memory_space<vmem>>, vector<1x1x1x128xf32>,
    return
  }
  func.func @transform_0(%arg0: i32, %arg1: i32) -> (i32, i32, i32, i32) {
    %c0_i32 = arith.constant 0 : i32
    %c0_i32_0 = arith.constant 0 : i32
    %c0_i32_1 = arith.constant 0 : i32
    return %arg0, %arg1, %c0_i32, %c0_i32_0 : i32, i32, i32, i32
  }
  func.func @transform_1(%arg0: i32, %arg1: i32) -> (i32, i32, i32, i32) {
    %c16_i32 = arith.constant 16 : i32
    %0 = arith.muli %arg1, %c16_i32 : i32
    %c1_i32 = arith.constant 1 : i32
    %1 = arith.subi %0, %c1_i32 : i32
    %c0_i32 = arith.constant 0 : i32
    %2 = arith.maxsi %1, %c0_i32 : i32
    %c0_i32_0 = arith.constant 0 : i32
    %c0_i32_1 = arith.constant 0 : i32
    %c0_i32_2 = arith.constant 0 : i32
    return %arg0, %2, %c0_i32_0, %c0_i32_1 : i32, i32, i32, i32
  }
  func.func @transform_2(%arg0: i32, %arg1: i32) -> (i32, i32, i32, i32) {
    %c16_i32 = arith.constant 16 : i32
    %0 = arith.muli %arg1, %c16_i32 : i32
    %c16_i32_0 = arith.constant 16 : i32
    %1 = arith.addi %0, %c16_i32_0 : i32
    %c15_i32 = arith.constant 15 : i32
    %2 = arith.minsi %1, %c15_i32 : i32
    %c0_i32 = arith.constant 0 : i32
    %c0_i32_1 = arith.constant 0 : i32
    %c0_i32_2 = arith.constant 0 : i32
    return %arg0, %2, %c0_i32, %c0_i32_1 : i32, i32, i32, i32
  }
  func.func @transform_3(%arg0: i32, %arg1: i32) -> (i32, i32, i32) {
    %c0_i32 = arith.constant 0 : i32
    %c0_i32_0 = arith.constant 0 : i32
    %c0_i32_1 = arith.constant 0 : i32
    %c0_i32_2 = arith.constant 0 : i32
    return %c0_i32, %c0_i32_0, %c0_i32_1 : i32, i32, i32
  }
  func.func @transform_4(%arg0: i32, %arg1: i32) -> (i32, i32, i32, i32) {
    %c0_i32 = arith.constant 0 : i32
    %c0_i32_0 = arith.constant 0 : i32
    %c0_i32_1 = arith.constant 0 : i32
    return %arg0, %arg1, %c0_i32, %c0_i32_0 : i32, i32, i32, i32
  }
  func.func @transform_5(%arg0: i32, %arg1: i32) -> (i32, i32, i32, i32) {
    %c0_i32 = arith.constant 0 : i32
    %c0_i32_0 = arith.constant 0 : i32
    %c0_i32_1 = arith.constant 0 : i32
    return %arg0, %arg1, %c0_i32, %c0_i32_0 : i32, i32, i32, i32
  }
}

module attributes {stable_mosaic.version = 11 : i64} {
  func.func @_conv2_kernel(%arg0: i32, %arg1: i32, %arg2: memref<1x16x16x128xbf16, #tpu.memory_space<vmem>>, %arg3: memref<1x1x16x128xbf16, #tpu.memory_space<vmem>>, %arg4: memref<1x1x16x128xbf16, #tpu.memory_space<vmem>>, %arg5: memref<1x128xf32, #tpu.memory_space<vmem>>, %arg6: memref<1x128xf32, #tpu.memory_space<vmem>>, %arg7: memref<3x128x384xbf16, #tpu.memory_space<vmem>>, %arg8: memref<1x16x16x128xbf16, #tpu.memory_space<vmem>>, %arg9: memref<1x1x2x128xf32, #tpu.memory_space<vmem>>) attributes {dimension_semantics = [#tpu.dimension_semantics<parallel>, #tpu.dimension_semantics<parallel>], iteration_bounds = array<i64: 2, 1>, scalar_prefetch = 0 : i64, scratch_operands = 0 : i64, tpu.core_type = #tpu.core_type<tc>, window_params = [{transform_indices = @transform_0, window_bounds = array<i64: 1, 16, 16, 128>}, {transform_indices = @transform_1, window_bounds = array<i64: 1, 1, 16, 128>}, {transform_indices = @transform_2, window_bounds = array<i64: 1, 1, 16, 128>}, {pipeline_mode = #tpu.pipeline_mode<synchronous>, transform_indices = @transform_3, window_bounds = array<i64: 1, 128>}, {pipeline_mode = #tpu.pipeline_mode<synchronous>, transform_indices = @transform_4, window_bounds = array<i64: 1, 128>}, {pipeline_mode = #tpu.pipeline_mode<synchronous>, transform_indices = @transform_5, window_bounds = array<i64: 3, 128, 384>}, {transform_indices = @transform_6, window_bounds = array<i64: 1, 16, 16, 128>}, {transform_indices = @transform_7, window_bounds = array<i64: 1, 1, 2, 128>}]} {
    %c0 = arith.constant 0 : index
    %c0_0 = arith.constant 0 : index
    %0 = vector.load %arg5[%c0, %c0_0] : memref<1x128xf32, #tpu.memory_space<vmem>>, vector<1x128xf32>
    %c0_1 = arith.constant 0 : index
    %c0_2 = arith.constant 0 : index
    %1 = vector.load %arg6[%c0_1, %c0_2] : memref<1x128xf32, #tpu.memory_space<vmem>>, vector<1x128xf32>
    %c0_3 = arith.constant 0 : index
    %c0_4 = arith.constant 0 : index
    %c0_5 = arith.constant 0 : index
    %c0_6 = arith.constant 0 : index
    %2 = vector.load %arg2[%c0_3, %c0_4, %c0_5, %c0_6] : memref<1x16x16x128xbf16, #tpu.memory_space<vmem>>, vector<1x16x16x128xbf16>
    %3 = vector.shape_cast %2 : vector<1x16x16x128xbf16> to vector<16x16x128xbf16>
    %4 = vector.shape_cast %3 : vector<16x16x128xbf16> to vector<256x128xbf16>
    %5 = arith.extf %4 : vector<256x128xbf16> to vector<256x128xf32>
    %6 = vector.broadcast %0 : vector<1x128xf32> to vector<256x128xf32>
    %7 = arith.mulf %5, %6 : vector<256x128xf32>
    %8 = vector.broadcast %1 : vector<1x128xf32> to vector<256x128xf32>
    %9 = arith.addf %7, %8 : vector<256x128xf32>
    %cst = arith.constant 0.000000e+00 : f32
    %10 = vector.broadcast %cst : f32 to vector<256x128xf32>
    %11 = arith.maximumf %9, %10 : vector<256x128xf32>
    %12 = arith.truncf %11 : vector<256x128xf32> to vector<256x128xbf16>
    %c0_7 = arith.constant 0 : index
    %c0_8 = arith.constant 0 : index
    %c0_9 = arith.constant 0 : index
    %c0_10 = arith.constant 0 : index
    %13 = vector.load %arg3[%c0_7, %c0_8, %c0_9, %c0_10] : memref<1x1x16x128xbf16, #tpu.memory_space<vmem>>, vector<1x1x16x128xbf16>
    %14 = vector.shape_cast %13 : vector<1x1x16x128xbf16> to vector<16x128xbf16>
    %15 = arith.extf %14 : vector<16x128xbf16> to vector<16x128xf32>
    %16 = vector.broadcast %0 : vector<1x128xf32> to vector<16x128xf32>
    %17 = arith.mulf %15, %16 : vector<16x128xf32>
    %18 = vector.broadcast %1 : vector<1x128xf32> to vector<16x128xf32>
    %19 = arith.addf %17, %18 : vector<16x128xf32>
    %cst_11 = arith.constant 0.000000e+00 : f32
    %20 = vector.broadcast %cst_11 : f32 to vector<16x128xf32>
    %21 = arith.maximumf %19, %20 : vector<16x128xf32>
    %22 = arith.truncf %21 : vector<16x128xf32> to vector<16x128xbf16>
    %c0_i32 = arith.constant 0 : i32
    %23 = arith.cmpi sgt, %arg1, %c0_i32 : i32
    %cst_12 = arith.constant 1.000000e+00 : f32
    %cst_13 = arith.constant 0.000000e+00 : f32
    %24 = arith.select %23, %cst_12, %cst_13 : f32
    %25 = arith.truncf %24 : f32 to bf16
    %26 = vector.broadcast %25 : bf16 to vector<16x128xbf16>
    %27 = arith.mulf %22, %26 : vector<16x128xbf16>
    %c0_14 = arith.constant 0 : index
    %c0_15 = arith.constant 0 : index
    %c0_16 = arith.constant 0 : index
    %c0_17 = arith.constant 0 : index
    %28 = vector.load %arg4[%c0_14, %c0_15, %c0_16, %c0_17] : memref<1x1x16x128xbf16, #tpu.memory_space<vmem>>, vector<1x1x16x128xbf16>
    %29 = vector.shape_cast %28 : vector<1x1x16x128xbf16> to vector<16x128xbf16>
    %30 = arith.extf %29 : vector<16x128xbf16> to vector<16x128xf32>
    %31 = vector.broadcast %0 : vector<1x128xf32> to vector<16x128xf32>
    %32 = arith.mulf %30, %31 : vector<16x128xf32>
    %33 = vector.broadcast %1 : vector<1x128xf32> to vector<16x128xf32>
    %34 = arith.addf %32, %33 : vector<16x128xf32>
    %cst_18 = arith.constant 0.000000e+00 : f32
    %35 = vector.broadcast %cst_18 : f32 to vector<16x128xf32>
    %36 = arith.maximumf %34, %35 : vector<16x128xf32>
    %37 = arith.truncf %36 : vector<16x128xf32> to vector<16x128xbf16>
    %c0_i32_19 = arith.constant 0 : i32
    %38 = arith.cmpi slt, %arg1, %c0_i32_19 : i32
    %cst_20 = arith.constant 1.000000e+00 : f32
    %cst_21 = arith.constant 0.000000e+00 : f32
    %39 = arith.select %38, %cst_20, %cst_21 : f32
    %40 = arith.truncf %39 : f32 to bf16
    %41 = vector.broadcast %40 : bf16 to vector<16x128xbf16>
    %42 = arith.mulf %37, %41 : vector<16x128xbf16>
    %43 = vector.extract_strided_slice %12 {offsets = [0, 0], sizes = [240, 128], strides = [1, 1]} : vector<256x128xbf16> to vector<240x128xbf16>
    %44 = tpu.concatenate %27, %43 in 0 : vector<16x128xbf16>, vector<240x128xbf16> -> vector<256x128xbf16>
    %45 = vector.extract_strided_slice %12 {offsets = [16, 0], sizes = [240, 128], strides = [1, 1]} : vector<256x128xbf16> to vector<240x128xbf16>
    %46 = tpu.concatenate %45, %42 in 0 : vector<240x128xbf16>, vector<16x128xbf16> -> vector<256x128xbf16>
    %47 = tpu.concatenate %44, %12, %46 in 1 : vector<256x128xbf16>, vector<256x128xbf16>, vector<256x128xbf16> -> vector<256x384xbf16>
    %c0_22 = arith.constant 0 : index
    %c0_23 = arith.constant 0 : index
    %c0_24 = arith.constant 0 : index
    %48 = vector.load %arg7[%c0_22, %c0_23, %c0_24] : memref<3x128x384xbf16, #tpu.memory_space<vmem>>, vector<3x128x384xbf16>
    %49 = vector.shape_cast %48 : vector<3x128x384xbf16> to vector<384x384xbf16>
    %cst_25 = arith.constant dense<0.000000e+00> : vector<256x384xf32>
    %50 = tpu.matmul %47, %49, %cst_25 {dimension_numbers = #tpu.dot_dimension_numbers<[1], [0], [0], [1], [0, 0, 1, 1], [], []>} : vector<256x384xbf16>, vector<384x384xbf16>, vector<256x384xf32> -> vector<256x384xf32>
    %51 = tpu.iota {dimensions = array<i32: 0>} : vector<256x1xi32>
    %c16_i32 = arith.constant 16 : i32
    %c0_i32_26 = arith.constant 0 : i32
    %52 = arith.cmpi eq, %c16_i32, %c0_i32_26 : i32
    %c1_i32 = arith.constant 1 : i32
    %53 = arith.select %52, %c1_i32, %c16_i32 : i32
    %54 = vector.broadcast %53 : i32 to vector<256x1xi32>
    %55 = arith.remsi %51, %54 : vector<256x1xi32>
    %c0_i32_27 = arith.constant 0 : i32
    %56 = vector.broadcast %c0_i32_27 : i32 to vector<256x1xi32>
    %57 = arith.cmpi ne, %55, %56 : vector<256x1xi32>
    %c0_i32_28 = arith.constant 0 : i32
    %58 = vector.broadcast %c0_i32_28 : i32 to vector<256x1xi32>
    %59 = arith.cmpi slt, %55, %58 : vector<256x1xi32>
    %c0_i32_29 = arith.constant 0 : i32
    %60 = arith.cmpi slt, %53, %c0_i32_29 : i32
    %61 = vector.broadcast %60 : i1 to vector<256x1xi1>
    %62 = vector.broadcast %61 : vector<256x1xi1> to vector<256x1xi1>
    %63 = arith.xori %59, %62 : vector<256x1xi1>
    %64 = arith.andi %63, %57 : vector<256x1xi1>
    %65 = vector.broadcast %53 : i32 to vector<256x1xi32>
    %66 = arith.addi %55, %65 : vector<256x1xi32>
    %67 = arith.select %64, %66, %55 : vector<256x1xi1>, vector<256x1xi32>
    %c0_i32_30 = arith.constant 0 : i32
    %68 = vector.broadcast %c0_i32_30 : i32 to vector<256x1xi32>
    %69 = arith.cmpi ne, %67, %68 : vector<256x1xi32>
    %70 = vector.extract_strided_slice %50 {offsets = [0, 0], sizes = [256, 128], strides = [1, 1]} : vector<256x384xf32> to vector<256x128xf32>
    %c1_i32_31 = arith.constant 1 : i32
    %71 = tpu.dynamic_rotate %70 by %c1_i32_31 dim 0 : vector<256x128xf32>, i32 -> vector<256x128xf32>
    %cst_32 = arith.constant 0.000000e+00 : f32
    %72 = vector.shape_cast %69 : vector<256x1xi1> to vector<256x1xi1>
    %73 = vector.broadcast %72 : vector<256x1xi1> to vector<256x128xi1>
    %74 = vector.broadcast %cst_32 : f32 to vector<256x128xf32>
    %75 = arith.select %73, %71, %74 : vector<256x128xi1>, vector<256x128xf32>
    %c15_i32 = arith.constant 15 : i32
    %76 = vector.broadcast %c15_i32 : i32 to vector<256x1xi32>
    %77 = arith.cmpi ne, %67, %76 : vector<256x1xi32>
    %78 = vector.extract_strided_slice %50 {offsets = [0, 256], sizes = [256, 128], strides = [1, 1]} : vector<256x384xf32> to vector<256x128xf32>
    %c255_i32 = arith.constant 255 : i32
    %79 = tpu.dynamic_rotate %78 by %c255_i32 dim 0 : vector<256x128xf32>, i32 -> vector<256x128xf32>
    %cst_33 = arith.constant 0.000000e+00 : f32
    %80 = vector.shape_cast %77 : vector<256x1xi1> to vector<256x1xi1>
    %81 = vector.broadcast %80 : vector<256x1xi1> to vector<256x128xi1>
    %82 = vector.broadcast %cst_33 : f32 to vector<256x128xf32>
    %83 = arith.select %81, %79, %82 : vector<256x128xi1>, vector<256x128xf32>
    %84 = vector.extract_strided_slice %50 {offsets = [0, 128], sizes = [256, 128], strides = [1, 1]} : vector<256x384xf32> to vector<256x128xf32>
    %85 = arith.addf %75, %84 : vector<256x128xf32>
    %86 = arith.addf %85, %83 : vector<256x128xf32>
    %87 = vector.shape_cast %86 : vector<256x128xf32> to vector<16x16x128xf32>
    %88 = arith.truncf %87 : vector<16x16x128xf32> to vector<16x16x128xbf16>
    %c0_34 = arith.constant 0 : index
    %c0_35 = arith.constant 0 : index
    %c0_36 = arith.constant 0 : index
    %c0_37 = arith.constant 0 : index
    %89 = vector.load %arg8[%c0_34, %c0_35, %c0_36, %c0_37] : memref<1x16x16x128xbf16, #tpu.memory_space<vmem>>, vector<1x16x16x128xbf16>
    %90 = vector.shape_cast %89 : vector<1x16x16x128xbf16> to vector<16x16x128xbf16>
    %91 = vector.shape_cast %88 : vector<16x16x128xbf16> to vector<1x16x16x128xbf16>
    tpu.vector_store %arg8[%c0_34, %c0_35, %c0_36, %c0_37], %91 {strides = array<i32>} : memref<1x16x16x128xbf16, #tpu.memory_space<vmem>>, vector<1x16x16x128xbf16>,
    %cst_38 = arith.constant dense<0.000000e+00> : vector<128xf32>
    %92 = vector.multi_reduction <add>, %86, %cst_38 [0] : vector<256x128xf32> to vector<128xf32>
    %93 = vector.shape_cast %92 : vector<128xf32> to vector<1x128xf32>
    %c0_39 = arith.constant 0 : index
    %c0_40 = arith.constant 0 : index
    %c0_41 = arith.constant 0 : index
    %c0_42 = arith.constant 0 : index
    %94 = vector.load %arg9[%c0_39, %c0_40, %c0_41, %c0_42] : memref<1x1x2x128xf32, #tpu.memory_space<vmem>>, vector<1x1x1x128xf32>
    %95 = vector.shape_cast %94 : vector<1x1x1x128xf32> to vector<1x128xf32>
    %96 = vector.shape_cast %93 : vector<1x128xf32> to vector<1x1x1x128xf32>
    tpu.vector_store %arg9[%c0_39, %c0_40, %c0_41, %c0_42], %96 {strides = array<i32>} : memref<1x1x2x128xf32, #tpu.memory_space<vmem>>, vector<1x1x1x128xf32>,
    %97 = arith.mulf %86, %86 : vector<256x128xf32>
    %cst_43 = arith.constant dense<0.000000e+00> : vector<128xf32>
    %98 = vector.multi_reduction <add>, %97, %cst_43 [0] : vector<256x128xf32> to vector<128xf32>
    %99 = vector.shape_cast %98 : vector<128xf32> to vector<1x128xf32>
    %c0_44 = arith.constant 0 : index
    %c0_45 = arith.constant 0 : index
    %c1 = arith.constant 1 : index
    %c0_46 = arith.constant 0 : index
    %100 = vector.load %arg9[%c0_44, %c0_45, %c1, %c0_46] : memref<1x1x2x128xf32, #tpu.memory_space<vmem>>, vector<1x1x1x128xf32>
    %101 = vector.shape_cast %100 : vector<1x1x1x128xf32> to vector<1x128xf32>
    %102 = vector.shape_cast %99 : vector<1x128xf32> to vector<1x1x1x128xf32>
    tpu.vector_store %arg9[%c0_44, %c0_45, %c1, %c0_46], %102 {strides = array<i32>} : memref<1x1x2x128xf32, #tpu.memory_space<vmem>>, vector<1x1x1x128xf32>,
    return
  }
  func.func @transform_0(%arg0: i32, %arg1: i32) -> (i32, i32, i32, i32) {
    %c0_i32 = arith.constant 0 : i32
    %c0_i32_0 = arith.constant 0 : i32
    %c0_i32_1 = arith.constant 0 : i32
    return %arg0, %arg1, %c0_i32, %c0_i32_0 : i32, i32, i32, i32
  }
  func.func @transform_1(%arg0: i32, %arg1: i32) -> (i32, i32, i32, i32) {
    %c16_i32 = arith.constant 16 : i32
    %0 = arith.muli %arg1, %c16_i32 : i32
    %c1_i32 = arith.constant 1 : i32
    %1 = arith.subi %0, %c1_i32 : i32
    %c0_i32 = arith.constant 0 : i32
    %2 = arith.maxsi %1, %c0_i32 : i32
    %c0_i32_0 = arith.constant 0 : i32
    %c0_i32_1 = arith.constant 0 : i32
    %c0_i32_2 = arith.constant 0 : i32
    return %arg0, %2, %c0_i32_0, %c0_i32_1 : i32, i32, i32, i32
  }
  func.func @transform_2(%arg0: i32, %arg1: i32) -> (i32, i32, i32, i32) {
    %c16_i32 = arith.constant 16 : i32
    %0 = arith.muli %arg1, %c16_i32 : i32
    %c16_i32_0 = arith.constant 16 : i32
    %1 = arith.addi %0, %c16_i32_0 : i32
    %c15_i32 = arith.constant 15 : i32
    %2 = arith.minsi %1, %c15_i32 : i32
    %c0_i32 = arith.constant 0 : i32
    %c0_i32_1 = arith.constant 0 : i32
    %c0_i32_2 = arith.constant 0 : i32
    return %arg0, %2, %c0_i32, %c0_i32_1 : i32, i32, i32, i32
  }
  func.func @transform_3(%arg0: i32, %arg1: i32) -> (i32, i32) {
    %c0_i32 = arith.constant 0 : i32
    %c0_i32_0 = arith.constant 0 : i32
    %c0_i32_1 = arith.constant 0 : i32
    return %c0_i32, %c0_i32_0 : i32, i32
  }
  func.func @transform_4(%arg0: i32, %arg1: i32) -> (i32, i32) {
    %c0_i32 = arith.constant 0 : i32
    %c0_i32_0 = arith.constant 0 : i32
    %c0_i32_1 = arith.constant 0 : i32
    return %c0_i32, %c0_i32_0 : i32, i32
  }
  func.func @transform_5(%arg0: i32, %arg1: i32) -> (i32, i32, i32) {
    %c0_i32 = arith.constant 0 : i32
    %c0_i32_0 = arith.constant 0 : i32
    %c0_i32_1 = arith.constant 0 : i32
    %c0_i32_2 = arith.constant 0 : i32
    return %c0_i32, %c0_i32_0, %c0_i32_1 : i32, i32, i32
  }
  func.func @transform_6(%arg0: i32, %arg1: i32) -> (i32, i32, i32, i32) {
    %c0_i32 = arith.constant 0 : i32
    %c0_i32_0 = arith.constant 0 : i32
    %c0_i32_1 = arith.constant 0 : i32
    return %arg0, %arg1, %c0_i32, %c0_i32_0 : i32, i32, i32, i32
  }
  func.func @transform_7(%arg0: i32, %arg1: i32) -> (i32, i32, i32, i32) {
    %c0_i32 = arith.constant 0 : i32
    %c0_i32_0 = arith.constant 0 : i32
    %c0_i32_1 = arith.constant 0 : i32
    return %arg0, %arg1, %c0_i32, %c0_i32_0 : i32, i32, i32, i32
  }
}

module attributes {stable_mosaic.version = 11 : i64} {
  func.func @_bn_relu_kernel(%arg0: i32, %arg1: memref<512x128xbf16, #tpu.memory_space<vmem>>, %arg2: memref<1x128xf32, #tpu.memory_space<vmem>>, %arg3: memref<1x128xf32, #tpu.memory_space<vmem>>, %arg4: memref<512x8xf32, #tpu.memory_space<vmem>>) attributes {dimension_semantics = [#tpu.dimension_semantics<parallel>], iteration_bounds = array<i64: 1>, scalar_prefetch = 0 : i64, scratch_operands = 0 : i64, tpu.core_type = #tpu.core_type<tc>, window_params = [{transform_indices = @transform_0, window_bounds = array<i64: 512, 128>}, {pipeline_mode = #tpu.pipeline_mode<synchronous>, transform_indices = @transform_1, window_bounds = array<i64: 1, 128>}, {pipeline_mode = #tpu.pipeline_mode<synchronous>, transform_indices = @transform_2, window_bounds = array<i64: 1, 128>}, {transform_indices = @transform_3, window_bounds = array<i64: 512, 8>}]} {
    %c0 = arith.constant 0 : index
    %c0_0 = arith.constant 0 : index
    %0 = vector.load %arg1[%c0, %c0_0] : memref<512x128xbf16, #tpu.memory_space<vmem>>, vector<512x128xbf16>
    %1 = arith.extf %0 : vector<512x128xbf16> to vector<512x128xf32>
    %c0_1 = arith.constant 0 : index
    %c0_2 = arith.constant 0 : index
    %2 = vector.load %arg2[%c0_1, %c0_2] : memref<1x128xf32, #tpu.memory_space<vmem>>, vector<1x128xf32>
    %3 = vector.broadcast %2 : vector<1x128xf32> to vector<512x128xf32>
    %4 = arith.mulf %1, %3 : vector<512x128xf32>
    %c0_3 = arith.constant 0 : index
    %c0_4 = arith.constant 0 : index
    %5 = vector.load %arg3[%c0_3, %c0_4] : memref<1x128xf32, #tpu.memory_space<vmem>>, vector<1x128xf32>
    %6 = vector.broadcast %5 : vector<1x128xf32> to vector<512x128xf32>
    %7 = arith.addf %4, %6 : vector<512x128xf32>
    %cst = arith.constant 0.000000e+00 : f32
    %8 = vector.broadcast %cst : f32 to vector<512x128xf32>
    %9 = arith.maximumf %7, %8 : vector<512x128xf32>
    %10 = vector.extract_strided_slice %9 {offsets = [0, 0], sizes = [512, 8], strides = [1, 1]} : vector<512x128xf32> to vector<512x8xf32>
    %c0_5 = arith.constant 0 : index
    %c0_6 = arith.constant 0 : index
    %11 = vector.load %arg4[%c0_5, %c0_6] : memref<512x8xf32, #tpu.memory_space<vmem>>, vector<512x8xf32>
    tpu.vector_store %arg4[%c0_5, %c0_6], %10 {strides = array<i32>} : memref<512x8xf32, #tpu.memory_space<vmem>>, vector<512x8xf32>,
    return
  }
  func.func @transform_0(%arg0: i32) -> (i32, i32) {
    %c0_i32 = arith.constant 0 : i32
    %c0_i32_0 = arith.constant 0 : i32
    return %arg0, %c0_i32 : i32, i32
  }
  func.func @transform_1(%arg0: i32) -> (i32, i32) {
    %c0_i32 = arith.constant 0 : i32
    %c0_i32_0 = arith.constant 0 : i32
    %c0_i32_1 = arith.constant 0 : i32
    return %c0_i32, %c0_i32_0 : i32, i32
  }
  func.func @transform_2(%arg0: i32) -> (i32, i32) {
    %c0_i32 = arith.constant 0 : i32
    %c0_i32_0 = arith.constant 0 : i32
    %c0_i32_1 = arith.constant 0 : i32
    return %c0_i32, %c0_i32_0 : i32, i32
  }
  func.func @transform_3(%arg0: i32) -> (i32, i32) {
    %c0_i32 = arith.constant 0 : i32
    %c0_i32_0 = arith.constant 0 : i32
    return %arg0, %c0_i32 : i32, i32
  }
}

</mosaic_0001>

<llo_original>
// kernel: double_conv.5
$region0: #{double_conv.5}
  #allocation0 [shape = 'u32[]', space=smem, size = 0x4, offset = 0x4, fixed_abs, tag = 'smem constant byte address 0x4 - core index']
  #allocation1 [shape = 'u32[144,128]{1,0:T(1,128)}', space=vmem, size = 0x12000, scoped, tag = 'internal scratch']
  %s0 = inlined_call_operand.vmem [shape: bf16[512,128], index: 0, kind: input, shape index: {}]
  %s1 = inlined_call_operand.vmem [shape: f32[1,128], index: 1, kind: input, shape index: {}]
  %s2 = inlined_call_operand.vmem [shape: f32[1,128], index: 2, kind: input, shape index: {}]
  %s3 = inlined_call_operand.vmem [shape: f32[512,8], index: 3, kind: output, shape index: {}]
  %s4 = sld [smem:[#allocation0]]
  $region22: #{double_conv.5} parent=0
    _
  %s6 = ssub.s32 1, %s4
  %s7 = scalar_select 0, %s6, %s4
  // Predicated region
  $region2: #{double_conv.5} parent=0 // pred_check
    _
  $region3: #{double_conv.5} parent=0 // pred_check_branch
    %9 = sbr.rel (0) target = $region5
  $region4: #{double_conv.5} parent=0 // pred_region
    _
  $region5: #{double_conv.5} parent=0 // pred_fallthru
    _
  // Predicated region
  $region6: #{double_conv.5} parent=0 // pred_check
    _
  $region7: #{double_conv.5} parent=0 // pred_check_branch
    %11 = sbr.rel (0) target = $region9
  $region8: #{double_conv.5} parent=0 // pred_region
    _
  $region9: #{double_conv.5} parent=0 // pred_fallthru
    _
  // Predicated region
  $region10: #{double_conv.5} parent=0 // pred_check
    _
  $region11: #{double_conv.5} parent=0 // pred_check_branch
    %13 = sbr.rel (0) target = $region13
  $region12: #{double_conv.5} parent=0 // pred_region
    _
  $region13: #{double_conv.5} parent=0 // pred_fallthru
    _
  %v14 = vld [vmem:[%s0] sm:$0xf]
  %v15 = vld [vmem:[%s0 + $0x4] sm:$0xf]
  %v16 = vld [vmem:[%s0 + $0x8] sm:$0xf]
  %v17 = vld [vmem:[%s0 + $0xc] sm:$0xf]
  %v18 = vld [vmem:[%s0 + $0x10] sm:$0xf]
  %v19 = vld [vmem:[%s0 + $0x14] sm:$0xf]
  %v20 = vld [vmem:[%s0 + $0x18] sm:$0xf]
  %v21 = vld [vmem:[%s0 + $0x1c] sm:$0xf]
  %v22 = vld [vmem:[%s0 + $0x20] sm:$0xf]
  %v23 = vld [vmem:[%s0 + $0x24] sm:$0xf]
  %v24 = vld [vmem:[%s0 + $0x28] sm:$0xf]
  %v25 = vld [vmem:[%s0 + $0x2c] sm:$0xf]
  %v26 = vld [vmem:[%s0 + $0x30] sm:$0xf]
  %v27 = vld [vmem:[%s0 + $0x34] sm:$0xf]
  %v28 = vld [vmem:[%s0 + $0x38] sm:$0xf]
  %v29 = vld [vmem:[%s0 + $0x3c] sm:$0xf]
  %v30 = vld [vmem:[%s0 + $0x40] sm:$0xf]
  %v31 = vld [vmem:[%s0 + $0x44] sm:$0xf]
  %v32 = vld [vmem:[%s0 + $0x48] sm:$0xf]
  %v33 = vld [vmem:[%s0 + $0x4c] sm:$0xf]
  %v34 = vld [vmem:[%s0 + $0x50] sm:$0xf]
  %v35 = vld [vmem:[%s0 + $0x54] sm:$0xf]
  %v36 = vld [vmem:[%s0 + $0x58] sm:$0xf]
  %v37 = vld [vmem:[%s0 + $0x5c] sm:$0xf]
  %v38 = vld [vmem:[%s0 + $0x60] sm:$0xf]
  %v39 = vld [vmem:[%s0 + $0x64] sm:$0xf]
  %v40 = vld [vmem:[%s0 + $0x68] sm:$0xf]
  %v41 = vld [vmem:[%s0 + $0x6c] sm:$0xf]
  %v42 = vld [vmem:[%s0 + $0x70] sm:$0xf]
  %v43 = vld [vmem:[%s0 + $0x74] sm:$0xf]
  %v44 = vld [vmem:[%s0 + $0x78] sm:$0xf]
  %v45 = vld [vmem:[%s0 + $0x7c] sm:$0xf]
  %v46 = vld [vmem:[%s0 + $0x80] sm:$0xf]
  %v47 = vld [vmem:[%s0 + $0x84] sm:$0xf]
  %v48 = vld [vmem:[%s0 + $0x88] sm:$0xf]
  %v49 = vld [vmem:[%s0 + $0x8c] sm:$0xf]
  %v50 = vld [vmem:[%s0 + $0x90] sm:$0xf]
  %v51 = vld [vmem:[%s0 + $0x94] sm:$0xf]
  %v52 = vld [vmem:[%s0 + $0x98] sm:$0xf]
  %v53 = vld [vmem:[%s0 + $0x9c] sm:$0xf]
  %v54 = vld [vmem:[%s0 + $0xa0] sm:$0xf]
  %v55 = vld [vmem:[%s0 + $0xa4] sm:$0xf]
  %v56 = vld [vmem:[%s0 + $0xa8] sm:$0xf]
  %v57 = vld [vmem:[%s0 + $0xac] sm:$0xf]
  %v58 = vld [vmem:[%s0 + $0xb0] sm:$0xf]
  %v59 = vld [vmem:[%s0 + $0xb4] sm:$0xf]
  %v60 = vld [vmem:[%s0 + $0xb8] sm:$0xf]
  %v61 = vld [vmem:[%s0 + $0xbc] sm:$0xf]
  %v62 = vld [vmem:[%s0 + $0xc0] sm:$0xf]
  %v63 = vld [vmem:[%s0 + $0xc4] sm:$0xf]
  %v64 = vld [vmem:[%s0 + $0xc8] sm:$0xf]
  %v65 = vld [vmem:[%s0 + $0xcc] sm:$0xf]
  %v66 = vld [vmem:[%s0 + $0xd0] sm:$0xf]
  %v67 = vld [vmem:[%s0 + $0xd4] sm:$0xf]
  %v68 = vld [vmem:[%s0 + $0xd8] sm:$0xf]
  %v69 = vld [vmem:[%s0 + $0xdc] sm:$0xf]
  %v70 = vld [vmem:[%s0 + $0xe0] sm:$0xf]
  %v71 = vld [vmem:[%s0 + $0xe4] sm:$0xf]
  %v72 = vld [vmem:[%s0 + $0xe8] sm:$0xf]
  %v73 = vld [vmem:[%s0 + $0xec] sm:$0xf]
  %v74 = vld [vmem:[%s0 + $0xf0] sm:$0xf]
  %v75 = vld [vmem:[%s0 + $0xf4] sm:$0xf]
  %v76 = vld [vmem:[%s0 + $0xf8] sm:$0xf]
  %v77 = vld [vmem:[%s0 + $0xfc] sm:$0xf]
  %v78 = vunpack.c.l.bf16 %v14
  %v79 = vunpack.c.l.bf16 %v15
  %v80 = vunpack.c.l.bf16 %v16
  %v81 = vunpack.c.l.bf16 %v17
  %v82 = vunpack.c.l.bf16 %v18
  %v83 = vunpack.c.l.bf16 %v19
  %v84 = vunpack.c.l.bf16 %v20
  %v85 = vunpack.c.l.bf16 %v21
  %v86 = vunpack.c.l.bf16 %v22
  %v87 = vunpack.c.l.bf16 %v23
  %v88 = vunpack.c.l.bf16 %v24
  %v89 = vunpack.c.l.bf16 %v25
  %v90 = vunpack.c.l.bf16 %v26
  %v91 = vunpack.c.l.bf16 %v27
  %v92 = vunpack.c.l.bf16 %v28
  %v93 = vunpack.c.l.bf16 %v29
  %v94 = vunpack.c.l.bf16 %v30
  %v95 = vunpack.c.l.bf16 %v31
  %v96 = vunpack.c.l.bf16 %v32
  %v97 = vunpack.c.l.bf16 %v33
  %v98 = vunpack.c.l.bf16 %v34
  %v99 = vunpack.c.l.bf16 %v35
  %v100 = vunpack.c.l.bf16 %v36
  %v101 = vunpack.c.l.bf16 %v37
  %v102 = vunpack.c.l.bf16 %v38
  %v103 = vunpack.c.l.bf16 %v39
  %v104 = vunpack.c.l.bf16 %v40
  %v105 = vunpack.c.l.bf16 %v41
  %v106 = vunpack.c.l.bf16 %v42
  %v107 = vunpack.c.l.bf16 %v43
  %v108 = vunpack.c.l.bf16 %v44
  %v109 = vunpack.c.l.bf16 %v45
  %v110 = vunpack.c.l.bf16 %v46
  %v111 = vunpack.c.l.bf16 %v47
  %v112 = vunpack.c.l.bf16 %v48
  %v113 = vunpack.c.l.bf16 %v49
  %v114 = vunpack.c.l.bf16 %v50
  %v115 = vunpack.c.l.bf16 %v51
  %v116 = vunpack.c.l.bf16 %v52
  %v117 = vunpack.c.l.bf16 %v53
  %v118 = vunpack.c.l.bf16 %v54
  %v119 = vunpack.c.l.bf16 %v55
  %v120 = vunpack.c.l.bf16 %v56
  %v121 = vunpack.c.l.bf16 %v57
  %v122 = vunpack.c.l.bf16 %v58
  %v123 = vunpack.c.l.bf16 %v59
  %v124 = vunpack.c.l.bf16 %v60
  %v125 = vunpack.c.l.bf16 %v61
  %v126 = vunpack.c.l.bf16 %v62
  %v127 = vunpack.c.l.bf16 %v63
  %v128 = vunpack.c.l.bf16 %v64
  %v129 = vunpack.c.l.bf16 %v65
  %v130 = vunpack.c.l.bf16 %v66
  %v131 = vunpack.c.l.bf16 %v67
  %v132 = vunpack.c.l.bf16 %v68
  %v133 = vunpack.c.l.bf16 %v69
  %v134 = vunpack.c.l.bf16 %v70
  %v135 = vunpack.c.l.bf16 %v71
  %v136 = vunpack.c.l.bf16 %v72
  %v137 = vunpack.c.l.bf16 %v73
  %v138 = vunpack.c.l.bf16 %v74
  %v139 = vunpack.c.l.bf16 %v75
  %v140 = vunpack.c.l.bf16 %v76
  %v141 = vunpack.c.l.bf16 %v77
  %v142 = vld [vmem:[%s1] sm:$0x1]
  %v144 = vlaneseq
  %v145 = vshrl.u32 %v144, 7
  %v146 = vsub.s32 0, %v145
  %v147 = vrot.slane %v142, %v146
  %v149 = vmul.f32 %v78, %v147
  %v150 = vmul.f32 %v79, %v147
  %v151 = vmul.f32 %v80, %v147
  %v152 = vmul.f32 %v81, %v147
  %v153 = vmul.f32 %v82, %v147
  %v154 = vmul.f32 %v83, %v147
  %v155 = vmul.f32 %v84, %v147
  %v156 = vmul.f32 %v85, %v147
  %v157 = vmul.f32 %v86, %v147
  %v158 = vmul.f32 %v87, %v147
  %v159 = vmul.f32 %v88, %v147
  %v160 = vmul.f32 %v89, %v147
  %v161 = vmul.f32 %v90, %v147
  %v162 = vmul.f32 %v91, %v147
  %v163 = vmul.f32 %v92, %v147
  %v164 = vmul.f32 %v93, %v147
  %v165 = vmul.f32 %v94, %v147
  %v166 = vmul.f32 %v95, %v147
  %v167 = vmul.f32 %v96, %v147
  %v168 = vmul.f32 %v97, %v147
  %v169 = vmul.f32 %v98, %v147
  %v170 = vmul.f32 %v99, %v147
  %v171 = vmul.f32 %v100, %v147
  %v172 = vmul.f32 %v101, %v147
  %v173 = vmul.f32 %v102, %v147
  %v174 = vmul.f32 %v103, %v147
  %v175 = vmul.f32 %v104, %v147
  %v176 = vmul.f32 %v105, %v147
  %v177 = vmul.f32 %v106, %v147
  %v178 = vmul.f32 %v107, %v147
  %v179 = vmul.f32 %v108, %v147
  %v180 = vmul.f32 %v109, %v147
  %v181 = vmul.f32 %v110, %v147
  %v182 = vmul.f32 %v111, %v147
  %v183 = vmul.f32 %v112, %v147
  %v184 = vmul.f32 %v113, %v147
  %v185 = vmul.f32 %v114, %v147
  %v186 = vmul.f32 %v115, %v147
  %v187 = vmul.f32 %v116, %v147
  %v188 = vmul.f32 %v117, %v147
  %v189 = vmul.f32 %v118, %v147
  %v190 = vmul.f32 %v119, %v147
  %v191 = vmul.f32 %v120, %v147
  %v192 = vmul.f32 %v121, %v147
  %v193 = vmul.f32 %v122, %v147
  %v194 = vmul.f32 %v123, %v147
  %v195 = vmul.f32 %v124, %v147
  %v196 = vmul.f32 %v125, %v147
  %v197 = vmul.f32 %v126, %v147
  %v198 = vmul.f32 %v127, %v147
  %v199 = vmul.f32 %v128, %v147
  %v200 = vmul.f32 %v129, %v147
  %v201 = vmul.f32 %v130, %v147
  %v202 = vmul.f32 %v131, %v147
  %v203 = vmul.f32 %v132, %v147
  %v204 = vmul.f32 %v133, %v147
  %v205 = vmul.f32 %v134, %v147
  %v206 = vmul.f32 %v135, %v147
  %v207 = vmul.f32 %v136, %v147
  %v208 = vmul.f32 %v137, %v147
  %v209 = vmul.f32 %v138, %v147
  %v210 = vmul.f32 %v139, %v147
  %v211 = vmul.f32 %v140, %v147
  %v212 = vmul.f32 %v141, %v147
  %v213 = vld [vmem:[%s2] sm:$0x1]
  %v215 = vlaneseq
  %v216 = vshrl.u32 %v215, 7
  %v217 = vsub.s32 0, %v216
  %v218 = vrot.slane %v213, %v217
  %v220 = vadd.f32 %v149, %v218
  %v221 = vadd.f32 %v150, %v218
  %v222 = vadd.f32 %v151, %v218
  %v223 = vadd.f32 %v152, %v218
  %v224 = vadd.f32 %v153, %v218
  %v225 = vadd.f32 %v154, %v218
  %v226 = vadd.f32 %v155, %v218
  %v227 = vadd.f32 %v156, %v218
  %v228 = vadd.f32 %v157, %v218
  %v229 = vadd.f32 %v158, %v218
  %v230 = vadd.f32 %v159, %v218
  %v231 = vadd.f32 %v160, %v218
  %v232 = vadd.f32 %v161, %v218
  %v233 = vadd.f32 %v162, %v218
  %v234 = vadd.f32 %v163, %v218
  %v235 = vadd.f32 %v164, %v218
  %v236 = vadd.f32 %v165, %v218
  %v237 = vadd.f32 %v166, %v218
  %v238 = vadd.f32 %v167, %v218
  %v239 = vadd.f32 %v168, %v218
  %v240 = vadd.f32 %v169, %v218
  %v241 = vadd.f32 %v170, %v218
  %v242 = vadd.f32 %v171, %v218
  %v243 = vadd.f32 %v172, %v218
  %v244 = vadd.f32 %v173, %v218
  %v245 = vadd.f32 %v174, %v218
  %v246 = vadd.f32 %v175, %v218
  %v247 = vadd.f32 %v176, %v218
  %v248 = vadd.f32 %v177, %v218
  %v249 = vadd.f32 %v178, %v218
  %v250 = vadd.f32 %v179, %v218
  %v251 = vadd.f32 %v180, %v218
  %v252 = vadd.f32 %v181, %v218
  %v253 = vadd.f32 %v182, %v218
  %v254 = vadd.f32 %v183, %v218
  %v255 = vadd.f32 %v184, %v218
  %v256 = vadd.f32 %v185, %v218
  %v257 = vadd.f32 %v186, %v218
  %v258 = vadd.f32 %v187, %v218
  %v259 = vadd.f32 %v188, %v218
  %v260 = vadd.f32 %v189, %v218
  %v261 = vadd.f32 %v190, %v218
  %v262 = vadd.f32 %v191, %v218
  %v263 = vadd.f32 %v192, %v218
  %v264 = vadd.f32 %v193, %v218
  %v265 = vadd.f32 %v194, %v218
  %v266 = vadd.f32 %v195, %v218
  %v267 = vadd.f32 %v196, %v218
  %v268 = vadd.f32 %v197, %v218
  %v269 = vadd.f32 %v198, %v218
  %v270 = vadd.f32 %v199, %v218
  %v271 = vadd.f32 %v200, %v218
  %v272 = vadd.f32 %v201, %v218
  %v273 = vadd.f32 %v202, %v218
  %v274 = vadd.f32 %v203, %v218
  %v275 = vadd.f32 %v204, %v218
  %v276 = vadd.f32 %v205, %v218
  %v277 = vadd.f32 %v206, %v218
  %v278 = vadd.f32 %v207, %v218
  %v279 = vadd.f32 %v208, %v218
  %v280 = vadd.f32 %v209, %v218
  %v281 = vadd.f32 %v210, %v218
  %v282 = vadd.f32 %v211, %v218
  %v283 = vadd.f32 %v212, %v218
  %v284 = vmax.f32 %v220, 0.0
  %v285 = vmax.f32 %v221, 0.0
  %v286 = vmax.f32 %v222, 0.0
  %v287 = vmax.f32 %v223, 0.0
  %v288 = vmax.f32 %v224, 0.0
  %v289 = vmax.f32 %v225, 0.0
  %v290 = vmax.f32 %v226, 0.0
  %v291 = vmax.f32 %v227, 0.0
  %v292 = vmax.f32 %v228, 0.0
  %v293 = vmax.f32 %v229, 0.0
  %v294 = vmax.f32 %v230, 0.0
  %v295 = vmax.f32 %v231, 0.0
  %v296 = vmax.f32 %v232, 0.0
  %v297 = vmax.f32 %v233, 0.0
  %v298 = vmax.f32 %v234, 0.0
  %v299 = vmax.f32 %v235, 0.0
  %v300 = vmax.f32 %v236, 0.0
  %v301 = vmax.f32 %v237, 0.0
  %v302 = vmax.f32 %v238, 0.0
  %v303 = vmax.f32 %v239, 0.0
  %v304 = vmax.f32 %v240, 0.0
  %v305 = vmax.f32 %v241, 0.0
  %v306 = vmax.f32 %v242, 0.0
  %v307 = vmax.f32 %v243, 0.0
  %v308 = vmax.f32 %v244, 0.0
  %v309 = vmax.f32 %v245, 0.0
  %v310 = vmax.f32 %v246, 0.0
  %v311 = vmax.f32 %v247, 0.0
  %v312 = vmax.f32 %v248, 0.0
  %v313 = vmax.f32 %v249, 0.0
  %v314 = vmax.f32 %v250, 0.0
  %v315 = vmax.f32 %v251, 0.0
  %v316 = vmax.f32 %v252, 0.0
  %v317 = vmax.f32 %v253, 0.0
  %v318 = vmax.f32 %v254, 0.0
  %v319 = vmax.f32 %v255, 0.0
  %v320 = vmax.f32 %v256, 0.0
  %v321 = vmax.f32 %v257, 0.0
  %v322 = vmax.f32 %v258, 0.0
  %v323 = vmax.f32 %v259, 0.0
  %v324 = vmax.f32 %v260, 0.0
  %v325 = vmax.f32 %v261, 0.0
  %v326 = vmax.f32 %v262, 0.0
  %v327 = vmax.f32 %v263, 0.0
  %v328 = vmax.f32 %v264, 0.0
  %v329 = vmax.f32 %v265, 0.0
  %v330 = vmax.f32 %v266, 0.0
  %v331 = vmax.f32 %v267, 0.0
  %v332 = vmax.f32 %v268, 0.0
  %v333 = vmax.f32 %v269, 0.0
  %v334 = vmax.f32 %v270, 0.0
  %v335 = vmax.f32 %v271, 0.0
  %v336 = vmax.f32 %v272, 0.0
  %v337 = vmax.f32 %v273, 0.0
  %v338 = vmax.f32 %v274, 0.0
  %v339 = vmax.f32 %v275, 0.0
  %v340 = vmax.f32 %v276, 0.0
  %v341 = vmax.f32 %v277, 0.0
  %v342 = vmax.f32 %v278, 0.0
  %v343 = vmax.f32 %v279, 0.0
  %v344 = vmax.f32 %v280, 0.0
  %v345 = vmax.f32 %v281, 0.0
  %v346 = vmax.f32 %v282, 0.0
  %v347 = vmax.f32 %v283, 0.0
  %vm348 = vcmask 64512
  %349 = vst.msk [vmem:[%s3] sm:$0xff] %vm348, %v284
  %350 = vst.msk [vmem:[%s3 + $0x8] sm:$0xff] %vm348, %v285
  %351 = vst.msk [vmem:[%s3 + $0x10] sm:$0xff] %vm348, %v286
  %352 = vst.msk [vmem:[%s3 + $0x18] sm:$0xff] %vm348, %v287
  %353 = vst.msk [vmem:[%s3 + $0x20] sm:$0xff] %vm348, %v288
  %354 = vst.msk [vmem:[%s3 + $0x28] sm:$0xff] %vm348, %v289
  %355 = vst.msk [vmem:[%s3 + $0x30] sm:$0xff] %vm348, %v290
  %356 = vst.msk [vmem:[%s3 + $0x38] sm:$0xff] %vm348, %v291
  %357 = vst.msk [vmem:[%s3 + $0x40] sm:$0xff] %vm348, %v292
  %358 = vst.msk [vmem:[%s3 + $0x48] sm:$0xff] %vm348, %v293
  %359 = vst.msk [vmem:[%s3 + $0x50] sm:$0xff] %vm348, %v294
  %360 = vst.msk [vmem:[%s3 + $0x58] sm:$0xff] %vm348, %v295
  %361 = vst.msk [vmem:[%s3 + $0x60] sm:$0xff] %vm348, %v296
  %362 = vst.msk [vmem:[%s3 + $0x68] sm:$0xff] %vm348, %v297
  %363 = vst.msk [vmem:[%s3 + $0x70] sm:$0xff] %vm348, %v298
  %364 = vst.msk [vmem:[%s3 + $0x78] sm:$0xff] %vm348, %v299
  %365 = vst.msk [vmem:[%s3 + $0x80] sm:$0xff] %vm348, %v300
  %366 = vst.msk [vmem:[%s3 + $0x88] sm:$0xff] %vm348, %v301
  %367 = vst.msk [vmem:[%s3 + $0x90] sm:$0xff] %vm348, %v302
  %368 = vst.msk [vmem:[%s3 + $0x98] sm:$0xff] %vm348, %v303
  %369 = vst.msk [vmem:[%s3 + $0xa0] sm:$0xff] %vm348, %v304
  %370 = vst.msk [vmem:[%s3 + $0xa8] sm:$0xff] %vm348, %v305
  %371 = vst.msk [vmem:[%s3 + $0xb0] sm:$0xff] %vm348, %v306
  %372 = vst.msk [vmem:[%s3 + $0xb8] sm:$0xff] %vm348, %v307
  %373 = vst.msk [vmem:[%s3 + $0xc0] sm:$0xff] %vm348, %v308
  %374 = vst.msk [vmem:[%s3 + $0xc8] sm:$0xff] %vm348, %v309
  %375 = vst.msk [vmem:[%s3 + $0xd0] sm:$0xff] %vm348, %v310
  %376 = vst.msk [vmem:[%s3 + $0xd8] sm:$0xff] %vm348, %v311
  %377 = vst.msk [vmem:[%s3 + $0xe0] sm:$0xff] %vm348, %v312
  %378 = vst.msk [vmem:[%s3 + $0xe8] sm:$0xff] %vm348, %v313
  %379 = vst.msk [vmem:[%s3 + $0xf0] sm:$0xff] %vm348, %v314
  %380 = vst.msk [vmem:[%s3 + $0xf8] sm:$0xff] %vm348, %v315
  %381 = vst.msk [vmem:[%s3 + $0x100] sm:$0xff] %vm348, %v316
  %382 = vst.msk [vmem:[%s3 + $0x108] sm:$0xff] %vm348, %v317
  %383 = vst.msk [vmem:[%s3 + $0x110] sm:$0xff] %vm348, %v318
  %384 = vst.msk [vmem:[%s3 + $0x118] sm:$0xff] %vm348, %v319
  %385 = vst.msk [vmem:[%s3 + $0x120] sm:$0xff] %vm348, %v320
  %386 = vst.msk [vmem:[%s3 + $0x128] sm:$0xff] %vm348, %v321
  %387 = vst.msk [vmem:[%s3 + $0x130] sm:$0xff] %vm348, %v322
  %388 = vst.msk [vmem:[%s3 + $0x138] sm:$0xff] %vm348, %v323
  %389 = vst.msk [vmem:[%s3 + $0x140] sm:$0xff] %vm348, %v324
  %390 = vst.msk [vmem:[%s3 + $0x148] sm:$0xff] %vm348, %v325
  %391 = vst.msk [vmem:[%s3 + $0x150] sm:$0xff] %vm348, %v326
  %392 = vst.msk [vmem:[%s3 + $0x158] sm:$0xff] %vm348, %v327
  %393 = vst.msk [vmem:[%s3 + $0x160] sm:$0xff] %vm348, %v328
  %394 = vst.msk [vmem:[%s3 + $0x168] sm:$0xff] %vm348, %v329
  %395 = vst.msk [vmem:[%s3 + $0x170] sm:$0xff] %vm348, %v330
  %396 = vst.msk [vmem:[%s3 + $0x178] sm:$0xff] %vm348, %v331
  %397 = vst.msk [vmem:[%s3 + $0x180] sm:$0xff] %vm348, %v332
  %398 = vst.msk [vmem:[%s3 + $0x188] sm:$0xff] %vm348, %v333
  %399 = vst.msk [vmem:[%s3 + $0x190] sm:$0xff] %vm348, %v334
  %400 = vst.msk [vmem:[%s3 + $0x198] sm:$0xff] %vm348, %v335
  %401 = vst.msk [vmem:[%s3 + $0x1a0] sm:$0xff] %vm348, %v336
  %402 = vst.msk [vmem:[%s3 + $0x1a8] sm:$0xff] %vm348, %v337
  %403 = vst.msk [vmem:[%s3 + $0x1b0] sm:$0xff] %vm348, %v338
  %404 = vst.msk [vmem:[%s3 + $0x1b8] sm:$0xff] %vm348, %v339
  %405 = vst.msk [vmem:[%s3 + $0x1c0] sm:$0xff] %vm348, %v340
  %406 = vst.msk [vmem:[%s3 + $0x1c8] sm:$0xff] %vm348, %v341
  %407 = vst.msk [vmem:[%s3 + $0x1d0] sm:$0xff] %vm348, %v342
  %408 = vst.msk [vmem:[%s3 + $0x1d8] sm:$0xff] %vm348, %v343
  %409 = vst.msk [vmem:[%s3 + $0x1e0] sm:$0xff] %vm348, %v344
  %410 = vst.msk [vmem:[%s3 + $0x1e8] sm:$0xff] %vm348, %v345
  %411 = vst.msk [vmem:[%s3 + $0x1f0] sm:$0xff] %vm348, %v346
  %412 = vst.msk [vmem:[%s3 + $0x1f8] sm:$0xff] %vm348, %v347
  // Predicated region
  $region14: #{double_conv.5} parent=0 // pred_check
    _
  $region15: #{double_conv.5} parent=0 // pred_check_branch
    %414 = sbr.rel (0) target = $region17
  $region16: #{double_conv.5} parent=0 // pred_region
    _
  $region17: #{double_conv.5} parent=0 // pred_fallthru
    _
  // Predicated region
  $region18: #{double_conv.5} parent=0 // pred_check
    _
  $region19: #{double_conv.5} parent=0 // pred_check_branch
    %416 = sbr.rel (0) target = $region21
  $region20: #{double_conv.5} parent=0 // pred_region
    _
  $region21: #{double_conv.5} parent=0 // pred_fallthru
    _

// kernel: double_conv.3
$region0: #{double_conv.3}
  #allocation0 [shape = 'u32[]', space=smem, size = 0x4, offset = 0x4, fixed_abs, tag = 'smem constant byte address 0x4 - core index']
  #allocation1 [shape = 'u32[144,128]{1,0:T(1,128)}', space=vmem, size = 0x12000, scoped, tag = 'internal scratch']
  %s0 = inlined_call_operand.vmem [shape: bf16[2,16,16,8], index: 0, kind: input, shape index: {}, may-alias: {0,1,2}]
  %s1 = inlined_call_operand.vmem [shape: bf16[2,16,16,8], index: 1, kind: input, shape index: {}, may-alias: {0,1,2}]
  %s2 = inlined_call_operand.vmem [shape: bf16[2,16,16,8], index: 2, kind: input, shape index: {}, may-alias: {0,1,2}]
  %s3 = inlined_call_operand.vmem [shape: bf16[3,8,384], index: 3, kind: input, shape index: {}]
  %s4 = inlined_call_operand.vmem [shape: bf16[2,16,16,128], index: 4, kind: output, shape index: {0}]
  %s5 = inlined_call_operand.vmem [shape: f32[2,1,2,128], index: 5, kind: output, shape index: {1}]
  %6 = xla_tuple %s4, %s5
  %s7 = sld [smem:[#allocation0]]
  $region57: #{double_conv.3} parent=0
    _
  %s9 = ssub.s32 1, %s7
  %s10 = scalar_select 0, %s9, %s7
  loop: start=0, step=1, limit=4
  $region2: #{double_conv.3} parent=0 // loop_pre_header
    _
  $region3: #{double_conv.3} parent=0 // loop_header
    %s12 = sphi 0, %s16
    %p13 = scmp.ge.s32.totalorder %s12, 4
    %s19 = sphi 0, %s31
    %s20 = sphi 0, %s27
    %s21 = sphi 0, %s19
    %s22 = sphi 0, %s20
    %s23 = sphi 0, %s21
    %s24 = sphi 0, %s22
    %s36 = sphi 0, %s38
    %s39 = sphi 0, %s36
    %s40 = sphi 0, %s39
    %s56 = sphi 0, %s40
    %s72 = sphi 0, %s74
    %s75 = sphi 0, %s72
    %s76 = sphi 0, %s75
    %s92 = sphi 0, %s76
    %s108 = sphi 0, %s110
    %s111 = sphi 0, %s108
    %s112 = sphi 0, %s111
    %s128 = sphi 0, %s112
    %s132 = sphi 0, %s132
    %s134 = sphi 0, %s132
    %s135 = sphi 0, %s134
    %s149 = sphi 0, %s135
    %s157 = sphi 0, %s159
    %s160 = sphi 0, %s157
    %s161 = sphi 0, %s160
    %s177 = sphi 0, %s161
    %s185 = sphi 0, %s187
    %s188 = sphi 0, %s185
    %s189 = sphi 0, %s188
    %s205 = sphi 0, %s189
  $region4: #{double_conv.3} parent=0 // loop_header_branch
    %15 = sbr.rel (%p13) target = $region8
  $region5: #{double_conv.3} parent=0 // loop_body
    %s17 = ssub.s32 %s12, 1
    %s18 = ssub.s32 %s12, 2
    %s25 = sadd.s32 1, %s20
    %p26 = scmp.ge.s32.totalorder %s25, 1
    %s27 = scalar_select %p26, 0, %s25
    %s28 = sadd.s32 1, %s19
    %s29 = scalar_select %p26, %s28, %s19
    %p30 = scmp.ge.s32.totalorder %s29, 2
    %s31 = scalar_select %p30, 0, %s29
    %s32 = ssub.s32 %s19, %s31
    %s33 = ssub.s32 %s20, %s27
    %s34 = sor.u32 %s32, %s33
    %p35 = scmp.eq.s32.totalorder %s34, 0
    %s37 = sadd.s32 %s36, 1
    %s38 = scalar_select %p35, %s36, %s37
    %p41 = pneg %p35
    %p42 = scmp.eq.s32.totalorder %s12, 1
    %p43 = por %p41, %p42
    %p44 = scmp.ne.s32.totalorder %s36, %s39
    %p45 = scmp.eq.s32.totalorder %s12, 0
    %p46 = por %p44, %p45
    %p47 = scmp.ne.s32.totalorder %s36, %s39
    %p48 = scmp.eq.s32.totalorder %s17, 1
    %p49 = por %p47, %p48
    %p50 = scmp.ne.s32.totalorder %s39, %s40
    %p51 = scmp.eq.s32.totalorder %s17, 0
    %p52 = por %p50, %p51
    %p53 = scmp.ne.s32.totalorder %s39, %s40
    %p54 = scmp.eq.s32.totalorder %s18, 1
    %p55 = por %p53, %p54
    %p57 = scmp.ne.s32.totalorder %s40, %s56
    %p58 = scmp.eq.s32.totalorder %s18, 0
    %p59 = por %p57, %p58
    %s60 = smul.u32 %s20, 16
    %s61 = ssub.s32 %s60, 1
    %p62 = scmp.gt.s32.totalorder %s61, 0
    %s63 = scalar_select %p62, %s61, 0
    %s64 = smul.u32 %s27, 16
    %s65 = ssub.s32 %s64, 1
    %p66 = scmp.gt.s32.totalorder %s65, 0
    %s67 = scalar_select %p66, %s65, 0
    %s68 = ssub.s32 %s19, %s31
    %s69 = ssub.s32 %s63, %s67
    %s70 = sor.u32 %s68, %s69
    %p71 = scmp.eq.s32.totalorder %s70, 0
    %s73 = sadd.s32 %s72, 1
    %s74 = scalar_select %p71, %s72, %s73
    %p77 = pneg %p71
    %p78 = scmp.eq.s32.totalorder %s12, 1
    %p79 = por %p77, %p78
    %p80 = scmp.ne.s32.totalorder %s72, %s75
    %p81 = scmp.eq.s32.totalorder %s12, 0
    %p82 = por %p80, %p81
    %p83 = scmp.ne.s32.totalorder %s72, %s75
    %p84 = scmp.eq.s32.totalorder %s17, 1
    %p85 = por %p83, %p84
    %p86 = scmp.ne.s32.totalorder %s75, %s76
    %p87 = scmp.eq.s32.totalorder %s17, 0
    %p88 = por %p86, %p87
    %p89 = scmp.ne.s32.totalorder %s75, %s76
    %p90 = scmp.eq.s32.totalorder %s18, 1
    %p91 = por %p89, %p90
    %p93 = scmp.ne.s32.totalorder %s76, %s92
    %p94 = scmp.eq.s32.totalorder %s18, 0
    %p95 = por %p93, %p94
    %s96 = smul.u32 %s20, 16
    %s97 = sadd.s32 %s96, 16
    %p98 = scmp.lt.s32.totalorder %s97, 15
    %s99 = scalar_select %p98, %s97, 15
    %s100 = smul.u32 %s27, 16
    %s101 = sadd.s32 %s100, 16
    %p102 = scmp.lt.s32.totalorder %s101, 15
    %s103 = scalar_select %p102, %s101, 15
    %s104 = ssub.s32 %s19, %s31
    %s105 = ssub.s32 %s99, %s103
    %s106 = sor.u32 %s104, %s105
    %p107 = scmp.eq.s32.totalorder %s106, 0
    %s109 = sadd.s32 %s108, 1
    %s110 = scalar_select %p107, %s108, %s109
    %p113 = pneg %p107
    %p114 = scmp.eq.s32.totalorder %s12, 1
    %p115 = por %p113, %p114
    %p116 = scmp.ne.s32.totalorder %s108, %s111
    %p117 = scmp.eq.s32.totalorder %s12, 0
    %p118 = por %p116, %p117
    %p119 = scmp.ne.s32.totalorder %s108, %s111
    %p120 = scmp.eq.s32.totalorder %s17, 1
    %p121 = por %p119, %p120
    %p122 = scmp.ne.s32.totalorder %s111, %s112
    %p123 = scmp.eq.s32.totalorder %s17, 0
    %p124 = por %p122, %p123
    %p125 = scmp.ne.s32.totalorder %s111, %s112
    %p126 = scmp.eq.s32.totalorder %s18, 1
    %p127 = por %p125, %p126
    %p129 = scmp.ne.s32.totalorder %s112, %s128
    %p130 = scmp.eq.s32.totalorder %s18, 0
    %p131 = por %p129, %p130
    %s133 = sadd.s32 %s132, 1
    %p136 = scmp.eq.s32.totalorder %s12, 1
    %p137 = scmp.ne.s32.totalorder %s132, %s134
    %p138 = scmp.eq.s32.totalorder %s12, 0
    %p139 = por %p137, %p138
    %p140 = scmp.ne.s32.totalorder %s132, %s134
    %p141 = scmp.eq.s32.totalorder %s17, 1
    %p142 = por %p140, %p141
    %p143 = scmp.ne.s32.totalorder %s134, %s135
    %p144 = scmp.eq.s32.totalorder %s17, 0
    %p145 = por %p143, %p144
    %p146 = scmp.ne.s32.totalorder %s134, %s135
    %p147 = scmp.eq.s32.totalorder %s18, 1
    %p148 = por %p146, %p147
    %p150 = scmp.ne.s32.totalorder %s135, %s149
    %p151 = scmp.eq.s32.totalorder %s18, 0
    %p152 = por %p150, %p151
    %s153 = ssub.s32 %s19, %s31
    %s154 = ssub.s32 %s20, %s27
    %s155 = sor.u32 %s153, %s154
    %p156 = scmp.eq.s32.totalorder %s155, 0
    %s158 = sadd.s32 %s157, 1
    %s159 = scalar_select %p156, %s157, %s158
    %p162 = pneg %p156
    %p163 = scmp.eq.s32.totalorder %s12, 1
    %p164 = por %p162, %p163
    %p165 = scmp.ne.s32.totalorder %s157, %s160
    %p166 = scmp.eq.s32.totalorder %s12, 0
    %p167 = por %p165, %p166
    %p168 = scmp.ne.s32.totalorder %s157, %s160
    %p169 = scmp.eq.s32.totalorder %s17, 1
    %p170 = por %p168, %p169
    %p171 = scmp.ne.s32.totalorder %s160, %s161
    %p172 = scmp.eq.s32.totalorder %s17, 0
    %p173 = por %p171, %p172
    %p174 = scmp.ne.s32.totalorder %s160, %s161
    %p175 = scmp.eq.s32.totalorder %s18, 1
    %p176 = por %p174, %p175
    %p178 = scmp.ne.s32.totalorder %s161, %s177
    %p179 = scmp.eq.s32.totalorder %s18, 0
    %p180 = por %p178, %p179
    %s181 = ssub.s32 %s19, %s31
    %s182 = ssub.s32 %s20, %s27
    %s183 = sor.u32 %s181, %s182
    %p184 = scmp.eq.s32.totalorder %s183, 0
    %s186 = sadd.s32 %s185, 1
    %s187 = scalar_select %p184, %s185, %s186
    %p190 = pneg %p184
    %p191 = scmp.eq.s32.totalorder %s12, 1
    %p192 = por %p190, %p191
    %p193 = scmp.ne.s32.totalorder %s185, %s188
    %p194 = scmp.eq.s32.totalorder %s12, 0
    %p195 = por %p193, %p194
    %p196 = scmp.ne.s32.totalorder %s185, %s188
    %p197 = scmp.eq.s32.totalorder %s17, 1
    %p198 = por %p196, %p197
    %p199 = scmp.ne.s32.totalorder %s188, %s189
    %p200 = scmp.eq.s32.totalorder %s17, 0
    %p201 = por %p199, %p200
    %p202 = scmp.ne.s32.totalorder %s188, %s189
    %p203 = scmp.eq.s32.totalorder %s18, 1
    %p204 = por %p202, %p203
    %p206 = scmp.ne.s32.totalorder %s189, %s205
    %p207 = scmp.eq.s32.totalorder %s18, 0
    %p208 = por %p206, %p207
    %p209 = scmp.le.s32.totalorder 1, %s12
    %p210 = scmp.lt.s32.totalorder %s12, 3
    %p211 = pnand %p209, %p210
    %p212 = pneg %p211
    // Predicated region
    $region9: #{double_conv.3} parent=5 // pred_check
      _
    $region10: #{double_conv.3} parent=5 // pred_check_branch
      %214 = sbr.rel (%p211) target = $region12
    $region11: #{double_conv.3} parent=5 // pred_region
      %s215 = ssub.s32 %s12, 1
      // Predicated region
      $region13: #{double_conv.3} parent=11 // pred_check
        %p216 = pneg %p145
      $region14: #{double_conv.3} parent=11 // pred_check_branch
        %218 = sbr.rel (%p216) target = $region16
      $region15: #{double_conv.3} parent=11 // pred_region
        _
      $region16: #{double_conv.3} parent=11 // pred_fallthru
        _
    $region12: #{double_conv.3} parent=5 // pred_fallthru
      _
    %p219 = scmp.lt.s32.totalorder %s12, 2
    // Predicated region
    $region17: #{double_conv.3} parent=5 // pred_check
      %p220 = pneg %p219
    $region18: #{double_conv.3} parent=5 // pred_check_branch
      %222 = sbr.rel (%p220) target = $region20
    $region19: #{double_conv.3} parent=5 // pred_region
      // Predicated region
      $region21: #{double_conv.3} parent=19 // pred_check
        %p223 = pneg %p46
      $region22: #{double_conv.3} parent=19 // pred_check_branch
        %225 = sbr.rel (%p223) target = $region24
      $region23: #{double_conv.3} parent=19 // pred_region
        %s226 = smul.u32 16, %s20
        %p227 = scmp.lt.s32.totalorder %s19, 1
        %s228 = scalar_select %p227, %s19, 1
        %p229 = scmp.lt.s32.totalorder %s226, 15
        %s230 = scalar_select %p229, %s226, 15
        %s231 = smul.addr %s230, 2
        %s232 = smul.addr %s228, 32
        %s233 = sadd.s32 %s231, %s232
        %s234 = smul.addr %s233, 4
        %s235 = scalar_lea.vmem %s0, %s234
        %s236 = smul.u32 16, %s20
      $region24: #{double_conv.3} parent=19 // pred_fallthru
        _
      // Predicated region
      $region25: #{double_conv.3} parent=19 // pred_check
        %p237 = pneg %p82
      $region26: #{double_conv.3} parent=19 // pred_check_branch
        %239 = sbr.rel (%p237) target = $region28
      $region27: #{double_conv.3} parent=19 // pred_region
        %s240 = smul.u32 %s20, 16
        %s241 = ssub.s32 %s240, 1
        %p242 = scmp.gt.s32.totalorder %s241, 0
        %s243 = scalar_select %p242, %s241, 0
        %p244 = scmp.lt.s32.totalorder %s19, 1
        %s245 = scalar_select %p244, %s19, 1
        %p246 = scmp.lt.s32.totalorder %s243, 15
        %s247 = scalar_select %p246, %s243, 15
        %s248 = smul.addr %s247, 2
        %s249 = smul.addr %s245, 32
        %s250 = sadd.s32 %s248, %s249
        %s251 = smul.addr %s250, 4
        %s252 = scalar_lea.vmem %s1, %s251
        %s253 = smul.u32 %s20, 16
        %s254 = ssub.s32 %s253, 1
        %p255 = scmp.gt.s32.totalorder %s254, 0
        %s256 = scalar_select %p255, %s254, 0
      $region28: #{double_conv.3} parent=19 // pred_fallthru
        _
      // Predicated region
      $region29: #{double_conv.3} parent=19 // pred_check
        %p257 = pneg %p118
      $region30: #{double_conv.3} parent=19 // pred_check_branch
        %259 = sbr.rel (%p257) target = $region32
      $region31: #{double_conv.3} parent=19 // pred_region
        %s260 = smul.u32 %s20, 16
        %s261 = sadd.s32 %s260, 16
        %p262 = scmp.lt.s32.totalorder %s261, 15
        %s263 = scalar_select %p262, %s261, 15
        %p264 = scmp.lt.s32.totalorder %s19, 1
        %s265 = scalar_select %p264, %s19, 1
        %p266 = scmp.lt.s32.totalorder %s263, 15
        %s267 = scalar_select %p266, %s263, 15
        %s268 = smul.addr %s267, 2
        %s269 = smul.addr %s265, 32
        %s270 = sadd.s32 %s268, %s269
        %s271 = smul.addr %s270, 4
        %s272 = scalar_lea.vmem %s2, %s271
        %s273 = smul.u32 %s20, 16
        %s274 = sadd.s32 %s273, 16
        %p275 = scmp.lt.s32.totalorder %s274, 15
        %s276 = scalar_select %p275, %s274, 15
      $region32: #{double_conv.3} parent=19 // pred_fallthru
        _
    $region20: #{double_conv.3} parent=5 // pred_fallthru
      _
    %p277 = scmp.le.s32.totalorder 1, %s12
    %p278 = scmp.lt.s32.totalorder %s12, 3
    %p279 = pnand %p277, %p278
    %p280 = pneg %p279
    // Predicated region
    $region33: #{double_conv.3} parent=5 // pred_check
      _
    $region34: #{double_conv.3} parent=5 // pred_check_branch
      %282 = sbr.rel (%p279) target = $region36
    $region35: #{double_conv.3} parent=5 // pred_region
      %s283 = ssub.s32 %s12, 1
      %s284 = smul.u32 16, %s22
      %p285 = scmp.lt.s32.totalorder %s21, 1
      %s286 = scalar_select %p285, %s21, 1
      %p287 = scmp.lt.s32.totalorder %s284, 15
      %s288 = scalar_select %p287, %s284, 15
      %s289 = smul.addr %s288, 2
      %s290 = smul.addr %s286, 32
      %s291 = sadd.s32 %s289, %s290
      %s292 = smul.addr %s291, 4
      %s293 = scalar_lea.vmem %s0, %s292
      %p294 = pneg %p52
      %p295 = pneg %p49
      %s296 = smul.u32 %s22, 16
      %s297 = ssub.s32 %s296, 1
      %p298 = scmp.gt.s32.totalorder %s297, 0
      %s299 = scalar_select %p298, %s297, 0
      %p300 = scmp.lt.s32.totalorder %s21, 1
      %s301 = scalar_select %p300, %s21, 1
      %p302 = scmp.lt.s32.totalorder %s299, 15
      %s303 = scalar_select %p302, %s299, 15
      %s304 = smul.addr %s303, 2
      %s305 = smul.addr %s301, 32
      %s306 = sadd.s32 %s304, %s305
      %s307 = smul.addr %s306, 4
      %s308 = scalar_lea.vmem %s1, %s307
      %p309 = pneg %p88
      %p310 = pneg %p85
      %s311 = smul.u32 %s22, 16
      %s312 = sadd.s32 %s311, 16
      %p313 = scmp.lt.s32.totalorder %s312, 15
      %s314 = scalar_select %p313, %s312, 15
      %p315 = scmp.lt.s32.totalorder %s21, 1
      %s316 = scalar_select %p315, %s21, 1
      %p317 = scmp.lt.s32.totalorder %s314, 15
      %s318 = scalar_select %p317, %s314, 15
      %s319 = smul.addr %s318, 2
      %s320 = smul.addr %s316, 32
      %s321 = sadd.s32 %s319, %s320
      %s322 = smul.addr %s321, 4
      %s323 = scalar_lea.vmem %s2, %s322
      %p324 = pneg %p124
      %p325 = pneg %p121
      %p326 = pneg %p145
      %p327 = pneg %p142
      %p328 = pneg %p173
      %p329 = pneg %p170
      %s330 = smul.u32 16, %s22
      %p331 = scmp.lt.s32.totalorder %s21, 1
      %s332 = scalar_select %p331, %s21, 1
      %p333 = scmp.lt.s32.totalorder %s330, 15
      %s334 = scalar_select %p333, %s330, 15
      %s335 = smul.addr %s334, 2
      %s336 = smul.addr %s332, 32
      %s337 = sadd.s32 %s335, %s336
      %s338 = smul.addr %s337, 4
      %s339 = scalar_lea.vmem %s4, %s338
      %p340 = pneg %p201
      %p341 = pneg %p198
      %p342 = scmp.lt.s32.totalorder %s21, 1
      %s343 = scalar_select %p342, %s21, 1
      %p344 = scmp.lt.s32.totalorder %s22, 0
      %s345 = scalar_select %p344, %s22, 0
      %s346 = sadd.s32 %s345, %s343
      %s347 = smul.addr %s346, 2
      %s348 = scalar_lea.vmem %s5, %s347
      %s349 = smul.u32 16, %s22
      %p350 = scmp.lt.s32.totalorder %s21, 1
      %s351 = scalar_select %p350, %s21, 1
      %p352 = scmp.lt.s32.totalorder %s349, 15
      %s353 = scalar_select %p352, %s349, 15
      %s354 = smul.addr %s353, 2
      %s355 = smul.addr %s351, 32
      %s356 = sadd.s32 %s354, %s355
      %s357 = smul.addr %s356, 4
      %s358 = scalar_lea.vmem %s0, %s357
      %s359 = smul.u32 16, %s22
      %s360 = smul.u32 %s22, 16
      %s361 = ssub.s32 %s360, 1
      %p362 = scmp.gt.s32.totalorder %s361, 0
      %s363 = scalar_select %p362, %s361, 0
      %p364 = scmp.lt.s32.totalorder %s21, 1
      %s365 = scalar_select %p364, %s21, 1
      %p366 = scmp.lt.s32.totalorder %s363, 15
      %s367 = scalar_select %p366, %s363, 15
      %s368 = smul.addr %s367, 2
      %s369 = smul.addr %s365, 32
      %s370 = sadd.s32 %s368, %s369
      %s371 = smul.addr %s370, 4
      %s372 = scalar_lea.vmem %s1, %s371
      %s373 = smul.u32 %s22, 16
      %s374 = ssub.s32 %s373, 1
      %p375 = scmp.gt.s32.totalorder %s374, 0
      %s376 = scalar_select %p375, %s374, 0
      %s377 = smul.u32 %s22, 16
      %s378 = sadd.s32 %s377, 16
      %p379 = scmp.lt.s32.totalorder %s378, 15
      %s380 = scalar_select %p379, %s378, 15
      %p381 = scmp.lt.s32.totalorder %s21, 1
      %s382 = scalar_select %p381, %s21, 1
      %p383 = scmp.lt.s32.totalorder %s380, 15
      %s384 = scalar_select %p383, %s380, 15
      %s385 = smul.addr %s384, 2
      %s386 = smul.addr %s382, 32
      %s387 = sadd.s32 %s385, %s386
      %s388 = smul.addr %s387, 4
      %s389 = scalar_lea.vmem %s2, %s388
      %s390 = smul.u32 %s22, 16
      %s391 = sadd.s32 %s390, 16
      %p392 = scmp.lt.s32.totalorder %s391, 15
      %s393 = scalar_select %p392, %s391, 15
      %s394 = smul.u32 16, %s22
      %p395 = scmp.lt.s32.totalorder %s21, 1
      %s396 = scalar_select %p395, %s21, 1
      %p397 = scmp.lt.s32.totalorder %s394, 15
      %s398 = scalar_select %p397, %s394, 15
      %s399 = smul.addr %s398, 2
      %s400 = smul.addr %s396, 32
      %s401 = sadd.s32 %s399, %s400
      %s402 = smul.addr %s401, 4
      %s403 = scalar_lea.vmem %s4, %s402
      %s404 = smul.u32 16, %s22
      %p405 = scmp.lt.s32.totalorder %s21, 1
      %s406 = scalar_select %p405, %s21, 1
      %p407 = scmp.lt.s32.totalorder %s22, 0
      %s408 = scalar_select %p407, %s22, 0
      %s409 = sadd.s32 %s408, %s406
      %s410 = smul.addr %s409, 2
      %s411 = scalar_lea.vmem %s5, %s410
      %v413 = vld [vmem:[%s358] sm:$0xf]
      %v414 = vld [vmem:[%s358 + $0x4] sm:$0xf]
      %v415 = vld [vmem:[%s358 + $0x8] sm:$0xf]
      %v416 = vld [vmem:[%s358 + $0xc] sm:$0xf]
      %v417 = vld [vmem:[%s358 + $0x10] sm:$0xf]
      %v418 = vld [vmem:[%s358 + $0x14] sm:$0xf]
      %v419 = vld [vmem:[%s358 + $0x18] sm:$0xf]
      %v420 = vld [vmem:[%s358 + $0x1c] sm:$0xf]
      %v421 = vld [vmem:[%s358 + $0x20] sm:$0xf]
      %v422 = vld [vmem:[%s358 + $0x24] sm:$0xf]
      %v423 = vld [vmem:[%s358 + $0x28] sm:$0xf]
      %v424 = vld [vmem:[%s358 + $0x2c] sm:$0xf]
      %v425 = vld [vmem:[%s358 + $0x30] sm:$0xf]
      %v426 = vld [vmem:[%s358 + $0x34] sm:$0xf]
      %v427 = vld [vmem:[%s358 + $0x38] sm:$0xf]
      %v428 = vld [vmem:[%s358 + $0x3c] sm:$0xf]
      %v429 = vld [vmem:[%s358 + $0x40] sm:$0xf]
      %v430 = vld [vmem:[%s358 + $0x44] sm:$0xf]
      %v431 = vld [vmem:[%s358 + $0x48] sm:$0xf]
      %v432 = vld [vmem:[%s358 + $0x4c] sm:$0xf]
      %v433 = vld [vmem:[%s358 + $0x50] sm:$0xf]
      %v434 = vld [vmem:[%s358 + $0x54] sm:$0xf]
      %v435 = vld [vmem:[%s358 + $0x58] sm:$0xf]
      %v436 = vld [vmem:[%s358 + $0x5c] sm:$0xf]
      %v437 = vld [vmem:[%s358 + $0x60] sm:$0xf]
      %v438 = vld [vmem:[%s358 + $0x64] sm:$0xf]
      %v439 = vld [vmem:[%s358 + $0x68] sm:$0xf]
      %v440 = vld [vmem:[%s358 + $0x6c] sm:$0xf]
      %v441 = vld [vmem:[%s358 + $0x70] sm:$0xf]
      %v442 = vld [vmem:[%s358 + $0x74] sm:$0xf]
      %v443 = vld [vmem:[%s358 + $0x78] sm:$0xf]
      %v444 = vld [vmem:[%s358 + $0x7c] sm:$0xf]
      %v445 = vld [vmem:[%s372] sm:$0xf]
      %v446 = vld [vmem:[%s372 + $0x4] sm:$0xf]
      %p447 = scmp.gt.s32.totalorder %s22, 0
      %s448 = scalar_select %p447, 1.0, 0.0
      %p450 = scmp.ne.f32.partialorder %s448, %s448
      %s451 = sshrl.u32 %s448, 16
      %s452 = sand.u32 %s451, 1
      %s453 = sadd.s32 32767, %s452
      %s454 = sadd.s32 %s448, %s453
      %s455 = sand.u32 %s454, 4294901760
      %s456 = scalar_select %p450, 2143289344, %s455
      %s458 = sshrl.u32 %s456, 16
      %s459 = sshll.u32 %s458, 16
      %s460 = sor.u32 %s458, %s459
      %v461 = vstv %s460
      %v463 = vmul.bf16 %v445, %v461
      %v464 = vmul.bf16 %v446, %v461
      %v465 = vld [vmem:[%s389] sm:$0xf]
      %v466 = vld [vmem:[%s389 + $0x4] sm:$0xf]
      %p467 = scmp.lt.s32.totalorder %s22, 0
      %s468 = scalar_select %p467, 1.0, 0.0
      %p470 = scmp.ne.f32.partialorder %s468, %s468
      %s471 = sshrl.u32 %s468, 16
      %s472 = sand.u32 %s471, 1
      %s473 = sadd.s32 32767, %s472
      %s474 = sadd.s32 %s468, %s473
      %s475 = sand.u32 %s474, 4294901760
      %s476 = scalar_select %p470, 2143289344, %s475
      %s478 = sshrl.u32 %s476, 16
      %s479 = sshll.u32 %s478, 16
      %s480 = sor.u32 %s478, %s479
      %v481 = vstv %s480
      %v483 = vmul.bf16 %v465, %v481
      %v484 = vmul.bf16 %v466, %v481
      %v487 = vunpack.c.l.b16 %v463
      %v488 = vunpack.c.l.b16 %v464
      %v489 = vpack.c.b16 %v488, %v487
      %v520 = vunpack.c.l.b16 %v413
      %v521 = vunpack.c.l.b16 %v414
      %v522 = vunpack.c.l.b16 %v415
      %v523 = vunpack.c.l.b16 %v416
      %v524 = vunpack.c.l.b16 %v417
      %v525 = vunpack.c.l.b16 %v418
      %v526 = vunpack.c.l.b16 %v419
      %v527 = vunpack.c.l.b16 %v420
      %v528 = vunpack.c.l.b16 %v421
      %v529 = vunpack.c.l.b16 %v422
      %v530 = vunpack.c.l.b16 %v423
      %v531 = vunpack.c.l.b16 %v424
      %v532 = vunpack.c.l.b16 %v425
      %v533 = vunpack.c.l.b16 %v426
      %v534 = vunpack.c.l.b16 %v427
      %v535 = vunpack.c.l.b16 %v428
      %v536 = vunpack.c.l.b16 %v429
      %v537 = vunpack.c.l.b16 %v430
      %v538 = vunpack.c.l.b16 %v431
      %v539 = vunpack.c.l.b16 %v432
      %v540 = vunpack.c.l.b16 %v433
      %v541 = vunpack.c.l.b16 %v434
      %v542 = vunpack.c.l.b16 %v435
      %v543 = vunpack.c.l.b16 %v436
      %v544 = vunpack.c.l.b16 %v437
      %v545 = vunpack.c.l.b16 %v438
      %v546 = vunpack.c.l.b16 %v439
      %v547 = vunpack.c.l.b16 %v440
      %v548 = vunpack.c.l.b16 %v441
      %v549 = vunpack.c.l.b16 %v442
      %v550 = vpack.c.b16 %v521, %v520
      %v551 = vpack.c.b16 %v523, %v522
      %v552 = vpack.c.b16 %v525, %v524
      %v553 = vpack.c.b16 %v527, %v526
      %v554 = vpack.c.b16 %v529, %v528
      %v555 = vpack.c.b16 %v531, %v530
      %v556 = vpack.c.b16 %v533, %v532
      %v557 = vpack.c.b16 %v535, %v534
      %v558 = vpack.c.b16 %v537, %v536
      %v559 = vpack.c.b16 %v539, %v538
      %v560 = vpack.c.b16 %v541, %v540
      %v561 = vpack.c.b16 %v543, %v542
      %v562 = vpack.c.b16 %v545, %v544
      %v563 = vpack.c.b16 %v547, %v546
      %v564 = vpack.c.b16 %v549, %v548
      %v567 = vunpack.c.l.b16 %v443
      %v568 = vunpack.c.l.b16 %v444
      %v569 = vpack.c.b16 %v568, %v567
      %v572 = vunpack.c.l.b16 %v483
      %v573 = vunpack.c.l.b16 %v484
      %v574 = vpack.c.b16 %v573, %v572
      %v575 = vld [vmem:[%s3] sm:$0xff]
      %v576 = vld [vmem:[%s3 + $0x8] sm:$0xf]
      %s577 = scalar_lea.vmem %s3, 12
      %v578 = vld [vmem:[%s577] sm:$0xff]
      %v579 = vld [vmem:[%s577 + $0x8] sm:$0xf]
      %v582 = vunpack.c.l.b16 %v578
      %v583 = vunpack.c.h.b16 %v578
      %v584 = vunpack.c.l.b16 %v579
      %v585 = vpack.c.b16 %v582, %v582
      %v586 = vpack.c.b16 %v583, %v583
      %v587 = vpack.c.b16 %v584, %v584
      %vm588 = vcmask 64512
      %v590 = vsel %vm588, %v550, 0
      %v593 = vsel %vm588, %v551, 0
      %v596 = vsel %vm588, %v552, 0
      %v599 = vsel %vm588, %v553, 0
      %v602 = vsel %vm588, %v554, 0
      %v605 = vsel %vm588, %v555, 0
      %v608 = vsel %vm588, %v556, 0
      %v611 = vsel %vm588, %v557, 0
      %v614 = vsel %vm588, %v558, 0
      %v617 = vsel %vm588, %v559, 0
      %v620 = vsel %vm588, %v560, 0
      %v623 = vsel %vm588, %v561, 0
      %v626 = vsel %vm588, %v562, 0
      %v629 = vsel %vm588, %v563, 0
      %v632 = vsel %vm588, %v564, 0
      %v635 = vsel %vm588, %v569, 0
      %vm637 = vcmask 1043456
      %v639 = vsel %vm637, %v585, 0
      %v642 = vsel %vm637, %v586, 0
      %v645 = vsel %vm637, %v587, 0
      %647 = vmatprep.subr.bf16.mxu0 %v642
      %648 = vmatpush1.bf16.msra.mxu0 %v639
      %649 = vmatprep.subr.bf16.mxu0 0
      %650 = vmatpush1.bf16.msra.mxu0 0
      %651 = vmatprep.subr.bf16.mxu0 0
      %652 = vmatpush1.bf16.msra.mxu0 0
      %653 = vmatprep.subr.bf16.mxu0 0
      %654 = vmatpush1.bf16.msra.mxu0 0
      %655 = vmatprep.subr.bf16.mxu0 0
      %656 = vmatpush1.bf16.msra.mxu0 0
      %657 = vmatprep.subr.bf16.mxu0 0
      %658 = vmatpush1.bf16.msra.mxu0 0
      %659 = vmatprep.subr.bf16.mxu0 0
      %660 = vmatpush1.bf16.msra.mxu0 0
      %661 = vmatprep.subr.bf16.mxu0 0
      %662 = vmatpush1.bf16.msra.mxu0 0
      %663 = vmatprep.subr.bf16.mxu0 0
      %664 = vmatpush1.bf16.msra.mxu0 0
      %665 = vmatprep.subr.bf16.mxu0 0
      %666 = vmatpush1.bf16.msra.mxu0 0
      %667 = vmatprep.subr.bf16.mxu0 0
      %668 = vmatpush1.bf16.msra.mxu0 0
      %669 = vmatprep.subr.bf16.mxu0 0
      %670 = vmatpush1.bf16.msra.mxu0 0
      %671 = vmatprep.subr.bf16.mxu0 0
      %672 = vmatpush1.bf16.msra.mxu0 0
      %673 = vmatprep.subr.bf16.mxu0 0
      %674 = vmatpush1.bf16.msra.mxu0 0
      %675 = vmatprep.subr.bf16.mxu0 0
      %676 = vmatpush1.bf16.msra.mxu0 0
      %677 = vmatprep.subr.bf16.mxu0 0
      %678 = vmatpush1.bf16.msra.mxu0 0
      %679 = vmatprep.mubr.bf16.mxu0 0
      %680 = vmatmul.mubr.bf16.gmra.mrb[0].mxu0 %v590
      %v681 = vpop.f32.mrb[0].mxu0
      %v682 = vadd.f32 0.0, %v681
      %v683 = vpop.f32.mrb[0].mxu0
      %v684 = vadd.f32 0.0, %v683
      %v685 = vpop.f32.mrb[0].mxu0
      %v686 = vadd.f32 0.0, %v685
      %v687 = vpop.f32.mrb[0].mxu0
      %v688 = vadd.f32 0.0, %v687
      %689 = vmatprep.mubr.bf16.mxu0 0
      %690 = vmatmul.mubr.bf16.gmra.mrb[0].mxu0 %v593
      %v691 = vpop.f32.mrb[0].mxu0
      %v692 = vadd.f32 0.0, %v691
      %v693 = vpop.f32.mrb[0].mxu0
      %v694 = vadd.f32 0.0, %v693
      %v695 = vpop.f32.mrb[0].mxu0
      %v696 = vadd.f32 0.0, %v695
      %v697 = vpop.f32.mrb[0].mxu0
      %v698 = vadd.f32 0.0, %v697
      %699 = vmatprep.mubr.bf16.mxu0 0
      %700 = vmatmul.mubr.bf16.gmra.mrb[0].mxu0 %v596
      %v701 = vpop.f32.mrb[0].mxu0
      %v702 = vadd.f32 0.0, %v701
      %v703 = vpop.f32.mrb[0].mxu0
      %v704 = vadd.f32 0.0, %v703
      %v705 = vpop.f32.mrb[0].mxu0
      %v706 = vadd.f32 0.0, %v705
      %v707 = vpop.f32.mrb[0].mxu0
      %v708 = vadd.f32 0.0, %v707
      %709 = vmatprep.mubr.bf16.mxu0 0
      %710 = vmatmul.mubr.bf16.gmra.mrb[0].mxu0 %v599
      %v711 = vpop.f32.mrb[0].mxu0
      %v712 = vadd.f32 0.0, %v711
      %v713 = vpop.f32.mrb[0].mxu0
      %v714 = vadd.f32 0.0, %v713
      %v715 = vpop.f32.mrb[0].mxu0
      %v716 = vadd.f32 0.0, %v715
      %v717 = vpop.f32.mrb[0].mxu0
      %v718 = vadd.f32 0.0, %v717
      %719 = vmatprep.mubr.bf16.mxu0 0
      %720 = vmatmul.mubr.bf16.gmra.mrb[0].mxu0 %v602
      %v721 = vpop.f32.mrb[0].mxu0
      %v722 = vadd.f32 0.0, %v721
      %v723 = vpop.f32.mrb[0].mxu0
      %v724 = vadd.f32 0.0, %v723
      %v725 = vpop.f32.mrb[0].mxu0
      %v726 = vadd.f32 0.0, %v725
      %v727 = vpop.f32.mrb[0].mxu0
      %v728 = vadd.f32 0.0, %v727
      %729 = vmatprep.mubr.bf16.mxu0 0
      %730 = vmatmul.mubr.bf16.gmra.mrb[0].mxu0 %v605
      %v731 = vpop.f32.mrb[0].mxu0
      %v732 = vadd.f32 0.0, %v731
      %v733 = vpop.f32.mrb[0].mxu0
      %v734 = vadd.f32 0.0, %v733
      %v735 = vpop.f32.mrb[0].mxu0
      %v736 = vadd.f32 0.0, %v735
      %v737 = vpop.f32.mrb[0].mxu0
      %v738 = vadd.f32 0.0, %v737
      %739 = vmatprep.mubr.bf16.mxu0 0
      %740 = vmatmul.mubr.bf16.gmra.mrb[0].mxu0 %v608
      %v741 = vpop.f32.mrb[0].mxu0
      %v742 = vadd.f32 0.0, %v741
      %v743 = vpop.f32.mrb[0].mxu0
      %v744 = vadd.f32 0.0, %v743
      %v745 = vpop.f32.mrb[0].mxu0
      %v746 = vadd.f32 0.0, %v745
      %v747 = vpop.f32.mrb[0].mxu0
      %v748 = vadd.f32 0.0, %v747
      %749 = vmatprep.mubr.bf16.mxu0 0
      %750 = vmatmul.mubr.bf16.gmra.mrb[0].mxu0 %v611
      %v751 = vpop.f32.mrb[0].mxu0
      %v752 = vadd.f32 0.0, %v751
      %v753 = vpop.f32.mrb[0].mxu0
      %v754 = vadd.f32 0.0, %v753
      %v755 = vpop.f32.mrb[0].mxu0
      %v756 = vadd.f32 0.0, %v755
      %v757 = vpop.f32.mrb[0].mxu0
      %v758 = vadd.f32 0.0, %v757
      %759 = vmatprep.mubr.bf16.mxu0 0
      %760 = vmatmul.mubr.bf16.gmra.mrb[0].mxu0 %v614
      %v761 = vpop.f32.mrb[0].mxu0
      %v762 = vadd.f32 0.0, %v761
      %v763 = vpop.f32.mrb[0].mxu0
      %v764 = vadd.f32 0.0, %v763
      %v765 = vpop.f32.mrb[0].mxu0
      %v766 = vadd.f32 0.0, %v765
      %v767 = vpop.f32.mrb[0].mxu0
      %v768 = vadd.f32 0.0, %v767
      %769 = vmatprep.mubr.bf16.mxu0 0
      %770 = vmatmul.mubr.bf16.gmra.mrb[0].mxu0 %v617
      %v771 = vpop.f32.mrb[0].mxu0
      %v772 = vadd.f32 0.0, %v771
      %v773 = vpop.f32.mrb[0].mxu0
      %v774 = vadd.f32 0.0, %v773
      %v775 = vpop.f32.mrb[0].mxu0
      %v776 = vadd.f32 0.0, %v775
      %v777 = vpop.f32.mrb[0].mxu0
      %v778 = vadd.f32 0.0, %v777
      %779 = vmatprep.mubr.bf16.mxu0 0
      %780 = vmatmul.mubr.bf16.gmra.mrb[0].mxu0 %v620
      %v781 = vpop.f32.mrb[0].mxu0
      %v782 = vadd.f32 0.0, %v781
      %v783 = vpop.f32.mrb[0].mxu0
      %v784 = vadd.f32 0.0, %v783
      %v785 = vpop.f32.mrb[0].mxu0
      %v786 = vadd.f32 0.0, %v785
      %v787 = vpop.f32.mrb[0].mxu0
      %v788 = vadd.f32 0.0, %v787
      %789 = vmatprep.mubr.bf16.mxu0 0
      %790 = vmatmul.mubr.bf16.gmra.mrb[0].mxu0 %v623
      %v791 = vpop.f32.mrb[0].mxu0
      %v792 = vadd.f32 0.0, %v791
      %v793 = vpop.f32.mrb[0].mxu0
      %v794 = vadd.f32 0.0, %v793
      %v795 = vpop.f32.mrb[0].mxu0
      %v796 = vadd.f32 0.0, %v795
      %v797 = vpop.f32.mrb[0].mxu0
      %v798 = vadd.f32 0.0, %v797
      %799 = vmatprep.mubr.bf16.mxu0 0
      %800 = vmatmul.mubr.bf16.gmra.mrb[0].mxu0 %v626
      %v801 = vpop.f32.mrb[0].mxu0
      %v802 = vadd.f32 0.0, %v801
      %v803 = vpop.f32.mrb[0].mxu0
      %v804 = vadd.f32 0.0, %v803
      %v805 = vpop.f32.mrb[0].mxu0
      %v806 = vadd.f32 0.0, %v805
      %v807 = vpop.f32.mrb[0].mxu0
      %v808 = vadd.f32 0.0, %v807
      %809 = vmatprep.mubr.bf16.mxu0 0
      %810 = vmatmul.mubr.bf16.gmra.mrb[0].mxu0 %v629
      %v811 = vpop.f32.mrb[0].mxu0
      %v812 = vadd.f32 0.0, %v811
      %v813 = vpop.f32.mrb[0].mxu0
      %v814 = vadd.f32 0.0, %v813
      %v815 = vpop.f32.mrb[0].mxu0
      %v816 = vadd.f32 0.0, %v815
      %v817 = vpop.f32.mrb[0].mxu0
      %v818 = vadd.f32 0.0, %v817
      %819 = vmatprep.mubr.bf16.mxu0 0
      %820 = vmatmul.mubr.bf16.gmra.mrb[0].mxu0 %v632
      %v821 = vpop.f32.mrb[0].mxu0
      %v822 = vadd.f32 0.0, %v821
      %v823 = vpop.f32.mrb[0].mxu0
      %v824 = vadd.f32 0.0, %v823
      %v825 = vpop.f32.mrb[0].mxu0
      %v826 = vadd.f32 0.0, %v825
      %v827 = vpop.f32.mrb[0].mxu0
      %v828 = vadd.f32 0.0, %v827
      %829 = vmatprep.mubr.bf16.mxu0 0
      %830 = vmatmul.mubr.bf16.gmra.mrb[0].mxu0 %v635
      %v831 = vpop.f32.mrb[0].mxu0
      %v832 = vadd.f32 0.0, %v831
      %v833 = vpop.f32.mrb[0].mxu0
      %v834 = vadd.f32 0.0, %v833
      %v835 = vpop.f32.mrb[0].mxu0
      %v836 = vadd.f32 0.0, %v835
      %v837 = vpop.f32.mrb[0].mxu0
      %v838 = vadd.f32 0.0, %v837
      %839 = vdwg.mxu0
      %840 = vmatprep.subr.bf16.mxu0 0
      %841 = vmatpush1.bf16.msra.mxu0 %v645
      %842 = vmatprep.subr.bf16.mxu0 0
      %843 = vmatpush1.bf16.msra.mxu0 0
      %844 = vmatprep.subr.bf16.mxu0 0
      %845 = vmatpush1.bf16.msra.mxu0 0
      %846 = vmatprep.subr.bf16.mxu0 0
      %847 = vmatpush1.bf16.msra.mxu0 0
      %848 = vmatprep.subr.bf16.mxu0 0
      %849 = vmatpush1.bf16.msra.mxu0 0
      %850 = vmatprep.subr.bf16.mxu0 0
      %851 = vmatpush1.bf16.msra.mxu0 0
      %852 = vmatprep.subr.bf16.mxu0 0
      %853 = vmatpush1.bf16.msra.mxu0 0
      %854 = vmatprep.subr.bf16.mxu0 0
      %855 = vmatpush1.bf16.msra.mxu0 0
      %856 = vmatprep.subr.bf16.mxu0 0
      %857 = vmatpush1.bf16.msra.mxu0 0
      %858 = vmatprep.subr.bf16.mxu0 0
      %859 = vmatpush1.bf16.msra.mxu0 0
      %860 = vmatprep.subr.bf16.mxu0 0
      %861 = vmatpush1.bf16.msra.mxu0 0
      %862 = vmatprep.subr.bf16.mxu0 0
      %863 = vmatpush1.bf16.msra.mxu0 0
      %864 = vmatprep.subr.bf16.mxu0 0
      %865 = vmatpush1.bf16.msra.mxu0 0
      %866 = vmatprep.subr.bf16.mxu0 0
      %867 = vmatpush1.bf16.msra.mxu0 0
      %868 = vmatprep.subr.bf16.mxu0 0
      %869 = vmatpush1.bf16.msra.mxu0 0
      %870 = vmatprep.subr.bf16.mxu0 0
      %871 = vmatpush1.bf16.msra.mxu0 0
      %872 = vmatprep.mubr.bf16.mxu0 0
      %873 = vmatmul.mubr.bf16.gmra.mrb[0].mxu0 %v590
      %v874 = vpop.f32.mrb[0].mxu0
      %v875 = vadd.f32 0.0, %v874
      %v876 = vpop.f32.mrb[0].mxu0
      %v877 = vpop.f32.mrb[0].mxu0
      %v878 = vadd.f32 0.0, %v877
      %v879 = vpop.f32.mrb[0].mxu0
      %880 = vmatprep.mubr.bf16.mxu0 0
      %881 = vmatmul.mubr.bf16.gmra.mrb[0].mxu0 %v593
      %v882 = vpop.f32.mrb[0].mxu0
      %v883 = vadd.f32 0.0, %v882
      %v884 = vpop.f32.mrb[0].mxu0
      %v885 = vpop.f32.mrb[0].mxu0
      %v886 = vadd.f32 0.0, %v885
      %v887 = vpop.f32.mrb[0].mxu0
      %888 = vmatprep.mubr.bf16.mxu0 0
      %889 = vmatmul.mubr.bf16.gmra.mrb[0].mxu0 %v596
      %v890 = vpop.f32.mrb[0].mxu0
      %v891 = vadd.f32 0.0, %v890
      %v892 = vpop.f32.mrb[0].mxu0
      %v893 = vpop.f32.mrb[0].mxu0
      %v894 = vadd.f32 0.0, %v893
      %v895 = vpop.f32.mrb[0].mxu0
      %896 = vmatprep.mubr.bf16.mxu0 0
      %897 = vmatmul.mubr.bf16.gmra.mrb[0].mxu0 %v599
      %v898 = vpop.f32.mrb[0].mxu0
      %v899 = vadd.f32 0.0, %v898
      %v900 = vpop.f32.mrb[0].mxu0
      %v901 = vpop.f32.mrb[0].mxu0
      %v902 = vadd.f32 0.0, %v901
      %v903 = vpop.f32.mrb[0].mxu0
      %904 = vmatprep.mubr.bf16.mxu0 0
      %905 = vmatmul.mubr.bf16.gmra.mrb[0].mxu0 %v602
      %v906 = vpop.f32.mrb[0].mxu0
      %v907 = vadd.f32 0.0, %v906
      %v908 = vpop.f32.mrb[0].mxu0
      %v909 = vpop.f32.mrb[0].mxu0
      %v910 = vadd.f32 0.0, %v909
      %v911 = vpop.f32.mrb[0].mxu0
      %912 = vmatprep.mubr.bf16.mxu0 0
      %913 = vmatmul.mubr.bf16.gmra.mrb[0].mxu0 %v605
      %v914 = vpop.f32.mrb[0].mxu0
      %v915 = vadd.f32 0.0, %v914
      %v916 = vpop.f32.mrb[0].mxu0
      %v917 = vpop.f32.mrb[0].mxu0
      %v918 = vadd.f32 0.0, %v917
      %v919 = vpop.f32.mrb[0].mxu0
      %920 = vmatprep.mubr.bf16.mxu0 0
      %921 = vmatmul.mubr.bf16.gmra.mrb[0].mxu0 %v608
      %v922 = vpop.f32.mrb[0].mxu0
      %v923 = vadd.f32 0.0, %v922
      %v924 = vpop.f32.mrb[0].mxu0
      %v925 = vpop.f32.mrb[0].mxu0
      %v926 = vadd.f32 0.0, %v925
      %v927 = vpop.f32.mrb[0].mxu0
      %928 = vmatprep.mubr.bf16.mxu0 0
      %929 = vmatmul.mubr.bf16.gmra.mrb[0].mxu0 %v611
      %v930 = vpop.f32.mrb[0].mxu0
      %v931 = vadd.f32 0.0, %v930
      %v932 = vpop.f32.mrb[0].mxu0
      %v933 = vpop.f32.mrb[0].mxu0
      %v934 = vadd.f32 0.0, %v933
      %v935 = vpop.f32.mrb[0].mxu0
      %936 = vmatprep.mubr.bf16.mxu0 0
      %937 = vmatmul.mubr.bf16.gmra.mrb[0].mxu0 %v614
      %v938 = vpop.f32.mrb[0].mxu0
      %v939 = vadd.f32 0.0, %v938
      %v940 = vpop.f32.mrb[0].mxu0
      %v941 = vpop.f32.mrb[0].mxu0
      %v942 = vadd.f32 0.0, %v941
      %v943 = vpop.f32.mrb[0].mxu0
      %944 = vmatprep.mubr.bf16.mxu0 0
      %945 = vmatmul.mubr.bf16.gmra.mrb[0].mxu0 %v617
      %v946 = vpop.f32.mrb[0].mxu0
      %v947 = vadd.f32 0.0, %v946
      %v948 = vpop.f32.mrb[0].mxu0
      %v949 = vpop.f32.mrb[0].mxu0
      %v950 = vadd.f32 0.0, %v949
      %v951 = vpop.f32.mrb[0].mxu0
      %952 = vmatprep.mubr.bf16.mxu0 0
      %953 = vmatmul.mubr.bf16.gmra.mrb[0].mxu0 %v620
      %v954 = vpop.f32.mrb[0].mxu0
      %v955 = vadd.f32 0.0, %v954
      %v956 = vpop.f32.mrb[0].mxu0
      %v957 = vpop.f32.mrb[0].mxu0
      %v958 = vadd.f32 0.0, %v957
      %v959 = vpop.f32.mrb[0].mxu0
      %960 = vmatprep.mubr.bf16.mxu0 0
      %961 = vmatmul.mubr.bf16.gmra.mrb[0].mxu0 %v623
      %v962 = vpop.f32.mrb[0].mxu0
      %v963 = vadd.f32 0.0, %v962
      %v964 = vpop.f32.mrb[0].mxu0
      %v965 = vpop.f32.mrb[0].mxu0
      %v966 = vadd.f32 0.0, %v965
      %v967 = vpop.f32.mrb[0].mxu0
      %968 = vmatprep.mubr.bf16.mxu0 0
      %969 = vmatmul.mubr.bf16.gmra.mrb[0].mxu0 %v626
      %v970 = vpop.f32.mrb[0].mxu0
      %v971 = vadd.f32 0.0, %v970
      %v972 = vpop.f32.mrb[0].mxu0
      %v973 = vpop.f32.mrb[0].mxu0
      %v974 = vadd.f32 0.0, %v973
      %v975 = vpop.f32.mrb[0].mxu0
      %976 = vmatprep.mubr.bf16.mxu0 0
      %977 = vmatmul.mubr.bf16.gmra.mrb[0].mxu0 %v629
      %v978 = vpop.f32.mrb[0].mxu0
      %v979 = vadd.f32 0.0, %v978
      %v980 = vpop.f32.mrb[0].mxu0
      %v981 = vpop.f32.mrb[0].mxu0
      %v982 = vadd.f32 0.0, %v981
      %v983 = vpop.f32.mrb[0].mxu0
      %984 = vmatprep.mubr.bf16.mxu0 0
      %985 = vmatmul.mubr.bf16.gmra.mrb[0].mxu0 %v632
      %v986 = vpop.f32.mrb[0].mxu0
      %v987 = vadd.f32 0.0, %v986
      %v988 = vpop.f32.mrb[0].mxu0
      %v989 = vpop.f32.mrb[0].mxu0
      %v990 = vadd.f32 0.0, %v989
      %v991 = vpop.f32.mrb[0].mxu0
      %992 = vmatprep.mubr.bf16.mxu0 0
      %993 = vmatmul.mubr.bf16.gmra.mrb[0].mxu0 %v635
      %v994 = vpop.f32.mrb[0].mxu0
      %v995 = vadd.f32 0.0, %v994
      %v996 = vpop.f32.mrb[0].mxu0
      %v997 = vpop.f32.mrb[0].mxu0
      %v998 = vadd.f32 0.0, %v997
      %v999 = vpop.f32.mrb[0].mxu0
      %1000 = vdwg.mxu0
      %v1003 = vunpack.c.l.b16 %v575
      %v1004 = vunpack.c.h.b16 %v575
      %v1005 = vunpack.c.l.b16 %v576
      %v1006 = vpack.c.b16 %v1003, %v1003
      %v1007 = vpack.c.b16 %v1004, %v1004
      %v1008 = vpack.c.b16 %v1005, %v1005
      %v1010 = vsel %vm588, %v489, 0
      %v1013 = vsel %vm637, %v1006, 0
      %v1016 = vsel %vm637, %v1007, 0
      %v1019 = vsel %vm637, %v1008, 0
      %1021 = vmatprep.subr.bf16.mxu0 %v1016
      %1022 = vmatpush1.bf16.msra.mxu0 %v1013
      %1023 = vmatprep.subr.bf16.mxu0 0
      %1024 = vmatpush1.bf16.msra.mxu0 0
      %1025 = vmatprep.subr.bf16.mxu0 0
      %1026 = vmatpush1.bf16.msra.mxu0 0
      %1027 = vmatprep.subr.bf16.mxu0 0
      %1028 = vmatpush1.bf16.msra.mxu0 0
      %1029 = vmatprep.subr.bf16.mxu0 0
      %1030 = vmatpush1.bf16.msra.mxu0 0
      %1031 = vmatprep.subr.bf16.mxu0 0
      %1032 = vmatpush1.bf16.msra.mxu0 0
      %1033 = vmatprep.subr.bf16.mxu0 0
      %1034 = vmatpush1.bf16.msra.mxu0 0
      %1035 = vmatprep.subr.bf16.mxu0 0
      %1036 = vmatpush1.bf16.msra.mxu0 0
      %1037 = vmatprep.subr.bf16.mxu0 0
      %1038 = vmatpush1.bf16.msra.mxu0 0
      %1039 = vmatprep.subr.bf16.mxu0 0
      %1040 = vmatpush1.bf16.msra.mxu0 0
      %1041 = vmatprep.subr.bf16.mxu0 0
      %1042 = vmatpush1.bf16.msra.mxu0 0
      %1043 = vmatprep.subr.bf16.mxu0 0
      %1044 = vmatpush1.bf16.msra.mxu0 0
      %1045 = vmatprep.subr.bf16.mxu0 0
      %1046 = vmatpush1.bf16.msra.mxu0 0
      %1047 = vmatprep.subr.bf16.mxu0 0
      %1048 = vmatpush1.bf16.msra.mxu0 0
      %1049 = vmatprep.subr.bf16.mxu0 0
      %1050 = vmatpush1.bf16.msra.mxu0 0
      %1051 = vmatprep.subr.bf16.mxu0 0
      %1052 = vmatpush1.bf16.msra.mxu0 0
      %1053 = vmatprep.mubr.bf16.mxu0 0
      %1054 = vmatmul.mubr.bf16.gmra.mrb[0].mxu0 %v1010
      %v1055 = vpop.f32.mrb[0].mxu0
      %v1056 = vadd.f32 %v682, %v1055
      %v1057 = vpop.f32.mrb[0].mxu0
      %v1058 = vadd.f32 %v684, %v1057
      %v1059 = vpop.f32.mrb[0].mxu0
      %v1060 = vadd.f32 %v686, %v1059
      %v1061 = vpop.f32.mrb[0].mxu0
      %v1062 = vadd.f32 %v688, %v1061
      %1063 = vmatprep.mubr.bf16.mxu0 0
      %1064 = vmatmul.mubr.bf16.gmra.mrb[0].mxu0 %v590
      %v1065 = vpop.f32.mrb[0].mxu0
      %v1066 = vadd.f32 %v692, %v1065
      %v1067 = vpop.f32.mrb[0].mxu0
      %v1068 = vadd.f32 %v694, %v1067
      %v1069 = vpop.f32.mrb[0].mxu0
      %v1070 = vadd.f32 %v696, %v1069
      %v1071 = vpop.f32.mrb[0].mxu0
      %v1072 = vadd.f32 %v698, %v1071
      %1073 = vmatprep.mubr.bf16.mxu0 0
      %1074 = vmatmul.mubr.bf16.gmra.mrb[0].mxu0 %v593
      %v1075 = vpop.f32.mrb[0].mxu0
      %v1076 = vadd.f32 %v702, %v1075
      %v1077 = vpop.f32.mrb[0].mxu0
      %v1078 = vadd.f32 %v704, %v1077
      %v1079 = vpop.f32.mrb[0].mxu0
      %v1080 = vadd.f32 %v706, %v1079
      %v1081 = vpop.f32.mrb[0].mxu0
      %v1082 = vadd.f32 %v708, %v1081
      %1083 = vmatprep.mubr.bf16.mxu0 0
      %1084 = vmatmul.mubr.bf16.gmra.mrb[0].mxu0 %v596
      %v1085 = vpop.f32.mrb[0].mxu0
      %v1086 = vadd.f32 %v712, %v1085
      %v1087 = vpop.f32.mrb[0].mxu0
      %v1088 = vadd.f32 %v714, %v1087
      %v1089 = vpop.f32.mrb[0].mxu0
      %v1090 = vadd.f32 %v716, %v1089
      %v1091 = vpop.f32.mrb[0].mxu0
      %v1092 = vadd.f32 %v718, %v1091
      %1093 = vmatprep.mubr.bf16.mxu0 0
      %1094 = vmatmul.mubr.bf16.gmra.mrb[0].mxu0 %v599
      %v1095 = vpop.f32.mrb[0].mxu0
      %v1096 = vadd.f32 %v722, %v1095
      %v1097 = vpop.f32.mrb[0].mxu0
      %v1098 = vadd.f32 %v724, %v1097
      %v1099 = vpop.f32.mrb[0].mxu0
      %v1100 = vadd.f32 %v726, %v1099
      %v1101 = vpop.f32.mrb[0].mxu0
      %v1102 = vadd.f32 %v728, %v1101
      %1103 = vmatprep.mubr.bf16.mxu0 0
      %1104 = vmatmul.mubr.bf16.gmra.mrb[0].mxu0 %v602
      %v1105 = vpop.f32.mrb[0].mxu0
      %v1106 = vadd.f32 %v732, %v1105
      %v1107 = vpop.f32.mrb[0].mxu0
      %v1108 = vadd.f32 %v734, %v1107
      %v1109 = vpop.f32.mrb[0].mxu0
      %v1110 = vadd.f32 %v736, %v1109
      %v1111 = vpop.f32.mrb[0].mxu0
      %v1112 = vadd.f32 %v738, %v1111
      %1113 = vmatprep.mubr.bf16.mxu0 0
      %1114 = vmatmul.mubr.bf16.gmra.mrb[0].mxu0 %v605
      %v1115 = vpop.f32.mrb[0].mxu0
      %v1116 = vadd.f32 %v742, %v1115
      %v1117 = vpop.f32.mrb[0].mxu0
      %v1118 = vadd.f32 %v744, %v1117
      %v1119 = vpop.f32.mrb[0].mxu0
      %v1120 = vadd.f32 %v746, %v1119
      %v1121 = vpop.f32.mrb[0].mxu0
      %v1122 = vadd.f32 %v748, %v1121
      %1123 = vmatprep.mubr.bf16.mxu0 0
      %1124 = vmatmul.mubr.bf16.gmra.mrb[0].mxu0 %v608
      %v1125 = vpop.f32.mrb[0].mxu0
      %v1126 = vadd.f32 %v752, %v1125
      %v1127 = vpop.f32.mrb[0].mxu0
      %v1128 = vadd.f32 %v754, %v1127
      %v1129 = vpop.f32.mrb[0].mxu0
      %v1130 = vadd.f32 %v756, %v1129
      %v1131 = vpop.f32.mrb[0].mxu0
      %v1132 = vadd.f32 %v758, %v1131
      %1133 = vmatprep.mubr.bf16.mxu0 0
      %1134 = vmatmul.mubr.bf16.gmra.mrb[0].mxu0 %v611
      %v1135 = vpop.f32.mrb[0].mxu0
      %v1136 = vadd.f32 %v762, %v1135
      %v1137 = vpop.f32.mrb[0].mxu0
      %v1138 = vadd.f32 %v764, %v1137
      %v1139 = vpop.f32.mrb[0].mxu0
      %v1140 = vadd.f32 %v766, %v1139
      %v1141 = vpop.f32.mrb[0].mxu0
      %v1142 = vadd.f32 %v768, %v1141
      %1143 = vmatprep.mubr.bf16.mxu0 0
      %1144 = vmatmul.mubr.bf16.gmra.mrb[0].mxu0 %v614
      %v1145 = vpop.f32.mrb[0].mxu0
      %v1146 = vadd.f32 %v772, %v1145
      %v1147 = vpop.f32.mrb[0].mxu0
      %v1148 = vadd.f32 %v774, %v1147
      %v1149 = vpop.f32.mrb[0].mxu0
      %v1150 = vadd.f32 %v776, %v1149
      %v1151 = vpop.f32.mrb[0].mxu0
      %v1152 = vadd.f32 %v778, %v1151
      %1153 = vmatprep.mubr.bf16.mxu0 0
      %1154 = vmatmul.mubr.bf16.gmra.mrb[0].mxu0 %v617
      %v1155 = vpop.f32.mrb[0].mxu0
      %v1156 = vadd.f32 %v782, %v1155
      %v1157 = vpop.f32.mrb[0].mxu0
      %v1158 = vadd.f32 %v784, %v1157
      %v1159 = vpop.f32.mrb[0].mxu0
      %v1160 = vadd.f32 %v786, %v1159
      %v1161 = vpop.f32.mrb[0].mxu0
      %v1162 = vadd.f32 %v788, %v1161
      %1163 = vmatprep.mubr.bf16.mxu0 0
      %1164 = vmatmul.mubr.bf16.gmra.mrb[0].mxu0 %v620
      %v1165 = vpop.f32.mrb[0].mxu0
      %v1166 = vadd.f32 %v792, %v1165
      %v1167 = vpop.f32.mrb[0].mxu0
      %v1168 = vadd.f32 %v794, %v1167
      %v1169 = vpop.f32.mrb[0].mxu0
      %v1170 = vadd.f32 %v796, %v1169
      %v1171 = vpop.f32.mrb[0].mxu0
      %v1172 = vadd.f32 %v798, %v1171
      %1173 = vmatprep.mubr.bf16.mxu0 0
      %1174 = vmatmul.mubr.bf16.gmra.mrb[0].mxu0 %v623
      %v1175 = vpop.f32.mrb[0].mxu0
      %v1176 = vadd.f32 %v802, %v1175
      %v1177 = vpop.f32.mrb[0].mxu0
      %v1178 = vadd.f32 %v804, %v1177
      %v1179 = vpop.f32.mrb[0].mxu0
      %v1180 = vadd.f32 %v806, %v1179
      %v1181 = vpop.f32.mrb[0].mxu0
      %v1182 = vadd.f32 %v808, %v1181
      %1183 = vmatprep.mubr.bf16.mxu0 0
      %1184 = vmatmul.mubr.bf16.gmra.mrb[0].mxu0 %v626
      %v1185 = vpop.f32.mrb[0].mxu0
      %v1186 = vadd.f32 %v812, %v1185
      %v1187 = vpop.f32.mrb[0].mxu0
      %v1188 = vadd.f32 %v814, %v1187
      %v1189 = vpop.f32.mrb[0].mxu0
      %v1190 = vadd.f32 %v816, %v1189
      %v1191 = vpop.f32.mrb[0].mxu0
      %v1192 = vadd.f32 %v818, %v1191
      %1193 = vmatprep.mubr.bf16.mxu0 0
      %1194 = vmatmul.mubr.bf16.gmra.mrb[0].mxu0 %v629
      %v1195 = vpop.f32.mrb[0].mxu0
      %v1196 = vadd.f32 %v822, %v1195
      %v1197 = vpop.f32.mrb[0].mxu0
      %v1198 = vadd.f32 %v824, %v1197
      %v1199 = vpop.f32.mrb[0].mxu0
      %v1200 = vadd.f32 %v826, %v1199
      %v1201 = vpop.f32.mrb[0].mxu0
      %v1202 = vadd.f32 %v828, %v1201
      %1203 = vmatprep.mubr.bf16.mxu0 0
      %1204 = vmatmul.mubr.bf16.gmra.mrb[0].mxu0 %v632
      %v1205 = vpop.f32.mrb[0].mxu0
      %v1206 = vadd.f32 %v832, %v1205
      %v1207 = vpop.f32.mrb[0].mxu0
      %v1208 = vadd.f32 %v834, %v1207
      %v1209 = vpop.f32.mrb[0].mxu0
      %v1210 = vadd.f32 %v836, %v1209
      %v1211 = vpop.f32.mrb[0].mxu0
      %v1212 = vadd.f32 %v838, %v1211
      %1213 = vdwg.mxu0
      %1214 = vmatprep.subr.bf16.mxu0 0
      %1215 = vmatpush1.bf16.msra.mxu0 %v1019
      %1216 = vmatprep.subr.bf16.mxu0 0
      %1217 = vmatpush1.bf16.msra.mxu0 0
      %1218 = vmatprep.subr.bf16.mxu0 0
      %1219 = vmatpush1.bf16.msra.mxu0 0
      %1220 = vmatprep.subr.bf16.mxu0 0
      %1221 = vmatpush1.bf16.msra.mxu0 0
      %1222 = vmatprep.subr.bf16.mxu0 0
      %1223 = vmatpush1.bf16.msra.mxu0 0
      %1224 = vmatprep.subr.bf16.mxu0 0
      %1225 = vmatpush1.bf16.msra.mxu0 0
      %1226 = vmatprep.subr.bf16.mxu0 0
      %1227 = vmatpush1.bf16.msra.mxu0 0
      %1228 = vmatprep.subr.bf16.mxu0 0
      %1229 = vmatpush1.bf16.msra.mxu0 0
      %1230 = vmatprep.subr.bf16.mxu0 0
      %1231 = vmatpush1.bf16.msra.mxu0 0
      %1232 = vmatprep.subr.bf16.mxu0 0
      %1233 = vmatpush1.bf16.msra.mxu0 0
      %1234 = vmatprep.subr.bf16.mxu0 0
      %1235 = vmatpush1.bf16.msra.mxu0 0
      %1236 = vmatprep.subr.bf16.mxu0 0
      %1237 = vmatpush1.bf16.msra.mxu0 0
      %1238 = vmatprep.subr.bf16.mxu0 0
      %1239 = vmatpush1.bf16.msra.mxu0 0
      %1240 = vmatprep.subr.bf16.mxu0 0
      %1241 = vmatpush1.bf16.msra.mxu0 0
      %1242 = vmatprep.subr.bf16.mxu0 0
      %1243 = vmatpush1.bf16.msra.mxu0 0
      %1244 = vmatprep.subr.bf16.mxu0 0
      %1245 = vmatpush1.bf16.msra.mxu0 0
      %1246 = vmatprep.mubr.bf16.mxu0 0
      %1247 = vmatmul.mubr.bf16.gmra.mrb[0].mxu0 %v1010
      %v1248 = vpop.f32.mrb[0].mxu0
      %v1249 = vadd.f32 %v875, %v1248
      %v1250 = vpop.f32.mrb[0].mxu0
      %v1251 = vpop.f32.mrb[0].mxu0
      %v1252 = vadd.f32 %v878, %v1251
      %v1253 = vpop.f32.mrb[0].mxu0
      %1254 = vmatprep.mubr.bf16.mxu0 0
      %1255 = vmatmul.mubr.bf16.gmra.mrb[0].mxu0 %v590
      %v1256 = vpop.f32.mrb[0].mxu0
      %v1257 = vadd.f32 %v883, %v1256
      %v1258 = vpop.f32.mrb[0].mxu0
      %v1259 = vpop.f32.mrb[0].mxu0
      %v1260 = vadd.f32 %v886, %v1259
      %v1261 = vpop.f32.mrb[0].mxu0
      %1262 = vmatprep.mubr.bf16.mxu0 0
      %1263 = vmatmul.mubr.bf16.gmra.mrb[0].mxu0 %v593
      %v1264 = vpop.f32.mrb[0].mxu0
      %v1265 = vadd.f32 %v891, %v1264
      %v1266 = vpop.f32.mrb[0].mxu0
      %v1267 = vpop.f32.mrb[0].mxu0
      %v1268 = vadd.f32 %v894, %v1267
      %v1269 = vpop.f32.mrb[0].mxu0
      %1270 = vmatprep.mubr.bf16.mxu0 0
      %1271 = vmatmul.mubr.bf16.gmra.mrb[0].mxu0 %v596
      %v1272 = vpop.f32.mrb[0].mxu0
      %v1273 = vadd.f32 %v899, %v1272
      %v1274 = vpop.f32.mrb[0].mxu0
      %v1275 = vpop.f32.mrb[0].mxu0
      %v1276 = vadd.f32 %v902, %v1275
      %v1277 = vpop.f32.mrb[0].mxu0
      %1278 = vmatprep.mubr.bf16.mxu0 0
      %1279 = vmatmul.mubr.bf16.gmra.mrb[0].mxu0 %v599
      %v1280 = vpop.f32.mrb[0].mxu0
      %v1281 = vadd.f32 %v907, %v1280
      %v1282 = vpop.f32.mrb[0].mxu0
      %v1283 = vpop.f32.mrb[0].mxu0
      %v1284 = vadd.f32 %v910, %v1283
      %v1285 = vpop.f32.mrb[0].mxu0
      %1286 = vmatprep.mubr.bf16.mxu0 0
      %1287 = vmatmul.mubr.bf16.gmra.mrb[0].mxu0 %v602
      %v1288 = vpop.f32.mrb[0].mxu0
      %v1289 = vadd.f32 %v915, %v1288
      %v1290 = vpop.f32.mrb[0].mxu0
      %v1291 = vpop.f32.mrb[0].mxu0
      %v1292 = vadd.f32 %v918, %v1291
      %v1293 = vpop.f32.mrb[0].mxu0
      %1294 = vmatprep.mubr.bf16.mxu0 0
      %1295 = vmatmul.mubr.bf16.gmra.mrb[0].mxu0 %v605
      %v1296 = vpop.f32.mrb[0].mxu0
      %v1297 = vadd.f32 %v923, %v1296
      %v1298 = vpop.f32.mrb[0].mxu0
      %v1299 = vpop.f32.mrb[0].mxu0
      %v1300 = vadd.f32 %v926, %v1299
      %v1301 = vpop.f32.mrb[0].mxu0
      %1302 = vmatprep.mubr.bf16.mxu0 0
      %1303 = vmatmul.mubr.bf16.gmra.mrb[0].mxu0 %v608
      %v1304 = vpop.f32.mrb[0].mxu0
      %v1305 = vadd.f32 %v931, %v1304
      %v1306 = vpop.f32.mrb[0].mxu0
      %v1307 = vpop.f32.mrb[0].mxu0
      %v1308 = vadd.f32 %v934, %v1307
      %v1309 = vpop.f32.mrb[0].mxu0
      %1310 = vmatprep.mubr.bf16.mxu0 0
      %1311 = vmatmul.mubr.bf16.gmra.mrb[0].mxu0 %v611
      %v1312 = vpop.f32.mrb[0].mxu0
      %v1313 = vadd.f32 %v939, %v1312
      %v1314 = vpop.f32.mrb[0].mxu0
      %v1315 = vpop.f32.mrb[0].mxu0
      %v1316 = vadd.f32 %v942, %v1315
      %v1317 = vpop.f32.mrb[0].mxu0
      %1318 = vmatprep.mubr.bf16.mxu0 0
      %1319 = vmatmul.mubr.bf16.gmra.mrb[0].mxu0 %v614
      %v1320 = vpop.f32.mrb[0].mxu0
      %v1321 = vadd.f32 %v947, %v1320
      %v1322 = vpop.f32.mrb[0].mxu0
      %v1323 = vpop.f32.mrb[0].mxu0
      %v1324 = vadd.f32 %v950, %v1323
      %v1325 = vpop.f32.mrb[0].mxu0
      %1326 = vmatprep.mubr.bf16.mxu0 0
      %1327 = vmatmul.mubr.bf16.gmra.mrb[0].mxu0 %v617
      %v1328 = vpop.f32.mrb[0].mxu0
      %v1329 = vadd.f32 %v955, %v1328
      %v1330 = vpop.f32.mrb[0].mxu0
      %v1331 = vpop.f32.mrb[0].mxu0
      %v1332 = vadd.f32 %v958, %v1331
      %v1333 = vpop.f32.mrb[0].mxu0
      %1334 = vmatprep.mubr.bf16.mxu0 0
      %1335 = vmatmul.mubr.bf16.gmra.mrb[0].mxu0 %v620
      %v1336 = vpop.f32.mrb[0].mxu0
      %v1337 = vadd.f32 %v963, %v1336
      %v1338 = vpop.f32.mrb[0].mxu0
      %v1339 = vpop.f32.mrb[0].mxu0
      %v1340 = vadd.f32 %v966, %v1339
      %v1341 = vpop.f32.mrb[0].mxu0
      %1342 = vmatprep.mubr.bf16.mxu0 0
      %1343 = vmatmul.mubr.bf16.gmra.mrb[0].mxu0 %v623
      %v1344 = vpop.f32.mrb[0].mxu0
      %v1345 = vadd.f32 %v971, %v1344
      %v1346 = vpop.f32.mrb[0].mxu0
      %v1347 = vpop.f32.mrb[0].mxu0
      %v1348 = vadd.f32 %v974, %v1347
      %v1349 = vpop.f32.mrb[0].mxu0
      %1350 = vmatprep.mubr.bf16.mxu0 0
      %1351 = vmatmul.mubr.bf16.gmra.mrb[0].mxu0 %v626
      %v1352 = vpop.f32.mrb[0].mxu0
      %v1353 = vadd.f32 %v979, %v1352
      %v1354 = vpop.f32.mrb[0].mxu0
      %v1355 = vpop.f32.mrb[0].mxu0
      %v1356 = vadd.f32 %v982, %v1355
      %v1357 = vpop.f32.mrb[0].mxu0
      %1358 = vmatprep.mubr.bf16.mxu0 0
      %1359 = vmatmul.mubr.bf16.gmra.mrb[0].mxu0 %v629
      %v1360 = vpop.f32.mrb[0].mxu0
      %v1361 = vadd.f32 %v987, %v1360
      %v1362 = vpop.f32.mrb[0].mxu0
      %v1363 = vpop.f32.mrb[0].mxu0
      %v1364 = vadd.f32 %v990, %v1363
      %v1365 = vpop.f32.mrb[0].mxu0
      %1366 = vmatprep.mubr.bf16.mxu0 0
      %1367 = vmatmul.mubr.bf16.gmra.mrb[0].mxu0 %v632
      %v1368 = vpop.f32.mrb[0].mxu0
      %v1369 = vadd.f32 %v995, %v1368
      %v1370 = vpop.f32.mrb[0].mxu0
      %v1371 = vpop.f32.mrb[0].mxu0
      %v1372 = vadd.f32 %v998, %v1371
      %v1373 = vpop.f32.mrb[0].mxu0
      %1374 = vdwg.mxu0
      %s1375 = scalar_lea.vmem %s3, 24
      %v1376 = vld [vmem:[%s1375] sm:$0xff]
      %v1377 = vld [vmem:[%s1375 + $0x8] sm:$0xf]
      %v1380 = vunpack.c.l.b16 %v1376
      %v1381 = vunpack.c.h.b16 %v1376
      %v1382 = vunpack.c.l.b16 %v1377
      %v1383 = vpack.c.b16 %v1380, %v1380
      %v1384 = vpack.c.b16 %v1381, %v1381
      %v1385 = vpack.c.b16 %v1382, %v1382
      %v1387 = vsel %vm588, %v574, 0
      %v1390 = vsel %vm637, %v1383, 0
      %v1393 = vsel %vm637, %v1384, 0
      %v1396 = vsel %vm637, %v1385, 0
      %1398 = vmatprep.subr.bf16.mxu0 %v1393
      %1399 = vmatpush1.bf16.msra.mxu0 %v1390
      %1400 = vmatprep.subr.bf16.mxu0 0
      %1401 = vmatpush1.bf16.msra.mxu0 0
      %1402 = vmatprep.subr.bf16.mxu0 0
      %1403 = vmatpush1.bf16.msra.mxu0 0
      %1404 = vmatprep.subr.bf16.mxu0 0
      %1405 = vmatpush1.bf16.msra.mxu0 0
      %1406 = vmatprep.subr.bf16.mxu0 0
      %1407 = vmatpush1.bf16.msra.mxu0 0
      %1408 = vmatprep.subr.bf16.mxu0 0
      %1409 = vmatpush1.bf16.msra.mxu0 0
      %1410 = vmatprep.subr.bf16.mxu0 0
      %1411 = vmatpush1.bf16.msra.mxu0 0
      %1412 = vmatprep.subr.bf16.mxu0 0
      %1413 = vmatpush1.bf16.msra.mxu0 0
      %1414 = vmatprep.subr.bf16.mxu0 0
      %1415 = vmatpush1.bf16.msra.mxu0 0
      %1416 = vmatprep.subr.bf16.mxu0 0
      %1417 = vmatpush1.bf16.msra.mxu0 0
      %1418 = vmatprep.subr.bf16.mxu0 0
      %1419 = vmatpush1.bf16.msra.mxu0 0
      %1420 = vmatprep.subr.bf16.mxu0 0
      %1421 = vmatpush1.bf16.msra.mxu0 0
      %1422 = vmatprep.subr.bf16.mxu0 0
      %1423 = vmatpush1.bf16.msra.mxu0 0
      %1424 = vmatprep.subr.bf16.mxu0 0
      %1425 = vmatpush1.bf16.msra.mxu0 0
      %1426 = vmatprep.subr.bf16.mxu0 0
      %1427 = vmatpush1.bf16.msra.mxu0 0
      %1428 = vmatprep.subr.bf16.mxu0 0
      %1429 = vmatpush1.bf16.msra.mxu0 0
      %1430 = vmatprep.mubr.bf16.mxu0 0
      %1431 = vmatmul.mubr.bf16.gmra.mrb[0].mxu0 %v593
      %v1432 = vpop.f32.mrb[0].mxu0
      %v1433 = vadd.f32 0.0, %v1432
      %v1434 = vpop.f32.mrb[0].mxu0
      %v1435 = vadd.f32 0.0, %v1434
      %v1436 = vpop.f32.mrb[0].mxu0
      %v1437 = vadd.f32 0.0, %v1436
      %v1438 = vpop.f32.mrb[0].mxu0
      %v1439 = vadd.f32 0.0, %v1438
      %1440 = vmatprep.mubr.bf16.mxu0 0
      %1441 = vmatmul.mubr.bf16.gmra.mrb[0].mxu0 %v596
      %v1442 = vpop.f32.mrb[0].mxu0
      %v1443 = vadd.f32 0.0, %v1442
      %v1444 = vpop.f32.mrb[0].mxu0
      %v1445 = vadd.f32 0.0, %v1444
      %v1446 = vpop.f32.mrb[0].mxu0
      %v1447 = vadd.f32 0.0, %v1446
      %v1448 = vpop.f32.mrb[0].mxu0
      %v1449 = vadd.f32 0.0, %v1448
      %1450 = vmatprep.mubr.bf16.mxu0 0
      %1451 = vmatmul.mubr.bf16.gmra.mrb[0].mxu0 %v599
      %v1452 = vpop.f32.mrb[0].mxu0
      %v1453 = vadd.f32 0.0, %v1452
      %v1454 = vpop.f32.mrb[0].mxu0
      %v1455 = vadd.f32 0.0, %v1454
      %v1456 = vpop.f32.mrb[0].mxu0
      %v1457 = vadd.f32 0.0, %v1456
      %v1458 = vpop.f32.mrb[0].mxu0
      %v1459 = vadd.f32 0.0, %v1458
      %1460 = vmatprep.mubr.bf16.mxu0 0
      %1461 = vmatmul.mubr.bf16.gmra.mrb[0].mxu0 %v602
      %v1462 = vpop.f32.mrb[0].mxu0
      %v1463 = vadd.f32 0.0, %v1462
      %v1464 = vpop.f32.mrb[0].mxu0
      %v1465 = vadd.f32 0.0, %v1464
      %v1466 = vpop.f32.mrb[0].mxu0
      %v1467 = vadd.f32 0.0, %v1466
      %v1468 = vpop.f32.mrb[0].mxu0
      %v1469 = vadd.f32 0.0, %v1468
      %1470 = vmatprep.mubr.bf16.mxu0 0
      %1471 = vmatmul.mubr.bf16.gmra.mrb[0].mxu0 %v605
      %v1472 = vpop.f32.mrb[0].mxu0
      %v1473 = vadd.f32 0.0, %v1472
      %v1474 = vpop.f32.mrb[0].mxu0
      %v1475 = vadd.f32 0.0, %v1474
      %v1476 = vpop.f32.mrb[0].mxu0
      %v1477 = vadd.f32 0.0, %v1476
      %v1478 = vpop.f32.mrb[0].mxu0
      %v1479 = vadd.f32 0.0, %v1478
      %1480 = vmatprep.mubr.bf16.mxu0 0
      %1481 = vmatmul.mubr.bf16.gmra.mrb[0].mxu0 %v608
      %v1482 = vpop.f32.mrb[0].mxu0
      %v1483 = vadd.f32 0.0, %v1482
      %v1484 = vpop.f32.mrb[0].mxu0
      %v1485 = vadd.f32 0.0, %v1484
      %v1486 = vpop.f32.mrb[0].mxu0
      %v1487 = vadd.f32 0.0, %v1486
      %v1488 = vpop.f32.mrb[0].mxu0
      %v1489 = vadd.f32 0.0, %v1488
      %1490 = vmatprep.mubr.bf16.mxu0 0
      %1491 = vmatmul.mubr.bf16.gmra.mrb[0].mxu0 %v611
      %v1492 = vpop.f32.mrb[0].mxu0
      %v1493 = vadd.f32 0.0, %v1492
      %v1494 = vpop.f32.mrb[0].mxu0
      %v1495 = vadd.f32 0.0, %v1494
      %v1496 = vpop.f32.mrb[0].mxu0
      %v1497 = vadd.f32 0.0, %v1496
      %v1498 = vpop.f32.mrb[0].mxu0
      %v1499 = vadd.f32 0.0, %v1498
      %1500 = vmatprep.mubr.bf16.mxu0 0
      %1501 = vmatmul.mubr.bf16.gmra.mrb[0].mxu0 %v614
      %v1502 = vpop.f32.mrb[0].mxu0
      %v1503 = vadd.f32 0.0, %v1502
      %v1504 = vpop.f32.mrb[0].mxu0
      %v1505 = vadd.f32 0.0, %v1504
      %v1506 = vpop.f32.mrb[0].mxu0
      %v1507 = vadd.f32 0.0, %v1506
      %v1508 = vpop.f32.mrb[0].mxu0
      %v1509 = vadd.f32 0.0, %v1508
      %1510 = vmatprep.mubr.bf16.mxu0 0
      %1511 = vmatmul.mubr.bf16.gmra.mrb[0].mxu0 %v617
      %v1512 = vpop.f32.mrb[0].mxu0
      %v1513 = vadd.f32 0.0, %v1512
      %v1514 = vpop.f32.mrb[0].mxu0
      %v1515 = vadd.f32 0.0, %v1514
      %v1516 = vpop.f32.mrb[0].mxu0
      %v1517 = vadd.f32 0.0, %v1516
      %v1518 = vpop.f32.mrb[0].mxu0
      %v1519 = vadd.f32 0.0, %v1518
      %1520 = vmatprep.mubr.bf16.mxu0 0
      %1521 = vmatmul.mubr.bf16.gmra.mrb[0].mxu0 %v620
      %v1522 = vpop.f32.mrb[0].mxu0
      %v1523 = vadd.f32 0.0, %v1522
      %v1524 = vpop.f32.mrb[0].mxu0
      %v1525 = vadd.f32 0.0, %v1524
      %v1526 = vpop.f32.mrb[0].mxu0
      %v1527 = vadd.f32 0.0, %v1526
      %v1528 = vpop.f32.mrb[0].mxu0
      %v1529 = vadd.f32 0.0, %v1528
      %1530 = vmatprep.mubr.bf16.mxu0 0
      %1531 = vmatmul.mubr.bf16.gmra.mrb[0].mxu0 %v623
      %v1532 = vpop.f32.mrb[0].mxu0
      %v1533 = vadd.f32 0.0, %v1532
      %v1534 = vpop.f32.mrb[0].mxu0
      %v1535 = vadd.f32 0.0, %v1534
      %v1536 = vpop.f32.mrb[0].mxu0
      %v1537 = vadd.f32 0.0, %v1536
      %v1538 = vpop.f32.mrb[0].mxu0
      %v1539 = vadd.f32 0.0, %v1538
      %1540 = vmatprep.mubr.bf16.mxu0 0
      %1541 = vmatmul.mubr.bf16.gmra.mrb[0].mxu0 %v626
      %v1542 = vpop.f32.mrb[0].mxu0
      %v1543 = vadd.f32 0.0, %v1542
      %v1544 = vpop.f32.mrb[0].mxu0
      %v1545 = vadd.f32 0.0, %v1544
      %v1546 = vpop.f32.mrb[0].mxu0
      %v1547 = vadd.f32 0.0, %v1546
      %v1548 = vpop.f32.mrb[0].mxu0
      %v1549 = vadd.f32 0.0, %v1548
      %1550 = vmatprep.mubr.bf16.mxu0 0
      %1551 = vmatmul.mubr.bf16.gmra.mrb[0].mxu0 %v629
      %v1552 = vpop.f32.mrb[0].mxu0
      %v1553 = vadd.f32 0.0, %v1552
      %v1554 = vpop.f32.mrb[0].mxu0
      %v1555 = vadd.f32 0.0, %v1554
      %v1556 = vpop.f32.mrb[0].mxu0
      %v1557 = vadd.f32 0.0, %v1556
      %v1558 = vpop.f32.mrb[0].mxu0
      %v1559 = vadd.f32 0.0, %v1558
      %1560 = vmatprep.mubr.bf16.mxu0 0
      %1561 = vmatmul.mubr.bf16.gmra.mrb[0].mxu0 %v632
      %v1562 = vpop.f32.mrb[0].mxu0
      %v1563 = vadd.f32 0.0, %v1562
      %v1564 = vpop.f32.mrb[0].mxu0
      %v1565 = vadd.f32 0.0, %v1564
      %v1566 = vpop.f32.mrb[0].mxu0
      %v1567 = vadd.f32 0.0, %v1566
      %v1568 = vpop.f32.mrb[0].mxu0
      %v1569 = vadd.f32 0.0, %v1568
      %1570 = vmatprep.mubr.bf16.mxu0 0
      %1571 = vmatmul.mubr.bf16.gmra.mrb[0].mxu0 %v635
      %v1572 = vpop.f32.mrb[0].mxu0
      %v1573 = vadd.f32 0.0, %v1572
      %v1574 = vpop.f32.mrb[0].mxu0
      %v1575 = vadd.f32 0.0, %v1574
      %v1576 = vpop.f32.mrb[0].mxu0
      %v1577 = vadd.f32 0.0, %v1576
      %v1578 = vpop.f32.mrb[0].mxu0
      %v1579 = vadd.f32 0.0, %v1578
      %1580 = vmatprep.mubr.bf16.mxu0 0
      %1581 = vmatmul.mubr.bf16.gmra.mrb[0].mxu0 %v1387
      %v1582 = vpop.f32.mrb[0].mxu0
      %v1583 = vadd.f32 0.0, %v1582
      %v1584 = vpop.f32.mrb[0].mxu0
      %v1585 = vadd.f32 0.0, %v1584
      %v1586 = vpop.f32.mrb[0].mxu0
      %v1587 = vadd.f32 0.0, %v1586
      %v1588 = vpop.f32.mrb[0].mxu0
      %v1589 = vadd.f32 0.0, %v1588
      %1590 = vdwg.mxu0
      %1591 = vmatprep.subr.bf16.mxu0 0
      %1592 = vmatpush1.bf16.msra.mxu0 %v1396
      %1593 = vmatprep.subr.bf16.mxu0 0
      %1594 = vmatpush1.bf16.msra.mxu0 0
      %1595 = vmatprep.subr.bf16.mxu0 0
      %1596 = vmatpush1.bf16.msra.mxu0 0
      %1597 = vmatprep.subr.bf16.mxu0 0
      %1598 = vmatpush1.bf16.msra.mxu0 0
      %1599 = vmatprep.subr.bf16.mxu0 0
      %1600 = vmatpush1.bf16.msra.mxu0 0
      %1601 = vmatprep.subr.bf16.mxu0 0
      %1602 = vmatpush1.bf16.msra.mxu0 0
      %1603 = vmatprep.subr.bf16.mxu0 0
      %1604 = vmatpush1.bf16.msra.mxu0 0
      %1605 = vmatprep.subr.bf16.mxu0 0
      %1606 = vmatpush1.bf16.msra.mxu0 0
      %1607 = vmatprep.subr.bf16.mxu0 0
      %1608 = vmatpush1.bf16.msra.mxu0 0
      %1609 = vmatprep.subr.bf16.mxu0 0
      %1610 = vmatpush1.bf16.msra.mxu0 0
      %1611 = vmatprep.subr.bf16.mxu0 0
      %1612 = vmatpush1.bf16.msra.mxu0 0
      %1613 = vmatprep.subr.bf16.mxu0 0
      %1614 = vmatpush1.bf16.msra.mxu0 0
      %1615 = vmatprep.subr.bf16.mxu0 0
      %1616 = vmatpush1.bf16.msra.mxu0 0
      %1617 = vmatprep.subr.bf16.mxu0 0
      %1618 = vmatpush1.bf16.msra.mxu0 0
      %1619 = vmatprep.subr.bf16.mxu0 0
      %1620 = vmatpush1.bf16.msra.mxu0 0
      %1621 = vmatprep.subr.bf16.mxu0 0
      %1622 = vmatpush1.bf16.msra.mxu0 0
      %1623 = vmatprep.mubr.bf16.mxu0 0
      %1624 = vmatmul.mubr.bf16.gmra.mrb[0].mxu0 %v593
      %v1625 = vpop.f32.mrb[0].mxu0
      %v1626 = vadd.f32 0.0, %v1625
      %v1627 = vpop.f32.mrb[0].mxu0
      %v1628 = vpop.f32.mrb[0].mxu0
      %v1629 = vadd.f32 0.0, %v1628
      %v1630 = vpop.f32.mrb[0].mxu0
      %1631 = vmatprep.mubr.bf16.mxu0 0
      %1632 = vmatmul.mubr.bf16.gmra.mrb[0].mxu0 %v596
      %v1633 = vpop.f32.mrb[0].mxu0
      %v1634 = vadd.f32 0.0, %v1633
      %v1635 = vpop.f32.mrb[0].mxu0
      %v1636 = vpop.f32.mrb[0].mxu0
      %v1637 = vadd.f32 0.0, %v1636
      %v1638 = vpop.f32.mrb[0].mxu0
      %1639 = vmatprep.mubr.bf16.mxu0 0
      %1640 = vmatmul.mubr.bf16.gmra.mrb[0].mxu0 %v599
      %v1641 = vpop.f32.mrb[0].mxu0
      %v1642 = vadd.f32 0.0, %v1641
      %v1643 = vpop.f32.mrb[0].mxu0
      %v1644 = vpop.f32.mrb[0].mxu0
      %v1645 = vadd.f32 0.0, %v1644
      %v1646 = vpop.f32.mrb[0].mxu0
      %1647 = vmatprep.mubr.bf16.mxu0 0
      %1648 = vmatmul.mubr.bf16.gmra.mrb[0].mxu0 %v602
      %v1649 = vpop.f32.mrb[0].mxu0
      %v1650 = vadd.f32 0.0, %v1649
      %v1651 = vpop.f32.mrb[0].mxu0
      %v1652 = vpop.f32.mrb[0].mxu0
      %v1653 = vadd.f32 0.0, %v1652
      %v1654 = vpop.f32.mrb[0].mxu0
      %1655 = vmatprep.mubr.bf16.mxu0 0
      %1656 = vmatmul.mubr.bf16.gmra.mrb[0].mxu0 %v605
      %v1657 = vpop.f32.mrb[0].mxu0
      %v1658 = vadd.f32 0.0, %v1657
      %v1659 = vpop.f32.mrb[0].mxu0
      %v1660 = vpop.f32.mrb[0].mxu0
      %v1661 = vadd.f32 0.0, %v1660
      %v1662 = vpop.f32.mrb[0].mxu0
      %1663 = vmatprep.mubr.bf16.mxu0 0
      %1664 = vmatmul.mubr.bf16.gmra.mrb[0].mxu0 %v608
      %v1665 = vpop.f32.mrb[0].mxu0
      %v1666 = vadd.f32 0.0, %v1665
      %v1667 = vpop.f32.mrb[0].mxu0
      %v1668 = vpop.f32.mrb[0].mxu0
      %v1669 = vadd.f32 0.0, %v1668
      %v1670 = vpop.f32.mrb[0].mxu0
      %1671 = vmatprep.mubr.bf16.mxu0 0
      %1672 = vmatmul.mubr.bf16.gmra.mrb[0].mxu0 %v611
      %v1673 = vpop.f32.mrb[0].mxu0
      %v1674 = vadd.f32 0.0, %v1673
      %v1675 = vpop.f32.mrb[0].mxu0
      %v1676 = vpop.f32.mrb[0].mxu0
      %v1677 = vadd.f32 0.0, %v1676
      %v1678 = vpop.f32.mrb[0].mxu0
      %1679 = vmatprep.mubr.bf16.mxu0 0
      %1680 = vmatmul.mubr.bf16.gmra.mrb[0].mxu0 %v614
      %v1681 = vpop.f32.mrb[0].mxu0
      %v1682 = vadd.f32 0.0, %v1681
      %v1683 = vpop.f32.mrb[0].mxu0
      %v1684 = vpop.f32.mrb[0].mxu0
      %v1685 = vadd.f32 0.0, %v1684
      %v1686 = vpop.f32.mrb[0].mxu0
      %1687 = vmatprep.mubr.bf16.mxu0 0
      %1688 = vmatmul.mubr.bf16.gmra.mrb[0].mxu0 %v617
      %v1689 = vpop.f32.mrb[0].mxu0
      %v1690 = vadd.f32 0.0, %v1689
      %v1691 = vpop.f32.mrb[0].mxu0
      %v1692 = vpop.f32.mrb[0].mxu0
      %v1693 = vadd.f32 0.0, %v1692
      %v1694 = vpop.f32.mrb[0].mxu0
      %1695 = vmatprep.mubr.bf16.mxu0 0
      %1696 = vmatmul.mubr.bf16.gmra.mrb[0].mxu0 %v620
      %v1697 = vpop.f32.mrb[0].mxu0
      %v1698 = vadd.f32 0.0, %v1697
      %v1699 = vpop.f32.mrb[0].mxu0
      %v1700 = vpop.f32.mrb[0].mxu0
      %v1701 = vadd.f32 0.0, %v1700
      %v1702 = vpop.f32.mrb[0].mxu0
      %1703 = vmatprep.mubr.bf16.mxu0 0
      %1704 = vmatmul.mubr.bf16.gmra.mrb[0].mxu0 %v623
      %v1705 = vpop.f32.mrb[0].mxu0
      %v1706 = vadd.f32 0.0, %v1705
      %v1707 = vpop.f32.mrb[0].mxu0
      %v1708 = vpop.f32.mrb[0].mxu0
      %v1709 = vadd.f32 0.0, %v1708
      %v1710 = vpop.f32.mrb[0].mxu0
      %1711 = vmatprep.mubr.bf16.mxu0 0
      %1712 = vmatmul.mubr.bf16.gmra.mrb[0].mxu0 %v626
      %v1713 = vpop.f32.mrb[0].mxu0
      %v1714 = vadd.f32 0.0, %v1713
      %v1715 = vpop.f32.mrb[0].mxu0
      %v1716 = vpop.f32.mrb[0].mxu0
      %v1717 = vadd.f32 0.0, %v1716
      %v1718 = vpop.f32.mrb[0].mxu0
      %1719 = vmatprep.mubr.bf16.mxu0 0
      %1720 = vmatmul.mubr.bf16.gmra.mrb[0].mxu0 %v629
      %v1721 = vpop.f32.mrb[0].mxu0
      %v1722 = vadd.f32 0.0, %v1721
      %v1723 = vpop.f32.mrb[0].mxu0
      %v1724 = vpop.f32.mrb[0].mxu0
      %v1725 = vadd.f32 0.0, %v1724
      %v1726 = vpop.f32.mrb[0].mxu0
      %1727 = vmatprep.mubr.bf16.mxu0 0
      %1728 = vmatmul.mubr.bf16.gmra.mrb[0].mxu0 %v632
      %v1729 = vpop.f32.mrb[0].mxu0
      %v1730 = vadd.f32 0.0, %v1729
      %v1731 = vpop.f32.mrb[0].mxu0
      %v1732 = vpop.f32.mrb[0].mxu0
      %v1733 = vadd.f32 0.0, %v1732
      %v1734 = vpop.f32.mrb[0].mxu0
      %1735 = vmatprep.mubr.bf16.mxu0 0
      %1736 = vmatmul.mubr.bf16.gmra.mrb[0].mxu0 %v635
      %v1737 = vpop.f32.mrb[0].mxu0
      %v1738 = vadd.f32 0.0, %v1737
      %v1739 = vpop.f32.mrb[0].mxu0
      %v1740 = vpop.f32.mrb[0].mxu0
      %v1741 = vadd.f32 0.0, %v1740
      %v1742 = vpop.f32.mrb[0].mxu0
      %1743 = vmatprep.mubr.bf16.mxu0 0
      %1744 = vmatmul.mubr.bf16.gmra.mrb[0].mxu0 %v1387
      %v1745 = vpop.f32.mrb[0].mxu0
      %v1746 = vadd.f32 0.0, %v1745
      %v1747 = vpop.f32.mrb[0].mxu0
      %v1748 = vpop.f32.mrb[0].mxu0
      %v1749 = vadd.f32 0.0, %v1748
      %v1750 = vpop.f32.mrb[0].mxu0
      %1751 = vdwg.mxu0
      %v1752 = vadd.f32 %v1056, %v1433
      %v1753 = vadd.f32 %v1058, %v1435
      %v1754 = vadd.f32 %v1249, %v1626
      %v1755 = vadd.f32 %v1060, %v1437
      %v1756 = vadd.f32 %v1062, %v1439
      %v1757 = vadd.f32 %v1252, %v1629
      %v1758 = vadd.f32 %v1066, %v1443
      %v1759 = vadd.f32 %v1068, %v1445
      %v1760 = vadd.f32 %v1257, %v1634
      %v1761 = vadd.f32 %v1070, %v1447
      %v1762 = vadd.f32 %v1072, %v1449
      %v1763 = vadd.f32 %v1260, %v1637
      %v1764 = vadd.f32 %v1076, %v1453
      %v1765 = vadd.f32 %v1078, %v1455
      %v1766 = vadd.f32 %v1265, %v1642
      %v1767 = vadd.f32 %v1080, %v1457
      %v1768 = vadd.f32 %v1082, %v1459
      %v1769 = vadd.f32 %v1268, %v1645
      %v1770 = vadd.f32 %v1086, %v1463
      %v1771 = vadd.f32 %v1088, %v1465
      %v1772 = vadd.f32 %v1273, %v1650
      %v1773 = vadd.f32 %v1090, %v1467
      %v1774 = vadd.f32 %v1092, %v1469
      %v1775 = vadd.f32 %v1276, %v1653
      %v1776 = vadd.f32 %v1096, %v1473
      %v1777 = vadd.f32 %v1098, %v1475
      %v1778 = vadd.f32 %v1281, %v1658
      %v1779 = vadd.f32 %v1100, %v1477
      %v1780 = vadd.f32 %v1102, %v1479
      %v1781 = vadd.f32 %v1284, %v1661
      %v1782 = vadd.f32 %v1106, %v1483
      %v1783 = vadd.f32 %v1108, %v1485
      %v1784 = vadd.f32 %v1289, %v1666
      %v1785 = vadd.f32 %v1110, %v1487
      %v1786 = vadd.f32 %v1112, %v1489
      %v1787 = vadd.f32 %v1292, %v1669
      %v1788 = vadd.f32 %v1116, %v1493
      %v1789 = vadd.f32 %v1118, %v1495
      %v1790 = vadd.f32 %v1297, %v1674
      %v1791 = vadd.f32 %v1120, %v1497
      %v1792 = vadd.f32 %v1122, %v1499
      %v1793 = vadd.f32 %v1300, %v1677
      %v1794 = vadd.f32 %v1126, %v1503
      %v1795 = vadd.f32 %v1128, %v1505
      %v1796 = vadd.f32 %v1305, %v1682
      %v1797 = vadd.f32 %v1130, %v1507
      %v1798 = vadd.f32 %v1132, %v1509
      %v1799 = vadd.f32 %v1308, %v1685
      %v1800 = vadd.f32 %v1136, %v1513
      %v1801 = vadd.f32 %v1138, %v1515
      %v1802 = vadd.f32 %v1313, %v1690
      %v1803 = vadd.f32 %v1140, %v1517
      %v1804 = vadd.f32 %v1142, %v1519
      %v1805 = vadd.f32 %v1316, %v1693
      %v1806 = vadd.f32 %v1146, %v1523
      %v1807 = vadd.f32 %v1148, %v1525
      %v1808 = vadd.f32 %v1321, %v1698
      %v1809 = vadd.f32 %v1150, %v1527
      %v1810 = vadd.f32 %v1152, %v1529
      %v1811 = vadd.f32 %v1324, %v1701
      %v1812 = vadd.f32 %v1156, %v1533
      %v1813 = vadd.f32 %v1158, %v1535
      %v1814 = vadd.f32 %v1329, %v1706
      %v1815 = vadd.f32 %v1160, %v1537
      %v1816 = vadd.f32 %v1162, %v1539
      %v1817 = vadd.f32 %v1332, %v1709
      %v1818 = vadd.f32 %v1166, %v1543
      %v1819 = vadd.f32 %v1168, %v1545
      %v1820 = vadd.f32 %v1337, %v1714
      %v1821 = vadd.f32 %v1170, %v1547
      %v1822 = vadd.f32 %v1172, %v1549
      %v1823 = vadd.f32 %v1340, %v1717
      %v1824 = vadd.f32 %v1176, %v1553
      %v1825 = vadd.f32 %v1178, %v1555
      %v1826 = vadd.f32 %v1345, %v1722
      %v1827 = vadd.f32 %v1180, %v1557
      %v1828 = vadd.f32 %v1182, %v1559
      %v1829 = vadd.f32 %v1348, %v1725
      %v1830 = vadd.f32 %v1186, %v1563
      %v1831 = vadd.f32 %v1188, %v1565
      %v1832 = vadd.f32 %v1353, %v1730
      %v1833 = vadd.f32 %v1190, %v1567
      %v1834 = vadd.f32 %v1192, %v1569
      %v1835 = vadd.f32 %v1356, %v1733
      %v1836 = vadd.f32 %v1196, %v1573
      %v1837 = vadd.f32 %v1198, %v1575
      %v1838 = vadd.f32 %v1361, %v1738
      %v1839 = vadd.f32 %v1200, %v1577
      %v1840 = vadd.f32 %v1202, %v1579
      %v1841 = vadd.f32 %v1364, %v1741
      %v1842 = vadd.f32 %v1206, %v1583
      %v1843 = vadd.f32 %v1208, %v1585
      %v1844 = vadd.f32 %v1369, %v1746
      %v1845 = vadd.f32 %v1210, %v1587
      %v1846 = vadd.f32 %v1212, %v1589
      %v1847 = vadd.f32 %v1372, %v1749
      %v1848 = vlaneseq
      %v1849 = vshrl.u32 %v1848, 7
      %v1850 = vadd.s32 %v1849, 8
      %v1851 = vadd.s32 %v1849, 16
      %v1852 = vadd.s32 %v1849, 24
      %v1853 = vadd.s32 %v1849, 32
      %v1854 = vadd.s32 %v1849, 40
      %v1855 = vadd.s32 %v1849, 48
      %v1856 = vadd.s32 %v1849, 56
      %v1857 = vadd.s32 %v1849, 64
      %v1858 = vadd.s32 %v1849, 72
      %v1859 = vadd.s32 %v1849, 80
      %v1860 = vadd.s32 %v1849, 88
      %v1861 = vadd.s32 %v1849, 96
      %v1862 = vadd.s32 %v1849, 104
      %v1863 = vadd.s32 %v1849, 112
      %v1864 = vadd.s32 %v1849, 120
      %v1865 = vadd.s32 %v1849, 128
      %v1866 = vadd.s32 %v1849, 136
      %v1867 = vadd.s32 %v1849, 144
      %v1868 = vadd.s32 %v1849, 152
      %v1869 = vadd.s32 %v1849, 160
      %v1870 = vadd.s32 %v1849, 168
      %v1871 = vadd.s32 %v1849, 176
      %v1872 = vadd.s32 %v1849, 184
      %v1873 = vadd.s32 %v1849, 192
      %v1874 = vadd.s32 %v1849, 200
      %v1875 = vadd.s32 %v1849, 208
      %v1876 = vadd.s32 %v1849, 216
      %v1877 = vadd.s32 %v1849, 224
      %v1878 = vadd.s32 %v1849, 232
      %v1879 = vadd.s32 %v1849, 240
      %v1880 = vadd.s32 %v1849, 248
      %vm1881 = vcmp.lt.s32.totalorder %v1849, 0
      %v1882 = vsub.s32 0, %v1849
      %v1883 = vsel %vm1881, %v1882, %v1849
      %v1884 = vshrl.u32 %v1883, 4
      %v1885 = vand.u32 %v1883, 15
      %v1886 = vsub.s32 0, %v1885
      %v1887 = vsel %vm1881, %v1886, %v1885
      %vm1888 = vcmp.lt.s32.totalorder %v1850, 0
      %v1889 = vsub.s32 0, %v1850
      %v1890 = vsel %vm1888, %v1889, %v1850
      %v1891 = vshrl.u32 %v1890, 4
      %v1892 = vand.u32 %v1890, 15
      %v1893 = vsub.s32 0, %v1892
      %v1894 = vsel %vm1888, %v1893, %v1892
      %vm1895 = vcmp.lt.s32.totalorder %v1851, 0
      %v1896 = vsub.s32 0, %v1851
      %v1897 = vsel %vm1895, %v1896, %v1851
      %v1898 = vshrl.u32 %v1897, 4
      %v1899 = vand.u32 %v1897, 15
      %v1900 = vsub.s32 0, %v1899
      %v1901 = vsel %vm1895, %v1900, %v1899
      %vm1902 = vcmp.lt.s32.totalorder %v1852, 0
      %v1903 = vsub.s32 0, %v1852
      %v1904 = vsel %vm1902, %v1903, %v1852
      %v1905 = vshrl.u32 %v1904, 4
      %v1906 = vand.u32 %v1904, 15
      %v1907 = vsub.s32 0, %v1906
      %v1908 = vsel %vm1902, %v1907, %v1906
      %vm1909 = vcmp.lt.s32.totalorder %v1853, 0
      %v1910 = vsub.s32 0, %v1853
      %v1911 = vsel %vm1909, %v1910, %v1853
      %v1912 = vshrl.u32 %v1911, 4
      %v1913 = vand.u32 %v1911, 15
      %v1914 = vsub.s32 0, %v1913
      %v1915 = vsel %vm1909, %v1914, %v1913
      %vm1916 = vcmp.lt.s32.totalorder %v1854, 0
      %v1917 = vsub.s32 0, %v1854
      %v1918 = vsel %vm1916, %v1917, %v1854
      %v1919 = vshrl.u32 %v1918, 4
      %v1920 = vand.u32 %v1918, 15
      %v1921 = vsub.s32 0, %v1920
      %v1922 = vsel %vm1916, %v1921, %v1920
      %vm1923 = vcmp.lt.s32.totalorder %v1855, 0
      %v1924 = vsub.s32 0, %v1855
      %v1925 = vsel %vm1923, %v1924, %v1855
      %v1926 = vshrl.u32 %v1925, 4
      %v1927 = vand.u32 %v1925, 15
      %v1928 = vsub.s32 0, %v1927
      %v1929 = vsel %vm1923, %v1928, %v1927
      %vm1930 = vcmp.lt.s32.totalorder %v1856, 0
      %v1931 = vsub.s32 0, %v1856
      %v1932 = vsel %vm1930, %v1931, %v1856
      %v1933 = vshrl.u32 %v1932, 4
      %v1934 = vand.u32 %v1932, 15
      %v1935 = vsub.s32 0, %v1934
      %v1936 = vsel %vm1930, %v1935, %v1934
      %vm1937 = vcmp.lt.s32.totalorder %v1857, 0
      %v1938 = vsub.s32 0, %v1857
      %v1939 = vsel %vm1937, %v1938, %v1857
      %v1940 = vshrl.u32 %v1939, 4
      %v1941 = vand.u32 %v1939, 15
      %v1942 = vsub.s32 0, %v1941
      %v1943 = vsel %vm1937, %v1942, %v1941
      %vm1944 = vcmp.lt.s32.totalorder %v1858, 0
      %v1945 = vsub.s32 0, %v1858
      %v1946 = vsel %vm1944, %v1945, %v1858
      %v1947 = vshrl.u32 %v1946, 4
      %v1948 = vand.u32 %v1946, 15
      %v1949 = vsub.s32 0, %v1948
      %v1950 = vsel %vm1944, %v1949, %v1948
      %vm1951 = vcmp.lt.s32.totalorder %v1859, 0
      %v1952 = vsub.s32 0, %v1859
      %v1953 = vsel %vm1951, %v1952, %v1859
      %v1954 = vshrl.u32 %v1953, 4
      %v1955 = vand.u32 %v1953, 15
      %v1956 = vsub.s32 0, %v1955
      %v1957 = vsel %vm1951, %v1956, %v1955
      %vm1958 = vcmp.lt.s32.totalorder %v1860, 0
      %v1959 = vsub.s32 0, %v1860
      %v1960 = vsel %vm1958, %v1959, %v1860
      %v1961 = vshrl.u32 %v1960, 4
      %v1962 = vand.u32 %v1960, 15
      %v1963 = vsub.s32 0, %v1962
      %v1964 = vsel %vm1958, %v1963, %v1962
      %vm1965 = vcmp.lt.s32.totalorder %v1861, 0
      %v1966 = vsub.s32 0, %v1861
      %v1967 = vsel %vm1965, %v1966, %v1861
      %v1968 = vshrl.u32 %v1967, 4
      %v1969 = vand.u32 %v1967, 15
      %v1970 = vsub.s32 0, %v1969
      %v1971 = vsel %vm1965, %v1970, %v1969
      %vm1972 = vcmp.lt.s32.totalorder %v1862, 0
      %v1973 = vsub.s32 0, %v1862
      %v1974 = vsel %vm1972, %v1973, %v1862
      %v1975 = vshrl.u32 %v1974, 4
      %v1976 = vand.u32 %v1974, 15
      %v1977 = vsub.s32 0, %v1976
      %v1978 = vsel %vm1972, %v1977, %v1976
      %vm1979 = vcmp.lt.s32.totalorder %v1863, 0
      %v1980 = vsub.s32 0, %v1863
      %v1981 = vsel %vm1979, %v1980, %v1863
      %v1982 = vshrl.u32 %v1981, 4
      %v1983 = vand.u32 %v1981, 15
      %v1984 = vsub.s32 0, %v1983
      %v1985 = vsel %vm1979, %v1984, %v1983
      %vm1986 = vcmp.lt.s32.totalorder %v1864, 0
      %v1987 = vsub.s32 0, %v1864
      %v1988 = vsel %vm1986, %v1987, %v1864
      %v1989 = vshrl.u32 %v1988, 4
      %v1990 = vand.u32 %v1988, 15
      %v1991 = vsub.s32 0, %v1990
      %v1992 = vsel %vm1986, %v1991, %v1990
      %vm1993 = vcmp.lt.s32.totalorder %v1865, 0
      %v1994 = vsub.s32 0, %v1865
      %v1995 = vsel %vm1993, %v1994, %v1865
      %v1996 = vshrl.u32 %v1995, 4
      %v1997 = vand.u32 %v1995, 15
      %v1998 = vsub.s32 0, %v1997
      %v1999 = vsel %vm1993, %v1998, %v1997
      %vm2000 = vcmp.lt.s32.totalorder %v1866, 0
      %v2001 = vsub.s32 0, %v1866
      %v2002 = vsel %vm2000, %v2001, %v1866
      %v2003 = vshrl.u32 %v2002, 4
      %v2004 = vand.u32 %v2002, 15
      %v2005 = vsub.s32 0, %v2004
      %v2006 = vsel %vm2000, %v2005, %v2004
      %vm2007 = vcmp.lt.s32.totalorder %v1867, 0
      %v2008 = vsub.s32 0, %v1867
      %v2009 = vsel %vm2007, %v2008, %v1867
      %v2010 = vshrl.u32 %v2009, 4
      %v2011 = vand.u32 %v2009, 15
      %v2012 = vsub.s32 0, %v2011
      %v2013 = vsel %vm2007, %v2012, %v2011
      %vm2014 = vcmp.lt.s32.totalorder %v1868, 0
      %v2015 = vsub.s32 0, %v1868
      %v2016 = vsel %vm2014, %v2015, %v1868
      %v2017 = vshrl.u32 %v2016, 4
      %v2018 = vand.u32 %v2016, 15
      %v2019 = vsub.s32 0, %v2018
      %v2020 = vsel %vm2014, %v2019, %v2018
      %vm2021 = vcmp.lt.s32.totalorder %v1869, 0
      %v2022 = vsub.s32 0, %v1869
      %v2023 = vsel %vm2021, %v2022, %v1869
      %v2024 = vshrl.u32 %v2023, 4
      %v2025 = vand.u32 %v2023, 15
      %v2026 = vsub.s32 0, %v2025
      %v2027 = vsel %vm2021, %v2026, %v2025
      %vm2028 = vcmp.lt.s32.totalorder %v1870, 0
      %v2029 = vsub.s32 0, %v1870
      %v2030 = vsel %vm2028, %v2029, %v1870
      %v2031 = vshrl.u32 %v2030, 4
      %v2032 = vand.u32 %v2030, 15
      %v2033 = vsub.s32 0, %v2032
      %v2034 = vsel %vm2028, %v2033, %v2032
      %vm2035 = vcmp.lt.s32.totalorder %v1871, 0
      %v2036 = vsub.s32 0, %v1871
      %v2037 = vsel %vm2035, %v2036, %v1871
      %v2038 = vshrl.u32 %v2037, 4
      %v2039 = vand.u32 %v2037, 15
      %v2040 = vsub.s32 0, %v2039
      %v2041 = vsel %vm2035, %v2040, %v2039
      %vm2042 = vcmp.lt.s32.totalorder %v1872, 0
      %v2043 = vsub.s32 0, %v1872
      %v2044 = vsel %vm2042, %v2043, %v1872
      %v2045 = vshrl.u32 %v2044, 4
      %v2046 = vand.u32 %v2044, 15
      %v2047 = vsub.s32 0, %v2046
      %v2048 = vsel %vm2042, %v2047, %v2046
      %vm2049 = vcmp.lt.s32.totalorder %v1873, 0
      %v2050 = vsub.s32 0, %v1873
      %v2051 = vsel %vm2049, %v2050, %v1873
      %v2052 = vshrl.u32 %v2051, 4
      %v2053 = vand.u32 %v2051, 15
      %v2054 = vsub.s32 0, %v2053
      %v2055 = vsel %vm2049, %v2054, %v2053
      %vm2056 = vcmp.lt.s32.totalorder %v1874, 0
      %v2057 = vsub.s32 0, %v1874
      %v2058 = vsel %vm2056, %v2057, %v1874
      %v2059 = vshrl.u32 %v2058, 4
      %v2060 = vand.u32 %v2058, 15
      %v2061 = vsub.s32 0, %v2060
      %v2062 = vsel %vm2056, %v2061, %v2060
      %vm2063 = vcmp.lt.s32.totalorder %v1875, 0
      %v2064 = vsub.s32 0, %v1875
      %v2065 = vsel %vm2063, %v2064, %v1875
      %v2066 = vshrl.u32 %v2065, 4
      %v2067 = vand.u32 %v2065, 15
      %v2068 = vsub.s32 0, %v2067
      %v2069 = vsel %vm2063, %v2068, %v2067
      %vm2070 = vcmp.lt.s32.totalorder %v1876, 0
      %v2071 = vsub.s32 0, %v1876
      %v2072 = vsel %vm2070, %v2071, %v1876
      %v2073 = vshrl.u32 %v2072, 4
      %v2074 = vand.u32 %v2072, 15
      %v2075 = vsub.s32 0, %v2074
      %v2076 = vsel %vm2070, %v2075, %v2074
      %vm2077 = vcmp.lt.s32.totalorder %v1877, 0
      %v2078 = vsub.s32 0, %v1877
      %v2079 = vsel %vm2077, %v2078, %v1877
      %v2080 = vshrl.u32 %v2079, 4
      %v2081 = vand.u32 %v2079, 15
      %v2082 = vsub.s32 0, %v2081
      %v2083 = vsel %vm2077, %v2082, %v2081
      %vm2084 = vcmp.lt.s32.totalorder %v1878, 0
      %v2085 = vsub.s32 0, %v1878
      %v2086 = vsel %vm2084, %v2085, %v1878
      %v2087 = vshrl.u32 %v2086, 4
      %v2088 = vand.u32 %v2086, 15
      %v2089 = vsub.s32 0, %v2088
      %v2090 = vsel %vm2084, %v2089, %v2088
      %vm2091 = vcmp.lt.s32.totalorder %v1879, 0
      %v2092 = vsub.s32 0, %v1879
      %v2093 = vsel %vm2091, %v2092, %v1879
      %v2094 = vshrl.u32 %v2093, 4
      %v2095 = vand.u32 %v2093, 15
      %v2096 = vsub.s32 0, %v2095
      %v2097 = vsel %vm2091, %v2096, %v2095
      %vm2098 = vcmp.lt.s32.totalorder %v1880, 0
      %v2099 = vsub.s32 0, %v1880
      %v2100 = vsel %vm2098, %v2099, %v1880
      %v2101 = vshrl.u32 %v2100, 4
      %v2102 = vand.u32 %v2100, 15
      %v2103 = vsub.s32 0, %v2102
      %v2104 = vsel %vm2098, %v2103, %v2102
      %vm2105 = vcmp.ne.s32.totalorder %v1887, 0
      %vm2106 = vcmp.ne.s32.totalorder %v1894, 0
      %vm2107 = vcmp.ne.s32.totalorder %v1901, 0
      %vm2108 = vcmp.ne.s32.totalorder %v1908, 0
      %vm2109 = vcmp.ne.s32.totalorder %v1915, 0
      %vm2110 = vcmp.ne.s32.totalorder %v1922, 0
      %vm2111 = vcmp.ne.s32.totalorder %v1929, 0
      %vm2112 = vcmp.ne.s32.totalorder %v1936, 0
      %vm2113 = vcmp.ne.s32.totalorder %v1943, 0
      %vm2114 = vcmp.ne.s32.totalorder %v1950, 0
      %vm2115 = vcmp.ne.s32.totalorder %v1957, 0
      %vm2116 = vcmp.ne.s32.totalorder %v1964, 0
      %vm2117 = vcmp.ne.s32.totalorder %v1971, 0
      %vm2118 = vcmp.ne.s32.totalorder %v1978, 0
      %vm2119 = vcmp.ne.s32.totalorder %v1985, 0
      %vm2120 = vcmp.ne.s32.totalorder %v1992, 0
      %vm2121 = vcmp.ne.s32.totalorder %v1999, 0
      %vm2122 = vcmp.ne.s32.totalorder %v2006, 0
      %vm2123 = vcmp.ne.s32.totalorder %v2013, 0
      %vm2124 = vcmp.ne.s32.totalorder %v2020, 0
      %vm2125 = vcmp.ne.s32.totalorder %v2027, 0
      %vm2126 = vcmp.ne.s32.totalorder %v2034, 0
      %vm2127 = vcmp.ne.s32.totalorder %v2041, 0
      %vm2128 = vcmp.ne.s32.totalorder %v2048, 0
      %vm2129 = vcmp.ne.s32.totalorder %v2055, 0
      %vm2130 = vcmp.ne.s32.totalorder %v2062, 0
      %vm2131 = vcmp.ne.s32.totalorder %v2069, 0
      %vm2132 = vcmp.ne.s32.totalorder %v2076, 0
      %vm2133 = vcmp.ne.s32.totalorder %v2083, 0
      %vm2134 = vcmp.ne.s32.totalorder %v2090, 0
      %vm2135 = vcmp.ne.s32.totalorder %v2097, 0
      %vm2136 = vcmp.ne.s32.totalorder %v2104, 0
      %vm2137 = vcmp.lt.s32.totalorder %v1887, 0
      %vm2138 = vcmp.lt.s32.totalorder %v1894, 0
      %vm2139 = vcmp.lt.s32.totalorder %v1901, 0
      %vm2140 = vcmp.lt.s32.totalorder %v1908, 0
      %vm2141 = vcmp.lt.s32.totalorder %v1915, 0
      %vm2142 = vcmp.lt.s32.totalorder %v1922, 0
      %vm2143 = vcmp.lt.s32.totalorder %v1929, 0
      %vm2144 = vcmp.lt.s32.totalorder %v1936, 0
      %vm2145 = vcmp.lt.s32.totalorder %v1943, 0
      %vm2146 = vcmp.lt.s32.totalorder %v1950, 0
      %vm2147 = vcmp.lt.s32.totalorder %v1957, 0
      %vm2148 = vcmp.lt.s32.totalorder %v1964, 0
      %vm2149 = vcmp.lt.s32.totalorder %v1971, 0
      %vm2150 = vcmp.lt.s32.totalorder %v1978, 0
      %vm2151 = vcmp.lt.s32.totalorder %v1985, 0
      %vm2152 = vcmp.lt.s32.totalorder %v1992, 0
      %vm2153 = vcmp.lt.s32.totalorder %v1999, 0
      %vm2154 = vcmp.lt.s32.totalorder %v2006, 0
      %vm2155 = vcmp.lt.s32.totalorder %v2013, 0
      %vm2156 = vcmp.lt.s32.totalorder %v2020, 0
      %vm2157 = vcmp.lt.s32.totalorder %v2027, 0
      %vm2158 = vcmp.lt.s32.totalorder %v2034, 0
      %vm2159 = vcmp.lt.s32.totalorder %v2041, 0
      %vm2160 = vcmp.lt.s32.totalorder %v2048, 0
      %vm2161 = vcmp.lt.s32.totalorder %v2055, 0
      %vm2162 = vcmp.lt.s32.totalorder %v2062, 0
      %vm2163 = vcmp.lt.s32.totalorder %v2069, 0
      %vm2164 = vcmp.lt.s32.totalorder %v2076, 0
      %vm2165 = vcmp.lt.s32.totalorder %v2083, 0
      %vm2166 = vcmp.lt.s32.totalorder %v2090, 0
      %vm2167 = vcmp.lt.s32.totalorder %v2097, 0
      %vm2168 = vcmp.lt.s32.totalorder %v2104, 0
      %vm2169 = vmand %vm2137, %vm2105
      %vm2170 = vmand %vm2138, %vm2106
      %vm2171 = vmand %vm2139, %vm2107
      %vm2172 = vmand %vm2140, %vm2108
      %vm2173 = vmand %vm2141, %vm2109
      %vm2174 = vmand %vm2142, %vm2110
      %vm2175 = vmand %vm2143, %vm2111
      %vm2176 = vmand %vm2144, %vm2112
      %vm2177 = vmand %vm2145, %vm2113
      %vm2178 = vmand %vm2146, %vm2114
      %vm2179 = vmand %vm2147, %vm2115
      %vm2180 = vmand %vm2148, %vm2116
      %vm2181 = vmand %vm2149, %vm2117
      %vm2182 = vmand %vm2150, %vm2118
      %vm2183 = vmand %vm2151, %vm2119
      %vm2184 = vmand %vm2152, %vm2120
      %vm2185 = vmand %vm2153, %vm2121
      %vm2186 = vmand %vm2154, %vm2122
      %vm2187 = vmand %vm2155, %vm2123
      %vm2188 = vmand %vm2156, %vm2124
      %vm2189 = vmand %vm2157, %vm2125
      %vm2190 = vmand %vm2158, %vm2126
      %vm2191 = vmand %vm2159, %vm2127
      %vm2192 = vmand %vm2160, %vm2128
      %vm2193 = vmand %vm2161, %vm2129
      %vm2194 = vmand %vm2162, %vm2130
      %vm2195 = vmand %vm2163, %vm2131
      %vm2196 = vmand %vm2164, %vm2132
      %vm2197 = vmand %vm2165, %vm2133
      %vm2198 = vmand %vm2166, %vm2134
      %vm2199 = vmand %vm2167, %vm2135
      %vm2200 = vmand %vm2168, %vm2136
      %v2201 = vadd.s32 %v1887, 16
      %v2202 = vadd.s32 %v1894, 16
      %v2203 = vadd.s32 %v1901, 16
      %v2204 = vadd.s32 %v1908, 16
      %v2205 = vadd.s32 %v1915, 16
      %v2206 = vadd.s32 %v1922, 16
      %v2207 = vadd.s32 %v1929, 16
      %v2208 = vadd.s32 %v1936, 16
      %v2209 = vadd.s32 %v1943, 16
      %v2210 = vadd.s32 %v1950, 16
      %v2211 = vadd.s32 %v1957, 16
      %v2212 = vadd.s32 %v1964, 16
      %v2213 = vadd.s32 %v1971, 16
      %v2214 = vadd.s32 %v1978, 16
      %v2215 = vadd.s32 %v1985, 16
      %v2216 = vadd.s32 %v1992, 16
      %v2217 = vadd.s32 %v1999, 16
      %v2218 = vadd.s32 %v2006, 16
      %v2219 = vadd.s32 %v2013, 16
      %v2220 = vadd.s32 %v2020, 16
      %v2221 = vadd.s32 %v2027, 16
      %v2222 = vadd.s32 %v2034, 16
      %v2223 = vadd.s32 %v2041, 16
      %v2224 = vadd.s32 %v2048, 16
      %v2225 = vadd.s32 %v2055, 16
      %v2226 = vadd.s32 %v2062, 16
      %v2227 = vadd.s32 %v2069, 16
      %v2228 = vadd.s32 %v2076, 16
      %v2229 = vadd.s32 %v2083, 16
      %v2230 = vadd.s32 %v2090, 16
      %v2231 = vadd.s32 %v2097, 16
      %v2232 = vadd.s32 %v2104, 16
      %v2233 = vsel %vm2169, %v2201, %v1887
      %v2234 = vsel %vm2170, %v2202, %v1894
      %v2235 = vsel %vm2171, %v2203, %v1901
      %v2236 = vsel %vm2172, %v2204, %v1908
      %v2237 = vsel %vm2173, %v2205, %v1915
      %v2238 = vsel %vm2174, %v2206, %v1922
      %v2239 = vsel %vm2175, %v2207, %v1929
      %v2240 = vsel %vm2176, %v2208, %v1936
      %v2241 = vsel %vm2177, %v2209, %v1943
      %v2242 = vsel %vm2178, %v2210, %v1950
      %v2243 = vsel %vm2179, %v2211, %v1957
      %v2244 = vsel %vm2180, %v2212, %v1964
      %v2245 = vsel %vm2181, %v2213, %v1971
      %v2246 = vsel %vm2182, %v2214, %v1978
      %v2247 = vsel %vm2183, %v2215, %v1985
      %v2248 = vsel %vm2184, %v2216, %v1992
      %v2249 = vsel %vm2185, %v2217, %v1999
      %v2250 = vsel %vm2186, %v2218, %v2006
      %v2251 = vsel %vm2187, %v2219, %v2013
      %v2252 = vsel %vm2188, %v2220, %v2020
      %v2253 = vsel %vm2189, %v2221, %v2027
      %v2254 = vsel %vm2190, %v2222, %v2034
      %v2255 = vsel %vm2191, %v2223, %v2041
      %v2256 = vsel %vm2192, %v2224, %v2048
      %v2257 = vsel %vm2193, %v2225, %v2055
      %v2258 = vsel %vm2194, %v2226, %v2062
      %v2259 = vsel %vm2195, %v2227, %v2069
      %v2260 = vsel %vm2196, %v2228, %v2076
      %v2261 = vsel %vm2197, %v2229, %v2083
      %v2262 = vsel %vm2198, %v2230, %v2090
      %v2263 = vsel %vm2199, %v2231, %v2097
      %v2264 = vsel %vm2200, %v2232, %v2104
      %vm2265 = vcmp.ne.s32.totalorder %v2233, 0
      %vm2266 = vcmp.ne.s32.totalorder %v2234, 0
      %vm2267 = vcmp.ne.s32.totalorder %v2235, 0
      %vm2268 = vcmp.ne.s32.totalorder %v2236, 0
      %vm2269 = vcmp.ne.s32.totalorder %v2237, 0
      %vm2270 = vcmp.ne.s32.totalorder %v2238, 0
      %vm2271 = vcmp.ne.s32.totalorder %v2239, 0
      %vm2272 = vcmp.ne.s32.totalorder %v2240, 0
      %vm2273 = vcmp.ne.s32.totalorder %v2241, 0
      %vm2274 = vcmp.ne.s32.totalorder %v2242, 0
      %vm2275 = vcmp.ne.s32.totalorder %v2243, 0
      %vm2276 = vcmp.ne.s32.totalorder %v2244, 0
      %vm2277 = vcmp.ne.s32.totalorder %v2245, 0
      %vm2278 = vcmp.ne.s32.totalorder %v2246, 0
      %vm2279 = vcmp.ne.s32.totalorder %v2247, 0
      %vm2280 = vcmp.ne.s32.totalorder %v2248, 0
      %vm2281 = vcmp.ne.s32.totalorder %v2249, 0
      %vm2282 = vcmp.ne.s32.totalorder %v2250, 0
      %vm2283 = vcmp.ne.s32.totalorder %v2251, 0
      %vm2284 = vcmp.ne.s32.totalorder %v2252, 0
      %vm2285 = vcmp.ne.s32.totalorder %v2253, 0
      %vm2286 = vcmp.ne.s32.totalorder %v2254, 0
      %vm2287 = vcmp.ne.s32.totalorder %v2255, 0
      %vm2288 = vcmp.ne.s32.totalorder %v2256, 0
      %vm2289 = vcmp.ne.s32.totalorder %v2257, 0
      %vm2290 = vcmp.ne.s32.totalorder %v2258, 0
      %vm2291 = vcmp.ne.s32.totalorder %v2259, 0
      %vm2292 = vcmp.ne.s32.totalorder %v2260, 0
      %vm2293 = vcmp.ne.s32.totalorder %v2261, 0
      %vm2294 = vcmp.ne.s32.totalorder %v2262, 0
      %vm2295 = vcmp.ne.s32.totalorder %v2263, 0
      %vm2296 = vcmp.ne.s32.totalorder %v2264, 0
      %v2297 = vrot.slane %v1752, 7
      %v2298 = vrot.slane %v1755, 7
      %v2299 = vrot.slane %v1758, 7
      %v2300 = vrot.slane %v1761, 7
      %v2301 = vrot.slane %v1764, 7
      %v2302 = vrot.slane %v1767, 7
      %v2303 = vrot.slane %v1770, 7
      %v2304 = vrot.slane %v1773, 7
      %v2305 = vrot.slane %v1776, 7
      %v2306 = vrot.slane %v1779, 7
      %v2307 = vrot.slane %v1782, 7
      %v2308 = vrot.slane %v1785, 7
      %v2309 = vrot.slane %v1788, 7
      %v2310 = vrot.slane %v1791, 7
      %v2311 = vrot.slane %v1794, 7
      %v2312 = vrot.slane %v1797, 7
      %v2313 = vrot.slane %v1800, 7
      %v2314 = vrot.slane %v1803, 7
      %v2315 = vrot.slane %v1806, 7
      %v2316 = vrot.slane %v1809, 7
      %v2317 = vrot.slane %v1812, 7
      %v2318 = vrot.slane %v1815, 7
      %v2319 = vrot.slane %v1818, 7
      %v2320 = vrot.slane %v1821, 7
      %v2321 = vrot.slane %v1824, 7
      %v2322 = vrot.slane %v1827, 7
      %v2323 = vrot.slane %v1830, 7
      %v2324 = vrot.slane %v1833, 7
      %v2325 = vrot.slane %v1836, 7
      %v2326 = vrot.slane %v1839, 7
      %v2327 = vrot.slane %v1842, 7
      %v2328 = vrot.slane %v1845, 7
      %vm2329 = vcmp.lt.s32.totalorder %v1849, 1
      %v2330 = vsel %vm2329, %v2327, %v2328
      %v2331 = vsel %vm2329, %v2326, %v2327
      %v2332 = vsel %vm2329, %v2325, %v2326
      %v2333 = vsel %vm2329, %v2324, %v2325
      %v2334 = vsel %vm2329, %v2323, %v2324
      %v2335 = vsel %vm2329, %v2322, %v2323
      %v2336 = vsel %vm2329, %v2321, %v2322
      %v2337 = vsel %vm2329, %v2320, %v2321
      %v2338 = vsel %vm2329, %v2319, %v2320
      %v2339 = vsel %vm2329, %v2318, %v2319
      %v2340 = vsel %vm2329, %v2317, %v2318
      %v2341 = vsel %vm2329, %v2316, %v2317
      %v2342 = vsel %vm2329, %v2315, %v2316
      %v2343 = vsel %vm2329, %v2314, %v2315
      %v2344 = vsel %vm2329, %v2313, %v2314
      %v2345 = vsel %vm2329, %v2312, %v2313
      %v2346 = vsel %vm2329, %v2311, %v2312
      %v2347 = vsel %vm2329, %v2310, %v2311
      %v2348 = vsel %vm2329, %v2309, %v2310
      %v2349 = vsel %vm2329, %v2308, %v2309
      %v2350 = vsel %vm2329, %v2307, %v2308
      %v2351 = vsel %vm2329, %v2306, %v2307
      %v2352 = vsel %vm2329, %v2305, %v2306
      %v2353 = vsel %vm2329, %v2304, %v2305
      %v2354 = vsel %vm2329, %v2303, %v2304
      %v2355 = vsel %vm2329, %v2302, %v2303
      %v2356 = vsel %vm2329, %v2301, %v2302
      %v2357 = vsel %vm2329, %v2300, %v2301
      %v2358 = vsel %vm2329, %v2299, %v2300
      %v2359 = vsel %vm2329, %v2298, %v2299
      %v2360 = vsel %vm2329, %v2297, %v2298
      %v2361 = vsel %vm2329, %v2328, %v2297
      %v2362 = vsel %vm2265, 1, 0
      %v2363 = vsel %vm2266, 1, 0
      %v2364 = vsel %vm2267, 1, 0
      %v2365 = vsel %vm2268, 1, 0
      %v2366 = vsel %vm2269, 1, 0
      %v2367 = vsel %vm2270, 1, 0
      %v2368 = vsel %vm2271, 1, 0
      %v2369 = vsel %vm2272, 1, 0
      %v2370 = vsel %vm2273, 1, 0
      %v2371 = vsel %vm2274, 1, 0
      %v2372 = vsel %vm2275, 1, 0
      %v2373 = vsel %vm2276, 1, 0
      %v2374 = vsel %vm2277, 1, 0
      %v2375 = vsel %vm2278, 1, 0
      %v2376 = vsel %vm2279, 1, 0
      %v2377 = vsel %vm2280, 1, 0
      %v2378 = vsel %vm2281, 1, 0
      %v2379 = vsel %vm2282, 1, 0
      %v2380 = vsel %vm2283, 1, 0
      %v2381 = vsel %vm2284, 1, 0
      %v2382 = vsel %vm2285, 1, 0
      %v2383 = vsel %vm2286, 1, 0
      %v2384 = vsel %vm2287, 1, 0
      %v2385 = vsel %vm2288, 1, 0
      %v2386 = vsel %vm2289, 1, 0
      %v2387 = vsel %vm2290, 1, 0
      %v2388 = vsel %vm2291, 1, 0
      %v2389 = vsel %vm2292, 1, 0
      %v2390 = vsel %vm2293, 1, 0
      %v2391 = vsel %vm2294, 1, 0
      %v2392 = vsel %vm2295, 1, 0
      %v2393 = vsel %vm2296, 1, 0
      %vm2394 = vcmp.eq.s32.totalorder %v2362, 1
      %vm2395 = vcmp.eq.s32.totalorder %v2363, 1
      %vm2396 = vcmp.eq.s32.totalorder %v2364, 1
      %vm2397 = vcmp.eq.s32.totalorder %v2365, 1
      %vm2398 = vcmp.eq.s32.totalorder %v2366, 1
      %vm2399 = vcmp.eq.s32.totalorder %v2367, 1
      %vm2400 = vcmp.eq.s32.totalorder %v2368, 1
      %vm2401 = vcmp.eq.s32.totalorder %v2369, 1
      %vm2402 = vcmp.eq.s32.totalorder %v2370, 1
      %vm2403 = vcmp.eq.s32.totalorder %v2371, 1
      %vm2404 = vcmp.eq.s32.totalorder %v2372, 1
      %vm2405 = vcmp.eq.s32.totalorder %v2373, 1
      %vm2406 = vcmp.eq.s32.totalorder %v2374, 1
      %vm2407 = vcmp.eq.s32.totalorder %v2375, 1
      %vm2408 = vcmp.eq.s32.totalorder %v2376, 1
      %vm2409 = vcmp.eq.s32.totalorder %v2377, 1
      %vm2410 = vcmp.eq.s32.totalorder %v2378, 1
      %vm2411 = vcmp.eq.s32.totalorder %v2379, 1
      %vm2412 = vcmp.eq.s32.totalorder %v2380, 1
      %vm2413 = vcmp.eq.s32.totalorder %v2381, 1
      %vm2414 = vcmp.eq.s32.totalorder %v2382, 1
      %vm2415 = vcmp.eq.s32.totalorder %v2383, 1
      %vm2416 = vcmp.eq.s32.totalorder %v2384, 1
      %vm2417 = vcmp.eq.s32.totalorder %v2385, 1
      %vm2418 = vcmp.eq.s32.totalorder %v2386, 1
      %vm2419 = vcmp.eq.s32.totalorder %v2387, 1
      %vm2420 = vcmp.eq.s32.totalorder %v2388, 1
      %vm2421 = vcmp.eq.s32.totalorder %v2389, 1
      %vm2422 = vcmp.eq.s32.totalorder %v2390, 1
      %vm2423 = vcmp.eq.s32.totalorder %v2391, 1
      %vm2424 = vcmp.eq.s32.totalorder %v2392, 1
      %vm2425 = vcmp.eq.s32.totalorder %v2393, 1
      %v2426 = vsel %vm2394, %v2361, 0.0
      %v2427 = vsel %vm2395, %v2360, 0.0
      %v2428 = vsel %vm2396, %v2359, 0.0
      %v2429 = vsel %vm2397, %v2358, 0.0
      %v2430 = vsel %vm2398, %v2357, 0.0
      %v2431 = vsel %vm2399, %v2356, 0.0
      %v2432 = vsel %vm2400, %v2355, 0.0
      %v2433 = vsel %vm2401, %v2354, 0.0
      %v2434 = vsel %vm2402, %v2353, 0.0
      %v2435 = vsel %vm2403, %v2352, 0.0
      %v2436 = vsel %vm2404, %v2351, 0.0
      %v2437 = vsel %vm2405, %v2350, 0.0
      %v2438 = vsel %vm2406, %v2349, 0.0
      %v2439 = vsel %vm2407, %v2348, 0.0
      %v2440 = vsel %vm2408, %v2347, 0.0
      %v2441 = vsel %vm2409, %v2346, 0.0
      %v2442 = vsel %vm2410, %v2345, 0.0
      %v2443 = vsel %vm2411, %v2344, 0.0
      %v2444 = vsel %vm2412, %v2343, 0.0
      %v2445 = vsel %vm2413, %v2342, 0.0
      %v2446 = vsel %vm2414, %v2341, 0.0
      %v2447 = vsel %vm2415, %v2340, 0.0
      %v2448 = vsel %vm2416, %v2339, 0.0
      %v2449 = vsel %vm2417, %v2338, 0.0
      %v2450 = vsel %vm2418, %v2337, 0.0
      %v2451 = vsel %vm2419, %v2336, 0.0
      %v2452 = vsel %vm2420, %v2335, 0.0
      %v2453 = vsel %vm2421, %v2334, 0.0
      %v2454 = vsel %vm2422, %v2333, 0.0
      %v2455 = vsel %vm2423, %v2332, 0.0
      %v2456 = vsel %vm2424, %v2331, 0.0
      %v2457 = vsel %vm2425, %v2330, 0.0
      %vm2458 = vcmp.ne.s32.totalorder %v2233, 15
      %vm2459 = vcmp.ne.s32.totalorder %v2234, 15
      %vm2460 = vcmp.ne.s32.totalorder %v2235, 15
      %vm2461 = vcmp.ne.s32.totalorder %v2236, 15
      %vm2462 = vcmp.ne.s32.totalorder %v2237, 15
      %vm2463 = vcmp.ne.s32.totalorder %v2238, 15
      %vm2464 = vcmp.ne.s32.totalorder %v2239, 15
      %vm2465 = vcmp.ne.s32.totalorder %v2240, 15
      %vm2466 = vcmp.ne.s32.totalorder %v2241, 15
      %vm2467 = vcmp.ne.s32.totalorder %v2242, 15
      %vm2468 = vcmp.ne.s32.totalorder %v2243, 15
      %vm2469 = vcmp.ne.s32.totalorder %v2244, 15
      %vm2470 = vcmp.ne.s32.totalorder %v2245, 15
      %vm2471 = vcmp.ne.s32.totalorder %v2246, 15
      %vm2472 = vcmp.ne.s32.totalorder %v2247, 15
      %vm2473 = vcmp.ne.s32.totalorder %v2248, 15
      %vm2474 = vcmp.ne.s32.totalorder %v2249, 15
      %vm2475 = vcmp.ne.s32.totalorder %v2250, 15
      %vm2476 = vcmp.ne.s32.totalorder %v2251, 15
      %vm2477 = vcmp.ne.s32.totalorder %v2252, 15
      %vm2478 = vcmp.ne.s32.totalorder %v2253, 15
      %vm2479 = vcmp.ne.s32.totalorder %v2254, 15
      %vm2480 = vcmp.ne.s32.totalorder %v2255, 15
      %vm2481 = vcmp.ne.s32.totalorder %v2256, 15
      %vm2482 = vcmp.ne.s32.totalorder %v2257, 15
      %vm2483 = vcmp.ne.s32.totalorder %v2258, 15
      %vm2484 = vcmp.ne.s32.totalorder %v2259, 15
      %vm2485 = vcmp.ne.s32.totalorder %v2260, 15
      %vm2486 = vcmp.ne.s32.totalorder %v2261, 15
      %vm2487 = vcmp.ne.s32.totalorder %v2262, 15
      %vm2488 = vcmp.ne.s32.totalorder %v2263, 15
      %vm2489 = vcmp.ne.s32.totalorder %v2264, 15
      %v2490 = vrot.slane %v1754, 1
      %v2491 = vrot.slane %v1757, 1
      %v2492 = vrot.slane %v1760, 1
      %v2493 = vrot.slane %v1763, 1
      %v2494 = vrot.slane %v1766, 1
      %v2495 = vrot.slane %v1769, 1
      %v2496 = vrot.slane %v1772, 1
      %v2497 = vrot.slane %v1775, 1
      %v2498 = vrot.slane %v1778, 1
      %v2499 = vrot.slane %v1781, 1
      %v2500 = vrot.slane %v1784, 1
      %v2501 = vrot.slane %v1787, 1
      %v2502 = vrot.slane %v1790, 1
      %v2503 = vrot.slane %v1793, 1
      %v2504 = vrot.slane %v1796, 1
      %v2505 = vrot.slane %v1799, 1
      %v2506 = vrot.slane %v1802, 1
      %v2507 = vrot.slane %v1805, 1
      %v2508 = vrot.slane %v1808, 1
      %v2509 = vrot.slane %v1811, 1
      %v2510 = vrot.slane %v1814, 1
      %v2511 = vrot.slane %v1817, 1
      %v2512 = vrot.slane %v1820, 1
      %v2513 = vrot.slane %v1823, 1
      %v2514 = vrot.slane %v1826, 1
      %v2515 = vrot.slane %v1829, 1
      %v2516 = vrot.slane %v1832, 1
      %v2517 = vrot.slane %v1835, 1
      %v2518 = vrot.slane %v1838, 1
      %v2519 = vrot.slane %v1841, 1
      %v2520 = vrot.slane %v1844, 1
      %v2521 = vrot.slane %v1847, 1
      %vm2522 = vcmp.lt.s32.totalorder %v1849, 7
      %v2523 = vsel %vm2522, %v2520, %v2521
      %v2524 = vsel %vm2522, %v2519, %v2520
      %v2525 = vsel %vm2522, %v2518, %v2519
      %v2526 = vsel %vm2522, %v2517, %v2518
      %v2527 = vsel %vm2522, %v2516, %v2517
      %v2528 = vsel %vm2522, %v2515, %v2516
      %v2529 = vsel %vm2522, %v2514, %v2515
      %v2530 = vsel %vm2522, %v2513, %v2514
      %v2531 = vsel %vm2522, %v2512, %v2513
      %v2532 = vsel %vm2522, %v2511, %v2512
      %v2533 = vsel %vm2522, %v2510, %v2511
      %v2534 = vsel %vm2522, %v2509, %v2510
      %v2535 = vsel %vm2522, %v2508, %v2509
      %v2536 = vsel %vm2522, %v2507, %v2508
      %v2537 = vsel %vm2522, %v2506, %v2507
      %v2538 = vsel %vm2522, %v2505, %v2506
      %v2539 = vsel %vm2522, %v2504, %v2505
      %v2540 = vsel %vm2522, %v2503, %v2504
      %v2541 = vsel %vm2522, %v2502, %v2503
      %v2542 = vsel %vm2522, %v2501, %v2502
      %v2543 = vsel %vm2522, %v2500, %v2501
      %v2544 = vsel %vm2522, %v2499, %v2500
      %v2545 = vsel %vm2522, %v2498, %v2499
      %v2546 = vsel %vm2522, %v2497, %v2498
      %v2547 = vsel %vm2522, %v2496, %v2497
      %v2548 = vsel %vm2522, %v2495, %v2496
      %v2549 = vsel %vm2522, %v2494, %v2495
      %v2550 = vsel %vm2522, %v2493, %v2494
      %v2551 = vsel %vm2522, %v2492, %v2493
      %v2552 = vsel %vm2522, %v2491, %v2492
      %v2553 = vsel %vm2522, %v2490, %v2491
      %v2554 = vsel %vm2522, %v2521, %v2490
      %v2555 = vsel %vm2458, 1, 0
      %v2556 = vsel %vm2459, 1, 0
      %v2557 = vsel %vm2460, 1, 0
      %v2558 = vsel %vm2461, 1, 0
      %v2559 = vsel %vm2462, 1, 0
      %v2560 = vsel %vm2463, 1, 0
      %v2561 = vsel %vm2464, 1, 0
      %v2562 = vsel %vm2465, 1, 0
      %v2563 = vsel %vm2466, 1, 0
      %v2564 = vsel %vm2467, 1, 0
      %v2565 = vsel %vm2468, 1, 0
      %v2566 = vsel %vm2469, 1, 0
      %v2567 = vsel %vm2470, 1, 0
      %v2568 = vsel %vm2471, 1, 0
      %v2569 = vsel %vm2472, 1, 0
      %v2570 = vsel %vm2473, 1, 0
      %v2571 = vsel %vm2474, 1, 0
      %v2572 = vsel %vm2475, 1, 0
      %v2573 = vsel %vm2476, 1, 0
      %v2574 = vsel %vm2477, 1, 0
      %v2575 = vsel %vm2478, 1, 0
      %v2576 = vsel %vm2479, 1, 0
      %v2577 = vsel %vm2480, 1, 0
      %v2578 = vsel %vm2481, 1, 0
      %v2579 = vsel %vm2482, 1, 0
      %v2580 = vsel %vm2483, 1, 0
      %v2581 = vsel %vm2484, 1, 0
      %v2582 = vsel %vm2485, 1, 0
      %v2583 = vsel %vm2486, 1, 0
      %v2584 = vsel %vm2487, 1, 0
      %v2585 = vsel %vm2488, 1, 0
      %v2586 = vsel %vm2489, 1, 0
      %vm2587 = vcmp.eq.s32.totalorder %v2555, 1
      %vm2588 = vcmp.eq.s32.totalorder %v2556, 1
      %vm2589 = vcmp.eq.s32.totalorder %v2557, 1
      %vm2590 = vcmp.eq.s32.totalorder %v2558, 1
      %vm2591 = vcmp.eq.s32.totalorder %v2559, 1
      %vm2592 = vcmp.eq.s32.totalorder %v2560, 1
      %vm2593 = vcmp.eq.s32.totalorder %v2561, 1
      %vm2594 = vcmp.eq.s32.totalorder %v2562, 1
      %vm2595 = vcmp.eq.s32.totalorder %v2563, 1
      %vm2596 = vcmp.eq.s32.totalorder %v2564, 1
      %vm2597 = vcmp.eq.s32.totalorder %v2565, 1
      %vm2598 = vcmp.eq.s32.totalorder %v2566, 1
      %vm2599 = vcmp.eq.s32.totalorder %v2567, 1
      %vm2600 = vcmp.eq.s32.totalorder %v2568, 1
      %vm2601 = vcmp.eq.s32.totalorder %v2569, 1
      %vm2602 = vcmp.eq.s32.totalorder %v2570, 1
      %vm2603 = vcmp.eq.s32.totalorder %v2571, 1
      %vm2604 = vcmp.eq.s32.totalorder %v2572, 1
      %vm2605 = vcmp.eq.s32.totalorder %v2573, 1
      %vm2606 = vcmp.eq.s32.totalorder %v2574, 1
      %vm2607 = vcmp.eq.s32.totalorder %v2575, 1
      %vm2608 = vcmp.eq.s32.totalorder %v2576, 1
      %vm2609 = vcmp.eq.s32.totalorder %v2577, 1
      %vm2610 = vcmp.eq.s32.totalorder %v2578, 1
      %vm2611 = vcmp.eq.s32.totalorder %v2579, 1
      %vm2612 = vcmp.eq.s32.totalorder %v2580, 1
      %vm2613 = vcmp.eq.s32.totalorder %v2581, 1
      %vm2614 = vcmp.eq.s32.totalorder %v2582, 1
      %vm2615 = vcmp.eq.s32.totalorder %v2583, 1
      %vm2616 = vcmp.eq.s32.totalorder %v2584, 1
      %vm2617 = vcmp.eq.s32.totalorder %v2585, 1
      %vm2618 = vcmp.eq.s32.totalorder %v2586, 1
      %v2619 = vsel %vm2587, %v2553, 0.0
      %v2620 = vsel %vm2588, %v2552, 0.0
      %v2621 = vsel %vm2589, %v2551, 0.0
      %v2622 = vsel %vm2590, %v2550, 0.0
      %v2623 = vsel %vm2591, %v2549, 0.0
      %v2624 = vsel %vm2592, %v2548, 0.0
      %v2625 = vsel %vm2593, %v2547, 0.0
      %v2626 = vsel %vm2594, %v2546, 0.0
      %v2627 = vsel %vm2595, %v2545, 0.0
      %v2628 = vsel %vm2596, %v2544, 0.0
      %v2629 = vsel %vm2597, %v2543, 0.0
      %v2630 = vsel %vm2598, %v2542, 0.0
      %v2631 = vsel %vm2599, %v2541, 0.0
      %v2632 = vsel %vm2600, %v2540, 0.0
      %v2633 = vsel %vm2601, %v2539, 0.0
      %v2634 = vsel %vm2602, %v2538, 0.0
      %v2635 = vsel %vm2603, %v2537, 0.0
      %v2636 = vsel %vm2604, %v2536, 0.0
      %v2637 = vsel %vm2605, %v2535, 0.0
      %v2638 = vsel %vm2606, %v2534, 0.0
      %v2639 = vsel %vm2607, %v2533, 0.0
      %v2640 = vsel %vm2608, %v2532, 0.0
      %v2641 = vsel %vm2609, %v2531, 0.0
      %v2642 = vsel %vm2610, %v2530, 0.0
      %v2643 = vsel %vm2611, %v2529, 0.0
      %v2644 = vsel %vm2612, %v2528, 0.0
      %v2645 = vsel %vm2613, %v2527, 0.0
      %v2646 = vsel %vm2614, %v2526, 0.0
      %v2647 = vsel %vm2615, %v2525, 0.0
      %v2648 = vsel %vm2616, %v2524, 0.0
      %v2649 = vsel %vm2617, %v2523, 0.0
      %v2650 = vsel %vm2618, %v2554, 0.0
      %v2651 = vadd.f32 %v2426, %v1753
      %v2652 = vadd.f32 %v2427, %v1756
      %v2653 = vadd.f32 %v2428, %v1759
      %v2654 = vadd.f32 %v2429, %v1762
      %v2655 = vadd.f32 %v2430, %v1765
      %v2656 = vadd.f32 %v2431, %v1768
      %v2657 = vadd.f32 %v2432, %v1771
      %v2658 = vadd.f32 %v2433, %v1774
      %v2659 = vadd.f32 %v2434, %v1777
      %v2660 = vadd.f32 %v2435, %v1780
      %v2661 = vadd.f32 %v2436, %v1783
      %v2662 = vadd.f32 %v2437, %v1786
      %v2663 = vadd.f32 %v2438, %v1789
      %v2664 = vadd.f32 %v2439, %v1792
      %v2665 = vadd.f32 %v2440, %v1795
      %v2666 = vadd.f32 %v2441, %v1798
      %v2667 = vadd.f32 %v2442, %v1801
      %v2668 = vadd.f32 %v2443, %v1804
      %v2669 = vadd.f32 %v2444, %v1807
      %v2670 = vadd.f32 %v2445, %v1810
      %v2671 = vadd.f32 %v2446, %v1813
      %v2672 = vadd.f32 %v2447, %v1816
      %v2673 = vadd.f32 %v2448, %v1819
      %v2674 = vadd.f32 %v2449, %v1822
      %v2675 = vadd.f32 %v2450, %v1825
      %v2676 = vadd.f32 %v2451, %v1828
      %v2677 = vadd.f32 %v2452, %v1831
      %v2678 = vadd.f32 %v2453, %v1834
      %v2679 = vadd.f32 %v2454, %v1837
      %v2680 = vadd.f32 %v2455, %v1840
      %v2681 = vadd.f32 %v2456, %v1843
      %v2682 = vadd.f32 %v2457, %v1846
      %v2683 = vadd.f32 %v2651, %v2619
      %v2684 = vadd.f32 %v2652, %v2620
      %v2685 = vadd.f32 %v2653, %v2621
      %v2686 = vadd.f32 %v2654, %v2622
      %v2687 = vadd.f32 %v2655, %v2623
      %v2688 = vadd.f32 %v2656, %v2624
      %v2689 = vadd.f32 %v2657, %v2625
      %v2690 = vadd.f32 %v2658, %v2626
      %v2691 = vadd.f32 %v2659, %v2627
      %v2692 = vadd.f32 %v2660, %v2628
      %v2693 = vadd.f32 %v2661, %v2629
      %v2694 = vadd.f32 %v2662, %v2630
      %v2695 = vadd.f32 %v2663, %v2631
      %v2696 = vadd.f32 %v2664, %v2632
      %v2697 = vadd.f32 %v2665, %v2633
      %v2698 = vadd.f32 %v2666, %v2634
      %v2699 = vadd.f32 %v2667, %v2635
      %v2700 = vadd.f32 %v2668, %v2636
      %v2701 = vadd.f32 %v2669, %v2637
      %v2702 = vadd.f32 %v2670, %v2638
      %v2703 = vadd.f32 %v2671, %v2639
      %v2704 = vadd.f32 %v2672, %v2640
      %v2705 = vadd.f32 %v2673, %v2641
      %v2706 = vadd.f32 %v2674, %v2642
      %v2707 = vadd.f32 %v2675, %v2643
      %v2708 = vadd.f32 %v2676, %v2644
      %v2709 = vadd.f32 %v2677, %v2645
      %v2710 = vadd.f32 %v2678, %v2646
      %v2711 = vadd.f32 %v2679, %v2647
      %v2712 = vadd.f32 %v2680, %v2648
      %v2713 = vadd.f32 %v2681, %v2649
      %v2714 = vadd.f32 %v2682, %v2650
      %v2715 = vpack.c.bf16 %v2684, %v2683
      %v2716 = vpack.c.bf16 %v2686, %v2685
      %v2717 = vpack.c.bf16 %v2688, %v2687
      %v2718 = vpack.c.bf16 %v2690, %v2689
      %v2719 = vpack.c.bf16 %v2692, %v2691
      %v2720 = vpack.c.bf16 %v2694, %v2693
      %v2721 = vpack.c.bf16 %v2696, %v2695
      %v2722 = vpack.c.bf16 %v2698, %v2697
      %v2723 = vpack.c.bf16 %v2700, %v2699
      %v2724 = vpack.c.bf16 %v2702, %v2701
      %v2725 = vpack.c.bf16 %v2704, %v2703
      %v2726 = vpack.c.bf16 %v2706, %v2705
      %v2727 = vpack.c.bf16 %v2708, %v2707
      %v2728 = vpack.c.bf16 %v2710, %v2709
      %v2729 = vpack.c.bf16 %v2712, %v2711
      %v2730 = vpack.c.bf16 %v2714, %v2713
      %v2747 = vunpack.c.l.b16 %v2715
      %v2748 = vunpack.c.h.b16 %v2715
      %v2749 = vunpack.c.l.b16 %v2716
      %v2750 = vunpack.c.h.b16 %v2716
      %v2751 = vunpack.c.l.b16 %v2717
      %v2752 = vunpack.c.h.b16 %v2717
      %v2753 = vunpack.c.l.b16 %v2718
      %v2754 = vunpack.c.h.b16 %v2718
      %v2755 = vunpack.c.l.b16 %v2719
      %v2756 = vunpack.c.h.b16 %v2719
      %v2757 = vunpack.c.l.b16 %v2720
      %v2758 = vunpack.c.h.b16 %v2720
      %v2759 = vunpack.c.l.b16 %v2721
      %v2760 = vunpack.c.h.b16 %v2721
      %v2761 = vunpack.c.l.b16 %v2722
      %v2762 = vunpack.c.h.b16 %v2722
      %v2763 = vunpack.c.l.b16 %v2723
      %v2764 = vunpack.c.h.b16 %v2723
      %v2765 = vunpack.c.l.b16 %v2724
      %v2766 = vunpack.c.h.b16 %v2724
      %v2767 = vunpack.c.l.b16 %v2725
      %v2768 = vunpack.c.h.b16 %v2725
      %v2769 = vunpack.c.l.b16 %v2726
      %v2770 = vunpack.c.h.b16 %v2726
      %v2771 = vunpack.c.l.b16 %v2727
      %v2772 = vunpack.c.h.b16 %v2727
      %v2773 = vunpack.c.l.b16 %v2728
      %v2774 = vunpack.c.h.b16 %v2728
      %v2775 = vunpack.c.l.b16 %v2729
      %v2776 = vunpack.c.h.b16 %v2729
      %v2777 = vunpack.c.l.b16 %v2730
      %v2778 = vunpack.c.h.b16 %v2730
      %v2779 = vpack.c.b16 %v2747, %v2747
      %v2780 = vpack.c.b16 %v2748, %v2748
      %v2781 = vpack.c.b16 %v2749, %v2749
      %v2782 = vpack.c.b16 %v2750, %v2750
      %v2783 = vpack.c.b16 %v2751, %v2751
      %v2784 = vpack.c.b16 %v2752, %v2752
      %v2785 = vpack.c.b16 %v2753, %v2753
      %v2786 = vpack.c.b16 %v2754, %v2754
      %v2787 = vpack.c.b16 %v2755, %v2755
      %v2788 = vpack.c.b16 %v2756, %v2756
      %v2789 = vpack.c.b16 %v2757, %v2757
      %v2790 = vpack.c.b16 %v2758, %v2758
      %v2791 = vpack.c.b16 %v2759, %v2759
      %v2792 = vpack.c.b16 %v2760, %v2760
      %v2793 = vpack.c.b16 %v2761, %v2761
      %v2794 = vpack.c.b16 %v2762, %v2762
      %v2795 = vpack.c.b16 %v2763, %v2763
      %v2796 = vpack.c.b16 %v2764, %v2764
      %v2797 = vpack.c.b16 %v2765, %v2765
      %v2798 = vpack.c.b16 %v2766, %v2766
      %v2799 = vpack.c.b16 %v2767, %v2767
      %v2800 = vpack.c.b16 %v2768, %v2768
      %v2801 = vpack.c.b16 %v2769, %v2769
      %v2802 = vpack.c.b16 %v2770, %v2770
      %v2803 = vpack.c.b16 %v2771, %v2771
      %v2804 = vpack.c.b16 %v2772, %v2772
      %v2805 = vpack.c.b16 %v2773, %v2773
      %v2806 = vpack.c.b16 %v2774, %v2774
      %v2807 = vpack.c.b16 %v2775, %v2775
      %v2808 = vpack.c.b16 %v2776, %v2776
      %v2809 = vpack.c.b16 %v2777, %v2777
      %v2810 = vpack.c.b16 %v2778, %v2778
      %2843 = vst [vmem:[%s403] sm:$0xf] %v2779
      %2844 = vst [vmem:[%s403 + $0x4] sm:$0xf] %v2780
      %2845 = vst [vmem:[%s403 + $0x8] sm:$0xf] %v2781
      %2846 = vst [vmem:[%s403 + $0xc] sm:$0xf] %v2782
      %2847 = vst [vmem:[%s403 + $0x10] sm:$0xf] %v2783
      %2848 = vst [vmem:[%s403 + $0x14] sm:$0xf] %v2784
      %2849 = vst [vmem:[%s403 + $0x18] sm:$0xf] %v2785
      %2850 = vst [vmem:[%s403 + $0x1c] sm:$0xf] %v2786
      %2851 = vst [vmem:[%s403 + $0x20] sm:$0xf] %v2787
      %2852 = vst [vmem:[%s403 + $0x24] sm:$0xf] %v2788
      %2853 = vst [vmem:[%s403 + $0x28] sm:$0xf] %v2789
      %2854 = vst [vmem:[%s403 + $0x2c] sm:$0xf] %v2790
      %2855 = vst [vmem:[%s403 + $0x30] sm:$0xf] %v2791
      %2856 = vst [vmem:[%s403 + $0x34] sm:$0xf] %v2792
      %2857 = vst [vmem:[%s403 + $0x38] sm:$0xf] %v2793
      %2858 = vst [vmem:[%s403 + $0x3c] sm:$0xf] %v2794
      %2859 = vst [vmem:[%s403 + $0x40] sm:$0xf] %v2795
      %2860 = vst [vmem:[%s403 + $0x44] sm:$0xf] %v2796
      %2861 = vst [vmem:[%s403 + $0x48] sm:$0xf] %v2797
      %2862 = vst [vmem:[%s403 + $0x4c] sm:$0xf] %v2798
      %2863 = vst [vmem:[%s403 + $0x50] sm:$0xf] %v2799
      %2864 = vst [vmem:[%s403 + $0x54] sm:$0xf] %v2800
      %2865 = vst [vmem:[%s403 + $0x58] sm:$0xf] %v2801
      %2866 = vst [vmem:[%s403 + $0x5c] sm:$0xf] %v2802
      %2867 = vst [vmem:[%s403 + $0x60] sm:$0xf] %v2803
      %2868 = vst [vmem:[%s403 + $0x64] sm:$0xf] %v2804
      %2869 = vst [vmem:[%s403 + $0x68] sm:$0xf] %v2805
      %2870 = vst [vmem:[%s403 + $0x6c] sm:$0xf] %v2806
      %2871 = vst [vmem:[%s403 + $0x70] sm:$0xf] %v2807
      %2872 = vst [vmem:[%s403 + $0x74] sm:$0xf] %v2808
      %2873 = vst [vmem:[%s403 + $0x78] sm:$0xf] %v2809
      %2874 = vst [vmem:[%s403 + $0x7c] sm:$0xf] %v2810
      %v2875 = vadd.f32 %v2683, %v2684
      %v2876 = vadd.f32 %v2875, %v2685
      %v2877 = vadd.f32 %v2876, %v2686
      %v2878 = vadd.f32 %v2877, %v2687
      %v2879 = vadd.f32 %v2878, %v2688
      %v2880 = vadd.f32 %v2879, %v2689
      %v2881 = vadd.f32 %v2880, %v2690
      %v2882 = vadd.f32 %v2881, %v2691
      %v2883 = vadd.f32 %v2882, %v2692
      %v2884 = vadd.f32 %v2883, %v2693
      %v2885 = vadd.f32 %v2884, %v2694
      %v2886 = vadd.f32 %v2885, %v2695
      %v2887 = vadd.f32 %v2886, %v2696
      %v2888 = vadd.f32 %v2887, %v2697
      %v2889 = vadd.f32 %v2888, %v2698
      %v2890 = vadd.f32 %v2889, %v2699
      %v2891 = vadd.f32 %v2890, %v2700
      %v2892 = vadd.f32 %v2891, %v2701
      %v2893 = vadd.f32 %v2892, %v2702
      %v2894 = vadd.f32 %v2893, %v2703
      %v2895 = vadd.f32 %v2894, %v2704
      %v2896 = vadd.f32 %v2895, %v2705
      %v2897 = vadd.f32 %v2896, %v2706
      %v2898 = vadd.f32 %v2897, %v2707
      %v2899 = vadd.f32 %v2898, %v2708
      %v2900 = vadd.f32 %v2899, %v2709
      %v2901 = vadd.f32 %v2900, %v2710
      %v2902 = vadd.f32 %v2901, %v2711
      %v2903 = vadd.f32 %v2902, %v2712
      %v2904 = vadd.f32 %v2903, %v2713
      %v2905 = vadd.f32 %v2904, %v2714
      %v2906 = vrot.slane %v2905, 4
      %v2907 = vadd.f32 %v2905, %v2906
      %v2908 = vrot.slane %v2907, 2
      %v2909 = vadd.f32 %v2907, %v2908
      %v2910 = vrot.slane %v2909, 1
      %v2911 = vadd.f32 %v2909, %v2910
      %2912 = vst [vmem:[%s411] sm:$0x1] %v2911
      %v2913 = vmul.f32 %v2683, %v2683
      %v2914 = vmul.f32 %v2684, %v2684
      %v2915 = vmul.f32 %v2685, %v2685
      %v2916 = vmul.f32 %v2686, %v2686
      %v2917 = vmul.f32 %v2687, %v2687
      %v2918 = vmul.f32 %v2688, %v2688
      %v2919 = vmul.f32 %v2689, %v2689
      %v2920 = vmul.f32 %v2690, %v2690
      %v2921 = vmul.f32 %v2691, %v2691
      %v2922 = vmul.f32 %v2692, %v2692
      %v2923 = vmul.f32 %v2693, %v2693
      %v2924 = vmul.f32 %v2694, %v2694
      %v2925 = vmul.f32 %v2695, %v2695
      %v2926 = vmul.f32 %v2696, %v2696
      %v2927 = vmul.f32 %v2697, %v2697
      %v2928 = vmul.f32 %v2698, %v2698
      %v2929 = vmul.f32 %v2699, %v2699
      %v2930 = vmul.f32 %v2700, %v2700
      %v2931 = vmul.f32 %v2701, %v2701
      %v2932 = vmul.f32 %v2702, %v2702
      %v2933 = vmul.f32 %v2703, %v2703
      %v2934 = vmul.f32 %v2704, %v2704
      %v2935 = vmul.f32 %v2705, %v2705
      %v2936 = vmul.f32 %v2706, %v2706
      %v2937 = vmul.f32 %v2707, %v2707
      %v2938 = vmul.f32 %v2708, %v2708
      %v2939 = vmul.f32 %v2709, %v2709
      %v2940 = vmul.f32 %v2710, %v2710
      %v2941 = vmul.f32 %v2711, %v2711
      %v2942 = vmul.f32 %v2712, %v2712
      %v2943 = vmul.f32 %v2713, %v2713
      %v2944 = vmul.f32 %v2714, %v2714
      %v2945 = vadd.f32 %v2913, %v2914
      %v2946 = vadd.f32 %v2945, %v2915
      %v2947 = vadd.f32 %v2946, %v2916
      %v2948 = vadd.f32 %v2947, %v2917
      %v2949 = vadd.f32 %v2948, %v2918
      %v2950 = vadd.f32 %v2949, %v2919
      %v2951 = vadd.f32 %v2950, %v2920
      %v2952 = vadd.f32 %v2951, %v2921
      %v2953 = vadd.f32 %v2952, %v2922
      %v2954 = vadd.f32 %v2953, %v2923
      %v2955 = vadd.f32 %v2954, %v2924
      %v2956 = vadd.f32 %v2955, %v2925
      %v2957 = vadd.f32 %v2956, %v2926
      %v2958 = vadd.f32 %v2957, %v2927
      %v2959 = vadd.f32 %v2958, %v2928
      %v2960 = vadd.f32 %v2959, %v2929
      %v2961 = vadd.f32 %v2960, %v2930
      %v2962 = vadd.f32 %v2961, %v2931
      %v2963 = vadd.f32 %v2962, %v2932
      %v2964 = vadd.f32 %v2963, %v2933
      %v2965 = vadd.f32 %v2964, %v2934
      %v2966 = vadd.f32 %v2965, %v2935
      %v2967 = vadd.f32 %v2966, %v2936
      %v2968 = vadd.f32 %v2967, %v2937
      %v2969 = vadd.f32 %v2968, %v2938
      %v2970 = vadd.f32 %v2969, %v2939
      %v2971 = vadd.f32 %v2970, %v2940
      %v2972 = vadd.f32 %v2971, %v2941
      %v2973 = vadd.f32 %v2972, %v2942
      %v2974 = vadd.f32 %v2973, %v2943
      %v2975 = vadd.f32 %v2974, %v2944
      %v2976 = vrot.slane %v2975, 4
      %v2977 = vadd.f32 %v2975, %v2976
      %v2978 = vrot.slane %v2977, 2
      %v2979 = vadd.f32 %v2977, %v2978
      %v2980 = vrot.slane %v2979, 1
      %v2981 = vadd.f32 %v2979, %v2980
      %2982 = vst [vmem:[%s411 + $0x1] sm:$0x1] %v2981
      %s2983 = smul.u32 16, %s22
      %p2984 = scmp.lt.s32.totalorder %s21, 1
      %s2985 = scalar_select %p2984, %s21, 1
      %p2986 = scmp.lt.s32.totalorder %s2983, 15
      %s2987 = scalar_select %p2986, %s2983, 15
      %s2988 = smul.addr %s2987, 2
      %s2989 = smul.addr %s2985, 32
      %s2990 = sadd.s32 %s2988, %s2989
      %s2991 = smul.addr %s2990, 4
      %s2992 = scalar_lea.vmem %s4, %s2991
      %p2993 = scmp.lt.s32.totalorder %s21, 1
      %s2994 = scalar_select %p2993, %s21, 1
      %p2995 = scmp.lt.s32.totalorder %s22, 0
      %s2996 = scalar_select %p2995, %s22, 0
      %s2997 = sadd.s32 %s2996, %s2994
      %s2998 = smul.addr %s2997, 2
      %s2999 = scalar_lea.vmem %s5, %s2998
      // Predicated region
      $region37: #{double_conv.3} parent=35 // pred_check
        %p3000 = pneg %p170
      $region38: #{double_conv.3} parent=35 // pred_check_branch
        %3002 = sbr.rel (%p3000) target = $region40
      $region39: #{double_conv.3} parent=35 // pred_region
        %s3003 = smul.u32 16, %s22
      $region40: #{double_conv.3} parent=35 // pred_fallthru
        _
      // Predicated region
      $region41: #{double_conv.3} parent=35 // pred_check
        %p3004 = pneg %p198
      $region42: #{double_conv.3} parent=35 // pred_check_branch
        %3006 = sbr.rel (%p3004) target = $region44
      $region43: #{double_conv.3} parent=35 // pred_region
        _
      $region44: #{double_conv.3} parent=35 // pred_fallthru
        _
    $region36: #{double_conv.3} parent=5 // pred_fallthru
      _
    %p3007 = scmp.le.s32.totalorder 2, %s12
    // Predicated region
    $region45: #{double_conv.3} parent=5 // pred_check
      %p3008 = pneg %p3007
    $region46: #{double_conv.3} parent=5 // pred_check_branch
      %3010 = sbr.rel (%p3008) target = $region48
    $region47: #{double_conv.3} parent=5 // pred_region
      %s3011 = ssub.s32 %s12, 2
      // Predicated region
      $region49: #{double_conv.3} parent=47 // pred_check
        %p3012 = pneg %p176
      $region50: #{double_conv.3} parent=47 // pred_check_branch
        %3014 = sbr.rel (%p3012) target = $region52
      $region51: #{double_conv.3} parent=47 // pred_region
        %s3015 = smul.u32 16, %s24
        %p3016 = scmp.lt.s32.totalorder %s23, 1
        %s3017 = scalar_select %p3016, %s23, 1
        %p3018 = scmp.lt.s32.totalorder %s3015, 15
        %s3019 = scalar_select %p3018, %s3015, 15
        %s3020 = smul.addr %s3019, 2
        %s3021 = smul.addr %s3017, 32
        %s3022 = sadd.s32 %s3020, %s3021
        %s3023 = smul.addr %s3022, 4
        %s3024 = scalar_lea.vmem %s4, %s3023
      $region52: #{double_conv.3} parent=47 // pred_fallthru
        _
      // Predicated region
      $region53: #{double_conv.3} parent=47 // pred_check
        %p3025 = pneg %p204
      $region54: #{double_conv.3} parent=47 // pred_check_branch
        %3027 = sbr.rel (%p3025) target = $region56
      $region55: #{double_conv.3} parent=47 // pred_region
        %p3028 = scmp.lt.s32.totalorder %s23, 1
        %s3029 = scalar_select %p3028, %s23, 1
        %p3030 = scmp.lt.s32.totalorder %s24, 0
        %s3031 = scalar_select %p3030, %s24, 0
        %s3032 = sadd.s32 %s3031, %s3029
        %s3033 = smul.addr %s3032, 2
        %s3034 = scalar_lea.vmem %s5, %s3033
      $region56: #{double_conv.3} parent=47 // pred_fallthru
        _
    $region48: #{double_conv.3} parent=5 // pred_fallthru
      _
  $region6: #{double_conv.3} parent=0 // loop_footer
    %s16 = sadd.s32 1, %s12
  $region7: #{double_conv.3} parent=0 // loop_footer_branch
    %11 = sbr.rel target = $region3
  $region8: #{double_conv.3} parent=0 // loop_exit
    _

// kernel: double_conv.4
$region0: #{double_conv.4}
  #allocation0 [shape = 'u32[]', space=smem, size = 0x4, offset = 0x4, fixed_abs, tag = 'smem constant byte address 0x4 - core index']
  #allocation1 [shape = 'u32[144,128]{1,0:T(1,128)}', space=vmem, size = 0x12000, scoped, tag = 'internal scratch']
  %s0 = inlined_call_operand.vmem [shape: bf16[2,16,16,128], index: 0, kind: input, shape index: {}, may-alias: {0,1,2}]
  %s1 = inlined_call_operand.vmem [shape: bf16[2,16,16,128], index: 1, kind: input, shape index: {}, may-alias: {0,1,2}]
  %s2 = inlined_call_operand.vmem [shape: bf16[2,16,16,128], index: 2, kind: input, shape index: {}, may-alias: {0,1,2}]
  %s3 = inlined_call_operand.vmem [shape: f32[1,128], index: 3, kind: input, shape index: {}]
  %s4 = inlined_call_operand.vmem [shape: f32[1,128], index: 4, kind: input, shape index: {}]
  %s5 = inlined_call_operand.vmem [shape: bf16[3,128,384], index: 5, kind: input, shape index: {}]
  %s6 = inlined_call_operand.vmem [shape: bf16[2,16,16,128], index: 6, kind: output, shape index: {0}]
  %s7 = inlined_call_operand.vmem [shape: f32[2,1,2,128], index: 7, kind: output, shape index: {1}]
  %8 = xla_tuple %s6, %s7
  %s9 = sld [smem:[#allocation0]]
  $region65: #{double_conv.4} parent=0
    _
  %s11 = ssub.s32 1, %s9
  %s12 = scalar_select 0, %s11, %s9
  loop: start=0, step=1, limit=4
  $region2: #{double_conv.4} parent=0 // loop_pre_header
    _
  $region3: #{double_conv.4} parent=0 // loop_header
    %s14 = sphi 0, %s18
    %p15 = scmp.ge.s32.totalorder %s14, 4
    %s21 = sphi 0, %s33
    %s22 = sphi 0, %s29
    %s23 = sphi 0, %s21
    %s24 = sphi 0, %s22
    %s25 = sphi 0, %s23
    %s26 = sphi 0, %s24
    %s38 = sphi 0, %s40
    %s41 = sphi 0, %s38
    %s42 = sphi 0, %s41
    %s58 = sphi 0, %s42
    %s74 = sphi 0, %s76
    %s77 = sphi 0, %s74
    %s78 = sphi 0, %s77
    %s94 = sphi 0, %s78
    %s110 = sphi 0, %s112
    %s113 = sphi 0, %s110
    %s114 = sphi 0, %s113
    %s130 = sphi 0, %s114
    %s134 = sphi 0, %s134
    %s136 = sphi 0, %s134
    %s137 = sphi 0, %s136
    %s151 = sphi 0, %s137
    %s155 = sphi 0, %s155
    %s157 = sphi 0, %s155
    %s158 = sphi 0, %s157
    %s172 = sphi 0, %s158
    %s176 = sphi 0, %s176
    %s178 = sphi 0, %s176
    %s179 = sphi 0, %s178
    %s193 = sphi 0, %s179
    %s201 = sphi 0, %s203
    %s204 = sphi 0, %s201
    %s205 = sphi 0, %s204
    %s221 = sphi 0, %s205
    %s229 = sphi 0, %s231
    %s232 = sphi 0, %s229
    %s233 = sphi 0, %s232
    %s249 = sphi 0, %s233
  $region4: #{double_conv.4} parent=0 // loop_header_branch
    %17 = sbr.rel (%p15) target = $region8
  $region5: #{double_conv.4} parent=0 // loop_body
    %s19 = ssub.s32 %s14, 1
    %s20 = ssub.s32 %s14, 2
    %s27 = sadd.s32 1, %s22
    %p28 = scmp.ge.s32.totalorder %s27, 1
    %s29 = scalar_select %p28, 0, %s27
    %s30 = sadd.s32 1, %s21
    %s31 = scalar_select %p28, %s30, %s21
    %p32 = scmp.ge.s32.totalorder %s31, 2
    %s33 = scalar_select %p32, 0, %s31
    %s34 = ssub.s32 %s21, %s33
    %s35 = ssub.s32 %s22, %s29
    %s36 = sor.u32 %s34, %s35
    %p37 = scmp.eq.s32.totalorder %s36, 0
    %s39 = sadd.s32 %s38, 1
    %s40 = scalar_select %p37, %s38, %s39
    %p43 = pneg %p37
    %p44 = scmp.eq.s32.totalorder %s14, 1
    %p45 = por %p43, %p44
    %p46 = scmp.ne.s32.totalorder %s38, %s41
    %p47 = scmp.eq.s32.totalorder %s14, 0
    %p48 = por %p46, %p47
    %p49 = scmp.ne.s32.totalorder %s38, %s41
    %p50 = scmp.eq.s32.totalorder %s19, 1
    %p51 = por %p49, %p50
    %p52 = scmp.ne.s32.totalorder %s41, %s42
    %p53 = scmp.eq.s32.totalorder %s19, 0
    %p54 = por %p52, %p53
    %p55 = scmp.ne.s32.totalorder %s41, %s42
    %p56 = scmp.eq.s32.totalorder %s20, 1
    %p57 = por %p55, %p56
    %p59 = scmp.ne.s32.totalorder %s42, %s58
    %p60 = scmp.eq.s32.totalorder %s20, 0
    %p61 = por %p59, %p60
    %s62 = smul.u32 %s22, 16
    %s63 = ssub.s32 %s62, 1
    %p64 = scmp.gt.s32.totalorder %s63, 0
    %s65 = scalar_select %p64, %s63, 0
    %s66 = smul.u32 %s29, 16
    %s67 = ssub.s32 %s66, 1
    %p68 = scmp.gt.s32.totalorder %s67, 0
    %s69 = scalar_select %p68, %s67, 0
    %s70 = ssub.s32 %s21, %s33
    %s71 = ssub.s32 %s65, %s69
    %s72 = sor.u32 %s70, %s71
    %p73 = scmp.eq.s32.totalorder %s72, 0
    %s75 = sadd.s32 %s74, 1
    %s76 = scalar_select %p73, %s74, %s75
    %p79 = pneg %p73
    %p80 = scmp.eq.s32.totalorder %s14, 1
    %p81 = por %p79, %p80
    %p82 = scmp.ne.s32.totalorder %s74, %s77
    %p83 = scmp.eq.s32.totalorder %s14, 0
    %p84 = por %p82, %p83
    %p85 = scmp.ne.s32.totalorder %s74, %s77
    %p86 = scmp.eq.s32.totalorder %s19, 1
    %p87 = por %p85, %p86
    %p88 = scmp.ne.s32.totalorder %s77, %s78
    %p89 = scmp.eq.s32.totalorder %s19, 0
    %p90 = por %p88, %p89
    %p91 = scmp.ne.s32.totalorder %s77, %s78
    %p92 = scmp.eq.s32.totalorder %s20, 1
    %p93 = por %p91, %p92
    %p95 = scmp.ne.s32.totalorder %s78, %s94
    %p96 = scmp.eq.s32.totalorder %s20, 0
    %p97 = por %p95, %p96
    %s98 = smul.u32 %s22, 16
    %s99 = sadd.s32 %s98, 16
    %p100 = scmp.lt.s32.totalorder %s99, 15
    %s101 = scalar_select %p100, %s99, 15
    %s102 = smul.u32 %s29, 16
    %s103 = sadd.s32 %s102, 16
    %p104 = scmp.lt.s32.totalorder %s103, 15
    %s105 = scalar_select %p104, %s103, 15
    %s106 = ssub.s32 %s21, %s33
    %s107 = ssub.s32 %s101, %s105
    %s108 = sor.u32 %s106, %s107
    %p109 = scmp.eq.s32.totalorder %s108, 0
    %s111 = sadd.s32 %s110, 1
    %s112 = scalar_select %p109, %s110, %s111
    %p115 = pneg %p109
    %p116 = scmp.eq.s32.totalorder %s14, 1
    %p117 = por %p115, %p116
    %p118 = scmp.ne.s32.totalorder %s110, %s113
    %p119 = scmp.eq.s32.totalorder %s14, 0
    %p120 = por %p118, %p119
    %p121 = scmp.ne.s32.totalorder %s110, %s113
    %p122 = scmp.eq.s32.totalorder %s19, 1
    %p123 = por %p121, %p122
    %p124 = scmp.ne.s32.totalorder %s113, %s114
    %p125 = scmp.eq.s32.totalorder %s19, 0
    %p126 = por %p124, %p125
    %p127 = scmp.ne.s32.totalorder %s113, %s114
    %p128 = scmp.eq.s32.totalorder %s20, 1
    %p129 = por %p127, %p128
    %p131 = scmp.ne.s32.totalorder %s114, %s130
    %p132 = scmp.eq.s32.totalorder %s20, 0
    %p133 = por %p131, %p132
    %s135 = sadd.s32 %s134, 1
    %p138 = scmp.eq.s32.totalorder %s14, 1
    %p139 = scmp.ne.s32.totalorder %s134, %s136
    %p140 = scmp.eq.s32.totalorder %s14, 0
    %p141 = por %p139, %p140
    %p142 = scmp.ne.s32.totalorder %s134, %s136
    %p143 = scmp.eq.s32.totalorder %s19, 1
    %p144 = por %p142, %p143
    %p145 = scmp.ne.s32.totalorder %s136, %s137
    %p146 = scmp.eq.s32.totalorder %s19, 0
    %p147 = por %p145, %p146
    %p148 = scmp.ne.s32.totalorder %s136, %s137
    %p149 = scmp.eq.s32.totalorder %s20, 1
    %p150 = por %p148, %p149
    %p152 = scmp.ne.s32.totalorder %s137, %s151
    %p153 = scmp.eq.s32.totalorder %s20, 0
    %p154 = por %p152, %p153
    %s156 = sadd.s32 %s155, 1
    %p159 = scmp.eq.s32.totalorder %s14, 1
    %p160 = scmp.ne.s32.totalorder %s155, %s157
    %p161 = scmp.eq.s32.totalorder %s14, 0
    %p162 = por %p160, %p161
    %p163 = scmp.ne.s32.totalorder %s155, %s157
    %p164 = scmp.eq.s32.totalorder %s19, 1
    %p165 = por %p163, %p164
    %p166 = scmp.ne.s32.totalorder %s157, %s158
    %p167 = scmp.eq.s32.totalorder %s19, 0
    %p168 = por %p166, %p167
    %p169 = scmp.ne.s32.totalorder %s157, %s158
    %p170 = scmp.eq.s32.totalorder %s20, 1
    %p171 = por %p169, %p170
    %p173 = scmp.ne.s32.totalorder %s158, %s172
    %p174 = scmp.eq.s32.totalorder %s20, 0
    %p175 = por %p173, %p174
    %s177 = sadd.s32 %s176, 1
    %p180 = scmp.eq.s32.totalorder %s14, 1
    %p181 = scmp.ne.s32.totalorder %s176, %s178
    %p182 = scmp.eq.s32.totalorder %s14, 0
    %p183 = por %p181, %p182
    %p184 = scmp.ne.s32.totalorder %s176, %s178
    %p185 = scmp.eq.s32.totalorder %s19, 1
    %p186 = por %p184, %p185
    %p187 = scmp.ne.s32.totalorder %s178, %s179
    %p188 = scmp.eq.s32.totalorder %s19, 0
    %p189 = por %p187, %p188
    %p190 = scmp.ne.s32.totalorder %s178, %s179
    %p191 = scmp.eq.s32.totalorder %s20, 1
    %p192 = por %p190, %p191
    %p194 = scmp.ne.s32.totalorder %s179, %s193
    %p195 = scmp.eq.s32.totalorder %s20, 0
    %p196 = por %p194, %p195
    %s197 = ssub.s32 %s21, %s33
    %s198 = ssub.s32 %s22, %s29
    %s199 = sor.u32 %s197, %s198
    %p200 = scmp.eq.s32.totalorder %s199, 0
    %s202 = sadd.s32 %s201, 1
    %s203 = scalar_select %p200, %s201, %s202
    %p206 = pneg %p200
    %p207 = scmp.eq.s32.totalorder %s14, 1
    %p208 = por %p206, %p207
    %p209 = scmp.ne.s32.totalorder %s201, %s204
    %p210 = scmp.eq.s32.totalorder %s14, 0
    %p211 = por %p209, %p210
    %p212 = scmp.ne.s32.totalorder %s201, %s204
    %p213 = scmp.eq.s32.totalorder %s19, 1
    %p214 = por %p212, %p213
    %p215 = scmp.ne.s32.totalorder %s204, %s205
    %p216 = scmp.eq.s32.totalorder %s19, 0
    %p217 = por %p215, %p216
    %p218 = scmp.ne.s32.totalorder %s204, %s205
    %p219 = scmp.eq.s32.totalorder %s20, 1
    %p220 = por %p218, %p219
    %p222 = scmp.ne.s32.totalorder %s205, %s221
    %p223 = scmp.eq.s32.totalorder %s20, 0
    %p224 = por %p222, %p223
    %s225 = ssub.s32 %s21, %s33
    %s226 = ssub.s32 %s22, %s29
    %s227 = sor.u32 %s225, %s226
    %p228 = scmp.eq.s32.totalorder %s227, 0
    %s230 = sadd.s32 %s229, 1
    %s231 = scalar_select %p228, %s229, %s230
    %p234 = pneg %p228
    %p235 = scmp.eq.s32.totalorder %s14, 1
    %p236 = por %p234, %p235
    %p237 = scmp.ne.s32.totalorder %s229, %s232
    %p238 = scmp.eq.s32.totalorder %s14, 0
    %p239 = por %p237, %p238
    %p240 = scmp.ne.s32.totalorder %s229, %s232
    %p241 = scmp.eq.s32.totalorder %s19, 1
    %p242 = por %p240, %p241
    %p243 = scmp.ne.s32.totalorder %s232, %s233
    %p244 = scmp.eq.s32.totalorder %s19, 0
    %p245 = por %p243, %p244
    %p246 = scmp.ne.s32.totalorder %s232, %s233
    %p247 = scmp.eq.s32.totalorder %s20, 1
    %p248 = por %p246, %p247
    %p250 = scmp.ne.s32.totalorder %s233, %s249
    %p251 = scmp.eq.s32.totalorder %s20, 0
    %p252 = por %p250, %p251
    %p253 = scmp.le.s32.totalorder 1, %s14
    %p254 = scmp.lt.s32.totalorder %s14, 3
    %p255 = pnand %p253, %p254
    %p256 = pneg %p255
    // Predicated region
    $region9: #{double_conv.4} parent=5 // pred_check
      _
    $region10: #{double_conv.4} parent=5 // pred_check_branch
      %258 = sbr.rel (%p255) target = $region12
    $region11: #{double_conv.4} parent=5 // pred_region
      %s259 = ssub.s32 %s14, 1
      // Predicated region
      $region13: #{double_conv.4} parent=11 // pred_check
        %p260 = pneg %p147
      $region14: #{double_conv.4} parent=11 // pred_check_branch
        %262 = sbr.rel (%p260) target = $region16
      $region15: #{double_conv.4} parent=11 // pred_region
        _
      $region16: #{double_conv.4} parent=11 // pred_fallthru
        _
      // Predicated region
      $region17: #{double_conv.4} parent=11 // pred_check
        %p263 = pneg %p168
      $region18: #{double_conv.4} parent=11 // pred_check_branch
        %265 = sbr.rel (%p263) target = $region20
      $region19: #{double_conv.4} parent=11 // pred_region
        _
      $region20: #{double_conv.4} parent=11 // pred_fallthru
        _
      // Predicated region
      $region21: #{double_conv.4} parent=11 // pred_check
        %p266 = pneg %p189
      $region22: #{double_conv.4} parent=11 // pred_check_branch
        %268 = sbr.rel (%p266) target = $region24
      $region23: #{double_conv.4} parent=11 // pred_region
        _
      $region24: #{double_conv.4} parent=11 // pred_fallthru
        _
    $region12: #{double_conv.4} parent=5 // pred_fallthru
      _
    %p269 = scmp.lt.s32.totalorder %s14, 2
    // Predicated region
    $region25: #{double_conv.4} parent=5 // pred_check
      %p270 = pneg %p269
    $region26: #{double_conv.4} parent=5 // pred_check_branch
      %272 = sbr.rel (%p270) target = $region28
    $region27: #{double_conv.4} parent=5 // pred_region
      // Predicated region
      $region29: #{double_conv.4} parent=27 // pred_check
        %p273 = pneg %p48
      $region30: #{double_conv.4} parent=27 // pred_check_branch
        %275 = sbr.rel (%p273) target = $region32
      $region31: #{double_conv.4} parent=27 // pred_region
        %s276 = smul.u32 16, %s22
        %p277 = scmp.lt.s32.totalorder %s21, 1
        %s278 = scalar_select %p277, %s21, 1
        %p279 = scmp.lt.s32.totalorder %s276, 15
        %s280 = scalar_select %p279, %s276, 15
        %s281 = smul.addr %s280, 2
        %s282 = smul.addr %s278, 32
        %s283 = sadd.s32 %s281, %s282
        %s284 = smul.addr %s283, 4
        %s285 = scalar_lea.vmem %s0, %s284
        %s286 = smul.u32 16, %s22
      $region32: #{double_conv.4} parent=27 // pred_fallthru
        _
      // Predicated region
      $region33: #{double_conv.4} parent=27 // pred_check
        %p287 = pneg %p84
      $region34: #{double_conv.4} parent=27 // pred_check_branch
        %289 = sbr.rel (%p287) target = $region36
      $region35: #{double_conv.4} parent=27 // pred_region
        %s290 = smul.u32 %s22, 16
        %s291 = ssub.s32 %s290, 1
        %p292 = scmp.gt.s32.totalorder %s291, 0
        %s293 = scalar_select %p292, %s291, 0
        %p294 = scmp.lt.s32.totalorder %s21, 1
        %s295 = scalar_select %p294, %s21, 1
        %p296 = scmp.lt.s32.totalorder %s293, 15
        %s297 = scalar_select %p296, %s293, 15
        %s298 = smul.addr %s297, 2
        %s299 = smul.addr %s295, 32
        %s300 = sadd.s32 %s298, %s299
        %s301 = smul.addr %s300, 4
        %s302 = scalar_lea.vmem %s1, %s301
        %s303 = smul.u32 %s22, 16
        %s304 = ssub.s32 %s303, 1
        %p305 = scmp.gt.s32.totalorder %s304, 0
        %s306 = scalar_select %p305, %s304, 0
      $region36: #{double_conv.4} parent=27 // pred_fallthru
        _
      // Predicated region
      $region37: #{double_conv.4} parent=27 // pred_check
        %p307 = pneg %p120
      $region38: #{double_conv.4} parent=27 // pred_check_branch
        %309 = sbr.rel (%p307) target = $region40
      $region39: #{double_conv.4} parent=27 // pred_region
        %s310 = smul.u32 %s22, 16
        %s311 = sadd.s32 %s310, 16
        %p312 = scmp.lt.s32.totalorder %s311, 15
        %s313 = scalar_select %p312, %s311, 15
        %p314 = scmp.lt.s32.totalorder %s21, 1
        %s315 = scalar_select %p314, %s21, 1
        %p316 = scmp.lt.s32.totalorder %s313, 15
        %s317 = scalar_select %p316, %s313, 15
        %s318 = smul.addr %s317, 2
        %s319 = smul.addr %s315, 32
        %s320 = sadd.s32 %s318, %s319
        %s321 = smul.addr %s320, 4
        %s322 = scalar_lea.vmem %s2, %s321
        %s323 = smul.u32 %s22, 16
        %s324 = sadd.s32 %s323, 16
        %p325 = scmp.lt.s32.totalorder %s324, 15
        %s326 = scalar_select %p325, %s324, 15
      $region40: #{double_conv.4} parent=27 // pred_fallthru
        _
    $region28: #{double_conv.4} parent=5 // pred_fallthru
      _
    %p327 = scmp.le.s32.totalorder 1, %s14
    %p328 = scmp.lt.s32.totalorder %s14, 3
    %p329 = pnand %p327, %p328
    %p330 = pneg %p329
    // Predicated region
    $region41: #{double_conv.4} parent=5 // pred_check
      _
    $region42: #{double_conv.4} parent=5 // pred_check_branch
      %332 = sbr.rel (%p329) target = $region44
    $region43: #{double_conv.4} parent=5 // pred_region
      %s333 = ssub.s32 %s14, 1
      %s334 = smul.u32 16, %s24
      %p335 = scmp.lt.s32.totalorder %s23, 1
      %s336 = scalar_select %p335, %s23, 1
      %p337 = scmp.lt.s32.totalorder %s334, 15
      %s338 = scalar_select %p337, %s334, 15
      %s339 = smul.addr %s338, 2
      %s340 = smul.addr %s336, 32
      %s341 = sadd.s32 %s339, %s340
      %s342 = smul.addr %s341, 4
      %s343 = scalar_lea.vmem %s0, %s342
      %p344 = pneg %p54
      %p345 = pneg %p51
      %s346 = smul.u32 %s24, 16
      %s347 = ssub.s32 %s346, 1
      %p348 = scmp.gt.s32.totalorder %s347, 0
      %s349 = scalar_select %p348, %s347, 0
      %p350 = scmp.lt.s32.totalorder %s23, 1
      %s351 = scalar_select %p350, %s23, 1
      %p352 = scmp.lt.s32.totalorder %s349, 15
      %s353 = scalar_select %p352, %s349, 15
      %s354 = smul.addr %s353, 2
      %s355 = smul.addr %s351, 32
      %s356 = sadd.s32 %s354, %s355
      %s357 = smul.addr %s356, 4
      %s358 = scalar_lea.vmem %s1, %s357
      %p359 = pneg %p90
      %p360 = pneg %p87
      %s361 = smul.u32 %s24, 16
      %s362 = sadd.s32 %s361, 16
      %p363 = scmp.lt.s32.totalorder %s362, 15
      %s364 = scalar_select %p363, %s362, 15
      %p365 = scmp.lt.s32.totalorder %s23, 1
      %s366 = scalar_select %p365, %s23, 1
      %p367 = scmp.lt.s32.totalorder %s364, 15
      %s368 = scalar_select %p367, %s364, 15
      %s369 = smul.addr %s368, 2
      %s370 = smul.addr %s366, 32
      %s371 = sadd.s32 %s369, %s370
      %s372 = smul.addr %s371, 4
      %s373 = scalar_lea.vmem %s2, %s372
      %p374 = pneg %p126
      %p375 = pneg %p123
      %p376 = pneg %p147
      %p377 = pneg %p144
      %p378 = pneg %p168
      %p379 = pneg %p165
      %p380 = pneg %p189
      %p381 = pneg %p186
      %p382 = pneg %p217
      %p383 = pneg %p214
      %s384 = smul.u32 16, %s24
      %p385 = scmp.lt.s32.totalorder %s23, 1
      %s386 = scalar_select %p385, %s23, 1
      %p387 = scmp.lt.s32.totalorder %s384, 15
      %s388 = scalar_select %p387, %s384, 15
      %s389 = smul.addr %s388, 2
      %s390 = smul.addr %s386, 32
      %s391 = sadd.s32 %s389, %s390
      %s392 = smul.addr %s391, 4
      %s393 = scalar_lea.vmem %s6, %s392
      %p394 = pneg %p245
      %p395 = pneg %p242
      %p396 = scmp.lt.s32.totalorder %s23, 1
      %s397 = scalar_select %p396, %s23, 1
      %p398 = scmp.lt.s32.totalorder %s24, 0
      %s399 = scalar_select %p398, %s24, 0
      %s400 = sadd.s32 %s399, %s397
      %s401 = smul.addr %s400, 2
      %s402 = scalar_lea.vmem %s7, %s401
      %s403 = smul.u32 16, %s24
      %p404 = scmp.lt.s32.totalorder %s23, 1
      %s405 = scalar_select %p404, %s23, 1
      %p406 = scmp.lt.s32.totalorder %s403, 15
      %s407 = scalar_select %p406, %s403, 15
      %s408 = smul.addr %s407, 2
      %s409 = smul.addr %s405, 32
      %s410 = sadd.s32 %s408, %s409
      %s411 = smul.addr %s410, 4
      %s412 = scalar_lea.vmem %s0, %s411
      %s413 = smul.u32 16, %s24
      %s414 = smul.u32 %s24, 16
      %s415 = ssub.s32 %s414, 1
      %p416 = scmp.gt.s32.totalorder %s415, 0
      %s417 = scalar_select %p416, %s415, 0
      %p418 = scmp.lt.s32.totalorder %s23, 1
      %s419 = scalar_select %p418, %s23, 1
      %p420 = scmp.lt.s32.totalorder %s417, 15
      %s421 = scalar_select %p420, %s417, 15
      %s422 = smul.addr %s421, 2
      %s423 = smul.addr %s419, 32
      %s424 = sadd.s32 %s422, %s423
      %s425 = smul.addr %s424, 4
      %s426 = scalar_lea.vmem %s1, %s425
      %s427 = smul.u32 %s24, 16
      %s428 = ssub.s32 %s427, 1
      %p429 = scmp.gt.s32.totalorder %s428, 0
      %s430 = scalar_select %p429, %s428, 0
      %s431 = smul.u32 %s24, 16
      %s432 = sadd.s32 %s431, 16
      %p433 = scmp.lt.s32.totalorder %s432, 15
      %s434 = scalar_select %p433, %s432, 15
      %p435 = scmp.lt.s32.totalorder %s23, 1
      %s436 = scalar_select %p435, %s23, 1
      %p437 = scmp.lt.s32.totalorder %s434, 15
      %s438 = scalar_select %p437, %s434, 15
      %s439 = smul.addr %s438, 2
      %s440 = smul.addr %s436, 32
      %s441 = sadd.s32 %s439, %s440
      %s442 = smul.addr %s441, 4
      %s443 = scalar_lea.vmem %s2, %s442
      %s444 = smul.u32 %s24, 16
      %s445 = sadd.s32 %s444, 16
      %p446 = scmp.lt.s32.totalorder %s445, 15
      %s447 = scalar_select %p446, %s445, 15
      %s448 = smul.u32 16, %s24
      %p449 = scmp.lt.s32.totalorder %s23, 1
      %s450 = scalar_select %p449, %s23, 1
      %p451 = scmp.lt.s32.totalorder %s448, 15
      %s452 = scalar_select %p451, %s448, 15
      %s453 = smul.addr %s452, 2
      %s454 = smul.addr %s450, 32
      %s455 = sadd.s32 %s453, %s454
      %s456 = smul.addr %s455, 4
      %s457 = scalar_lea.vmem %s6, %s456
      %s458 = smul.u32 16, %s24
      %p459 = scmp.lt.s32.totalorder %s23, 1
      %s460 = scalar_select %p459, %s23, 1
      %p461 = scmp.lt.s32.totalorder %s24, 0
      %s462 = scalar_select %p461, %s24, 0
      %s463 = sadd.s32 %s462, %s460
      %s464 = smul.addr %s463, 2
      %s465 = scalar_lea.vmem %s7, %s464
      %v467 = vld [vmem:[%s3] sm:$0x1]
      %v468 = vld [vmem:[%s4] sm:$0x1]
      %v469 = vld [vmem:[%s412] sm:$0xf]
      %v470 = vld [vmem:[%s412 + $0x4] sm:$0xf]
      %v471 = vld [vmem:[%s412 + $0x8] sm:$0xf]
      %v472 = vld [vmem:[%s412 + $0xc] sm:$0xf]
      %v473 = vld [vmem:[%s412 + $0x10] sm:$0xf]
      %v474 = vld [vmem:[%s412 + $0x14] sm:$0xf]
      %v475 = vld [vmem:[%s412 + $0x18] sm:$0xf]
      %v476 = vld [vmem:[%s412 + $0x1c] sm:$0xf]
      %v477 = vld [vmem:[%s412 + $0x20] sm:$0xf]
      %v478 = vld [vmem:[%s412 + $0x24] sm:$0xf]
      %v479 = vld [vmem:[%s412 + $0x28] sm:$0xf]
      %v480 = vld [vmem:[%s412 + $0x2c] sm:$0xf]
      %v481 = vld [vmem:[%s412 + $0x30] sm:$0xf]
      %v482 = vld [vmem:[%s412 + $0x34] sm:$0xf]
      %v483 = vld [vmem:[%s412 + $0x38] sm:$0xf]
      %v484 = vld [vmem:[%s412 + $0x3c] sm:$0xf]
      %v485 = vld [vmem:[%s412 + $0x40] sm:$0xf]
      %v486 = vld [vmem:[%s412 + $0x44] sm:$0xf]
      %v487 = vld [vmem:[%s412 + $0x48] sm:$0xf]
      %v488 = vld [vmem:[%s412 + $0x4c] sm:$0xf]
      %v489 = vld [vmem:[%s412 + $0x50] sm:$0xf]
      %v490 = vld [vmem:[%s412 + $0x54] sm:$0xf]
      %v491 = vld [vmem:[%s412 + $0x58] sm:$0xf]
      %v492 = vld [vmem:[%s412 + $0x5c] sm:$0xf]
      %v493 = vld [vmem:[%s412 + $0x60] sm:$0xf]
      %v494 = vld [vmem:[%s412 + $0x64] sm:$0xf]
      %v495 = vld [vmem:[%s412 + $0x68] sm:$0xf]
      %v496 = vld [vmem:[%s412 + $0x6c] sm:$0xf]
      %v497 = vld [vmem:[%s412 + $0x70] sm:$0xf]
      %v498 = vld [vmem:[%s412 + $0x74] sm:$0xf]
      %v499 = vld [vmem:[%s412 + $0x78] sm:$0xf]
      %v500 = vld [vmem:[%s412 + $0x7c] sm:$0xf]
      %v501 = vunpack.c.l.bf16 %v469
      %v502 = vunpack.c.l.bf16 %v470
      %v503 = vunpack.c.l.bf16 %v471
      %v504 = vunpack.c.l.bf16 %v472
      %v505 = vunpack.c.l.bf16 %v473
      %v506 = vunpack.c.l.bf16 %v474
      %v507 = vunpack.c.l.bf16 %v475
      %v508 = vunpack.c.l.bf16 %v476
      %v509 = vunpack.c.l.bf16 %v477
      %v510 = vunpack.c.l.bf16 %v478
      %v511 = vunpack.c.l.bf16 %v479
      %v512 = vunpack.c.l.bf16 %v480
      %v513 = vunpack.c.l.bf16 %v481
      %v514 = vunpack.c.l.bf16 %v482
      %v515 = vunpack.c.l.bf16 %v483
      %v516 = vunpack.c.l.bf16 %v484
      %v517 = vunpack.c.l.bf16 %v485
      %v518 = vunpack.c.l.bf16 %v486
      %v519 = vunpack.c.l.bf16 %v487
      %v520 = vunpack.c.l.bf16 %v488
      %v521 = vunpack.c.l.bf16 %v489
      %v522 = vunpack.c.l.bf16 %v490
      %v523 = vunpack.c.l.bf16 %v491
      %v524 = vunpack.c.l.bf16 %v492
      %v525 = vunpack.c.l.bf16 %v493
      %v526 = vunpack.c.l.bf16 %v494
      %v527 = vunpack.c.l.bf16 %v495
      %v528 = vunpack.c.l.bf16 %v496
      %v529 = vunpack.c.l.bf16 %v497
      %v530 = vunpack.c.l.bf16 %v498
      %v531 = vunpack.c.l.bf16 %v499
      %v532 = vunpack.c.l.bf16 %v500
      %v534 = vlaneseq
      %v535 = vshrl.u32 %v534, 7
      %v536 = vsub.s32 0, %v535
      %v537 = vrot.slane %v467, %v536
      %v539 = vmul.f32 %v501, %v537
      %v540 = vmul.f32 %v502, %v537
      %v541 = vmul.f32 %v503, %v537
      %v542 = vmul.f32 %v504, %v537
      %v543 = vmul.f32 %v505, %v537
      %v544 = vmul.f32 %v506, %v537
      %v545 = vmul.f32 %v507, %v537
      %v546 = vmul.f32 %v508, %v537
      %v547 = vmul.f32 %v509, %v537
      %v548 = vmul.f32 %v510, %v537
      %v549 = vmul.f32 %v511, %v537
      %v550 = vmul.f32 %v512, %v537
      %v551 = vmul.f32 %v513, %v537
      %v552 = vmul.f32 %v514, %v537
      %v553 = vmul.f32 %v515, %v537
      %v554 = vmul.f32 %v516, %v537
      %v555 = vmul.f32 %v517, %v537
      %v556 = vmul.f32 %v518, %v537
      %v557 = vmul.f32 %v519, %v537
      %v558 = vmul.f32 %v520, %v537
      %v559 = vmul.f32 %v521, %v537
      %v560 = vmul.f32 %v522, %v537
      %v561 = vmul.f32 %v523, %v537
      %v562 = vmul.f32 %v524, %v537
      %v563 = vmul.f32 %v525, %v537
      %v564 = vmul.f32 %v526, %v537
      %v565 = vmul.f32 %v527, %v537
      %v566 = vmul.f32 %v528, %v537
      %v567 = vmul.f32 %v529, %v537
      %v568 = vmul.f32 %v530, %v537
      %v569 = vmul.f32 %v531, %v537
      %v570 = vmul.f32 %v532, %v537
      %v572 = vlaneseq
      %v573 = vshrl.u32 %v572, 7
      %v574 = vsub.s32 0, %v573
      %v575 = vrot.slane %v468, %v574
      %v577 = vadd.f32 %v539, %v575
      %v578 = vadd.f32 %v540, %v575
      %v579 = vadd.f32 %v541, %v575
      %v580 = vadd.f32 %v542, %v575
      %v581 = vadd.f32 %v543, %v575
      %v582 = vadd.f32 %v544, %v575
      %v583 = vadd.f32 %v545, %v575
      %v584 = vadd.f32 %v546, %v575
      %v585 = vadd.f32 %v547, %v575
      %v586 = vadd.f32 %v548, %v575
      %v587 = vadd.f32 %v549, %v575
      %v588 = vadd.f32 %v550, %v575
      %v589 = vadd.f32 %v551, %v575
      %v590 = vadd.f32 %v552, %v575
      %v591 = vadd.f32 %v553, %v575
      %v592 = vadd.f32 %v554, %v575
      %v593 = vadd.f32 %v555, %v575
      %v594 = vadd.f32 %v556, %v575
      %v595 = vadd.f32 %v557, %v575
      %v596 = vadd.f32 %v558, %v575
      %v597 = vadd.f32 %v559, %v575
      %v598 = vadd.f32 %v560, %v575
      %v599 = vadd.f32 %v561, %v575
      %v600 = vadd.f32 %v562, %v575
      %v601 = vadd.f32 %v563, %v575
      %v602 = vadd.f32 %v564, %v575
      %v603 = vadd.f32 %v565, %v575
      %v604 = vadd.f32 %v566, %v575
      %v605 = vadd.f32 %v567, %v575
      %v606 = vadd.f32 %v568, %v575
      %v607 = vadd.f32 %v569, %v575
      %v608 = vadd.f32 %v570, %v575
      %v609 = vmax.f32 %v577, 0.0
      %v610 = vmax.f32 %v578, 0.0
      %v611 = vmax.f32 %v579, 0.0
      %v612 = vmax.f32 %v580, 0.0
      %v613 = vmax.f32 %v581, 0.0
      %v614 = vmax.f32 %v582, 0.0
      %v615 = vmax.f32 %v583, 0.0
      %v616 = vmax.f32 %v584, 0.0
      %v617 = vmax.f32 %v585, 0.0
      %v618 = vmax.f32 %v586, 0.0
      %v619 = vmax.f32 %v587, 0.0
      %v620 = vmax.f32 %v588, 0.0
      %v621 = vmax.f32 %v589, 0.0
      %v622 = vmax.f32 %v590, 0.0
      %v623 = vmax.f32 %v591, 0.0
      %v624 = vmax.f32 %v592, 0.0
      %v625 = vmax.f32 %v593, 0.0
      %v626 = vmax.f32 %v594, 0.0
      %v627 = vmax.f32 %v595, 0.0
      %v628 = vmax.f32 %v596, 0.0
      %v629 = vmax.f32 %v597, 0.0
      %v630 = vmax.f32 %v598, 0.0
      %v631 = vmax.f32 %v599, 0.0
      %v632 = vmax.f32 %v600, 0.0
      %v633 = vmax.f32 %v601, 0.0
      %v634 = vmax.f32 %v602, 0.0
      %v635 = vmax.f32 %v603, 0.0
      %v636 = vmax.f32 %v604, 0.0
      %v637 = vmax.f32 %v605, 0.0
      %v638 = vmax.f32 %v606, 0.0
      %v639 = vmax.f32 %v607, 0.0
      %v640 = vmax.f32 %v608, 0.0
      %v641 = vpack.c.bf16 %v610, %v609
      %v642 = vpack.c.bf16 %v612, %v611
      %v643 = vpack.c.bf16 %v614, %v613
      %v644 = vpack.c.bf16 %v616, %v615
      %v645 = vpack.c.bf16 %v618, %v617
      %v646 = vpack.c.bf16 %v620, %v619
      %v647 = vpack.c.bf16 %v622, %v621
      %v648 = vpack.c.bf16 %v624, %v623
      %v649 = vpack.c.bf16 %v626, %v625
      %v650 = vpack.c.bf16 %v628, %v627
      %v651 = vpack.c.bf16 %v630, %v629
      %v652 = vpack.c.bf16 %v632, %v631
      %v653 = vpack.c.bf16 %v634, %v633
      %v654 = vpack.c.bf16 %v636, %v635
      %v655 = vpack.c.bf16 %v638, %v637
      %v656 = vpack.c.bf16 %v640, %v639
      %v657 = vld [vmem:[%s426] sm:$0xf]
      %v658 = vld [vmem:[%s426 + $0x4] sm:$0xf]
      %v659 = vunpack.c.l.bf16 %v657
      %v660 = vunpack.c.l.bf16 %v658
      %v661 = vmul.f32 %v659, %v537
      %v662 = vmul.f32 %v660, %v537
      %v663 = vadd.f32 %v661, %v575
      %v664 = vadd.f32 %v662, %v575
      %v665 = vmax.f32 %v663, 0.0
      %v666 = vmax.f32 %v664, 0.0
      %v667 = vpack.c.bf16 %v666, %v665
      %p668 = scmp.gt.s32.totalorder %s24, 0
      %s669 = scalar_select %p668, 1.0, 0.0
      %p671 = scmp.ne.f32.partialorder %s669, %s669
      %s672 = sshrl.u32 %s669, 16
      %s673 = sand.u32 %s672, 1
      %s674 = sadd.s32 32767, %s673
      %s675 = sadd.s32 %s669, %s674
      %s676 = sand.u32 %s675, 4294901760
      %s677 = scalar_select %p671, 2143289344, %s676
      %s679 = sshrl.u32 %s677, 16
      %s680 = sshll.u32 %s679, 16
      %s681 = sor.u32 %s679, %s680
      %v682 = vstv %s681
      %v684 = vmul.bf16 %v667, %v682
      %v685 = vld [vmem:[%s443] sm:$0xf]
      %v686 = vld [vmem:[%s443 + $0x4] sm:$0xf]
      %v687 = vunpack.c.l.bf16 %v685
      %v688 = vunpack.c.l.bf16 %v686
      %v689 = vmul.f32 %v687, %v537
      %v690 = vmul.f32 %v688, %v537
      %v691 = vadd.f32 %v689, %v575
      %v692 = vadd.f32 %v690, %v575
      %v693 = vmax.f32 %v691, 0.0
      %v694 = vmax.f32 %v692, 0.0
      %v695 = vpack.c.bf16 %v694, %v693
      %p696 = scmp.lt.s32.totalorder %s24, 0
      %s697 = scalar_select %p696, 1.0, 0.0
      %p699 = scmp.ne.f32.partialorder %s697, %s697
      %s700 = sshrl.u32 %s697, 16
      %s701 = sand.u32 %s700, 1
      %s702 = sadd.s32 32767, %s701
      %s703 = sadd.s32 %s697, %s702
      %s704 = sand.u32 %s703, 4294901760
      %s705 = scalar_select %p699, 2143289344, %s704
      %s707 = sshrl.u32 %s705, 16
      %s708 = sshll.u32 %s707, 16
      %s709 = sor.u32 %s707, %s708
      %v710 = vstv %s709
      %v712 = vmul.bf16 %v695, %v710
      %v713 = vld [vmem:[%s5] sm:$0xff]
      %v714 = vld [vmem:[%s5 + $0x8] sm:$0xf]
      %v715 = vld [vmem:[%s5 + $0xc] sm:$0xff]
      %v716 = vld [vmem:[%s5 + $0x14] sm:$0xf]
      %v717 = vld [vmem:[%s5 + $0x18] sm:$0xff]
      %v718 = vld [vmem:[%s5 + $0x20] sm:$0xf]
      %v719 = vld [vmem:[%s5 + $0x24] sm:$0xff]
      %v720 = vld [vmem:[%s5 + $0x2c] sm:$0xf]
      %v721 = vld [vmem:[%s5 + $0x30] sm:$0xff]
      %v722 = vld [vmem:[%s5 + $0x38] sm:$0xf]
      %v723 = vld [vmem:[%s5 + $0x3c] sm:$0xff]
      %v724 = vld [vmem:[%s5 + $0x44] sm:$0xf]
      %v725 = vld [vmem:[%s5 + $0x48] sm:$0xff]
      %v726 = vld [vmem:[%s5 + $0x50] sm:$0xf]
      %v727 = vld [vmem:[%s5 + $0x54] sm:$0xff]
      %v728 = vld [vmem:[%s5 + $0x5c] sm:$0xf]
      %v729 = vld [vmem:[%s5 + $0x60] sm:$0xff]
      %v730 = vld [vmem:[%s5 + $0x68] sm:$0xf]
      %v731 = vld [vmem:[%s5 + $0x6c] sm:$0xff]
      %v732 = vld [vmem:[%s5 + $0x74] sm:$0xf]
      %v733 = vld [vmem:[%s5 + $0x78] sm:$0xff]
      %v734 = vld [vmem:[%s5 + $0x80] sm:$0xf]
      %v735 = vld [vmem:[%s5 + $0x84] sm:$0xff]
      %v736 = vld [vmem:[%s5 + $0x8c] sm:$0xf]
      %v737 = vld [vmem:[%s5 + $0x90] sm:$0xff]
      %v738 = vld [vmem:[%s5 + $0x98] sm:$0xf]
      %v739 = vld [vmem:[%s5 + $0x9c] sm:$0xff]
      %v740 = vld [vmem:[%s5 + $0xa4] sm:$0xf]
      %v741 = vld [vmem:[%s5 + $0xa8] sm:$0xff]
      %v742 = vld [vmem:[%s5 + $0xb0] sm:$0xf]
      %v743 = vld [vmem:[%s5 + $0xb4] sm:$0xff]
      %v744 = vld [vmem:[%s5 + $0xbc] sm:$0xf]
      %v745 = vld [vmem:[%s5 + $0xc0] sm:$0xff]
      %v746 = vld [vmem:[%s5 + $0xc8] sm:$0xf]
      %v747 = vld [vmem:[%s5 + $0xcc] sm:$0xff]
      %v748 = vld [vmem:[%s5 + $0xd4] sm:$0xf]
      %v749 = vld [vmem:[%s5 + $0xd8] sm:$0xff]
      %v750 = vld [vmem:[%s5 + $0xe0] sm:$0xf]
      %v751 = vld [vmem:[%s5 + $0xe4] sm:$0xff]
      %v752 = vld [vmem:[%s5 + $0xec] sm:$0xf]
      %v753 = vld [vmem:[%s5 + $0xf0] sm:$0xff]
      %v754 = vld [vmem:[%s5 + $0xf8] sm:$0xf]
      %v755 = vld [vmem:[%s5 + $0xfc] sm:$0xff]
      %v756 = vld [vmem:[%s5 + $0x104] sm:$0xf]
      %v757 = vld [vmem:[%s5 + $0x108] sm:$0xff]
      %v758 = vld [vmem:[%s5 + $0x110] sm:$0xf]
      %v759 = vld [vmem:[%s5 + $0x114] sm:$0xff]
      %v760 = vld [vmem:[%s5 + $0x11c] sm:$0xf]
      %v761 = vld [vmem:[%s5 + $0x120] sm:$0xff]
      %v762 = vld [vmem:[%s5 + $0x128] sm:$0xf]
      %v763 = vld [vmem:[%s5 + $0x12c] sm:$0xff]
      %v764 = vld [vmem:[%s5 + $0x134] sm:$0xf]
      %v765 = vld [vmem:[%s5 + $0x138] sm:$0xff]
      %v766 = vld [vmem:[%s5 + $0x140] sm:$0xf]
      %v767 = vld [vmem:[%s5 + $0x144] sm:$0xff]
      %v768 = vld [vmem:[%s5 + $0x14c] sm:$0xf]
      %v769 = vld [vmem:[%s5 + $0x150] sm:$0xff]
      %v770 = vld [vmem:[%s5 + $0x158] sm:$0xf]
      %v771 = vld [vmem:[%s5 + $0x15c] sm:$0xff]
      %v772 = vld [vmem:[%s5 + $0x164] sm:$0xf]
      %v773 = vld [vmem:[%s5 + $0x168] sm:$0xff]
      %v774 = vld [vmem:[%s5 + $0x170] sm:$0xf]
      %v775 = vld [vmem:[%s5 + $0x174] sm:$0xff]
      %v776 = vld [vmem:[%s5 + $0x17c] sm:$0xf]
      %v777 = vld [vmem:[%s5 + $0x180] sm:$0xff]
      %v778 = vld [vmem:[%s5 + $0x188] sm:$0xf]
      %v779 = vld [vmem:[%s5 + $0x18c] sm:$0xff]
      %v780 = vld [vmem:[%s5 + $0x194] sm:$0xf]
      %v781 = vld [vmem:[%s5 + $0x198] sm:$0xff]
      %v782 = vld [vmem:[%s5 + $0x1a0] sm:$0xf]
      %v783 = vld [vmem:[%s5 + $0x1a4] sm:$0xff]
      %v784 = vld [vmem:[%s5 + $0x1ac] sm:$0xf]
      %v785 = vld [vmem:[%s5 + $0x1b0] sm:$0xff]
      %v786 = vld [vmem:[%s5 + $0x1b8] sm:$0xf]
      %v787 = vld [vmem:[%s5 + $0x1bc] sm:$0xff]
      %v788 = vld [vmem:[%s5 + $0x1c4] sm:$0xf]
      %v789 = vld [vmem:[%s5 + $0x1c8] sm:$0xff]
      %v790 = vld [vmem:[%s5 + $0x1d0] sm:$0xf]
      %v791 = vld [vmem:[%s5 + $0x1d4] sm:$0xff]
      %v792 = vld [vmem:[%s5 + $0x1dc] sm:$0xf]
      %v793 = vld [vmem:[%s5 + $0x1e0] sm:$0xff]
      %v794 = vld [vmem:[%s5 + $0x1e8] sm:$0xf]
      %v795 = vld [vmem:[%s5 + $0x1ec] sm:$0xff]
      %v796 = vld [vmem:[%s5 + $0x1f4] sm:$0xf]
      %v797 = vld [vmem:[%s5 + $0x1f8] sm:$0xff]
      %v798 = vld [vmem:[%s5 + $0x200] sm:$0xf]
      %v799 = vld [vmem:[%s5 + $0x204] sm:$0xff]
      %v800 = vld [vmem:[%s5 + $0x20c] sm:$0xf]
      %v801 = vld [vmem:[%s5 + $0x210] sm:$0xff]
      %v802 = vld [vmem:[%s5 + $0x218] sm:$0xf]
      %v803 = vld [vmem:[%s5 + $0x21c] sm:$0xff]
      %v804 = vld [vmem:[%s5 + $0x224] sm:$0xf]
      %v805 = vld [vmem:[%s5 + $0x228] sm:$0xff]
      %v806 = vld [vmem:[%s5 + $0x230] sm:$0xf]
      %v807 = vld [vmem:[%s5 + $0x234] sm:$0xff]
      %v808 = vld [vmem:[%s5 + $0x23c] sm:$0xf]
      %v905 = vunpack.c.l.b16 %v713
      %v906 = vunpack.c.h.b16 %v713
      %v907 = vunpack.c.l.b16 %v714
      %v908 = vunpack.c.l.b16 %v715
      %v909 = vunpack.c.h.b16 %v715
      %v910 = vunpack.c.l.b16 %v716
      %v911 = vunpack.c.l.b16 %v717
      %v912 = vunpack.c.h.b16 %v717
      %v913 = vunpack.c.l.b16 %v718
      %v914 = vunpack.c.l.b16 %v719
      %v915 = vunpack.c.h.b16 %v719
      %v916 = vunpack.c.l.b16 %v720
      %v917 = vunpack.c.l.b16 %v721
      %v918 = vunpack.c.h.b16 %v721
      %v919 = vunpack.c.l.b16 %v722
      %v920 = vunpack.c.l.b16 %v723
      %v921 = vunpack.c.h.b16 %v723
      %v922 = vunpack.c.l.b16 %v724
      %v923 = vunpack.c.l.b16 %v725
      %v924 = vunpack.c.h.b16 %v725
      %v925 = vunpack.c.l.b16 %v726
      %v926 = vunpack.c.l.b16 %v727
      %v927 = vunpack.c.h.b16 %v727
      %v928 = vunpack.c.l.b16 %v728
      %v929 = vunpack.c.l.b16 %v729
      %v930 = vunpack.c.h.b16 %v729
      %v931 = vunpack.c.l.b16 %v730
      %v932 = vunpack.c.l.b16 %v731
      %v933 = vunpack.c.h.b16 %v731
      %v934 = vunpack.c.l.b16 %v732
      %v935 = vunpack.c.l.b16 %v733
      %v936 = vunpack.c.h.b16 %v733
      %v937 = vunpack.c.l.b16 %v734
      %v938 = vunpack.c.l.b16 %v735
      %v939 = vunpack.c.h.b16 %v735
      %v940 = vunpack.c.l.b16 %v736
      %v941 = vunpack.c.l.b16 %v737
      %v942 = vunpack.c.h.b16 %v737
      %v943 = vunpack.c.l.b16 %v738
      %v944 = vunpack.c.l.b16 %v739
      %v945 = vunpack.c.h.b16 %v739
      %v946 = vunpack.c.l.b16 %v740
      %v947 = vunpack.c.l.b16 %v741
      %v948 = vunpack.c.h.b16 %v741
      %v949 = vunpack.c.l.b16 %v742
      %v950 = vunpack.c.l.b16 %v743
      %v951 = vunpack.c.h.b16 %v743
      %v952 = vunpack.c.l.b16 %v744
      %v953 = vunpack.c.l.b16 %v745
      %v954 = vunpack.c.h.b16 %v745
      %v955 = vunpack.c.l.b16 %v746
      %v956 = vunpack.c.l.b16 %v747
      %v957 = vunpack.c.h.b16 %v747
      %v958 = vunpack.c.l.b16 %v748
      %v959 = vunpack.c.l.b16 %v749
      %v960 = vunpack.c.h.b16 %v749
      %v961 = vunpack.c.l.b16 %v750
      %v962 = vunpack.c.l.b16 %v751
      %v963 = vunpack.c.h.b16 %v751
      %v964 = vunpack.c.l.b16 %v752
      %v965 = vunpack.c.l.b16 %v753
      %v966 = vunpack.c.h.b16 %v753
      %v967 = vunpack.c.l.b16 %v754
      %v968 = vunpack.c.l.b16 %v755
      %v969 = vunpack.c.h.b16 %v755
      %v970 = vunpack.c.l.b16 %v756
      %v971 = vunpack.c.l.b16 %v757
      %v972 = vunpack.c.h.b16 %v757
      %v973 = vunpack.c.l.b16 %v758
      %v974 = vunpack.c.l.b16 %v759
      %v975 = vunpack.c.h.b16 %v759
      %v976 = vunpack.c.l.b16 %v760
      %v977 = vunpack.c.l.b16 %v761
      %v978 = vunpack.c.h.b16 %v761
      %v979 = vunpack.c.l.b16 %v762
      %v980 = vunpack.c.l.b16 %v763
      %v981 = vunpack.c.h.b16 %v763
      %v982 = vunpack.c.l.b16 %v764
      %v983 = vunpack.c.l.b16 %v765
      %v984 = vunpack.c.h.b16 %v765
      %v985 = vunpack.c.l.b16 %v766
      %v986 = vunpack.c.l.b16 %v767
      %v987 = vunpack.c.h.b16 %v767
      %v988 = vunpack.c.l.b16 %v768
      %v989 = vunpack.c.l.b16 %v769
      %v990 = vunpack.c.h.b16 %v769
      %v991 = vunpack.c.l.b16 %v770
      %v992 = vunpack.c.l.b16 %v771
      %v993 = vunpack.c.h.b16 %v771
      %v994 = vunpack.c.l.b16 %v772
      %v995 = vunpack.c.l.b16 %v773
      %v996 = vunpack.c.h.b16 %v773
      %v997 = vunpack.c.l.b16 %v774
      %v998 = vunpack.c.l.b16 %v775
      %v999 = vunpack.c.h.b16 %v775
      %v1000 = vunpack.c.l.b16 %v776
      %v1001 = vunpack.c.l.b16 %v777
      %v1002 = vunpack.c.h.b16 %v777
      %v1003 = vunpack.c.l.b16 %v778
      %v1004 = vunpack.c.l.b16 %v779
      %v1005 = vunpack.c.h.b16 %v779
      %v1006 = vunpack.c.l.b16 %v780
      %v1007 = vunpack.c.l.b16 %v781
      %v1008 = vunpack.c.h.b16 %v781
      %v1009 = vunpack.c.l.b16 %v782
      %v1010 = vunpack.c.l.b16 %v783
      %v1011 = vunpack.c.h.b16 %v783
      %v1012 = vunpack.c.l.b16 %v784
      %v1013 = vunpack.c.l.b16 %v785
      %v1014 = vunpack.c.h.b16 %v785
      %v1015 = vunpack.c.l.b16 %v786
      %v1016 = vunpack.c.l.b16 %v787
      %v1017 = vunpack.c.h.b16 %v787
      %v1018 = vunpack.c.l.b16 %v788
      %v1019 = vunpack.c.l.b16 %v789
      %v1020 = vunpack.c.h.b16 %v789
      %v1021 = vunpack.c.l.b16 %v790
      %v1022 = vunpack.c.l.b16 %v791
      %v1023 = vunpack.c.h.b16 %v791
      %v1024 = vunpack.c.l.b16 %v792
      %v1025 = vunpack.c.l.b16 %v793
      %v1026 = vunpack.c.h.b16 %v793
      %v1027 = vunpack.c.l.b16 %v794
      %v1028 = vunpack.c.l.b16 %v795
      %v1029 = vunpack.c.h.b16 %v795
      %v1030 = vunpack.c.l.b16 %v796
      %v1031 = vunpack.c.l.b16 %v797
      %v1032 = vunpack.c.h.b16 %v797
      %v1033 = vunpack.c.l.b16 %v798
      %v1034 = vunpack.c.l.b16 %v799
      %v1035 = vunpack.c.h.b16 %v799
      %v1036 = vunpack.c.l.b16 %v800
      %v1037 = vunpack.c.l.b16 %v801
      %v1038 = vunpack.c.h.b16 %v801
      %v1039 = vunpack.c.l.b16 %v802
      %v1040 = vunpack.c.l.b16 %v803
      %v1041 = vunpack.c.h.b16 %v803
      %v1042 = vunpack.c.l.b16 %v804
      %v1043 = vunpack.c.l.b16 %v805
      %v1044 = vunpack.c.h.b16 %v805
      %v1045 = vunpack.c.l.b16 %v806
      %v1046 = vunpack.c.l.b16 %v807
      %v1047 = vunpack.c.h.b16 %v807
      %v1048 = vunpack.c.l.b16 %v808
      %v1049 = vpack.c.b16 %v908, %v905
      %v1050 = vpack.c.b16 %v909, %v906
      %v1051 = vpack.c.b16 %v910, %v907
      %v1052 = vpack.c.b16 %v914, %v911
      %v1053 = vpack.c.b16 %v915, %v912
      %v1054 = vpack.c.b16 %v916, %v913
      %v1055 = vpack.c.b16 %v920, %v917
      %v1056 = vpack.c.b16 %v921, %v918
      %v1057 = vpack.c.b16 %v922, %v919
      %v1058 = vpack.c.b16 %v926, %v923
      %v1059 = vpack.c.b16 %v927, %v924
      %v1060 = vpack.c.b16 %v928, %v925
      %v1061 = vpack.c.b16 %v932, %v929
      %v1062 = vpack.c.b16 %v933, %v930
      %v1063 = vpack.c.b16 %v934, %v931
      %v1064 = vpack.c.b16 %v938, %v935
      %v1065 = vpack.c.b16 %v939, %v936
      %v1066 = vpack.c.b16 %v940, %v937
      %v1067 = vpack.c.b16 %v944, %v941
      %v1068 = vpack.c.b16 %v945, %v942
      %v1069 = vpack.c.b16 %v946, %v943
      %v1070 = vpack.c.b16 %v950, %v947
      %v1071 = vpack.c.b16 %v951, %v948
      %v1072 = vpack.c.b16 %v952, %v949
      %v1073 = vpack.c.b16 %v956, %v953
      %v1074 = vpack.c.b16 %v957, %v954
      %v1075 = vpack.c.b16 %v958, %v955
      %v1076 = vpack.c.b16 %v962, %v959
      %v1077 = vpack.c.b16 %v963, %v960
      %v1078 = vpack.c.b16 %v964, %v961
      %v1079 = vpack.c.b16 %v968, %v965
      %v1080 = vpack.c.b16 %v969, %v966
      %v1081 = vpack.c.b16 %v970, %v967
      %v1082 = vpack.c.b16 %v974, %v971
      %v1083 = vpack.c.b16 %v975, %v972
      %v1084 = vpack.c.b16 %v976, %v973
      %v1085 = vpack.c.b16 %v980, %v977
      %v1086 = vpack.c.b16 %v981, %v978
      %v1087 = vpack.c.b16 %v982, %v979
      %v1088 = vpack.c.b16 %v986, %v983
      %v1089 = vpack.c.b16 %v987, %v984
      %v1090 = vpack.c.b16 %v988, %v985
      %v1091 = vpack.c.b16 %v992, %v989
      %v1092 = vpack.c.b16 %v993, %v990
      %v1093 = vpack.c.b16 %v994, %v991
      %v1094 = vpack.c.b16 %v998, %v995
      %v1095 = vpack.c.b16 %v999, %v996
      %v1096 = vpack.c.b16 %v1000, %v997
      %v1097 = vpack.c.b16 %v1004, %v1001
      %v1098 = vpack.c.b16 %v1005, %v1002
      %v1099 = vpack.c.b16 %v1006, %v1003
      %v1100 = vpack.c.b16 %v1010, %v1007
      %v1101 = vpack.c.b16 %v1011, %v1008
      %v1102 = vpack.c.b16 %v1012, %v1009
      %v1103 = vpack.c.b16 %v1016, %v1013
      %v1104 = vpack.c.b16 %v1017, %v1014
      %v1105 = vpack.c.b16 %v1018, %v1015
      %v1106 = vpack.c.b16 %v1022, %v1019
      %v1107 = vpack.c.b16 %v1023, %v1020
      %v1108 = vpack.c.b16 %v1024, %v1021
      %v1109 = vpack.c.b16 %v1028, %v1025
      %v1110 = vpack.c.b16 %v1029, %v1026
      %v1111 = vpack.c.b16 %v1030, %v1027
      %v1112 = vpack.c.b16 %v1034, %v1031
      %v1113 = vpack.c.b16 %v1035, %v1032
      %v1114 = vpack.c.b16 %v1036, %v1033
      %v1115 = vpack.c.b16 %v1040, %v1037
      %v1116 = vpack.c.b16 %v1041, %v1038
      %v1117 = vpack.c.b16 %v1042, %v1039
      %v1118 = vpack.c.b16 %v1046, %v1043
      %v1119 = vpack.c.b16 %v1047, %v1044
      %v1120 = vpack.c.b16 %v1048, %v1045
      %1193 = vmatprep.subr.bf16.mxu0 %v1050
      %1194 = vmatpush1.bf16.msra.mxu0 %v1049
      %1195 = vmatprep.subr.bf16.mxu0 %v1053
      %1196 = vmatpush1.bf16.msra.mxu0 %v1052
      %1197 = vmatprep.subr.bf16.mxu0 %v1056
      %1198 = vmatpush1.bf16.msra.mxu0 %v1055
      %1199 = vmatprep.subr.bf16.mxu0 %v1059
      %1200 = vmatpush1.bf16.msra.mxu0 %v1058
      %1201 = vmatprep.subr.bf16.mxu0 %v1062
      %1202 = vmatpush1.bf16.msra.mxu0 %v1061
      %1203 = vmatprep.subr.bf16.mxu0 %v1065
      %1204 = vmatpush1.bf16.msra.mxu0 %v1064
      %1205 = vmatprep.subr.bf16.mxu0 %v1068
      %1206 = vmatpush1.bf16.msra.mxu0 %v1067
      %1207 = vmatprep.subr.bf16.mxu0 %v1071
      %1208 = vmatpush1.bf16.msra.mxu0 %v1070
      %1209 = vmatprep.subr.bf16.mxu0 %v1074
      %1210 = vmatpush1.bf16.msra.mxu0 %v1073
      %1211 = vmatprep.subr.bf16.mxu0 %v1077
      %1212 = vmatpush1.bf16.msra.mxu0 %v1076
      %1213 = vmatprep.subr.bf16.mxu0 %v1080
      %1214 = vmatpush1.bf16.msra.mxu0 %v1079
      %1215 = vmatprep.subr.bf16.mxu0 %v1083
      %1216 = vmatpush1.bf16.msra.mxu0 %v1082
      %1217 = vmatprep.subr.bf16.mxu0 %v1086
      %1218 = vmatpush1.bf16.msra.mxu0 %v1085
      %1219 = vmatprep.subr.bf16.mxu0 %v1089
      %1220 = vmatpush1.bf16.msra.mxu0 %v1088
      %1221 = vmatprep.subr.bf16.mxu0 %v1092
      %1222 = vmatpush1.bf16.msra.mxu0 %v1091
      %1223 = vmatprep.subr.bf16.mxu0 %v1095
      %1224 = vmatpush1.bf16.msra.mxu0 %v1094
      %1225 = vmatprep.mubr.bf16.mxu0 %v641
      %1226 = vmatmul.mubr.bf16.gmra.mrb[0].mxu0 %v684
      %v1227 = vpop.f32.mrb[0].mxu0
      %v1228 = vadd.f32 0.0, %v1227
      %v1229 = vpop.f32.mrb[0].mxu0
      %v1230 = vadd.f32 0.0, %v1229
      %v1231 = vpop.f32.mrb[0].mxu0
      %v1232 = vadd.f32 0.0, %v1231
      %v1233 = vpop.f32.mrb[0].mxu0
      %v1234 = vadd.f32 0.0, %v1233
      %1235 = vmatprep.mubr.bf16.mxu0 %v642
      %1236 = vmatmul.mubr.bf16.gmra.mrb[0].mxu0 %v641
      %v1237 = vpop.f32.mrb[0].mxu0
      %v1238 = vadd.f32 0.0, %v1237
      %v1239 = vpop.f32.mrb[0].mxu0
      %v1240 = vadd.f32 0.0, %v1239
      %v1241 = vpop.f32.mrb[0].mxu0
      %v1242 = vadd.f32 0.0, %v1241
      %v1243 = vpop.f32.mrb[0].mxu0
      %v1244 = vadd.f32 0.0, %v1243
      %1245 = vmatprep.mubr.bf16.mxu0 %v643
      %1246 = vmatmul.mubr.bf16.gmra.mrb[0].mxu0 %v642
      %v1247 = vpop.f32.mrb[0].mxu0
      %v1248 = vadd.f32 0.0, %v1247
      %v1249 = vpop.f32.mrb[0].mxu0
      %v1250 = vadd.f32 0.0, %v1249
      %v1251 = vpop.f32.mrb[0].mxu0
      %v1252 = vadd.f32 0.0, %v1251
      %v1253 = vpop.f32.mrb[0].mxu0
      %v1254 = vadd.f32 0.0, %v1253
      %1255 = vmatprep.mubr.bf16.mxu0 %v644
      %1256 = vmatmul.mubr.bf16.gmra.mrb[0].mxu0 %v643
      %v1257 = vpop.f32.mrb[0].mxu0
      %v1258 = vadd.f32 0.0, %v1257
      %v1259 = vpop.f32.mrb[0].mxu0
      %v1260 = vadd.f32 0.0, %v1259
      %v1261 = vpop.f32.mrb[0].mxu0
      %v1262 = vadd.f32 0.0, %v1261
      %v1263 = vpop.f32.mrb[0].mxu0
      %v1264 = vadd.f32 0.0, %v1263
      %1265 = vmatprep.mubr.bf16.mxu0 %v645
      %1266 = vmatmul.mubr.bf16.gmra.mrb[0].mxu0 %v644
      %v1267 = vpop.f32.mrb[0].mxu0
      %v1268 = vadd.f32 0.0, %v1267
      %v1269 = vpop.f32.mrb[0].mxu0
      %v1270 = vadd.f32 0.0, %v1269
      %v1271 = vpop.f32.mrb[0].mxu0
      %v1272 = vadd.f32 0.0, %v1271
      %v1273 = vpop.f32.mrb[0].mxu0
      %v1274 = vadd.f32 0.0, %v1273
      %1275 = vmatprep.mubr.bf16.mxu0 %v646
      %1276 = vmatmul.mubr.bf16.gmra.mrb[0].mxu0 %v645
      %v1277 = vpop.f32.mrb[0].mxu0
      %v1278 = vadd.f32 0.0, %v1277
      %v1279 = vpop.f32.mrb[0].mxu0
      %v1280 = vadd.f32 0.0, %v1279
      %v1281 = vpop.f32.mrb[0].mxu0
      %v1282 = vadd.f32 0.0, %v1281
      %v1283 = vpop.f32.mrb[0].mxu0
      %v1284 = vadd.f32 0.0, %v1283
      %1285 = vmatprep.mubr.bf16.mxu0 %v647
      %1286 = vmatmul.mubr.bf16.gmra.mrb[0].mxu0 %v646
      %v1287 = vpop.f32.mrb[0].mxu0
      %v1288 = vadd.f32 0.0, %v1287
      %v1289 = vpop.f32.mrb[0].mxu0
      %v1290 = vadd.f32 0.0, %v1289
      %v1291 = vpop.f32.mrb[0].mxu0
      %v1292 = vadd.f32 0.0, %v1291
      %v1293 = vpop.f32.mrb[0].mxu0
      %v1294 = vadd.f32 0.0, %v1293
      %1295 = vmatprep.mubr.bf16.mxu0 %v648
      %1296 = vmatmul.mubr.bf16.gmra.mrb[0].mxu0 %v647
      %v1297 = vpop.f32.mrb[0].mxu0
      %v1298 = vadd.f32 0.0, %v1297
      %v1299 = vpop.f32.mrb[0].mxu0
      %v1300 = vadd.f32 0.0, %v1299
      %v1301 = vpop.f32.mrb[0].mxu0
      %v1302 = vadd.f32 0.0, %v1301
      %v1303 = vpop.f32.mrb[0].mxu0
      %v1304 = vadd.f32 0.0, %v1303
      %1305 = vmatprep.mubr.bf16.mxu0 %v649
      %1306 = vmatmul.mubr.bf16.gmra.mrb[0].mxu0 %v648
      %v1307 = vpop.f32.mrb[0].mxu0
      %v1308 = vadd.f32 0.0, %v1307
      %v1309 = vpop.f32.mrb[0].mxu0
      %v1310 = vadd.f32 0.0, %v1309
      %v1311 = vpop.f32.mrb[0].mxu0
      %v1312 = vadd.f32 0.0, %v1311
      %v1313 = vpop.f32.mrb[0].mxu0
      %v1314 = vadd.f32 0.0, %v1313
      %1315 = vmatprep.mubr.bf16.mxu0 %v650
      %1316 = vmatmul.mubr.bf16.gmra.mrb[0].mxu0 %v649
      %v1317 = vpop.f32.mrb[0].mxu0
      %v1318 = vadd.f32 0.0, %v1317
      %v1319 = vpop.f32.mrb[0].mxu0
      %v1320 = vadd.f32 0.0, %v1319
      %v1321 = vpop.f32.mrb[0].mxu0
      %v1322 = vadd.f32 0.0, %v1321
      %v1323 = vpop.f32.mrb[0].mxu0
      %v1324 = vadd.f32 0.0, %v1323
      %1325 = vmatprep.mubr.bf16.mxu0 %v651
      %1326 = vmatmul.mubr.bf16.gmra.mrb[0].mxu0 %v650
      %v1327 = vpop.f32.mrb[0].mxu0
      %v1328 = vadd.f32 0.0, %v1327
      %v1329 = vpop.f32.mrb[0].mxu0
      %v1330 = vadd.f32 0.0, %v1329
      %v1331 = vpop.f32.mrb[0].mxu0
      %v1332 = vadd.f32 0.0, %v1331
      %v1333 = vpop.f32.mrb[0].mxu0
      %v1334 = vadd.f32 0.0, %v1333
      %1335 = vmatprep.mubr.bf16.mxu0 %v652
      %1336 = vmatmul.mubr.bf16.gmra.mrb[0].mxu0 %v651
      %v1337 = vpop.f32.mrb[0].mxu0
      %v1338 = vadd.f32 0.0, %v1337
      %v1339 = vpop.f32.mrb[0].mxu0
      %v1340 = vadd.f32 0.0, %v1339
      %v1341 = vpop.f32.mrb[0].mxu0
      %v1342 = vadd.f32 0.0, %v1341
      %v1343 = vpop.f32.mrb[0].mxu0
      %v1344 = vadd.f32 0.0, %v1343
      %1345 = vmatprep.mubr.bf16.mxu0 %v653
      %1346 = vmatmul.mubr.bf16.gmra.mrb[0].mxu0 %v652
      %v1347 = vpop.f32.mrb[0].mxu0
      %v1348 = vadd.f32 0.0, %v1347
      %v1349 = vpop.f32.mrb[0].mxu0
      %v1350 = vadd.f32 0.0, %v1349
      %v1351 = vpop.f32.mrb[0].mxu0
      %v1352 = vadd.f32 0.0, %v1351
      %v1353 = vpop.f32.mrb[0].mxu0
      %v1354 = vadd.f32 0.0, %v1353
      %1355 = vmatprep.mubr.bf16.mxu0 %v654
      %1356 = vmatmul.mubr.bf16.gmra.mrb[0].mxu0 %v653
      %v1357 = vpop.f32.mrb[0].mxu0
      %v1358 = vadd.f32 0.0, %v1357
      %v1359 = vpop.f32.mrb[0].mxu0
      %v1360 = vadd.f32 0.0, %v1359
      %v1361 = vpop.f32.mrb[0].mxu0
      %v1362 = vadd.f32 0.0, %v1361
      %v1363 = vpop.f32.mrb[0].mxu0
      %v1364 = vadd.f32 0.0, %v1363
      %1365 = vmatprep.mubr.bf16.mxu0 %v655
      %1366 = vmatmul.mubr.bf16.gmra.mrb[0].mxu0 %v654
      %v1367 = vpop.f32.mrb[0].mxu0
      %v1368 = vadd.f32 0.0, %v1367
      %v1369 = vpop.f32.mrb[0].mxu0
      %v1370 = vadd.f32 0.0, %v1369
      %v1371 = vpop.f32.mrb[0].mxu0
      %v1372 = vadd.f32 0.0, %v1371
      %v1373 = vpop.f32.mrb[0].mxu0
      %v1374 = vadd.f32 0.0, %v1373
      %1375 = vmatprep.mubr.bf16.mxu0 %v656
      %1376 = vmatmul.mubr.bf16.gmra.mrb[0].mxu0 %v655
      %v1377 = vpop.f32.mrb[0].mxu0
      %v1378 = vadd.f32 0.0, %v1377
      %v1379 = vpop.f32.mrb[0].mxu0
      %v1380 = vadd.f32 0.0, %v1379
      %v1381 = vpop.f32.mrb[0].mxu0
      %v1382 = vadd.f32 0.0, %v1381
      %v1383 = vpop.f32.mrb[0].mxu0
      %v1384 = vadd.f32 0.0, %v1383
      %1385 = vdwg.mxu0
      %1386 = vmatprep.subr.bf16.mxu0 %v1098
      %1387 = vmatpush1.bf16.msra.mxu0 %v1097
      %1388 = vmatprep.subr.bf16.mxu0 %v1101
      %1389 = vmatpush1.bf16.msra.mxu0 %v1100
      %1390 = vmatprep.subr.bf16.mxu0 %v1104
      %1391 = vmatpush1.bf16.msra.mxu0 %v1103
      %1392 = vmatprep.subr.bf16.mxu0 %v1107
      %1393 = vmatpush1.bf16.msra.mxu0 %v1106
      %1394 = vmatprep.subr.bf16.mxu0 %v1110
      %1395 = vmatpush1.bf16.msra.mxu0 %v1109
      %1396 = vmatprep.subr.bf16.mxu0 %v1113
      %1397 = vmatpush1.bf16.msra.mxu0 %v1112
      %1398 = vmatprep.subr.bf16.mxu0 %v1116
      %1399 = vmatpush1.bf16.msra.mxu0 %v1115
      %1400 = vmatprep.subr.bf16.mxu0 %v1119
      %1401 = vmatpush1.bf16.msra.mxu0 %v1118
      %1402 = vmatprep.subr.bf16.mxu0 0
      %1403 = vmatpush1.bf16.msra.mxu0 0
      %1404 = vmatprep.subr.bf16.mxu0 0
      %1405 = vmatpush1.bf16.msra.mxu0 0
      %1406 = vmatprep.subr.bf16.mxu0 0
      %1407 = vmatpush1.bf16.msra.mxu0 0
      %1408 = vmatprep.subr.bf16.mxu0 0
      %1409 = vmatpush1.bf16.msra.mxu0 0
      %1410 = vmatprep.subr.bf16.mxu0 0
      %1411 = vmatpush1.bf16.msra.mxu0 0
      %1412 = vmatprep.subr.bf16.mxu0 0
      %1413 = vmatpush1.bf16.msra.mxu0 0
      %1414 = vmatprep.subr.bf16.mxu0 0
      %1415 = vmatpush1.bf16.msra.mxu0 0
      %1416 = vmatprep.subr.bf16.mxu0 0
      %1417 = vmatpush1.bf16.msra.mxu0 0
      %1418 = vmatprep.mubr.bf16.mxu0 0
      %1419 = vmatmul.mubr.bf16.gmra.mrb[0].mxu0 %v642
      %v1420 = vpop.f32.mrb[0].mxu0
      %v1421 = vadd.f32 %v1228, %v1420
      %v1422 = vpop.f32.mrb[0].mxu0
      %v1423 = vadd.f32 %v1230, %v1422
      %v1424 = vpop.f32.mrb[0].mxu0
      %v1425 = vadd.f32 %v1232, %v1424
      %v1426 = vpop.f32.mrb[0].mxu0
      %v1427 = vadd.f32 %v1234, %v1426
      %1428 = vmatprep.mubr.bf16.mxu0 0
      %1429 = vmatmul.mubr.bf16.gmra.mrb[0].mxu0 %v643
      %v1430 = vpop.f32.mrb[0].mxu0
      %v1431 = vadd.f32 %v1238, %v1430
      %v1432 = vpop.f32.mrb[0].mxu0
      %v1433 = vadd.f32 %v1240, %v1432
      %v1434 = vpop.f32.mrb[0].mxu0
      %v1435 = vadd.f32 %v1242, %v1434
      %v1436 = vpop.f32.mrb[0].mxu0
      %v1437 = vadd.f32 %v1244, %v1436
      %1438 = vmatprep.mubr.bf16.mxu0 0
      %1439 = vmatmul.mubr.bf16.gmra.mrb[0].mxu0 %v644
      %v1440 = vpop.f32.mrb[0].mxu0
      %v1441 = vadd.f32 %v1248, %v1440
      %v1442 = vpop.f32.mrb[0].mxu0
      %v1443 = vadd.f32 %v1250, %v1442
      %v1444 = vpop.f32.mrb[0].mxu0
      %v1445 = vadd.f32 %v1252, %v1444
      %v1446 = vpop.f32.mrb[0].mxu0
      %v1447 = vadd.f32 %v1254, %v1446
      %1448 = vmatprep.mubr.bf16.mxu0 0
      %1449 = vmatmul.mubr.bf16.gmra.mrb[0].mxu0 %v645
      %v1450 = vpop.f32.mrb[0].mxu0
      %v1451 = vadd.f32 %v1258, %v1450
      %v1452 = vpop.f32.mrb[0].mxu0
      %v1453 = vadd.f32 %v1260, %v1452
      %v1454 = vpop.f32.mrb[0].mxu0
      %v1455 = vadd.f32 %v1262, %v1454
      %v1456 = vpop.f32.mrb[0].mxu0
      %v1457 = vadd.f32 %v1264, %v1456
      %1458 = vmatprep.mubr.bf16.mxu0 0
      %1459 = vmatmul.mubr.bf16.gmra.mrb[0].mxu0 %v646
      %v1460 = vpop.f32.mrb[0].mxu0
      %v1461 = vadd.f32 %v1268, %v1460
      %v1462 = vpop.f32.mrb[0].mxu0
      %v1463 = vadd.f32 %v1270, %v1462
      %v1464 = vpop.f32.mrb[0].mxu0
      %v1465 = vadd.f32 %v1272, %v1464
      %v1466 = vpop.f32.mrb[0].mxu0
      %v1467 = vadd.f32 %v1274, %v1466
      %1468 = vmatprep.mubr.bf16.mxu0 0
      %1469 = vmatmul.mubr.bf16.gmra.mrb[0].mxu0 %v647
      %v1470 = vpop.f32.mrb[0].mxu0
      %v1471 = vadd.f32 %v1278, %v1470
      %v1472 = vpop.f32.mrb[0].mxu0
      %v1473 = vadd.f32 %v1280, %v1472
      %v1474 = vpop.f32.mrb[0].mxu0
      %v1475 = vadd.f32 %v1282, %v1474
      %v1476 = vpop.f32.mrb[0].mxu0
      %v1477 = vadd.f32 %v1284, %v1476
      %1478 = vmatprep.mubr.bf16.mxu0 0
      %1479 = vmatmul.mubr.bf16.gmra.mrb[0].mxu0 %v648
      %v1480 = vpop.f32.mrb[0].mxu0
      %v1481 = vadd.f32 %v1288, %v1480
      %v1482 = vpop.f32.mrb[0].mxu0
      %v1483 = vadd.f32 %v1290, %v1482
      %v1484 = vpop.f32.mrb[0].mxu0
      %v1485 = vadd.f32 %v1292, %v1484
      %v1486 = vpop.f32.mrb[0].mxu0
      %v1487 = vadd.f32 %v1294, %v1486
      %1488 = vmatprep.mubr.bf16.mxu0 0
      %1489 = vmatmul.mubr.bf16.gmra.mrb[0].mxu0 %v649
      %v1490 = vpop.f32.mrb[0].mxu0
      %v1491 = vadd.f32 %v1298, %v1490
      %v1492 = vpop.f32.mrb[0].mxu0
      %v1493 = vadd.f32 %v1300, %v1492
      %v1494 = vpop.f32.mrb[0].mxu0
      %v1495 = vadd.f32 %v1302, %v1494
      %v1496 = vpop.f32.mrb[0].mxu0
      %v1497 = vadd.f32 %v1304, %v1496
      %1498 = vmatprep.mubr.bf16.mxu0 0
      %1499 = vmatmul.mubr.bf16.gmra.mrb[0].mxu0 %v650
      %v1500 = vpop.f32.mrb[0].mxu0
      %v1501 = vadd.f32 %v1308, %v1500
      %v1502 = vpop.f32.mrb[0].mxu0
      %v1503 = vadd.f32 %v1310, %v1502
      %v1504 = vpop.f32.mrb[0].mxu0
      %v1505 = vadd.f32 %v1312, %v1504
      %v1506 = vpop.f32.mrb[0].mxu0
      %v1507 = vadd.f32 %v1314, %v1506
      %1508 = vmatprep.mubr.bf16.mxu0 0
      %1509 = vmatmul.mubr.bf16.gmra.mrb[0].mxu0 %v651
      %v1510 = vpop.f32.mrb[0].mxu0
      %v1511 = vadd.f32 %v1318, %v1510
      %v1512 = vpop.f32.mrb[0].mxu0
      %v1513 = vadd.f32 %v1320, %v1512
      %v1514 = vpop.f32.mrb[0].mxu0
      %v1515 = vadd.f32 %v1322, %v1514
      %v1516 = vpop.f32.mrb[0].mxu0
      %v1517 = vadd.f32 %v1324, %v1516
      %1518 = vmatprep.mubr.bf16.mxu0 0
      %1519 = vmatmul.mubr.bf16.gmra.mrb[0].mxu0 %v652
      %v1520 = vpop.f32.mrb[0].mxu0
      %v1521 = vadd.f32 %v1328, %v1520
      %v1522 = vpop.f32.mrb[0].mxu0
      %v1523 = vadd.f32 %v1330, %v1522
      %v1524 = vpop.f32.mrb[0].mxu0
      %v1525 = vadd.f32 %v1332, %v1524
      %v1526 = vpop.f32.mrb[0].mxu0
      %v1527 = vadd.f32 %v1334, %v1526
      %1528 = vmatprep.mubr.bf16.mxu0 0
      %1529 = vmatmul.mubr.bf16.gmra.mrb[0].mxu0 %v653
      %v1530 = vpop.f32.mrb[0].mxu0
      %v1531 = vadd.f32 %v1338, %v1530
      %v1532 = vpop.f32.mrb[0].mxu0
      %v1533 = vadd.f32 %v1340, %v1532
      %v1534 = vpop.f32.mrb[0].mxu0
      %v1535 = vadd.f32 %v1342, %v1534
      %v1536 = vpop.f32.mrb[0].mxu0
      %v1537 = vadd.f32 %v1344, %v1536
      %1538 = vmatprep.mubr.bf16.mxu0 0
      %1539 = vmatmul.mubr.bf16.gmra.mrb[0].mxu0 %v654
      %v1540 = vpop.f32.mrb[0].mxu0
      %v1541 = vadd.f32 %v1348, %v1540
      %v1542 = vpop.f32.mrb[0].mxu0
      %v1543 = vadd.f32 %v1350, %v1542
      %v1544 = vpop.f32.mrb[0].mxu0
      %v1545 = vadd.f32 %v1352, %v1544
      %v1546 = vpop.f32.mrb[0].mxu0
      %v1547 = vadd.f32 %v1354, %v1546
      %1548 = vmatprep.mubr.bf16.mxu0 0
      %1549 = vmatmul.mubr.bf16.gmra.mrb[0].mxu0 %v655
      %v1550 = vpop.f32.mrb[0].mxu0
      %v1551 = vadd.f32 %v1358, %v1550
      %v1552 = vpop.f32.mrb[0].mxu0
      %v1553 = vadd.f32 %v1360, %v1552
      %v1554 = vpop.f32.mrb[0].mxu0
      %v1555 = vadd.f32 %v1362, %v1554
      %v1556 = vpop.f32.mrb[0].mxu0
      %v1557 = vadd.f32 %v1364, %v1556
      %1558 = vmatprep.mubr.bf16.mxu0 0
      %1559 = vmatmul.mubr.bf16.gmra.mrb[0].mxu0 %v656
      %v1560 = vpop.f32.mrb[0].mxu0
      %v1561 = vadd.f32 %v1368, %v1560
      %v1562 = vpop.f32.mrb[0].mxu0
      %v1563 = vadd.f32 %v1370, %v1562
      %v1564 = vpop.f32.mrb[0].mxu0
      %v1565 = vadd.f32 %v1372, %v1564
      %v1566 = vpop.f32.mrb[0].mxu0
      %v1567 = vadd.f32 %v1374, %v1566
      %1568 = vmatprep.mubr.bf16.mxu0 0
      %1569 = vmatmul.mubr.bf16.gmra.mrb[0].mxu0 %v712
      %v1570 = vpop.f32.mrb[0].mxu0
      %v1571 = vadd.f32 %v1378, %v1570
      %v1572 = vpop.f32.mrb[0].mxu0
      %v1573 = vadd.f32 %v1380, %v1572
      %v1574 = vpop.f32.mrb[0].mxu0
      %v1575 = vadd.f32 %v1382, %v1574
      %v1576 = vpop.f32.mrb[0].mxu0
      %v1577 = vadd.f32 %v1384, %v1576
      %1578 = vdwg.mxu0
      %1579 = vmatprep.subr.bf16.mxu0 0
      %1580 = vmatpush1.bf16.msra.mxu0 %v1051
      %1581 = vmatprep.subr.bf16.mxu0 0
      %1582 = vmatpush1.bf16.msra.mxu0 %v1054
      %1583 = vmatprep.subr.bf16.mxu0 0
      %1584 = vmatpush1.bf16.msra.mxu0 %v1057
      %1585 = vmatprep.subr.bf16.mxu0 0
      %1586 = vmatpush1.bf16.msra.mxu0 %v1060
      %1587 = vmatprep.subr.bf16.mxu0 0
      %1588 = vmatpush1.bf16.msra.mxu0 %v1063
      %1589 = vmatprep.subr.bf16.mxu0 0
      %1590 = vmatpush1.bf16.msra.mxu0 %v1066
      %1591 = vmatprep.subr.bf16.mxu0 0
      %1592 = vmatpush1.bf16.msra.mxu0 %v1069
      %1593 = vmatprep.subr.bf16.mxu0 0
      %1594 = vmatpush1.bf16.msra.mxu0 %v1072
      %1595 = vmatprep.subr.bf16.mxu0 0
      %1596 = vmatpush1.bf16.msra.mxu0 %v1075
      %1597 = vmatprep.subr.bf16.mxu0 0
      %1598 = vmatpush1.bf16.msra.mxu0 %v1078
      %1599 = vmatprep.subr.bf16.mxu0 0
      %1600 = vmatpush1.bf16.msra.mxu0 %v1081
      %1601 = vmatprep.subr.bf16.mxu0 0
      %1602 = vmatpush1.bf16.msra.mxu0 %v1084
      %1603 = vmatprep.subr.bf16.mxu0 0
      %1604 = vmatpush1.bf16.msra.mxu0 %v1087
      %1605 = vmatprep.subr.bf16.mxu0 0
      %1606 = vmatpush1.bf16.msra.mxu0 %v1090
      %1607 = vmatprep.subr.bf16.mxu0 0
      %1608 = vmatpush1.bf16.msra.mxu0 %v1093
      %1609 = vmatprep.subr.bf16.mxu0 0
      %1610 = vmatpush1.bf16.msra.mxu0 %v1096
      %1611 = vmatprep.mubr.bf16.mxu0 %v641
      %1612 = vmatmul.mubr.bf16.gmra.mrb[0].mxu0 %v684
      %v1613 = vpop.f32.mrb[0].mxu0
      %v1614 = vadd.f32 0.0, %v1613
      %v1615 = vpop.f32.mrb[0].mxu0
      %v1616 = vpop.f32.mrb[0].mxu0
      %v1617 = vadd.f32 0.0, %v1616
      %v1618 = vpop.f32.mrb[0].mxu0
      %1619 = vmatprep.mubr.bf16.mxu0 %v642
      %1620 = vmatmul.mubr.bf16.gmra.mrb[0].mxu0 %v641
      %v1621 = vpop.f32.mrb[0].mxu0
      %v1622 = vadd.f32 0.0, %v1621
      %v1623 = vpop.f32.mrb[0].mxu0
      %v1624 = vpop.f32.mrb[0].mxu0
      %v1625 = vadd.f32 0.0, %v1624
      %v1626 = vpop.f32.mrb[0].mxu0
      %1627 = vmatprep.mubr.bf16.mxu0 %v643
      %1628 = vmatmul.mubr.bf16.gmra.mrb[0].mxu0 %v642
      %v1629 = vpop.f32.mrb[0].mxu0
      %v1630 = vadd.f32 0.0, %v1629
      %v1631 = vpop.f32.mrb[0].mxu0
      %v1632 = vpop.f32.mrb[0].mxu0
      %v1633 = vadd.f32 0.0, %v1632
      %v1634 = vpop.f32.mrb[0].mxu0
      %1635 = vmatprep.mubr.bf16.mxu0 %v644
      %1636 = vmatmul.mubr.bf16.gmra.mrb[0].mxu0 %v643
      %v1637 = vpop.f32.mrb[0].mxu0
      %v1638 = vadd.f32 0.0, %v1637
      %v1639 = vpop.f32.mrb[0].mxu0
      %v1640 = vpop.f32.mrb[0].mxu0
      %v1641 = vadd.f32 0.0, %v1640
      %v1642 = vpop.f32.mrb[0].mxu0
      %1643 = vmatprep.mubr.bf16.mxu0 %v645
      %1644 = vmatmul.mubr.bf16.gmra.mrb[0].mxu0 %v644
      %v1645 = vpop.f32.mrb[0].mxu0
      %v1646 = vadd.f32 0.0, %v1645
      %v1647 = vpop.f32.mrb[0].mxu0
      %v1648 = vpop.f32.mrb[0].mxu0
      %v1649 = vadd.f32 0.0, %v1648
      %v1650 = vpop.f32.mrb[0].mxu0
      %1651 = vmatprep.mubr.bf16.mxu0 %v646
      %1652 = vmatmul.mubr.bf16.gmra.mrb[0].mxu0 %v645
      %v1653 = vpop.f32.mrb[0].mxu0
      %v1654 = vadd.f32 0.0, %v1653
      %v1655 = vpop.f32.mrb[0].mxu0
      %v1656 = vpop.f32.mrb[0].mxu0
      %v1657 = vadd.f32 0.0, %v1656
      %v1658 = vpop.f32.mrb[0].mxu0
      %1659 = vmatprep.mubr.bf16.mxu0 %v647
      %1660 = vmatmul.mubr.bf16.gmra.mrb[0].mxu0 %v646
      %v1661 = vpop.f32.mrb[0].mxu0
      %v1662 = vadd.f32 0.0, %v1661
      %v1663 = vpop.f32.mrb[0].mxu0
      %v1664 = vpop.f32.mrb[0].mxu0
      %v1665 = vadd.f32 0.0, %v1664
      %v1666 = vpop.f32.mrb[0].mxu0
      %1667 = vmatprep.mubr.bf16.mxu0 %v648
      %1668 = vmatmul.mubr.bf16.gmra.mrb[0].mxu0 %v647
      %v1669 = vpop.f32.mrb[0].mxu0
      %v1670 = vadd.f32 0.0, %v1669
      %v1671 = vpop.f32.mrb[0].mxu0
      %v1672 = vpop.f32.mrb[0].mxu0
      %v1673 = vadd.f32 0.0, %v1672
      %v1674 = vpop.f32.mrb[0].mxu0
      %1675 = vmatprep.mubr.bf16.mxu0 %v649
      %1676 = vmatmul.mubr.bf16.gmra.mrb[0].mxu0 %v648
      %v1677 = vpop.f32.mrb[0].mxu0
      %v1678 = vadd.f32 0.0, %v1677
      %v1679 = vpop.f32.mrb[0].mxu0
      %v1680 = vpop.f32.mrb[0].mxu0
      %v1681 = vadd.f32 0.0, %v1680
      %v1682 = vpop.f32.mrb[0].mxu0
      %1683 = vmatprep.mubr.bf16.mxu0 %v650
      %1684 = vmatmul.mubr.bf16.gmra.mrb[0].mxu0 %v649
      %v1685 = vpop.f32.mrb[0].mxu0
      %v1686 = vadd.f32 0.0, %v1685
      %v1687 = vpop.f32.mrb[0].mxu0
      %v1688 = vpop.f32.mrb[0].mxu0
      %v1689 = vadd.f32 0.0, %v1688
      %v1690 = vpop.f32.mrb[0].mxu0
      %1691 = vmatprep.mubr.bf16.mxu0 %v651
      %1692 = vmatmul.mubr.bf16.gmra.mrb[0].mxu0 %v650
      %v1693 = vpop.f32.mrb[0].mxu0
      %v1694 = vadd.f32 0.0, %v1693
      %v1695 = vpop.f32.mrb[0].mxu0
      %v1696 = vpop.f32.mrb[0].mxu0
      %v1697 = vadd.f32 0.0, %v1696
      %v1698 = vpop.f32.mrb[0].mxu0
      %1699 = vmatprep.mubr.bf16.mxu0 %v652
      %1700 = vmatmul.mubr.bf16.gmra.mrb[0].mxu0 %v651
      %v1701 = vpop.f32.mrb[0].mxu0
      %v1702 = vadd.f32 0.0, %v1701
      %v1703 = vpop.f32.mrb[0].mxu0
      %v1704 = vpop.f32.mrb[0].mxu0
      %v1705 = vadd.f32 0.0, %v1704
      %v1706 = vpop.f32.mrb[0].mxu0
      %1707 = vmatprep.mubr.bf16.mxu0 %v653
      %1708 = vmatmul.mubr.bf16.gmra.mrb[0].mxu0 %v652
      %v1709 = vpop.f32.mrb[0].mxu0
      %v1710 = vadd.f32 0.0, %v1709
      %v1711 = vpop.f32.mrb[0].mxu0
      %v1712 = vpop.f32.mrb[0].mxu0
      %v1713 = vadd.f32 0.0, %v1712
      %v1714 = vpop.f32.mrb[0].mxu0
      %1715 = vmatprep.mubr.bf16.mxu0 %v654
      %1716 = vmatmul.mubr.bf16.gmra.mrb[0].mxu0 %v653
      %v1717 = vpop.f32.mrb[0].mxu0
      %v1718 = vadd.f32 0.0, %v1717
      %v1719 = vpop.f32.mrb[0].mxu0
      %v1720 = vpop.f32.mrb[0].mxu0
      %v1721 = vadd.f32 0.0, %v1720
      %v1722 = vpop.f32.mrb[0].mxu0
      %1723 = vmatprep.mubr.bf16.mxu0 %v655
      %1724 = vmatmul.mubr.bf16.gmra.mrb[0].mxu0 %v654
      %v1725 = vpop.f32.mrb[0].mxu0
      %v1726 = vadd.f32 0.0, %v1725
      %v1727 = vpop.f32.mrb[0].mxu0
      %v1728 = vpop.f32.mrb[0].mxu0
      %v1729 = vadd.f32 0.0, %v1728
      %v1730 = vpop.f32.mrb[0].mxu0
      %1731 = vmatprep.mubr.bf16.mxu0 %v656
      %1732 = vmatmul.mubr.bf16.gmra.mrb[0].mxu0 %v655
      %v1733 = vpop.f32.mrb[0].mxu0
      %v1734 = vadd.f32 0.0, %v1733
      %v1735 = vpop.f32.mrb[0].mxu0
      %v1736 = vpop.f32.mrb[0].mxu0
      %v1737 = vadd.f32 0.0, %v1736
      %v1738 = vpop.f32.mrb[0].mxu0
      %1739 = vdwg.mxu0
      %1740 = vmatprep.subr.bf16.mxu0 0
      %1741 = vmatpush1.bf16.msra.mxu0 %v1099
      %1742 = vmatprep.subr.bf16.mxu0 0
      %1743 = vmatpush1.bf16.msra.mxu0 %v1102
      %1744 = vmatprep.subr.bf16.mxu0 0
      %1745 = vmatpush1.bf16.msra.mxu0 %v1105
      %1746 = vmatprep.subr.bf16.mxu0 0
      %1747 = vmatpush1.bf16.msra.mxu0 %v1108
      %1748 = vmatprep.subr.bf16.mxu0 0
      %1749 = vmatpush1.bf16.msra.mxu0 %v1111
      %1750 = vmatprep.subr.bf16.mxu0 0
      %1751 = vmatpush1.bf16.msra.mxu0 %v1114
      %1752 = vmatprep.subr.bf16.mxu0 0
      %1753 = vmatpush1.bf16.msra.mxu0 %v1117
      %1754 = vmatprep.subr.bf16.mxu0 0
      %1755 = vmatpush1.bf16.msra.mxu0 %v1120
      %1756 = vmatprep.subr.bf16.mxu0 0
      %1757 = vmatpush1.bf16.msra.mxu0 0
      %1758 = vmatprep.subr.bf16.mxu0 0
      %1759 = vmatpush1.bf16.msra.mxu0 0
      %1760 = vmatprep.subr.bf16.mxu0 0
      %1761 = vmatpush1.bf16.msra.mxu0 0
      %1762 = vmatprep.subr.bf16.mxu0 0
      %1763 = vmatpush1.bf16.msra.mxu0 0
      %1764 = vmatprep.subr.bf16.mxu0 0
      %1765 = vmatpush1.bf16.msra.mxu0 0
      %1766 = vmatprep.subr.bf16.mxu0 0
      %1767 = vmatpush1.bf16.msra.mxu0 0
      %1768 = vmatprep.subr.bf16.mxu0 0
      %1769 = vmatpush1.bf16.msra.mxu0 0
      %1770 = vmatprep.subr.bf16.mxu0 0
      %1771 = vmatpush1.bf16.msra.mxu0 0
      %1772 = vmatprep.mubr.bf16.mxu0 0
      %1773 = vmatmul.mubr.bf16.gmra.mrb[0].mxu0 %v642
      %v1774 = vpop.f32.mrb[0].mxu0
      %v1775 = vadd.f32 %v1614, %v1774
      %v1776 = vpop.f32.mrb[0].mxu0
      %v1777 = vpop.f32.mrb[0].mxu0
      %v1778 = vadd.f32 %v1617, %v1777
      %v1779 = vpop.f32.mrb[0].mxu0
      %1780 = vmatprep.mubr.bf16.mxu0 0
      %1781 = vmatmul.mubr.bf16.gmra.mrb[0].mxu0 %v643
      %v1782 = vpop.f32.mrb[0].mxu0
      %v1783 = vadd.f32 %v1622, %v1782
      %v1784 = vpop.f32.mrb[0].mxu0
      %v1785 = vpop.f32.mrb[0].mxu0
      %v1786 = vadd.f32 %v1625, %v1785
      %v1787 = vpop.f32.mrb[0].mxu0
      %1788 = vmatprep.mubr.bf16.mxu0 0
      %1789 = vmatmul.mubr.bf16.gmra.mrb[0].mxu0 %v644
      %v1790 = vpop.f32.mrb[0].mxu0
      %v1791 = vadd.f32 %v1630, %v1790
      %v1792 = vpop.f32.mrb[0].mxu0
      %v1793 = vpop.f32.mrb[0].mxu0
      %v1794 = vadd.f32 %v1633, %v1793
      %v1795 = vpop.f32.mrb[0].mxu0
      %1796 = vmatprep.mubr.bf16.mxu0 0
      %1797 = vmatmul.mubr.bf16.gmra.mrb[0].mxu0 %v645
      %v1798 = vpop.f32.mrb[0].mxu0
      %v1799 = vadd.f32 %v1638, %v1798
      %v1800 = vpop.f32.mrb[0].mxu0
      %v1801 = vpop.f32.mrb[0].mxu0
      %v1802 = vadd.f32 %v1641, %v1801
      %v1803 = vpop.f32.mrb[0].mxu0
      %1804 = vmatprep.mubr.bf16.mxu0 0
      %1805 = vmatmul.mubr.bf16.gmra.mrb[0].mxu0 %v646
      %v1806 = vpop.f32.mrb[0].mxu0
      %v1807 = vadd.f32 %v1646, %v1806
      %v1808 = vpop.f32.mrb[0].mxu0
      %v1809 = vpop.f32.mrb[0].mxu0
      %v1810 = vadd.f32 %v1649, %v1809
      %v1811 = vpop.f32.mrb[0].mxu0
      %1812 = vmatprep.mubr.bf16.mxu0 0
      %1813 = vmatmul.mubr.bf16.gmra.mrb[0].mxu0 %v647
      %v1814 = vpop.f32.mrb[0].mxu0
      %v1815 = vadd.f32 %v1654, %v1814
      %v1816 = vpop.f32.mrb[0].mxu0
      %v1817 = vpop.f32.mrb[0].mxu0
      %v1818 = vadd.f32 %v1657, %v1817
      %v1819 = vpop.f32.mrb[0].mxu0
      %1820 = vmatprep.mubr.bf16.mxu0 0
      %1821 = vmatmul.mubr.bf16.gmra.mrb[0].mxu0 %v648
      %v1822 = vpop.f32.mrb[0].mxu0
      %v1823 = vadd.f32 %v1662, %v1822
      %v1824 = vpop.f32.mrb[0].mxu0
      %v1825 = vpop.f32.mrb[0].mxu0
      %v1826 = vadd.f32 %v1665, %v1825
      %v1827 = vpop.f32.mrb[0].mxu0
      %1828 = vmatprep.mubr.bf16.mxu0 0
      %1829 = vmatmul.mubr.bf16.gmra.mrb[0].mxu0 %v649
      %v1830 = vpop.f32.mrb[0].mxu0
      %v1831 = vadd.f32 %v1670, %v1830
      %v1832 = vpop.f32.mrb[0].mxu0
      %v1833 = vpop.f32.mrb[0].mxu0
      %v1834 = vadd.f32 %v1673, %v1833
      %v1835 = vpop.f32.mrb[0].mxu0
      %1836 = vmatprep.mubr.bf16.mxu0 0
      %1837 = vmatmul.mubr.bf16.gmra.mrb[0].mxu0 %v650
      %v1838 = vpop.f32.mrb[0].mxu0
      %v1839 = vadd.f32 %v1678, %v1838
      %v1840 = vpop.f32.mrb[0].mxu0
      %v1841 = vpop.f32.mrb[0].mxu0
      %v1842 = vadd.f32 %v1681, %v1841
      %v1843 = vpop.f32.mrb[0].mxu0
      %1844 = vmatprep.mubr.bf16.mxu0 0
      %1845 = vmatmul.mubr.bf16.gmra.mrb[0].mxu0 %v651
      %v1846 = vpop.f32.mrb[0].mxu0
      %v1847 = vadd.f32 %v1686, %v1846
      %v1848 = vpop.f32.mrb[0].mxu0
      %v1849 = vpop.f32.mrb[0].mxu0
      %v1850 = vadd.f32 %v1689, %v1849
      %v1851 = vpop.f32.mrb[0].mxu0
      %1852 = vmatprep.mubr.bf16.mxu0 0
      %1853 = vmatmul.mubr.bf16.gmra.mrb[0].mxu0 %v652
      %v1854 = vpop.f32.mrb[0].mxu0
      %v1855 = vadd.f32 %v1694, %v1854
      %v1856 = vpop.f32.mrb[0].mxu0
      %v1857 = vpop.f32.mrb[0].mxu0
      %v1858 = vadd.f32 %v1697, %v1857
      %v1859 = vpop.f32.mrb[0].mxu0
      %1860 = vmatprep.mubr.bf16.mxu0 0
      %1861 = vmatmul.mubr.bf16.gmra.mrb[0].mxu0 %v653
      %v1862 = vpop.f32.mrb[0].mxu0
      %v1863 = vadd.f32 %v1702, %v1862
      %v1864 = vpop.f32.mrb[0].mxu0
      %v1865 = vpop.f32.mrb[0].mxu0
      %v1866 = vadd.f32 %v1705, %v1865
      %v1867 = vpop.f32.mrb[0].mxu0
      %1868 = vmatprep.mubr.bf16.mxu0 0
      %1869 = vmatmul.mubr.bf16.gmra.mrb[0].mxu0 %v654
      %v1870 = vpop.f32.mrb[0].mxu0
      %v1871 = vadd.f32 %v1710, %v1870
      %v1872 = vpop.f32.mrb[0].mxu0
      %v1873 = vpop.f32.mrb[0].mxu0
      %v1874 = vadd.f32 %v1713, %v1873
      %v1875 = vpop.f32.mrb[0].mxu0
      %1876 = vmatprep.mubr.bf16.mxu0 0
      %1877 = vmatmul.mubr.bf16.gmra.mrb[0].mxu0 %v655
      %v1878 = vpop.f32.mrb[0].mxu0
      %v1879 = vadd.f32 %v1718, %v1878
      %v1880 = vpop.f32.mrb[0].mxu0
      %v1881 = vpop.f32.mrb[0].mxu0
      %v1882 = vadd.f32 %v1721, %v1881
      %v1883 = vpop.f32.mrb[0].mxu0
      %1884 = vmatprep.mubr.bf16.mxu0 0
      %1885 = vmatmul.mubr.bf16.gmra.mrb[0].mxu0 %v656
      %v1886 = vpop.f32.mrb[0].mxu0
      %v1887 = vadd.f32 %v1726, %v1886
      %v1888 = vpop.f32.mrb[0].mxu0
      %v1889 = vpop.f32.mrb[0].mxu0
      %v1890 = vadd.f32 %v1729, %v1889
      %v1891 = vpop.f32.mrb[0].mxu0
      %1892 = vmatprep.mubr.bf16.mxu0 0
      %1893 = vmatmul.mubr.bf16.gmra.mrb[0].mxu0 %v712
      %v1894 = vpop.f32.mrb[0].mxu0
      %v1895 = vadd.f32 %v1734, %v1894
      %v1896 = vpop.f32.mrb[0].mxu0
      %v1897 = vpop.f32.mrb[0].mxu0
      %v1898 = vadd.f32 %v1737, %v1897
      %v1899 = vpop.f32.mrb[0].mxu0
      %1900 = vdwg.mxu0
      %v1901 = vlaneseq
      %v1902 = vshrl.u32 %v1901, 7
      %v1903 = vadd.s32 %v1902, 8
      %v1904 = vadd.s32 %v1902, 16
      %v1905 = vadd.s32 %v1902, 24
      %v1906 = vadd.s32 %v1902, 32
      %v1907 = vadd.s32 %v1902, 40
      %v1908 = vadd.s32 %v1902, 48
      %v1909 = vadd.s32 %v1902, 56
      %v1910 = vadd.s32 %v1902, 64
      %v1911 = vadd.s32 %v1902, 72
      %v1912 = vadd.s32 %v1902, 80
      %v1913 = vadd.s32 %v1902, 88
      %v1914 = vadd.s32 %v1902, 96
      %v1915 = vadd.s32 %v1902, 104
      %v1916 = vadd.s32 %v1902, 112
      %v1917 = vadd.s32 %v1902, 120
      %v1918 = vadd.s32 %v1902, 128
      %v1919 = vadd.s32 %v1902, 136
      %v1920 = vadd.s32 %v1902, 144
      %v1921 = vadd.s32 %v1902, 152
      %v1922 = vadd.s32 %v1902, 160
      %v1923 = vadd.s32 %v1902, 168
      %v1924 = vadd.s32 %v1902, 176
      %v1925 = vadd.s32 %v1902, 184
      %v1926 = vadd.s32 %v1902, 192
      %v1927 = vadd.s32 %v1902, 200
      %v1928 = vadd.s32 %v1902, 208
      %v1929 = vadd.s32 %v1902, 216
      %v1930 = vadd.s32 %v1902, 224
      %v1931 = vadd.s32 %v1902, 232
      %v1932 = vadd.s32 %v1902, 240
      %v1933 = vadd.s32 %v1902, 248
      %vm1934 = vcmp.lt.s32.totalorder %v1902, 0
      %v1935 = vsub.s32 0, %v1902
      %v1936 = vsel %vm1934, %v1935, %v1902
      %v1937 = vshrl.u32 %v1936, 4
      %v1938 = vand.u32 %v1936, 15
      %v1939 = vsub.s32 0, %v1938
      %v1940 = vsel %vm1934, %v1939, %v1938
      %vm1941 = vcmp.lt.s32.totalorder %v1903, 0
      %v1942 = vsub.s32 0, %v1903
      %v1943 = vsel %vm1941, %v1942, %v1903
      %v1944 = vshrl.u32 %v1943, 4
      %v1945 = vand.u32 %v1943, 15
      %v1946 = vsub.s32 0, %v1945
      %v1947 = vsel %vm1941, %v1946, %v1945
      %vm1948 = vcmp.lt.s32.totalorder %v1904, 0
      %v1949 = vsub.s32 0, %v1904
      %v1950 = vsel %vm1948, %v1949, %v1904
      %v1951 = vshrl.u32 %v1950, 4
      %v1952 = vand.u32 %v1950, 15
      %v1953 = vsub.s32 0, %v1952
      %v1954 = vsel %vm1948, %v1953, %v1952
      %vm1955 = vcmp.lt.s32.totalorder %v1905, 0
      %v1956 = vsub.s32 0, %v1905
      %v1957 = vsel %vm1955, %v1956, %v1905
      %v1958 = vshrl.u32 %v1957, 4
      %v1959 = vand.u32 %v1957, 15
      %v1960 = vsub.s32 0, %v1959
      %v1961 = vsel %vm1955, %v1960, %v1959
      %vm1962 = vcmp.lt.s32.totalorder %v1906, 0
      %v1963 = vsub.s32 0, %v1906
      %v1964 = vsel %vm1962, %v1963, %v1906
      %v1965 = vshrl.u32 %v1964, 4
      %v1966 = vand.u32 %v1964, 15
      %v1967 = vsub.s32 0, %v1966
      %v1968 = vsel %vm1962, %v1967, %v1966
      %vm1969 = vcmp.lt.s32.totalorder %v1907, 0
      %v1970 = vsub.s32 0, %v1907
      %v1971 = vsel %vm1969, %v1970, %v1907
      %v1972 = vshrl.u32 %v1971, 4
      %v1973 = vand.u32 %v1971, 15
      %v1974 = vsub.s32 0, %v1973
      %v1975 = vsel %vm1969, %v1974, %v1973
      %vm1976 = vcmp.lt.s32.totalorder %v1908, 0
      %v1977 = vsub.s32 0, %v1908
      %v1978 = vsel %vm1976, %v1977, %v1908
      %v1979 = vshrl.u32 %v1978, 4
      %v1980 = vand.u32 %v1978, 15
      %v1981 = vsub.s32 0, %v1980
      %v1982 = vsel %vm1976, %v1981, %v1980
      %vm1983 = vcmp.lt.s32.totalorder %v1909, 0
      %v1984 = vsub.s32 0, %v1909
      %v1985 = vsel %vm1983, %v1984, %v1909
      %v1986 = vshrl.u32 %v1985, 4
      %v1987 = vand.u32 %v1985, 15
      %v1988 = vsub.s32 0, %v1987
      %v1989 = vsel %vm1983, %v1988, %v1987
      %vm1990 = vcmp.lt.s32.totalorder %v1910, 0
      %v1991 = vsub.s32 0, %v1910
      %v1992 = vsel %vm1990, %v1991, %v1910
      %v1993 = vshrl.u32 %v1992, 4
      %v1994 = vand.u32 %v1992, 15
      %v1995 = vsub.s32 0, %v1994
      %v1996 = vsel %vm1990, %v1995, %v1994
      %vm1997 = vcmp.lt.s32.totalorder %v1911, 0
      %v1998 = vsub.s32 0, %v1911
      %v1999 = vsel %vm1997, %v1998, %v1911
      %v2000 = vshrl.u32 %v1999, 4
      %v2001 = vand.u32 %v1999, 15
      %v2002 = vsub.s32 0, %v2001
      %v2003 = vsel %vm1997, %v2002, %v2001
      %vm2004 = vcmp.lt.s32.totalorder %v1912, 0
      %v2005 = vsub.s32 0, %v1912
      %v2006 = vsel %vm2004, %v2005, %v1912
      %v2007 = vshrl.u32 %v2006, 4
      %v2008 = vand.u32 %v2006, 15
      %v2009 = vsub.s32 0, %v2008
      %v2010 = vsel %vm2004, %v2009, %v2008
      %vm2011 = vcmp.lt.s32.totalorder %v1913, 0
      %v2012 = vsub.s32 0, %v1913
      %v2013 = vsel %vm2011, %v2012, %v1913
      %v2014 = vshrl.u32 %v2013, 4
      %v2015 = vand.u32 %v2013, 15
      %v2016 = vsub.s32 0, %v2015
      %v2017 = vsel %vm2011, %v2016, %v2015
      %vm2018 = vcmp.lt.s32.totalorder %v1914, 0
      %v2019 = vsub.s32 0, %v1914
      %v2020 = vsel %vm2018, %v2019, %v1914
      %v2021 = vshrl.u32 %v2020, 4
      %v2022 = vand.u32 %v2020, 15
      %v2023 = vsub.s32 0, %v2022
      %v2024 = vsel %vm2018, %v2023, %v2022
      %vm2025 = vcmp.lt.s32.totalorder %v1915, 0
      %v2026 = vsub.s32 0, %v1915
      %v2027 = vsel %vm2025, %v2026, %v1915
      %v2028 = vshrl.u32 %v2027, 4
      %v2029 = vand.u32 %v2027, 15
      %v2030 = vsub.s32 0, %v2029
      %v2031 = vsel %vm2025, %v2030, %v2029
      %vm2032 = vcmp.lt.s32.totalorder %v1916, 0
      %v2033 = vsub.s32 0, %v1916
      %v2034 = vsel %vm2032, %v2033, %v1916
      %v2035 = vshrl.u32 %v2034, 4
      %v2036 = vand.u32 %v2034, 15
      %v2037 = vsub.s32 0, %v2036
      %v2038 = vsel %vm2032, %v2037, %v2036
      %vm2039 = vcmp.lt.s32.totalorder %v1917, 0
      %v2040 = vsub.s32 0, %v1917
      %v2041 = vsel %vm2039, %v2040, %v1917
      %v2042 = vshrl.u32 %v2041, 4
      %v2043 = vand.u32 %v2041, 15
      %v2044 = vsub.s32 0, %v2043
      %v2045 = vsel %vm2039, %v2044, %v2043
      %vm2046 = vcmp.lt.s32.totalorder %v1918, 0
      %v2047 = vsub.s32 0, %v1918
      %v2048 = vsel %vm2046, %v2047, %v1918
      %v2049 = vshrl.u32 %v2048, 4
      %v2050 = vand.u32 %v2048, 15
      %v2051 = vsub.s32 0, %v2050
      %v2052 = vsel %vm2046, %v2051, %v2050
      %vm2053 = vcmp.lt.s32.totalorder %v1919, 0
      %v2054 = vsub.s32 0, %v1919
      %v2055 = vsel %vm2053, %v2054, %v1919
      %v2056 = vshrl.u32 %v2055, 4
      %v2057 = vand.u32 %v2055, 15
      %v2058 = vsub.s32 0, %v2057
      %v2059 = vsel %vm2053, %v2058, %v2057
      %vm2060 = vcmp.lt.s32.totalorder %v1920, 0
      %v2061 = vsub.s32 0, %v1920
      %v2062 = vsel %vm2060, %v2061, %v1920
      %v2063 = vshrl.u32 %v2062, 4
      %v2064 = vand.u32 %v2062, 15
      %v2065 = vsub.s32 0, %v2064
      %v2066 = vsel %vm2060, %v2065, %v2064
      %vm2067 = vcmp.lt.s32.totalorder %v1921, 0
      %v2068 = vsub.s32 0, %v1921
      %v2069 = vsel %vm2067, %v2068, %v1921
      %v2070 = vshrl.u32 %v2069, 4
      %v2071 = vand.u32 %v2069, 15
      %v2072 = vsub.s32 0, %v2071
      %v2073 = vsel %vm2067, %v2072, %v2071
      %vm2074 = vcmp.lt.s32.totalorder %v1922, 0
      %v2075 = vsub.s32 0, %v1922
      %v2076 = vsel %vm2074, %v2075, %v1922
      %v2077 = vshrl.u32 %v2076, 4
      %v2078 = vand.u32 %v2076, 15
      %v2079 = vsub.s32 0, %v2078
      %v2080 = vsel %vm2074, %v2079, %v2078
      %vm2081 = vcmp.lt.s32.totalorder %v1923, 0
      %v2082 = vsub.s32 0, %v1923
      %v2083 = vsel %vm2081, %v2082, %v1923
      %v2084 = vshrl.u32 %v2083, 4
      %v2085 = vand.u32 %v2083, 15
      %v2086 = vsub.s32 0, %v2085
      %v2087 = vsel %vm2081, %v2086, %v2085
      %vm2088 = vcmp.lt.s32.totalorder %v1924, 0
      %v2089 = vsub.s32 0, %v1924
      %v2090 = vsel %vm2088, %v2089, %v1924
      %v2091 = vshrl.u32 %v2090, 4
      %v2092 = vand.u32 %v2090, 15
      %v2093 = vsub.s32 0, %v2092
      %v2094 = vsel %vm2088, %v2093, %v2092
      %vm2095 = vcmp.lt.s32.totalorder %v1925, 0
      %v2096 = vsub.s32 0, %v1925
      %v2097 = vsel %vm2095, %v2096, %v1925
      %v2098 = vshrl.u32 %v2097, 4
      %v2099 = vand.u32 %v2097, 15
      %v2100 = vsub.s32 0, %v2099
      %v2101 = vsel %vm2095, %v2100, %v2099
      %vm2102 = vcmp.lt.s32.totalorder %v1926, 0
      %v2103 = vsub.s32 0, %v1926
      %v2104 = vsel %vm2102, %v2103, %v1926
      %v2105 = vshrl.u32 %v2104, 4
      %v2106 = vand.u32 %v2104, 15
      %v2107 = vsub.s32 0, %v2106
      %v2108 = vsel %vm2102, %v2107, %v2106
      %vm2109 = vcmp.lt.s32.totalorder %v1927, 0
      %v2110 = vsub.s32 0, %v1927
      %v2111 = vsel %vm2109, %v2110, %v1927
      %v2112 = vshrl.u32 %v2111, 4
      %v2113 = vand.u32 %v2111, 15
      %v2114 = vsub.s32 0, %v2113
      %v2115 = vsel %vm2109, %v2114, %v2113
      %vm2116 = vcmp.lt.s32.totalorder %v1928, 0
      %v2117 = vsub.s32 0, %v1928
      %v2118 = vsel %vm2116, %v2117, %v1928
      %v2119 = vshrl.u32 %v2118, 4
      %v2120 = vand.u32 %v2118, 15
      %v2121 = vsub.s32 0, %v2120
      %v2122 = vsel %vm2116, %v2121, %v2120
      %vm2123 = vcmp.lt.s32.totalorder %v1929, 0
      %v2124 = vsub.s32 0, %v1929
      %v2125 = vsel %vm2123, %v2124, %v1929
      %v2126 = vshrl.u32 %v2125, 4
      %v2127 = vand.u32 %v2125, 15
      %v2128 = vsub.s32 0, %v2127
      %v2129 = vsel %vm2123, %v2128, %v2127
      %vm2130 = vcmp.lt.s32.totalorder %v1930, 0
      %v2131 = vsub.s32 0, %v1930
      %v2132 = vsel %vm2130, %v2131, %v1930
      %v2133 = vshrl.u32 %v2132, 4
      %v2134 = vand.u32 %v2132, 15
      %v2135 = vsub.s32 0, %v2134
      %v2136 = vsel %vm2130, %v2135, %v2134
      %vm2137 = vcmp.lt.s32.totalorder %v1931, 0
      %v2138 = vsub.s32 0, %v1931
      %v2139 = vsel %vm2137, %v2138, %v1931
      %v2140 = vshrl.u32 %v2139, 4
      %v2141 = vand.u32 %v2139, 15
      %v2142 = vsub.s32 0, %v2141
      %v2143 = vsel %vm2137, %v2142, %v2141
      %vm2144 = vcmp.lt.s32.totalorder %v1932, 0
      %v2145 = vsub.s32 0, %v1932
      %v2146 = vsel %vm2144, %v2145, %v1932
      %v2147 = vshrl.u32 %v2146, 4
      %v2148 = vand.u32 %v2146, 15
      %v2149 = vsub.s32 0, %v2148
      %v2150 = vsel %vm2144, %v2149, %v2148
      %vm2151 = vcmp.lt.s32.totalorder %v1933, 0
      %v2152 = vsub.s32 0, %v1933
      %v2153 = vsel %vm2151, %v2152, %v1933
      %v2154 = vshrl.u32 %v2153, 4
      %v2155 = vand.u32 %v2153, 15
      %v2156 = vsub.s32 0, %v2155
      %v2157 = vsel %vm2151, %v2156, %v2155
      %vm2158 = vcmp.ne.s32.totalorder %v1940, 0
      %vm2159 = vcmp.ne.s32.totalorder %v1947, 0
      %vm2160 = vcmp.ne.s32.totalorder %v1954, 0
      %vm2161 = vcmp.ne.s32.totalorder %v1961, 0
      %vm2162 = vcmp.ne.s32.totalorder %v1968, 0
      %vm2163 = vcmp.ne.s32.totalorder %v1975, 0
      %vm2164 = vcmp.ne.s32.totalorder %v1982, 0
      %vm2165 = vcmp.ne.s32.totalorder %v1989, 0
      %vm2166 = vcmp.ne.s32.totalorder %v1996, 0
      %vm2167 = vcmp.ne.s32.totalorder %v2003, 0
      %vm2168 = vcmp.ne.s32.totalorder %v2010, 0
      %vm2169 = vcmp.ne.s32.totalorder %v2017, 0
      %vm2170 = vcmp.ne.s32.totalorder %v2024, 0
      %vm2171 = vcmp.ne.s32.totalorder %v2031, 0
      %vm2172 = vcmp.ne.s32.totalorder %v2038, 0
      %vm2173 = vcmp.ne.s32.totalorder %v2045, 0
      %vm2174 = vcmp.ne.s32.totalorder %v2052, 0
      %vm2175 = vcmp.ne.s32.totalorder %v2059, 0
      %vm2176 = vcmp.ne.s32.totalorder %v2066, 0
      %vm2177 = vcmp.ne.s32.totalorder %v2073, 0
      %vm2178 = vcmp.ne.s32.totalorder %v2080, 0
      %vm2179 = vcmp.ne.s32.totalorder %v2087, 0
      %vm2180 = vcmp.ne.s32.totalorder %v2094, 0
      %vm2181 = vcmp.ne.s32.totalorder %v2101, 0
      %vm2182 = vcmp.ne.s32.totalorder %v2108, 0
      %vm2183 = vcmp.ne.s32.totalorder %v2115, 0
      %vm2184 = vcmp.ne.s32.totalorder %v2122, 0
      %vm2185 = vcmp.ne.s32.totalorder %v2129, 0
      %vm2186 = vcmp.ne.s32.totalorder %v2136, 0
      %vm2187 = vcmp.ne.s32.totalorder %v2143, 0
      %vm2188 = vcmp.ne.s32.totalorder %v2150, 0
      %vm2189 = vcmp.ne.s32.totalorder %v2157, 0
      %vm2190 = vcmp.lt.s32.totalorder %v1940, 0
      %vm2191 = vcmp.lt.s32.totalorder %v1947, 0
      %vm2192 = vcmp.lt.s32.totalorder %v1954, 0
      %vm2193 = vcmp.lt.s32.totalorder %v1961, 0
      %vm2194 = vcmp.lt.s32.totalorder %v1968, 0
      %vm2195 = vcmp.lt.s32.totalorder %v1975, 0
      %vm2196 = vcmp.lt.s32.totalorder %v1982, 0
      %vm2197 = vcmp.lt.s32.totalorder %v1989, 0
      %vm2198 = vcmp.lt.s32.totalorder %v1996, 0
      %vm2199 = vcmp.lt.s32.totalorder %v2003, 0
      %vm2200 = vcmp.lt.s32.totalorder %v2010, 0
      %vm2201 = vcmp.lt.s32.totalorder %v2017, 0
      %vm2202 = vcmp.lt.s32.totalorder %v2024, 0
      %vm2203 = vcmp.lt.s32.totalorder %v2031, 0
      %vm2204 = vcmp.lt.s32.totalorder %v2038, 0
      %vm2205 = vcmp.lt.s32.totalorder %v2045, 0
      %vm2206 = vcmp.lt.s32.totalorder %v2052, 0
      %vm2207 = vcmp.lt.s32.totalorder %v2059, 0
      %vm2208 = vcmp.lt.s32.totalorder %v2066, 0
      %vm2209 = vcmp.lt.s32.totalorder %v2073, 0
      %vm2210 = vcmp.lt.s32.totalorder %v2080, 0
      %vm2211 = vcmp.lt.s32.totalorder %v2087, 0
      %vm2212 = vcmp.lt.s32.totalorder %v2094, 0
      %vm2213 = vcmp.lt.s32.totalorder %v2101, 0
      %vm2214 = vcmp.lt.s32.totalorder %v2108, 0
      %vm2215 = vcmp.lt.s32.totalorder %v2115, 0
      %vm2216 = vcmp.lt.s32.totalorder %v2122, 0
      %vm2217 = vcmp.lt.s32.totalorder %v2129, 0
      %vm2218 = vcmp.lt.s32.totalorder %v2136, 0
      %vm2219 = vcmp.lt.s32.totalorder %v2143, 0
      %vm2220 = vcmp.lt.s32.totalorder %v2150, 0
      %vm2221 = vcmp.lt.s32.totalorder %v2157, 0
      %vm2222 = vmand %vm2190, %vm2158
      %vm2223 = vmand %vm2191, %vm2159
      %vm2224 = vmand %vm2192, %vm2160
      %vm2225 = vmand %vm2193, %vm2161
      %vm2226 = vmand %vm2194, %vm2162
      %vm2227 = vmand %vm2195, %vm2163
      %vm2228 = vmand %vm2196, %vm2164
      %vm2229 = vmand %vm2197, %vm2165
      %vm2230 = vmand %vm2198, %vm2166
      %vm2231 = vmand %vm2199, %vm2167
      %vm2232 = vmand %vm2200, %vm2168
      %vm2233 = vmand %vm2201, %vm2169
      %vm2234 = vmand %vm2202, %vm2170
      %vm2235 = vmand %vm2203, %vm2171
      %vm2236 = vmand %vm2204, %vm2172
      %vm2237 = vmand %vm2205, %vm2173
      %vm2238 = vmand %vm2206, %vm2174
      %vm2239 = vmand %vm2207, %vm2175
      %vm2240 = vmand %vm2208, %vm2176
      %vm2241 = vmand %vm2209, %vm2177
      %vm2242 = vmand %vm2210, %vm2178
      %vm2243 = vmand %vm2211, %vm2179
      %vm2244 = vmand %vm2212, %vm2180
      %vm2245 = vmand %vm2213, %vm2181
      %vm2246 = vmand %vm2214, %vm2182
      %vm2247 = vmand %vm2215, %vm2183
      %vm2248 = vmand %vm2216, %vm2184
      %vm2249 = vmand %vm2217, %vm2185
      %vm2250 = vmand %vm2218, %vm2186
      %vm2251 = vmand %vm2219, %vm2187
      %vm2252 = vmand %vm2220, %vm2188
      %vm2253 = vmand %vm2221, %vm2189
      %v2254 = vadd.s32 %v1940, 16
      %v2255 = vadd.s32 %v1947, 16
      %v2256 = vadd.s32 %v1954, 16
      %v2257 = vadd.s32 %v1961, 16
      %v2258 = vadd.s32 %v1968, 16
      %v2259 = vadd.s32 %v1975, 16
      %v2260 = vadd.s32 %v1982, 16
      %v2261 = vadd.s32 %v1989, 16
      %v2262 = vadd.s32 %v1996, 16
      %v2263 = vadd.s32 %v2003, 16
      %v2264 = vadd.s32 %v2010, 16
      %v2265 = vadd.s32 %v2017, 16
      %v2266 = vadd.s32 %v2024, 16
      %v2267 = vadd.s32 %v2031, 16
      %v2268 = vadd.s32 %v2038, 16
      %v2269 = vadd.s32 %v2045, 16
      %v2270 = vadd.s32 %v2052, 16
      %v2271 = vadd.s32 %v2059, 16
      %v2272 = vadd.s32 %v2066, 16
      %v2273 = vadd.s32 %v2073, 16
      %v2274 = vadd.s32 %v2080, 16
      %v2275 = vadd.s32 %v2087, 16
      %v2276 = vadd.s32 %v2094, 16
      %v2277 = vadd.s32 %v2101, 16
      %v2278 = vadd.s32 %v2108, 16
      %v2279 = vadd.s32 %v2115, 16
      %v2280 = vadd.s32 %v2122, 16
      %v2281 = vadd.s32 %v2129, 16
      %v2282 = vadd.s32 %v2136, 16
      %v2283 = vadd.s32 %v2143, 16
      %v2284 = vadd.s32 %v2150, 16
      %v2285 = vadd.s32 %v2157, 16
      %v2286 = vsel %vm2222, %v2254, %v1940
      %v2287 = vsel %vm2223, %v2255, %v1947
      %v2288 = vsel %vm2224, %v2256, %v1954
      %v2289 = vsel %vm2225, %v2257, %v1961
      %v2290 = vsel %vm2226, %v2258, %v1968
      %v2291 = vsel %vm2227, %v2259, %v1975
      %v2292 = vsel %vm2228, %v2260, %v1982
      %v2293 = vsel %vm2229, %v2261, %v1989
      %v2294 = vsel %vm2230, %v2262, %v1996
      %v2295 = vsel %vm2231, %v2263, %v2003
      %v2296 = vsel %vm2232, %v2264, %v2010
      %v2297 = vsel %vm2233, %v2265, %v2017
      %v2298 = vsel %vm2234, %v2266, %v2024
      %v2299 = vsel %vm2235, %v2267, %v2031
      %v2300 = vsel %vm2236, %v2268, %v2038
      %v2301 = vsel %vm2237, %v2269, %v2045
      %v2302 = vsel %vm2238, %v2270, %v2052
      %v2303 = vsel %vm2239, %v2271, %v2059
      %v2304 = vsel %vm2240, %v2272, %v2066
      %v2305 = vsel %vm2241, %v2273, %v2073
      %v2306 = vsel %vm2242, %v2274, %v2080
      %v2307 = vsel %vm2243, %v2275, %v2087
      %v2308 = vsel %vm2244, %v2276, %v2094
      %v2309 = vsel %vm2245, %v2277, %v2101
      %v2310 = vsel %vm2246, %v2278, %v2108
      %v2311 = vsel %vm2247, %v2279, %v2115
      %v2312 = vsel %vm2248, %v2280, %v2122
      %v2313 = vsel %vm2249, %v2281, %v2129
      %v2314 = vsel %vm2250, %v2282, %v2136
      %v2315 = vsel %vm2251, %v2283, %v2143
      %v2316 = vsel %vm2252, %v2284, %v2150
      %v2317 = vsel %vm2253, %v2285, %v2157
      %vm2318 = vcmp.ne.s32.totalorder %v2286, 0
      %vm2319 = vcmp.ne.s32.totalorder %v2287, 0
      %vm2320 = vcmp.ne.s32.totalorder %v2288, 0
      %vm2321 = vcmp.ne.s32.totalorder %v2289, 0
      %vm2322 = vcmp.ne.s32.totalorder %v2290, 0
      %vm2323 = vcmp.ne.s32.totalorder %v2291, 0
      %vm2324 = vcmp.ne.s32.totalorder %v2292, 0
      %vm2325 = vcmp.ne.s32.totalorder %v2293, 0
      %vm2326 = vcmp.ne.s32.totalorder %v2294, 0
      %vm2327 = vcmp.ne.s32.totalorder %v2295, 0
      %vm2328 = vcmp.ne.s32.totalorder %v2296, 0
      %vm2329 = vcmp.ne.s32.totalorder %v2297, 0
      %vm2330 = vcmp.ne.s32.totalorder %v2298, 0
      %vm2331 = vcmp.ne.s32.totalorder %v2299, 0
      %vm2332 = vcmp.ne.s32.totalorder %v2300, 0
      %vm2333 = vcmp.ne.s32.totalorder %v2301, 0
      %vm2334 = vcmp.ne.s32.totalorder %v2302, 0
      %vm2335 = vcmp.ne.s32.totalorder %v2303, 0
      %vm2336 = vcmp.ne.s32.totalorder %v2304, 0
      %vm2337 = vcmp.ne.s32.totalorder %v2305, 0
      %vm2338 = vcmp.ne.s32.totalorder %v2306, 0
      %vm2339 = vcmp.ne.s32.totalorder %v2307, 0
      %vm2340 = vcmp.ne.s32.totalorder %v2308, 0
      %vm2341 = vcmp.ne.s32.totalorder %v2309, 0
      %vm2342 = vcmp.ne.s32.totalorder %v2310, 0
      %vm2343 = vcmp.ne.s32.totalorder %v2311, 0
      %vm2344 = vcmp.ne.s32.totalorder %v2312, 0
      %vm2345 = vcmp.ne.s32.totalorder %v2313, 0
      %vm2346 = vcmp.ne.s32.totalorder %v2314, 0
      %vm2347 = vcmp.ne.s32.totalorder %v2315, 0
      %vm2348 = vcmp.ne.s32.totalorder %v2316, 0
      %vm2349 = vcmp.ne.s32.totalorder %v2317, 0
      %v2350 = vrot.slane %v1421, 7
      %v2351 = vrot.slane %v1425, 7
      %v2352 = vrot.slane %v1431, 7
      %v2353 = vrot.slane %v1435, 7
      %v2354 = vrot.slane %v1441, 7
      %v2355 = vrot.slane %v1445, 7
      %v2356 = vrot.slane %v1451, 7
      %v2357 = vrot.slane %v1455, 7
      %v2358 = vrot.slane %v1461, 7
      %v2359 = vrot.slane %v1465, 7
      %v2360 = vrot.slane %v1471, 7
      %v2361 = vrot.slane %v1475, 7
      %v2362 = vrot.slane %v1481, 7
      %v2363 = vrot.slane %v1485, 7
      %v2364 = vrot.slane %v1491, 7
      %v2365 = vrot.slane %v1495, 7
      %v2366 = vrot.slane %v1501, 7
      %v2367 = vrot.slane %v1505, 7
      %v2368 = vrot.slane %v1511, 7
      %v2369 = vrot.slane %v1515, 7
      %v2370 = vrot.slane %v1521, 7
      %v2371 = vrot.slane %v1525, 7
      %v2372 = vrot.slane %v1531, 7
      %v2373 = vrot.slane %v1535, 7
      %v2374 = vrot.slane %v1541, 7
      %v2375 = vrot.slane %v1545, 7
      %v2376 = vrot.slane %v1551, 7
      %v2377 = vrot.slane %v1555, 7
      %v2378 = vrot.slane %v1561, 7
      %v2379 = vrot.slane %v1565, 7
      %v2380 = vrot.slane %v1571, 7
      %v2381 = vrot.slane %v1575, 7
      %vm2382 = vcmp.lt.s32.totalorder %v1902, 1
      %v2383 = vsel %vm2382, %v2380, %v2381
      %v2384 = vsel %vm2382, %v2379, %v2380
      %v2385 = vsel %vm2382, %v2378, %v2379
      %v2386 = vsel %vm2382, %v2377, %v2378
      %v2387 = vsel %vm2382, %v2376, %v2377
      %v2388 = vsel %vm2382, %v2375, %v2376
      %v2389 = vsel %vm2382, %v2374, %v2375
      %v2390 = vsel %vm2382, %v2373, %v2374
      %v2391 = vsel %vm2382, %v2372, %v2373
      %v2392 = vsel %vm2382, %v2371, %v2372
      %v2393 = vsel %vm2382, %v2370, %v2371
      %v2394 = vsel %vm2382, %v2369, %v2370
      %v2395 = vsel %vm2382, %v2368, %v2369
      %v2396 = vsel %vm2382, %v2367, %v2368
      %v2397 = vsel %vm2382, %v2366, %v2367
      %v2398 = vsel %vm2382, %v2365, %v2366
      %v2399 = vsel %vm2382, %v2364, %v2365
      %v2400 = vsel %vm2382, %v2363, %v2364
      %v2401 = vsel %vm2382, %v2362, %v2363
      %v2402 = vsel %vm2382, %v2361, %v2362
      %v2403 = vsel %vm2382, %v2360, %v2361
      %v2404 = vsel %vm2382, %v2359, %v2360
      %v2405 = vsel %vm2382, %v2358, %v2359
      %v2406 = vsel %vm2382, %v2357, %v2358
      %v2407 = vsel %vm2382, %v2356, %v2357
      %v2408 = vsel %vm2382, %v2355, %v2356
      %v2409 = vsel %vm2382, %v2354, %v2355
      %v2410 = vsel %vm2382, %v2353, %v2354
      %v2411 = vsel %vm2382, %v2352, %v2353
      %v2412 = vsel %vm2382, %v2351, %v2352
      %v2413 = vsel %vm2382, %v2350, %v2351
      %v2414 = vsel %vm2382, %v2381, %v2350
      %v2415 = vsel %vm2318, 1, 0
      %v2416 = vsel %vm2319, 1, 0
      %v2417 = vsel %vm2320, 1, 0
      %v2418 = vsel %vm2321, 1, 0
      %v2419 = vsel %vm2322, 1, 0
      %v2420 = vsel %vm2323, 1, 0
      %v2421 = vsel %vm2324, 1, 0
      %v2422 = vsel %vm2325, 1, 0
      %v2423 = vsel %vm2326, 1, 0
      %v2424 = vsel %vm2327, 1, 0
      %v2425 = vsel %vm2328, 1, 0
      %v2426 = vsel %vm2329, 1, 0
      %v2427 = vsel %vm2330, 1, 0
      %v2428 = vsel %vm2331, 1, 0
      %v2429 = vsel %vm2332, 1, 0
      %v2430 = vsel %vm2333, 1, 0
      %v2431 = vsel %vm2334, 1, 0
      %v2432 = vsel %vm2335, 1, 0
      %v2433 = vsel %vm2336, 1, 0
      %v2434 = vsel %vm2337, 1, 0
      %v2435 = vsel %vm2338, 1, 0
      %v2436 = vsel %vm2339, 1, 0
      %v2437 = vsel %vm2340, 1, 0
      %v2438 = vsel %vm2341, 1, 0
      %v2439 = vsel %vm2342, 1, 0
      %v2440 = vsel %vm2343, 1, 0
      %v2441 = vsel %vm2344, 1, 0
      %v2442 = vsel %vm2345, 1, 0
      %v2443 = vsel %vm2346, 1, 0
      %v2444 = vsel %vm2347, 1, 0
      %v2445 = vsel %vm2348, 1, 0
      %v2446 = vsel %vm2349, 1, 0
      %vm2447 = vcmp.eq.s32.totalorder %v2415, 1
      %vm2448 = vcmp.eq.s32.totalorder %v2416, 1
      %vm2449 = vcmp.eq.s32.totalorder %v2417, 1
      %vm2450 = vcmp.eq.s32.totalorder %v2418, 1
      %vm2451 = vcmp.eq.s32.totalorder %v2419, 1
      %vm2452 = vcmp.eq.s32.totalorder %v2420, 1
      %vm2453 = vcmp.eq.s32.totalorder %v2421, 1
      %vm2454 = vcmp.eq.s32.totalorder %v2422, 1
      %vm2455 = vcmp.eq.s32.totalorder %v2423, 1
      %vm2456 = vcmp.eq.s32.totalorder %v2424, 1
      %vm2457 = vcmp.eq.s32.totalorder %v2425, 1
      %vm2458 = vcmp.eq.s32.totalorder %v2426, 1
      %vm2459 = vcmp.eq.s32.totalorder %v2427, 1
      %vm2460 = vcmp.eq.s32.totalorder %v2428, 1
      %vm2461 = vcmp.eq.s32.totalorder %v2429, 1
      %vm2462 = vcmp.eq.s32.totalorder %v2430, 1
      %vm2463 = vcmp.eq.s32.totalorder %v2431, 1
      %vm2464 = vcmp.eq.s32.totalorder %v2432, 1
      %vm2465 = vcmp.eq.s32.totalorder %v2433, 1
      %vm2466 = vcmp.eq.s32.totalorder %v2434, 1
      %vm2467 = vcmp.eq.s32.totalorder %v2435, 1
      %vm2468 = vcmp.eq.s32.totalorder %v2436, 1
      %vm2469 = vcmp.eq.s32.totalorder %v2437, 1
      %vm2470 = vcmp.eq.s32.totalorder %v2438, 1
      %vm2471 = vcmp.eq.s32.totalorder %v2439, 1
      %vm2472 = vcmp.eq.s32.totalorder %v2440, 1
      %vm2473 = vcmp.eq.s32.totalorder %v2441, 1
      %vm2474 = vcmp.eq.s32.totalorder %v2442, 1
      %vm2475 = vcmp.eq.s32.totalorder %v2443, 1
      %vm2476 = vcmp.eq.s32.totalorder %v2444, 1
      %vm2477 = vcmp.eq.s32.totalorder %v2445, 1
      %vm2478 = vcmp.eq.s32.totalorder %v2446, 1
      %v2479 = vsel %vm2447, %v2414, 0.0
      %v2480 = vsel %vm2448, %v2413, 0.0
      %v2481 = vsel %vm2449, %v2412, 0.0
      %v2482 = vsel %vm2450, %v2411, 0.0
      %v2483 = vsel %vm2451, %v2410, 0.0
      %v2484 = vsel %vm2452, %v2409, 0.0
      %v2485 = vsel %vm2453, %v2408, 0.0
      %v2486 = vsel %vm2454, %v2407, 0.0
      %v2487 = vsel %vm2455, %v2406, 0.0
      %v2488 = vsel %vm2456, %v2405, 0.0
      %v2489 = vsel %vm2457, %v2404, 0.0
      %v2490 = vsel %vm2458, %v2403, 0.0
      %v2491 = vsel %vm2459, %v2402, 0.0
      %v2492 = vsel %vm2460, %v2401, 0.0
      %v2493 = vsel %vm2461, %v2400, 0.0
      %v2494 = vsel %vm2462, %v2399, 0.0
      %v2495 = vsel %vm2463, %v2398, 0.0
      %v2496 = vsel %vm2464, %v2397, 0.0
      %v2497 = vsel %vm2465, %v2396, 0.0
      %v2498 = vsel %vm2466, %v2395, 0.0
      %v2499 = vsel %vm2467, %v2394, 0.0
      %v2500 = vsel %vm2468, %v2393, 0.0
      %v2501 = vsel %vm2469, %v2392, 0.0
      %v2502 = vsel %vm2470, %v2391, 0.0
      %v2503 = vsel %vm2471, %v2390, 0.0
      %v2504 = vsel %vm2472, %v2389, 0.0
      %v2505 = vsel %vm2473, %v2388, 0.0
      %v2506 = vsel %vm2474, %v2387, 0.0
      %v2507 = vsel %vm2475, %v2386, 0.0
      %v2508 = vsel %vm2476, %v2385, 0.0
      %v2509 = vsel %vm2477, %v2384, 0.0
      %v2510 = vsel %vm2478, %v2383, 0.0
      %vm2511 = vcmp.ne.s32.totalorder %v2286, 15
      %vm2512 = vcmp.ne.s32.totalorder %v2287, 15
      %vm2513 = vcmp.ne.s32.totalorder %v2288, 15
      %vm2514 = vcmp.ne.s32.totalorder %v2289, 15
      %vm2515 = vcmp.ne.s32.totalorder %v2290, 15
      %vm2516 = vcmp.ne.s32.totalorder %v2291, 15
      %vm2517 = vcmp.ne.s32.totalorder %v2292, 15
      %vm2518 = vcmp.ne.s32.totalorder %v2293, 15
      %vm2519 = vcmp.ne.s32.totalorder %v2294, 15
      %vm2520 = vcmp.ne.s32.totalorder %v2295, 15
      %vm2521 = vcmp.ne.s32.totalorder %v2296, 15
      %vm2522 = vcmp.ne.s32.totalorder %v2297, 15
      %vm2523 = vcmp.ne.s32.totalorder %v2298, 15
      %vm2524 = vcmp.ne.s32.totalorder %v2299, 15
      %vm2525 = vcmp.ne.s32.totalorder %v2300, 15
      %vm2526 = vcmp.ne.s32.totalorder %v2301, 15
      %vm2527 = vcmp.ne.s32.totalorder %v2302, 15
      %vm2528 = vcmp.ne.s32.totalorder %v2303, 15
      %vm2529 = vcmp.ne.s32.totalorder %v2304, 15
      %vm2530 = vcmp.ne.s32.totalorder %v2305, 15
      %vm2531 = vcmp.ne.s32.totalorder %v2306, 15
      %vm2532 = vcmp.ne.s32.totalorder %v2307, 15
      %vm2533 = vcmp.ne.s32.totalorder %v2308, 15
      %vm2534 = vcmp.ne.s32.totalorder %v2309, 15
      %vm2535 = vcmp.ne.s32.totalorder %v2310, 15
      %vm2536 = vcmp.ne.s32.totalorder %v2311, 15
      %vm2537 = vcmp.ne.s32.totalorder %v2312, 15
      %vm2538 = vcmp.ne.s32.totalorder %v2313, 15
      %vm2539 = vcmp.ne.s32.totalorder %v2314, 15
      %vm2540 = vcmp.ne.s32.totalorder %v2315, 15
      %vm2541 = vcmp.ne.s32.totalorder %v2316, 15
      %vm2542 = vcmp.ne.s32.totalorder %v2317, 15
      %v2543 = vrot.slane %v1775, 1
      %v2544 = vrot.slane %v1778, 1
      %v2545 = vrot.slane %v1783, 1
      %v2546 = vrot.slane %v1786, 1
      %v2547 = vrot.slane %v1791, 1
      %v2548 = vrot.slane %v1794, 1
      %v2549 = vrot.slane %v1799, 1
      %v2550 = vrot.slane %v1802, 1
      %v2551 = vrot.slane %v1807, 1
      %v2552 = vrot.slane %v1810, 1
      %v2553 = vrot.slane %v1815, 1
      %v2554 = vrot.slane %v1818, 1
      %v2555 = vrot.slane %v1823, 1
      %v2556 = vrot.slane %v1826, 1
      %v2557 = vrot.slane %v1831, 1
      %v2558 = vrot.slane %v1834, 1
      %v2559 = vrot.slane %v1839, 1
      %v2560 = vrot.slane %v1842, 1
      %v2561 = vrot.slane %v1847, 1
      %v2562 = vrot.slane %v1850, 1
      %v2563 = vrot.slane %v1855, 1
      %v2564 = vrot.slane %v1858, 1
      %v2565 = vrot.slane %v1863, 1
      %v2566 = vrot.slane %v1866, 1
      %v2567 = vrot.slane %v1871, 1
      %v2568 = vrot.slane %v1874, 1
      %v2569 = vrot.slane %v1879, 1
      %v2570 = vrot.slane %v1882, 1
      %v2571 = vrot.slane %v1887, 1
      %v2572 = vrot.slane %v1890, 1
      %v2573 = vrot.slane %v1895, 1
      %v2574 = vrot.slane %v1898, 1
      %vm2575 = vcmp.lt.s32.totalorder %v1902, 7
      %v2576 = vsel %vm2575, %v2573, %v2574
      %v2577 = vsel %vm2575, %v2572, %v2573
      %v2578 = vsel %vm2575, %v2571, %v2572
      %v2579 = vsel %vm2575, %v2570, %v2571
      %v2580 = vsel %vm2575, %v2569, %v2570
      %v2581 = vsel %vm2575, %v2568, %v2569
      %v2582 = vsel %vm2575, %v2567, %v2568
      %v2583 = vsel %vm2575, %v2566, %v2567
      %v2584 = vsel %vm2575, %v2565, %v2566
      %v2585 = vsel %vm2575, %v2564, %v2565
      %v2586 = vsel %vm2575, %v2563, %v2564
      %v2587 = vsel %vm2575, %v2562, %v2563
      %v2588 = vsel %vm2575, %v2561, %v2562
      %v2589 = vsel %vm2575, %v2560, %v2561
      %v2590 = vsel %vm2575, %v2559, %v2560
      %v2591 = vsel %vm2575, %v2558, %v2559
      %v2592 = vsel %vm2575, %v2557, %v2558
      %v2593 = vsel %vm2575, %v2556, %v2557
      %v2594 = vsel %vm2575, %v2555, %v2556
      %v2595 = vsel %vm2575, %v2554, %v2555
      %v2596 = vsel %vm2575, %v2553, %v2554
      %v2597 = vsel %vm2575, %v2552, %v2553
      %v2598 = vsel %vm2575, %v2551, %v2552
      %v2599 = vsel %vm2575, %v2550, %v2551
      %v2600 = vsel %vm2575, %v2549, %v2550
      %v2601 = vsel %vm2575, %v2548, %v2549
      %v2602 = vsel %vm2575, %v2547, %v2548
      %v2603 = vsel %vm2575, %v2546, %v2547
      %v2604 = vsel %vm2575, %v2545, %v2546
      %v2605 = vsel %vm2575, %v2544, %v2545
      %v2606 = vsel %vm2575, %v2543, %v2544
      %v2607 = vsel %vm2575, %v2574, %v2543
      %v2608 = vsel %vm2511, 1, 0
      %v2609 = vsel %vm2512, 1, 0
      %v2610 = vsel %vm2513, 1, 0
      %v2611 = vsel %vm2514, 1, 0
      %v2612 = vsel %vm2515, 1, 0
      %v2613 = vsel %vm2516, 1, 0
      %v2614 = vsel %vm2517, 1, 0
      %v2615 = vsel %vm2518, 1, 0
      %v2616 = vsel %vm2519, 1, 0
      %v2617 = vsel %vm2520, 1, 0
      %v2618 = vsel %vm2521, 1, 0
      %v2619 = vsel %vm2522, 1, 0
      %v2620 = vsel %vm2523, 1, 0
      %v2621 = vsel %vm2524, 1, 0
      %v2622 = vsel %vm2525, 1, 0
      %v2623 = vsel %vm2526, 1, 0
      %v2624 = vsel %vm2527, 1, 0
      %v2625 = vsel %vm2528, 1, 0
      %v2626 = vsel %vm2529, 1, 0
      %v2627 = vsel %vm2530, 1, 0
      %v2628 = vsel %vm2531, 1, 0
      %v2629 = vsel %vm2532, 1, 0
      %v2630 = vsel %vm2533, 1, 0
      %v2631 = vsel %vm2534, 1, 0
      %v2632 = vsel %vm2535, 1, 0
      %v2633 = vsel %vm2536, 1, 0
      %v2634 = vsel %vm2537, 1, 0
      %v2635 = vsel %vm2538, 1, 0
      %v2636 = vsel %vm2539, 1, 0
      %v2637 = vsel %vm2540, 1, 0
      %v2638 = vsel %vm2541, 1, 0
      %v2639 = vsel %vm2542, 1, 0
      %vm2640 = vcmp.eq.s32.totalorder %v2608, 1
      %vm2641 = vcmp.eq.s32.totalorder %v2609, 1
      %vm2642 = vcmp.eq.s32.totalorder %v2610, 1
      %vm2643 = vcmp.eq.s32.totalorder %v2611, 1
      %vm2644 = vcmp.eq.s32.totalorder %v2612, 1
      %vm2645 = vcmp.eq.s32.totalorder %v2613, 1
      %vm2646 = vcmp.eq.s32.totalorder %v2614, 1
      %vm2647 = vcmp.eq.s32.totalorder %v2615, 1
      %vm2648 = vcmp.eq.s32.totalorder %v2616, 1
      %vm2649 = vcmp.eq.s32.totalorder %v2617, 1
      %vm2650 = vcmp.eq.s32.totalorder %v2618, 1
      %vm2651 = vcmp.eq.s32.totalorder %v2619, 1
      %vm2652 = vcmp.eq.s32.totalorder %v2620, 1
      %vm2653 = vcmp.eq.s32.totalorder %v2621, 1
      %vm2654 = vcmp.eq.s32.totalorder %v2622, 1
      %vm2655 = vcmp.eq.s32.totalorder %v2623, 1
      %vm2656 = vcmp.eq.s32.totalorder %v2624, 1
      %vm2657 = vcmp.eq.s32.totalorder %v2625, 1
      %vm2658 = vcmp.eq.s32.totalorder %v2626, 1
      %vm2659 = vcmp.eq.s32.totalorder %v2627, 1
      %vm2660 = vcmp.eq.s32.totalorder %v2628, 1
      %vm2661 = vcmp.eq.s32.totalorder %v2629, 1
      %vm2662 = vcmp.eq.s32.totalorder %v2630, 1
      %vm2663 = vcmp.eq.s32.totalorder %v2631, 1
      %vm2664 = vcmp.eq.s32.totalorder %v2632, 1
      %vm2665 = vcmp.eq.s32.totalorder %v2633, 1
      %vm2666 = vcmp.eq.s32.totalorder %v2634, 1
      %vm2667 = vcmp.eq.s32.totalorder %v2635, 1
      %vm2668 = vcmp.eq.s32.totalorder %v2636, 1
      %vm2669 = vcmp.eq.s32.totalorder %v2637, 1
      %vm2670 = vcmp.eq.s32.totalorder %v2638, 1
      %vm2671 = vcmp.eq.s32.totalorder %v2639, 1
      %v2672 = vsel %vm2640, %v2606, 0.0
      %v2673 = vsel %vm2641, %v2605, 0.0
      %v2674 = vsel %vm2642, %v2604, 0.0
      %v2675 = vsel %vm2643, %v2603, 0.0
      %v2676 = vsel %vm2644, %v2602, 0.0
      %v2677 = vsel %vm2645, %v2601, 0.0
      %v2678 = vsel %vm2646, %v2600, 0.0
      %v2679 = vsel %vm2647, %v2599, 0.0
      %v2680 = vsel %vm2648, %v2598, 0.0
      %v2681 = vsel %vm2649, %v2597, 0.0
      %v2682 = vsel %vm2650, %v2596, 0.0
      %v2683 = vsel %vm2651, %v2595, 0.0
      %v2684 = vsel %vm2652, %v2594, 0.0
      %v2685 = vsel %vm2653, %v2593, 0.0
      %v2686 = vsel %vm2654, %v2592, 0.0
      %v2687 = vsel %vm2655, %v2591, 0.0
      %v2688 = vsel %vm2656, %v2590, 0.0
      %v2689 = vsel %vm2657, %v2589, 0.0
      %v2690 = vsel %vm2658, %v2588, 0.0
      %v2691 = vsel %vm2659, %v2587, 0.0
      %v2692 = vsel %vm2660, %v2586, 0.0
      %v2693 = vsel %vm2661, %v2585, 0.0
      %v2694 = vsel %vm2662, %v2584, 0.0
      %v2695 = vsel %vm2663, %v2583, 0.0
      %v2696 = vsel %vm2664, %v2582, 0.0
      %v2697 = vsel %vm2665, %v2581, 0.0
      %v2698 = vsel %vm2666, %v2580, 0.0
      %v2699 = vsel %vm2667, %v2579, 0.0
      %v2700 = vsel %vm2668, %v2578, 0.0
      %v2701 = vsel %vm2669, %v2577, 0.0
      %v2702 = vsel %vm2670, %v2576, 0.0
      %v2703 = vsel %vm2671, %v2607, 0.0
      %v2704 = vadd.f32 %v2479, %v1423
      %v2705 = vadd.f32 %v2480, %v1427
      %v2706 = vadd.f32 %v2481, %v1433
      %v2707 = vadd.f32 %v2482, %v1437
      %v2708 = vadd.f32 %v2483, %v1443
      %v2709 = vadd.f32 %v2484, %v1447
      %v2710 = vadd.f32 %v2485, %v1453
      %v2711 = vadd.f32 %v2486, %v1457
      %v2712 = vadd.f32 %v2487, %v1463
      %v2713 = vadd.f32 %v2488, %v1467
      %v2714 = vadd.f32 %v2489, %v1473
      %v2715 = vadd.f32 %v2490, %v1477
      %v2716 = vadd.f32 %v2491, %v1483
      %v2717 = vadd.f32 %v2492, %v1487
      %v2718 = vadd.f32 %v2493, %v1493
      %v2719 = vadd.f32 %v2494, %v1497
      %v2720 = vadd.f32 %v2495, %v1503
      %v2721 = vadd.f32 %v2496, %v1507
      %v2722 = vadd.f32 %v2497, %v1513
      %v2723 = vadd.f32 %v2498, %v1517
      %v2724 = vadd.f32 %v2499, %v1523
      %v2725 = vadd.f32 %v2500, %v1527
      %v2726 = vadd.f32 %v2501, %v1533
      %v2727 = vadd.f32 %v2502, %v1537
      %v2728 = vadd.f32 %v2503, %v1543
      %v2729 = vadd.f32 %v2504, %v1547
      %v2730 = vadd.f32 %v2505, %v1553
      %v2731 = vadd.f32 %v2506, %v1557
      %v2732 = vadd.f32 %v2507, %v1563
      %v2733 = vadd.f32 %v2508, %v1567
      %v2734 = vadd.f32 %v2509, %v1573
      %v2735 = vadd.f32 %v2510, %v1577
      %v2736 = vadd.f32 %v2704, %v2672
      %v2737 = vadd.f32 %v2705, %v2673
      %v2738 = vadd.f32 %v2706, %v2674
      %v2739 = vadd.f32 %v2707, %v2675
      %v2740 = vadd.f32 %v2708, %v2676
      %v2741 = vadd.f32 %v2709, %v2677
      %v2742 = vadd.f32 %v2710, %v2678
      %v2743 = vadd.f32 %v2711, %v2679
      %v2744 = vadd.f32 %v2712, %v2680
      %v2745 = vadd.f32 %v2713, %v2681
      %v2746 = vadd.f32 %v2714, %v2682
      %v2747 = vadd.f32 %v2715, %v2683
      %v2748 = vadd.f32 %v2716, %v2684
      %v2749 = vadd.f32 %v2717, %v2685
      %v2750 = vadd.f32 %v2718, %v2686
      %v2751 = vadd.f32 %v2719, %v2687
      %v2752 = vadd.f32 %v2720, %v2688
      %v2753 = vadd.f32 %v2721, %v2689
      %v2754 = vadd.f32 %v2722, %v2690
      %v2755 = vadd.f32 %v2723, %v2691
      %v2756 = vadd.f32 %v2724, %v2692
      %v2757 = vadd.f32 %v2725, %v2693
      %v2758 = vadd.f32 %v2726, %v2694
      %v2759 = vadd.f32 %v2727, %v2695
      %v2760 = vadd.f32 %v2728, %v2696
      %v2761 = vadd.f32 %v2729, %v2697
      %v2762 = vadd.f32 %v2730, %v2698
      %v2763 = vadd.f32 %v2731, %v2699
      %v2764 = vadd.f32 %v2732, %v2700
      %v2765 = vadd.f32 %v2733, %v2701
      %v2766 = vadd.f32 %v2734, %v2702
      %v2767 = vadd.f32 %v2735, %v2703
      %v2768 = vpack.c.bf16 %v2737, %v2736
      %v2769 = vpack.c.bf16 %v2739, %v2738
      %v2770 = vpack.c.bf16 %v2741, %v2740
      %v2771 = vpack.c.bf16 %v2743, %v2742
      %v2772 = vpack.c.bf16 %v2745, %v2744
      %v2773 = vpack.c.bf16 %v2747, %v2746
      %v2774 = vpack.c.bf16 %v2749, %v2748
      %v2775 = vpack.c.bf16 %v2751, %v2750
      %v2776 = vpack.c.bf16 %v2753, %v2752
      %v2777 = vpack.c.bf16 %v2755, %v2754
      %v2778 = vpack.c.bf16 %v2757, %v2756
      %v2779 = vpack.c.bf16 %v2759, %v2758
      %v2780 = vpack.c.bf16 %v2761, %v2760
      %v2781 = vpack.c.bf16 %v2763, %v2762
      %v2782 = vpack.c.bf16 %v2765, %v2764
      %v2783 = vpack.c.bf16 %v2767, %v2766
      %v2800 = vunpack.c.l.b16 %v2768
      %v2801 = vunpack.c.h.b16 %v2768
      %v2802 = vunpack.c.l.b16 %v2769
      %v2803 = vunpack.c.h.b16 %v2769
      %v2804 = vunpack.c.l.b16 %v2770
      %v2805 = vunpack.c.h.b16 %v2770
      %v2806 = vunpack.c.l.b16 %v2771
      %v2807 = vunpack.c.h.b16 %v2771
      %v2808 = vunpack.c.l.b16 %v2772
      %v2809 = vunpack.c.h.b16 %v2772
      %v2810 = vunpack.c.l.b16 %v2773
      %v2811 = vunpack.c.h.b16 %v2773
      %v2812 = vunpack.c.l.b16 %v2774
      %v2813 = vunpack.c.h.b16 %v2774
      %v2814 = vunpack.c.l.b16 %v2775
      %v2815 = vunpack.c.h.b16 %v2775
      %v2816 = vunpack.c.l.b16 %v2776
      %v2817 = vunpack.c.h.b16 %v2776
      %v2818 = vunpack.c.l.b16 %v2777
      %v2819 = vunpack.c.h.b16 %v2777
      %v2820 = vunpack.c.l.b16 %v2778
      %v2821 = vunpack.c.h.b16 %v2778
      %v2822 = vunpack.c.l.b16 %v2779
      %v2823 = vunpack.c.h.b16 %v2779
      %v2824 = vunpack.c.l.b16 %v2780
      %v2825 = vunpack.c.h.b16 %v2780
      %v2826 = vunpack.c.l.b16 %v2781
      %v2827 = vunpack.c.h.b16 %v2781
      %v2828 = vunpack.c.l.b16 %v2782
      %v2829 = vunpack.c.h.b16 %v2782
      %v2830 = vunpack.c.l.b16 %v2783
      %v2831 = vunpack.c.h.b16 %v2783
      %v2832 = vpack.c.b16 %v2800, %v2800
      %v2833 = vpack.c.b16 %v2801, %v2801
      %v2834 = vpack.c.b16 %v2802, %v2802
      %v2835 = vpack.c.b16 %v2803, %v2803
      %v2836 = vpack.c.b16 %v2804, %v2804
      %v2837 = vpack.c.b16 %v2805, %v2805
      %v2838 = vpack.c.b16 %v2806, %v2806
      %v2839 = vpack.c.b16 %v2807, %v2807
      %v2840 = vpack.c.b16 %v2808, %v2808
      %v2841 = vpack.c.b16 %v2809, %v2809
      %v2842 = vpack.c.b16 %v2810, %v2810
      %v2843 = vpack.c.b16 %v2811, %v2811
      %v2844 = vpack.c.b16 %v2812, %v2812
      %v2845 = vpack.c.b16 %v2813, %v2813
      %v2846 = vpack.c.b16 %v2814, %v2814
      %v2847 = vpack.c.b16 %v2815, %v2815
      %v2848 = vpack.c.b16 %v2816, %v2816
      %v2849 = vpack.c.b16 %v2817, %v2817
      %v2850 = vpack.c.b16 %v2818, %v2818
      %v2851 = vpack.c.b16 %v2819, %v2819
      %v2852 = vpack.c.b16 %v2820, %v2820
      %v2853 = vpack.c.b16 %v2821, %v2821
      %v2854 = vpack.c.b16 %v2822, %v2822
      %v2855 = vpack.c.b16 %v2823, %v2823
      %v2856 = vpack.c.b16 %v2824, %v2824
      %v2857 = vpack.c.b16 %v2825, %v2825
      %v2858 = vpack.c.b16 %v2826, %v2826
      %v2859 = vpack.c.b16 %v2827, %v2827
      %v2860 = vpack.c.b16 %v2828, %v2828
      %v2861 = vpack.c.b16 %v2829, %v2829
      %v2862 = vpack.c.b16 %v2830, %v2830
      %v2863 = vpack.c.b16 %v2831, %v2831
      %2896 = vst [vmem:[%s457] sm:$0xf] %v2832
      %2897 = vst [vmem:[%s457 + $0x4] sm:$0xf] %v2833
      %2898 = vst [vmem:[%s457 + $0x8] sm:$0xf] %v2834
      %2899 = vst [vmem:[%s457 + $0xc] sm:$0xf] %v2835
      %2900 = vst [vmem:[%s457 + $0x10] sm:$0xf] %v2836
      %2901 = vst [vmem:[%s457 + $0x14] sm:$0xf] %v2837
      %2902 = vst [vmem:[%s457 + $0x18] sm:$0xf] %v2838
      %2903 = vst [vmem:[%s457 + $0x1c] sm:$0xf] %v2839
      %2904 = vst [vmem:[%s457 + $0x20] sm:$0xf] %v2840
      %2905 = vst [vmem:[%s457 + $0x24] sm:$0xf] %v2841
      %2906 = vst [vmem:[%s457 + $0x28] sm:$0xf] %v2842
      %2907 = vst [vmem:[%s457 + $0x2c] sm:$0xf] %v2843
      %2908 = vst [vmem:[%s457 + $0x30] sm:$0xf] %v2844
      %2909 = vst [vmem:[%s457 + $0x34] sm:$0xf] %v2845
      %2910 = vst [vmem:[%s457 + $0x38] sm:$0xf] %v2846
      %2911 = vst [vmem:[%s457 + $0x3c] sm:$0xf] %v2847
      %2912 = vst [vmem:[%s457 + $0x40] sm:$0xf] %v2848
      %2913 = vst [vmem:[%s457 + $0x44] sm:$0xf] %v2849
      %2914 = vst [vmem:[%s457 + $0x48] sm:$0xf] %v2850
      %2915 = vst [vmem:[%s457 + $0x4c] sm:$0xf] %v2851
      %2916 = vst [vmem:[%s457 + $0x50] sm:$0xf] %v2852
      %2917 = vst [vmem:[%s457 + $0x54] sm:$0xf] %v2853
      %2918 = vst [vmem:[%s457 + $0x58] sm:$0xf] %v2854
      %2919 = vst [vmem:[%s457 + $0x5c] sm:$0xf] %v2855
      %2920 = vst [vmem:[%s457 + $0x60] sm:$0xf] %v2856
      %2921 = vst [vmem:[%s457 + $0x64] sm:$0xf] %v2857
      %2922 = vst [vmem:[%s457 + $0x68] sm:$0xf] %v2858
      %2923 = vst [vmem:[%s457 + $0x6c] sm:$0xf] %v2859
      %2924 = vst [vmem:[%s457 + $0x70] sm:$0xf] %v2860
      %2925 = vst [vmem:[%s457 + $0x74] sm:$0xf] %v2861
      %2926 = vst [vmem:[%s457 + $0x78] sm:$0xf] %v2862
      %2927 = vst [vmem:[%s457 + $0x7c] sm:$0xf] %v2863
      %v2928 = vadd.f32 %v2736, %v2737
      %v2929 = vadd.f32 %v2928, %v2738
      %v2930 = vadd.f32 %v2929, %v2739
      %v2931 = vadd.f32 %v2930, %v2740
      %v2932 = vadd.f32 %v2931, %v2741
      %v2933 = vadd.f32 %v2932, %v2742
      %v2934 = vadd.f32 %v2933, %v2743
      %v2935 = vadd.f32 %v2934, %v2744
      %v2936 = vadd.f32 %v2935, %v2745
      %v2937 = vadd.f32 %v2936, %v2746
      %v2938 = vadd.f32 %v2937, %v2747
      %v2939 = vadd.f32 %v2938, %v2748
      %v2940 = vadd.f32 %v2939, %v2749
      %v2941 = vadd.f32 %v2940, %v2750
      %v2942 = vadd.f32 %v2941, %v2751
      %v2943 = vadd.f32 %v2942, %v2752
      %v2944 = vadd.f32 %v2943, %v2753
      %v2945 = vadd.f32 %v2944, %v2754
      %v2946 = vadd.f32 %v2945, %v2755
      %v2947 = vadd.f32 %v2946, %v2756
      %v2948 = vadd.f32 %v2947, %v2757
      %v2949 = vadd.f32 %v2948, %v2758
      %v2950 = vadd.f32 %v2949, %v2759
      %v2951 = vadd.f32 %v2950, %v2760
      %v2952 = vadd.f32 %v2951, %v2761
      %v2953 = vadd.f32 %v2952, %v2762
      %v2954 = vadd.f32 %v2953, %v2763
      %v2955 = vadd.f32 %v2954, %v2764
      %v2956 = vadd.f32 %v2955, %v2765
      %v2957 = vadd.f32 %v2956, %v2766
      %v2958 = vadd.f32 %v2957, %v2767
      %v2959 = vrot.slane %v2958, 4
      %v2960 = vadd.f32 %v2958, %v2959
      %v2961 = vrot.slane %v2960, 2
      %v2962 = vadd.f32 %v2960, %v2961
      %v2963 = vrot.slane %v2962, 1
      %v2964 = vadd.f32 %v2962, %v2963
      %2965 = vst [vmem:[%s465] sm:$0x1] %v2964
      %v2966 = vmul.f32 %v2736, %v2736
      %v2967 = vmul.f32 %v2737, %v2737
      %v2968 = vmul.f32 %v2738, %v2738
      %v2969 = vmul.f32 %v2739, %v2739
      %v2970 = vmul.f32 %v2740, %v2740
      %v2971 = vmul.f32 %v2741, %v2741
      %v2972 = vmul.f32 %v2742, %v2742
      %v2973 = vmul.f32 %v2743, %v2743
      %v2974 = vmul.f32 %v2744, %v2744
      %v2975 = vmul.f32 %v2745, %v2745
      %v2976 = vmul.f32 %v2746, %v2746
      %v2977 = vmul.f32 %v2747, %v2747
      %v2978 = vmul.f32 %v2748, %v2748
      %v2979 = vmul.f32 %v2749, %v2749
      %v2980 = vmul.f32 %v2750, %v2750
      %v2981 = vmul.f32 %v2751, %v2751
      %v2982 = vmul.f32 %v2752, %v2752
      %v2983 = vmul.f32 %v2753, %v2753
      %v2984 = vmul.f32 %v2754, %v2754
      %v2985 = vmul.f32 %v2755, %v2755
      %v2986 = vmul.f32 %v2756, %v2756
      %v2987 = vmul.f32 %v2757, %v2757
      %v2988 = vmul.f32 %v2758, %v2758
      %v2989 = vmul.f32 %v2759, %v2759
      %v2990 = vmul.f32 %v2760, %v2760
      %v2991 = vmul.f32 %v2761, %v2761
      %v2992 = vmul.f32 %v2762, %v2762
      %v2993 = vmul.f32 %v2763, %v2763
      %v2994 = vmul.f32 %v2764, %v2764
      %v2995 = vmul.f32 %v2765, %v2765
      %v2996 = vmul.f32 %v2766, %v2766
      %v2997 = vmul.f32 %v2767, %v2767
      %v2998 = vadd.f32 %v2966, %v2967
      %v2999 = vadd.f32 %v2998, %v2968
      %v3000 = vadd.f32 %v2999, %v2969
      %v3001 = vadd.f32 %v3000, %v2970
      %v3002 = vadd.f32 %v3001, %v2971
      %v3003 = vadd.f32 %v3002, %v2972
      %v3004 = vadd.f32 %v3003, %v2973
      %v3005 = vadd.f32 %v3004, %v2974
      %v3006 = vadd.f32 %v3005, %v2975
      %v3007 = vadd.f32 %v3006, %v2976
      %v3008 = vadd.f32 %v3007, %v2977
      %v3009 = vadd.f32 %v3008, %v2978
      %v3010 = vadd.f32 %v3009, %v2979
      %v3011 = vadd.f32 %v3010, %v2980
      %v3012 = vadd.f32 %v3011, %v2981
      %v3013 = vadd.f32 %v3012, %v2982
      %v3014 = vadd.f32 %v3013, %v2983
      %v3015 = vadd.f32 %v3014, %v2984
      %v3016 = vadd.f32 %v3015, %v2985
      %v3017 = vadd.f32 %v3016, %v2986
      %v3018 = vadd.f32 %v3017, %v2987
      %v3019 = vadd.f32 %v3018, %v2988
      %v3020 = vadd.f32 %v3019, %v2989
      %v3021 = vadd.f32 %v3020, %v2990
      %v3022 = vadd.f32 %v3021, %v2991
      %v3023 = vadd.f32 %v3022, %v2992
      %v3024 = vadd.f32 %v3023, %v2993
      %v3025 = vadd.f32 %v3024, %v2994
      %v3026 = vadd.f32 %v3025, %v2995
      %v3027 = vadd.f32 %v3026, %v2996
      %v3028 = vadd.f32 %v3027, %v2997
      %v3029 = vrot.slane %v3028, 4
      %v3030 = vadd.f32 %v3028, %v3029
      %v3031 = vrot.slane %v3030, 2
      %v3032 = vadd.f32 %v3030, %v3031
      %v3033 = vrot.slane %v3032, 1
      %v3034 = vadd.f32 %v3032, %v3033
      %3035 = vst [vmem:[%s465 + $0x1] sm:$0x1] %v3034
      %s3036 = smul.u32 16, %s24
      %p3037 = scmp.lt.s32.totalorder %s23, 1
      %s3038 = scalar_select %p3037, %s23, 1
      %p3039 = scmp.lt.s32.totalorder %s3036, 15
      %s3040 = scalar_select %p3039, %s3036, 15
      %s3041 = smul.addr %s3040, 2
      %s3042 = smul.addr %s3038, 32
      %s3043 = sadd.s32 %s3041, %s3042
      %s3044 = smul.addr %s3043, 4
      %s3045 = scalar_lea.vmem %s6, %s3044
      %p3046 = scmp.lt.s32.totalorder %s23, 1
      %s3047 = scalar_select %p3046, %s23, 1
      %p3048 = scmp.lt.s32.totalorder %s24, 0
      %s3049 = scalar_select %p3048, %s24, 0
      %s3050 = sadd.s32 %s3049, %s3047
      %s3051 = smul.addr %s3050, 2
      %s3052 = scalar_lea.vmem %s7, %s3051
      // Predicated region
      $region45: #{double_conv.4} parent=43 // pred_check
        %p3053 = pneg %p214
      $region46: #{double_conv.4} parent=43 // pred_check_branch
        %3055 = sbr.rel (%p3053) target = $region48
      $region47: #{double_conv.4} parent=43 // pred_region
        %s3056 = smul.u32 16, %s24
      $region48: #{double_conv.4} parent=43 // pred_fallthru
        _
      // Predicated region
      $region49: #{double_conv.4} parent=43 // pred_check
        %p3057 = pneg %p242
      $region50: #{double_conv.4} parent=43 // pred_check_branch
        %3059 = sbr.rel (%p3057) target = $region52
      $region51: #{double_conv.4} parent=43 // pred_region
        _
      $region52: #{double_conv.4} parent=43 // pred_fallthru
        _
    $region44: #{double_conv.4} parent=5 // pred_fallthru
      _
    %p3060 = scmp.le.s32.totalorder 2, %s14
    // Predicated region
    $region53: #{double_conv.4} parent=5 // pred_check
      %p3061 = pneg %p3060
    $region54: #{double_conv.4} parent=5 // pred_check_branch
      %3063 = sbr.rel (%p3061) target = $region56
    $region55: #{double_conv.4} parent=5 // pred_region
      %s3064 = ssub.s32 %s14, 2
      // Predicated region
      $region57: #{double_conv.4} parent=55 // pred_check
        %p3065 = pneg %p220
      $region58: #{double_conv.4} parent=55 // pred_check_branch
        %3067 = sbr.rel (%p3065) target = $region60
      $region59: #{double_conv.4} parent=55 // pred_region
        %s3068 = smul.u32 16, %s26
        %p3069 = scmp.lt.s32.totalorder %s25, 1
        %s3070 = scalar_select %p3069, %s25, 1
        %p3071 = scmp.lt.s32.totalorder %s3068, 15
        %s3072 = scalar_select %p3071, %s3068, 15
        %s3073 = smul.addr %s3072, 2
        %s3074 = smul.addr %s3070, 32
        %s3075 = sadd.s32 %s3073, %s3074
        %s3076 = smul.addr %s3075, 4
        %s3077 = scalar_lea.vmem %s6, %s3076
      $region60: #{double_conv.4} parent=55 // pred_fallthru
        _
      // Predicated region
      $region61: #{double_conv.4} parent=55 // pred_check
        %p3078 = pneg %p248
      $region62: #{double_conv.4} parent=55 // pred_check_branch
        %3080 = sbr.rel (%p3078) target = $region64
      $region63: #{double_conv.4} parent=55 // pred_region
        %p3081 = scmp.lt.s32.totalorder %s25, 1
        %s3082 = scalar_select %p3081, %s25, 1
        %p3083 = scmp.lt.s32.totalorder %s26, 0
        %s3084 = scalar_select %p3083, %s26, 0
        %s3085 = sadd.s32 %s3084, %s3082
        %s3086 = smul.addr %s3085, 2
        %s3087 = scalar_lea.vmem %s7, %s3086
      $region64: #{double_conv.4} parent=55 // pred_fallthru
        _
    $region56: #{double_conv.4} parent=5 // pred_fallthru
      _
  $region6: #{double_conv.4} parent=0 // loop_footer
    %s18 = sadd.s32 1, %s14
  $region7: #{double_conv.4} parent=0 // loop_footer_branch
    %13 = sbr.rel target = $region3
  $region8: #{double_conv.4} parent=0 // loop_exit
    _

</llo_original>
